<compile_context>
chip_gen: v7x
topology: tpu7x:2x2x1
jax: 0.10.0
libtpu: 0.0.40
codegen_flags: <defaults>
</compile_context>

<pallas_src>
import numpy as np
import jax
import jax.numpy as jnp
from jax.experimental import pallas as pl
from jax.experimental.pallas import tpu as pltpu


COMPUTE_DTYPE = jnp.bfloat16   # model-side kernel inputs (accumulation in f32)
TILE_R = 32768                 # fixed lane-dense row tile (multiple of 128)
VMEM_LIMIT = 32 * 1024 * 1024  # explicit scoped-VMEM (raises v5e's 16 MiB default)


def _round_up(x, m):
    return ((x + m - 1) // m) * m


# --------------------------------------------------------------------------
# Kernel 1: background log-softmax column + row logsumexp (lane-dense rows).
#   x: (C, T) logits  ->  bg = x[0] - lse : (1, T) ,  lse : (1, T)
# --------------------------------------------------------------------------
def _bg_lse_kernel(x_ref, bg_ref, lse_ref):
    x = x_ref[...].astype(jnp.float32)                        # (C, T)
    m = jnp.max(x, axis=0, keepdims=True)                     # (1, T) sublane red.
    lse = jnp.log(jnp.sum(jnp.exp(x - m), axis=0, keepdims=True)) + m
    bg_ref[...] = x[0:1, :] - lse
    lse_ref[...] = lse


def pallas_bg_lse(conf_t):
    C, Rp = conf_t.shape
    grid = (Rp // TILE_R,)
    return pl.pallas_call(
        _bg_lse_kernel,
        out_shape=(jax.ShapeDtypeStruct((1, Rp), jnp.float32),
                   jax.ShapeDtypeStruct((1, Rp), jnp.float32)),
        grid=grid,
        in_specs=[pl.BlockSpec((C, TILE_R), lambda i: (0, i))],
        out_specs=(pl.BlockSpec((1, TILE_R), lambda i: (0, i)),
                   pl.BlockSpec((1, TILE_R), lambda i: (0, i))),
        compiler_params=pltpu.CompilerParams(
            dimension_semantics=("parallel",),
            vmem_limit_bytes=VMEM_LIMIT),
    )(conf_t)


# --------------------------------------------------------------------------
# Kernel 2: fused masked CE-sum + masked smooth-L1-sum.
# Each grid step writes an independent (8,128) partial block:
#   row 0, lane 0 : per-tile cross-entropy partial sum
#   row 1, lane 0 : per-tile smooth-L1 partial sum
# so the grid axis can be "parallel" (v7x 2-TC sharding, no shared accumulator).
#   x   : (C, T) logits (bf16)
#   lse : (1, T) row logsumexp (reused from kernel 1, no re-exp)
#   tgt : (1, T) int32 target id (-1 unselected, 0 negative, >0 positive cls)
#   bp  : (4, T) bbox predictions (bf16)
#   bt  : (4, T) bbox regression targets (bf16)
# --------------------------------------------------------------------------
def _fused_loss_kernel(x_ref, lse_ref, tgt_ref, bp_ref, bt_ref, out_ref):
    x = x_ref[...].astype(jnp.float32)                        # (C, T)
    lse = lse_ref[...]                                        # (1, T)
    tgt = tgt_ref[...]                                        # (1, T) int32

    # cross-entropy over selected rows: sum over rows of (lse - x[target])
    cls_iota = jax.lax.broadcasted_iota(jnp.int32, x.shape, 0)
    picked = jnp.sum(jnp.where(cls_iota == tgt, x, 0.0),      # VPU select, no cast
                     axis=0, keepdims=True)                   # (1, T)
    row_ce = jnp.where(tgt >= 0, lse - picked, 0.0)           # (1, T)
    conf_p = jnp.sum(row_ce, axis=(0, 1), keepdims=True)      # (1, 1)

    # smooth-L1 (beta = 1) over positive rows
    d = bp_ref[...].astype(jnp.float32) - bt_ref[...].astype(jnp.float32)
    ad = jnp.abs(d)
    elem = jnp.where(ad < 1.0, 0.5 * d * d, ad - 0.5)         # (4, T)
    elem = jnp.where(tgt > 0, elem, 0.0)                      # (1,T) mask broadcast
    bbox_p = jnp.sum(elem, axis=(0, 1), keepdims=True)        # (1, 1)

    # place the two partials at [0,0] / [1,0] of a lane-dense (8,128) block
    rows = jax.lax.broadcasted_iota(jnp.int32, (8, 128), 0)
    cols = jax.lax.broadcasted_iota(jnp.int32, (8, 128), 1)
    vals = jnp.where(rows == 0, conf_p, jnp.where(rows == 1, bbox_p, 0.0))
    out_ref[...] = jnp.where(cols == 0, vals, 0.0)


def pallas_fused_loss(conf_t, lse, tgt_ids, bbox_p, bbox_tgt):
    C, Rp = conf_t.shape
    n_tiles = Rp // TILE_R
    return pl.pallas_call(
        _fused_loss_kernel,
        out_shape=jax.ShapeDtypeStruct((8, 128 * n_tiles), jnp.float32),
        grid=(n_tiles,),
        in_specs=[
            pl.BlockSpec((C, TILE_R), lambda i: (0, i)),
            pl.BlockSpec((1, TILE_R), lambda i: (0, i)),
            pl.BlockSpec((1, TILE_R), lambda i: (0, i)),
            pl.BlockSpec((4, TILE_R), lambda i: (0, i)),
            pl.BlockSpec((4, TILE_R), lambda i: (0, i)),
        ],
        out_specs=pl.BlockSpec((8, 128), lambda i: (0, i)),
        compiler_params=pltpu.CompilerParams(
            dimension_semantics=("parallel",),   # independent per-tile outputs
            vmem_limit_bytes=VMEM_LIMIT),
    )(conf_t, lse, tgt_ids, bbox_p, bbox_tgt)


# --------------------------------------------------------------------------
# jitted device stages (layout plumbing + kernels)
# --------------------------------------------------------------------------
@jax.jit
def _stage1(conf_out, bbox_out):
    # TODO(synk): ideally the detection heads emit (C, R)/(4, R) bf16 directly;
    # here the cast fuses into the transpose copy, but the relayout still reads
    # the original f32 activations once.
    B, N, C = conf_out.shape
    R = B * N
    Rp = _round_up(R, TILE_R)
    conf_t = conf_out.reshape(R, C).astype(COMPUTE_DTYPE).T   # (C, R) lane-dense
    conf_t = jnp.pad(conf_t, ((0, 0), (0, Rp - R)))
    bbox_p = bbox_out.reshape(R, 4).astype(COMPUTE_DTYPE).T   # (4, R) lane-dense
    bbox_p = jnp.pad(bbox_p, ((0, 0), (0, Rp - R)))
    bg, lse = pallas_bg_lse(conf_t)
    return conf_t, bbox_p, bg[0, :R], lse


@jax.jit
def _stage2(conf_t, lse, tgt_ids, bbox_p, bbox_tgt, n_sel, n_elem):
    part = pallas_fused_loss(conf_t, lse, tgt_ids, bbox_p, bbox_tgt)
    conf_loss = jnp.sum(part[0, :]) / n_sel    # CrossEntropyLoss: mean over rows
    bbox_loss = jnp.sum(part[1, :]) / n_elem   # SmoothL1Loss: mean over elements
    return conf_loss, bbox_loss


# --------------------------------------------------------------------------
# Host-side target building (sequential / data dependent, as in PyTorch)
# --------------------------------------------------------------------------
def build_conf_target_np(bg_logsoftmax, target, box_number):
    """Faithful buildConfTarget on the (B, N) background log-softmax column.

    Hard negatives are mined with an ASCENDING sort (descending=False in the
    original) over the background scores (scores of matched boxes zeroed
    first), stopping at the first already-selected index (early `break`),
    exactly as in the PyTorch code.
    """
    B, N = bg_logsoftmax.shape
    conf_masks = np.zeros((B, N), dtype=bool)
    conf_target = np.zeros((B, N), dtype=np.int32)
    score = bg_logsoftmax.astype(np.float32).copy()
    pnum = 0
    for i in range(B):
        num = int(target[i, 0])
        for j in range(num):
            off = j * 6
            k = int(target[i, off + 6])
            cls = int(target[i, off + 1])
            if cls > 0:
                conf_masks[i, k] = True
                conf_target[i, k] = cls
                score[i, k] = 0.0
                pnum += 1
            else:
                score[i, k] = 0.0
    order = np.argsort(score.reshape(-1), kind="stable")   # ascending
    for idx in range(pnum * 3):
        b = int(order[idx]) // box_number
        k = int(order[idx]) % box_number
        if conf_masks[b, k]:
            break
        conf_masks[b, k] = True
        conf_target[b, k] = 0
    return conf_masks, conf_target, pnum


def build_bbox_target_np(target, box_number):
    # TODO(synk): buildbboxTarget is not defined in the source file; this is a
    # faithful SSD-style reconstruction (positive boxes regress the 4 floats
    # stored at target[i, j*6+2 : j*6+6]).
    B = target.shape[0]
    bbox_masks = np.zeros((B, box_number), dtype=bool)
    bbox_target = np.zeros((B, box_number, 4), dtype=np.float32)
    for i in range(B):
        num = int(target[i, 0])
        for j in range(num):
            off = j * 6
            k = int(target[i, off + 6])
            cls = int(target[i, off + 1])
            if cls > 0:
                bbox_masks[i, k] = True
                bbox_target[i, k, :] = target[i, off + 2: off + 6]
    return bbox_masks, bbox_target


# --------------------------------------------------------------------------
# EzDetectLoss forward
# --------------------------------------------------------------------------
class Config:
    classNumber = 8
    gpu = False


def ez_detect_loss(config, conf_out, bbox_out, target_np):
    B, N, C = conf_out.shape
    assert C == config.classNumber
    R = B * N
    Rp = _round_up(R, TILE_R)

    # Stage 1 (device, jitted): lane-dense relayout + Pallas bg/lse kernel.
    # conf_t / bbox_p / lse stay device-resident; only bg crosses to host.
    conf_t, bbox_p, bg, lse = _stage1(conf_out, bbox_out)

    bg_np = np.asarray(bg).reshape(B, N)       # blocks only on the bg column
    conf_masks, conf_target, _ = build_conf_target_np(bg_np, target_np, N)
    bbox_masks, bbox_target = build_bbox_target_np(target_np, N)
    # TODO(synk): the sort + early-break mining could move on-device
    # (jax.lax.top_k + scatter) only if the original's "stop at the first
    # already-selected index" semantics were relaxed; kept host-side.

    # Pack masks/targets into small lane-dense arrays (no (R,1) mask operands).
    tgt_ids = np.full((1, Rp), -1, dtype=np.int32)
    flat_mask = conf_masks.reshape(-1)
    tgt_ids[0, :R][flat_mask] = conf_target.reshape(-1)[flat_mask]

    bbox_tgt = np.zeros((4, Rp), dtype=np.float32)
    bbox_tgt[:, :R] = bbox_target.reshape(R, 4).T
    bbox_tgt = bbox_tgt.astype(jnp.bfloat16)   # bf16 upload: half the H2D/HBM bytes

    n_sel = np.float32(max(int(flat_mask.sum()), 1))
    n_elem = np.float32(max(int(bbox_masks.sum()) * 4, 1))

    # Stage 2 (device, jitted): fused conf/bbox loss kernel + normalization.
    conf_loss, bbox_loss = _stage2(
        conf_t, lse, jnp.asarray(tgt_ids), bbox_p, jnp.asarray(bbox_tgt),
        jnp.asarray(n_sel), jnp.asarray(n_elem))
    return conf_loss, bbox_loss


# --------------------------------------------------------------------------
if __name__ == "__main__":
    config = Config()
    B, N, C = 2, 16, config.classNumber

    key = jax.random.PRNGKey(0)
    k1, k2 = jax.random.split(key)
    conf_out = jax.random.normal(k1, (B, N, C), dtype=jnp.float32)
    bbox_out = jax.random.normal(k2, (B, N, 4), dtype=jnp.float32)

    # target layout per sample: [num, (cls, x1, y1, x2, y2, boxIdx) * num, pad]
    target_np = np.zeros((B, 13), dtype=np.float32)
    target_np[0, 0] = 2
    target_np[0, 1:7] = [3, 0.1, 0.2, 0.6, 0.7, 5]    # positive, matched box 5
    target_np[0, 7:13] = [0, 0.0, 0.0, 0.0, 0.0, 9]   # cls==0 branch (score zeroed)
    target_np[1, 0] = 1
    target_np[1, 1:7] = [1, 0.3, 0.3, 0.9, 0.8, 2]    # positive, matched box 2

    conf_loss, bbox_loss = ez_detect_loss(config, conf_out, bbox_out, target_np)
    jax.block_until_ready((conf_loss, bbox_loss))
    assert np.isfinite(float(conf_loss)) and np.isfinite(float(bbox_loss))
    print("KERNEL_OK")
</pallas_src>

<mosaic_0001>
module attributes {stable_mosaic.version = 11 : i64} {
  func.func @_bg_lse_kernel(%arg0: i32, %arg1: memref<8x32768xbf16, #tpu.memory_space<vmem>>, %arg2: memref<1x32768xf32, #tpu.memory_space<vmem>>, %arg3: memref<1x32768xf32, #tpu.memory_space<vmem>>) attributes {dimension_semantics = [#tpu.dimension_semantics<parallel>], iteration_bounds = array<i64: 1>, scalar_prefetch = 0 : i64, scratch_operands = 0 : i64, tpu.core_type = #tpu.core_type<tc>, window_params = [{transform_indices = @transform_0, window_bounds = array<i64: 8, 32768>}, {transform_indices = @transform_1, window_bounds = array<i64: 1, 32768>}, {transform_indices = @transform_2, window_bounds = array<i64: 1, 32768>}]} {
    %c0 = arith.constant 0 : index
    %c0_0 = arith.constant 0 : index
    %0 = vector.load %arg1[%c0, %c0_0] : memref<8x32768xbf16, #tpu.memory_space<vmem>>, vector<8x32768xbf16>
    %1 = arith.extf %0 : vector<8x32768xbf16> to vector<8x32768xf32>
    %cst = arith.constant dense<0xFF800000> : vector<32768xf32>
    %2 = vector.multi_reduction <maximumf>, %1, %cst [0] : vector<8x32768xf32> to vector<32768xf32>
    %3 = vector.shape_cast %2 : vector<32768xf32> to vector<1x32768xf32>
    %4 = vector.broadcast %3 : vector<1x32768xf32> to vector<8x32768xf32>
    %5 = arith.subf %1, %4 : vector<8x32768xf32>
    %6 = math.exp %5 : vector<8x32768xf32>
    %cst_1 = arith.constant dense<0.000000e+00> : vector<32768xf32>
    %7 = vector.multi_reduction <add>, %6, %cst_1 [0] : vector<8x32768xf32> to vector<32768xf32>
    %8 = vector.shape_cast %7 : vector<32768xf32> to vector<1x32768xf32>
    %9 = math.log %8 : vector<1x32768xf32>
    %10 = arith.addf %9, %3 : vector<1x32768xf32>
    %11 = vector.extract_strided_slice %1 {offsets = [0, 0], sizes = [1, 32768], strides = [1, 1]} : vector<8x32768xf32> to vector<1x32768xf32>
    %12 = arith.subf %11, %10 : vector<1x32768xf32>
    %c0_2 = arith.constant 0 : index
    %c0_3 = arith.constant 0 : index
    %13 = vector.load %arg2[%c0_2, %c0_3] : memref<1x32768xf32, #tpu.memory_space<vmem>>, vector<1x32768xf32>
    tpu.vector_store %arg2[%c0_2, %c0_3], %12 {strides = array<i32>} : memref<1x32768xf32, #tpu.memory_space<vmem>>, vector<1x32768xf32>,
    %c0_4 = arith.constant 0 : index
    %c0_5 = arith.constant 0 : index
    %14 = vector.load %arg3[%c0_4, %c0_5] : memref<1x32768xf32, #tpu.memory_space<vmem>>, vector<1x32768xf32>
    tpu.vector_store %arg3[%c0_4, %c0_5], %10 {strides = array<i32>} : memref<1x32768xf32, #tpu.memory_space<vmem>>, vector<1x32768xf32>,
    return
  }
  func.func @transform_0(%arg0: i32) -> (i32, i32) {
    %c0_i32 = arith.constant 0 : i32
    %c0_i32_0 = arith.constant 0 : i32
    return %c0_i32, %arg0 : i32, i32
  }
  func.func @transform_1(%arg0: i32) -> (i32, i32) {
    %c0_i32 = arith.constant 0 : i32
    %c0_i32_0 = arith.constant 0 : i32
    return %c0_i32, %arg0 : i32, i32
  }
  func.func @transform_2(%arg0: i32) -> (i32, i32) {
    %c0_i32 = arith.constant 0 : i32
    %c0_i32_0 = arith.constant 0 : i32
    return %c0_i32, %arg0 : i32, i32
  }
}

</mosaic_0001>

<llo_original>
// kernel: _stage1.1
$region0: #{_stage1.1}
  #allocation0 [shape = 'u32[]', space=smem, size = 0x4, offset = 0x4, fixed_abs, tag = 'smem constant byte address 0x4 - core index']
  #allocation1 [shape = 'u32[144,128]{1,0:T(1,128)}', space=vmem, size = 0x12000, scoped, tag = 'internal scratch']
  %s0 = inlined_call_operand.vmem [shape: bf16[8,32768], index: 0, kind: input, shape index: {}]
  %s1 = inlined_call_operand.vmem [shape: f32[1,32768], index: 1, kind: output, shape index: {0}]
  %s2 = inlined_call_operand.hbm [shape: f32[1,32768], index: 2, kind: output, shape index: {1}]
  %3 = xla_tuple %s1, %s2
  %s4 = sld [smem:[#allocation0]]
  $region22: #{_stage1.1} parent=0
    _
  %s6 = ssub.s32 1, %s4
  %s7 = scalar_select 0, %s6, %s4
  $region1: #{_stage1.1} parent=0
    #allocation2 [shape = 'u8[131072]{0}', space=vmem, size = 0x20000, scoped, tag = 'output window, operand 1, single buffered']
    #allocation3 [shape = 's32[1]{0}', space=sflag, size = 0x4, scoped, tag = 'scoped memory for _stage1.1']
    %8 = vsyncpa [#allocation3], 0
    // Predicated region
    $region2: #{_stage1.1} parent=1 // pred_check
      _
    $region3: #{_stage1.1} parent=1 // pred_check_branch
      %10 = sbr.rel (0) target = $region5
    $region4: #{_stage1.1} parent=1 // pred_region
      _
    $region5: #{_stage1.1} parent=1 // pred_fallthru
      _
    %v11 = vld [vmem:[%s0] sm:$0xff]
    %v12 = vld [vmem:[%s0 + $0x8] sm:$0xff]
    %v13 = vld [vmem:[%s0 + $0x10] sm:$0xff]
    %v14 = vld [vmem:[%s0 + $0x18] sm:$0xff]
    %v15 = vld [vmem:[%s0 + $0x20] sm:$0xff]
    %v16 = vld [vmem:[%s0 + $0x28] sm:$0xff]
    %v17 = vld [vmem:[%s0 + $0x30] sm:$0xff]
    %v18 = vld [vmem:[%s0 + $0x38] sm:$0xff]
    %v19 = vld [vmem:[%s0 + $0x40] sm:$0xff]
    %v20 = vld [vmem:[%s0 + $0x48] sm:$0xff]
    %v21 = vld [vmem:[%s0 + $0x50] sm:$0xff]
    %v22 = vld [vmem:[%s0 + $0x58] sm:$0xff]
    %v23 = vld [vmem:[%s0 + $0x60] sm:$0xff]
    %v24 = vld [vmem:[%s0 + $0x68] sm:$0xff]
    %v25 = vld [vmem:[%s0 + $0x70] sm:$0xff]
    %v26 = vld [vmem:[%s0 + $0x78] sm:$0xff]
    %v27 = vld [vmem:[%s0 + $0x80] sm:$0xff]
    %v28 = vld [vmem:[%s0 + $0x88] sm:$0xff]
    %v29 = vld [vmem:[%s0 + $0x90] sm:$0xff]
    %v30 = vld [vmem:[%s0 + $0x98] sm:$0xff]
    %v31 = vld [vmem:[%s0 + $0xa0] sm:$0xff]
    %v32 = vld [vmem:[%s0 + $0xa8] sm:$0xff]
    %v33 = vld [vmem:[%s0 + $0xb0] sm:$0xff]
    %v34 = vld [vmem:[%s0 + $0xb8] sm:$0xff]
    %v35 = vld [vmem:[%s0 + $0xc0] sm:$0xff]
    %v36 = vld [vmem:[%s0 + $0xc8] sm:$0xff]
    %v37 = vld [vmem:[%s0 + $0xd0] sm:$0xff]
    %v38 = vld [vmem:[%s0 + $0xd8] sm:$0xff]
    %v39 = vld [vmem:[%s0 + $0xe0] sm:$0xff]
    %v40 = vld [vmem:[%s0 + $0xe8] sm:$0xff]
    %v41 = vld [vmem:[%s0 + $0xf0] sm:$0xff]
    %v42 = vld [vmem:[%s0 + $0xf8] sm:$0xff]
    %v43 = vld [vmem:[%s0 + $0x100] sm:$0xff]
    %v44 = vld [vmem:[%s0 + $0x108] sm:$0xff]
    %v45 = vld [vmem:[%s0 + $0x110] sm:$0xff]
    %v46 = vld [vmem:[%s0 + $0x118] sm:$0xff]
    %v47 = vld [vmem:[%s0 + $0x120] sm:$0xff]
    %v48 = vld [vmem:[%s0 + $0x128] sm:$0xff]
    %v49 = vld [vmem:[%s0 + $0x130] sm:$0xff]
    %v50 = vld [vmem:[%s0 + $0x138] sm:$0xff]
    %v51 = vld [vmem:[%s0 + $0x140] sm:$0xff]
    %v52 = vld [vmem:[%s0 + $0x148] sm:$0xff]
    %v53 = vld [vmem:[%s0 + $0x150] sm:$0xff]
    %v54 = vld [vmem:[%s0 + $0x158] sm:$0xff]
    %v55 = vld [vmem:[%s0 + $0x160] sm:$0xff]
    %v56 = vld [vmem:[%s0 + $0x168] sm:$0xff]
    %v57 = vld [vmem:[%s0 + $0x170] sm:$0xff]
    %v58 = vld [vmem:[%s0 + $0x178] sm:$0xff]
    %v59 = vld [vmem:[%s0 + $0x180] sm:$0xff]
    %v60 = vld [vmem:[%s0 + $0x188] sm:$0xff]
    %v61 = vld [vmem:[%s0 + $0x190] sm:$0xff]
    %v62 = vld [vmem:[%s0 + $0x198] sm:$0xff]
    %v63 = vld [vmem:[%s0 + $0x1a0] sm:$0xff]
    %v64 = vld [vmem:[%s0 + $0x1a8] sm:$0xff]
    %v65 = vld [vmem:[%s0 + $0x1b0] sm:$0xff]
    %v66 = vld [vmem:[%s0 + $0x1b8] sm:$0xff]
    %v67 = vld [vmem:[%s0 + $0x1c0] sm:$0xff]
    %v68 = vld [vmem:[%s0 + $0x1c8] sm:$0xff]
    %v69 = vld [vmem:[%s0 + $0x1d0] sm:$0xff]
    %v70 = vld [vmem:[%s0 + $0x1d8] sm:$0xff]
    %v71 = vld [vmem:[%s0 + $0x1e0] sm:$0xff]
    %v72 = vld [vmem:[%s0 + $0x1e8] sm:$0xff]
    %v73 = vld [vmem:[%s0 + $0x1f0] sm:$0xff]
    %v74 = vld [vmem:[%s0 + $0x1f8] sm:$0xff]
    %v75 = vld [vmem:[%s0 + $0x200] sm:$0xff]
    %v76 = vld [vmem:[%s0 + $0x208] sm:$0xff]
    %v77 = vld [vmem:[%s0 + $0x210] sm:$0xff]
    %v78 = vld [vmem:[%s0 + $0x218] sm:$0xff]
    %v79 = vld [vmem:[%s0 + $0x220] sm:$0xff]
    %v80 = vld [vmem:[%s0 + $0x228] sm:$0xff]
    %v81 = vld [vmem:[%s0 + $0x230] sm:$0xff]
    %v82 = vld [vmem:[%s0 + $0x238] sm:$0xff]
    %v83 = vld [vmem:[%s0 + $0x240] sm:$0xff]
    %v84 = vld [vmem:[%s0 + $0x248] sm:$0xff]
    %v85 = vld [vmem:[%s0 + $0x250] sm:$0xff]
    %v86 = vld [vmem:[%s0 + $0x258] sm:$0xff]
    %v87 = vld [vmem:[%s0 + $0x260] sm:$0xff]
    %v88 = vld [vmem:[%s0 + $0x268] sm:$0xff]
    %v89 = vld [vmem:[%s0 + $0x270] sm:$0xff]
    %v90 = vld [vmem:[%s0 + $0x278] sm:$0xff]
    %v91 = vld [vmem:[%s0 + $0x280] sm:$0xff]
    %v92 = vld [vmem:[%s0 + $0x288] sm:$0xff]
    %v93 = vld [vmem:[%s0 + $0x290] sm:$0xff]
    %v94 = vld [vmem:[%s0 + $0x298] sm:$0xff]
    %v95 = vld [vmem:[%s0 + $0x2a0] sm:$0xff]
    %v96 = vld [vmem:[%s0 + $0x2a8] sm:$0xff]
    %v97 = vld [vmem:[%s0 + $0x2b0] sm:$0xff]
    %v98 = vld [vmem:[%s0 + $0x2b8] sm:$0xff]
    %v99 = vld [vmem:[%s0 + $0x2c0] sm:$0xff]
    %v100 = vld [vmem:[%s0 + $0x2c8] sm:$0xff]
    %v101 = vld [vmem:[%s0 + $0x2d0] sm:$0xff]
    %v102 = vld [vmem:[%s0 + $0x2d8] sm:$0xff]
    %v103 = vld [vmem:[%s0 + $0x2e0] sm:$0xff]
    %v104 = vld [vmem:[%s0 + $0x2e8] sm:$0xff]
    %v105 = vld [vmem:[%s0 + $0x2f0] sm:$0xff]
    %v106 = vld [vmem:[%s0 + $0x2f8] sm:$0xff]
    %v107 = vld [vmem:[%s0 + $0x300] sm:$0xff]
    %v108 = vld [vmem:[%s0 + $0x308] sm:$0xff]
    %v109 = vld [vmem:[%s0 + $0x310] sm:$0xff]
    %v110 = vld [vmem:[%s0 + $0x318] sm:$0xff]
    %v111 = vld [vmem:[%s0 + $0x320] sm:$0xff]
    %v112 = vld [vmem:[%s0 + $0x328] sm:$0xff]
    %v113 = vld [vmem:[%s0 + $0x330] sm:$0xff]
    %v114 = vld [vmem:[%s0 + $0x338] sm:$0xff]
    %v115 = vld [vmem:[%s0 + $0x340] sm:$0xff]
    %v116 = vld [vmem:[%s0 + $0x348] sm:$0xff]
    %v117 = vld [vmem:[%s0 + $0x350] sm:$0xff]
    %v118 = vld [vmem:[%s0 + $0x358] sm:$0xff]
    %v119 = vld [vmem:[%s0 + $0x360] sm:$0xff]
    %v120 = vld [vmem:[%s0 + $0x368] sm:$0xff]
    %v121 = vld [vmem:[%s0 + $0x370] sm:$0xff]
    %v122 = vld [vmem:[%s0 + $0x378] sm:$0xff]
    %v123 = vld [vmem:[%s0 + $0x380] sm:$0xff]
    %v124 = vld [vmem:[%s0 + $0x388] sm:$0xff]
    %v125 = vld [vmem:[%s0 + $0x390] sm:$0xff]
    %v126 = vld [vmem:[%s0 + $0x398] sm:$0xff]
    %v127 = vld [vmem:[%s0 + $0x3a0] sm:$0xff]
    %v128 = vld [vmem:[%s0 + $0x3a8] sm:$0xff]
    %v129 = vld [vmem:[%s0 + $0x3b0] sm:$0xff]
    %v130 = vld [vmem:[%s0 + $0x3b8] sm:$0xff]
    %v131 = vld [vmem:[%s0 + $0x3c0] sm:$0xff]
    %v132 = vld [vmem:[%s0 + $0x3c8] sm:$0xff]
    %v133 = vld [vmem:[%s0 + $0x3d0] sm:$0xff]
    %v134 = vld [vmem:[%s0 + $0x3d8] sm:$0xff]
    %v135 = vld [vmem:[%s0 + $0x3e0] sm:$0xff]
    %v136 = vld [vmem:[%s0 + $0x3e8] sm:$0xff]
    %v137 = vld [vmem:[%s0 + $0x3f0] sm:$0xff]
    %v138 = vld [vmem:[%s0 + $0x3f8] sm:$0xff]
    %v139 = vunpack.c.l.bf16 %v11
    %v140 = vunpack.c.h.bf16 %v11
    %v141 = vunpack.c.l.bf16 %v12
    %v142 = vunpack.c.h.bf16 %v12
    %v143 = vunpack.c.l.bf16 %v13
    %v144 = vunpack.c.h.bf16 %v13
    %v145 = vunpack.c.l.bf16 %v14
    %v146 = vunpack.c.h.bf16 %v14
    %v147 = vunpack.c.l.bf16 %v15
    %v148 = vunpack.c.h.bf16 %v15
    %v149 = vunpack.c.l.bf16 %v16
    %v150 = vunpack.c.h.bf16 %v16
    %v151 = vunpack.c.l.bf16 %v17
    %v152 = vunpack.c.h.bf16 %v17
    %v153 = vunpack.c.l.bf16 %v18
    %v154 = vunpack.c.h.bf16 %v18
    %v155 = vunpack.c.l.bf16 %v19
    %v156 = vunpack.c.h.bf16 %v19
    %v157 = vunpack.c.l.bf16 %v20
    %v158 = vunpack.c.h.bf16 %v20
    %v159 = vunpack.c.l.bf16 %v21
    %v160 = vunpack.c.h.bf16 %v21
    %v161 = vunpack.c.l.bf16 %v22
    %v162 = vunpack.c.h.bf16 %v22
    %v163 = vunpack.c.l.bf16 %v23
    %v164 = vunpack.c.h.bf16 %v23
    %v165 = vunpack.c.l.bf16 %v24
    %v166 = vunpack.c.h.bf16 %v24
    %v167 = vunpack.c.l.bf16 %v25
    %v168 = vunpack.c.h.bf16 %v25
    %v169 = vunpack.c.l.bf16 %v26
    %v170 = vunpack.c.h.bf16 %v26
    %v171 = vunpack.c.l.bf16 %v27
    %v172 = vunpack.c.h.bf16 %v27
    %v173 = vunpack.c.l.bf16 %v28
    %v174 = vunpack.c.h.bf16 %v28
    %v175 = vunpack.c.l.bf16 %v29
    %v176 = vunpack.c.h.bf16 %v29
    %v177 = vunpack.c.l.bf16 %v30
    %v178 = vunpack.c.h.bf16 %v30
    %v179 = vunpack.c.l.bf16 %v31
    %v180 = vunpack.c.h.bf16 %v31
    %v181 = vunpack.c.l.bf16 %v32
    %v182 = vunpack.c.h.bf16 %v32
    %v183 = vunpack.c.l.bf16 %v33
    %v184 = vunpack.c.h.bf16 %v33
    %v185 = vunpack.c.l.bf16 %v34
    %v186 = vunpack.c.h.bf16 %v34
    %v187 = vunpack.c.l.bf16 %v35
    %v188 = vunpack.c.h.bf16 %v35
    %v189 = vunpack.c.l.bf16 %v36
    %v190 = vunpack.c.h.bf16 %v36
    %v191 = vunpack.c.l.bf16 %v37
    %v192 = vunpack.c.h.bf16 %v37
    %v193 = vunpack.c.l.bf16 %v38
    %v194 = vunpack.c.h.bf16 %v38
    %v195 = vunpack.c.l.bf16 %v39
    %v196 = vunpack.c.h.bf16 %v39
    %v197 = vunpack.c.l.bf16 %v40
    %v198 = vunpack.c.h.bf16 %v40
    %v199 = vunpack.c.l.bf16 %v41
    %v200 = vunpack.c.h.bf16 %v41
    %v201 = vunpack.c.l.bf16 %v42
    %v202 = vunpack.c.h.bf16 %v42
    %v203 = vunpack.c.l.bf16 %v43
    %v204 = vunpack.c.h.bf16 %v43
    %v205 = vunpack.c.l.bf16 %v44
    %v206 = vunpack.c.h.bf16 %v44
    %v207 = vunpack.c.l.bf16 %v45
    %v208 = vunpack.c.h.bf16 %v45
    %v209 = vunpack.c.l.bf16 %v46
    %v210 = vunpack.c.h.bf16 %v46
    %v211 = vunpack.c.l.bf16 %v47
    %v212 = vunpack.c.h.bf16 %v47
    %v213 = vunpack.c.l.bf16 %v48
    %v214 = vunpack.c.h.bf16 %v48
    %v215 = vunpack.c.l.bf16 %v49
    %v216 = vunpack.c.h.bf16 %v49
    %v217 = vunpack.c.l.bf16 %v50
    %v218 = vunpack.c.h.bf16 %v50
    %v219 = vunpack.c.l.bf16 %v51
    %v220 = vunpack.c.h.bf16 %v51
    %v221 = vunpack.c.l.bf16 %v52
    %v222 = vunpack.c.h.bf16 %v52
    %v223 = vunpack.c.l.bf16 %v53
    %v224 = vunpack.c.h.bf16 %v53
    %v225 = vunpack.c.l.bf16 %v54
    %v226 = vunpack.c.h.bf16 %v54
    %v227 = vunpack.c.l.bf16 %v55
    %v228 = vunpack.c.h.bf16 %v55
    %v229 = vunpack.c.l.bf16 %v56
    %v230 = vunpack.c.h.bf16 %v56
    %v231 = vunpack.c.l.bf16 %v57
    %v232 = vunpack.c.h.bf16 %v57
    %v233 = vunpack.c.l.bf16 %v58
    %v234 = vunpack.c.h.bf16 %v58
    %v235 = vunpack.c.l.bf16 %v59
    %v236 = vunpack.c.h.bf16 %v59
    %v237 = vunpack.c.l.bf16 %v60
    %v238 = vunpack.c.h.bf16 %v60
    %v239 = vunpack.c.l.bf16 %v61
    %v240 = vunpack.c.h.bf16 %v61
    %v241 = vunpack.c.l.bf16 %v62
    %v242 = vunpack.c.h.bf16 %v62
    %v243 = vunpack.c.l.bf16 %v63
    %v244 = vunpack.c.h.bf16 %v63
    %v245 = vunpack.c.l.bf16 %v64
    %v246 = vunpack.c.h.bf16 %v64
    %v247 = vunpack.c.l.bf16 %v65
    %v248 = vunpack.c.h.bf16 %v65
    %v249 = vunpack.c.l.bf16 %v66
    %v250 = vunpack.c.h.bf16 %v66
    %v251 = vunpack.c.l.bf16 %v67
    %v252 = vunpack.c.h.bf16 %v67
    %v253 = vunpack.c.l.bf16 %v68
    %v254 = vunpack.c.h.bf16 %v68
    %v255 = vunpack.c.l.bf16 %v69
    %v256 = vunpack.c.h.bf16 %v69
    %v257 = vunpack.c.l.bf16 %v70
    %v258 = vunpack.c.h.bf16 %v70
    %v259 = vunpack.c.l.bf16 %v71
    %v260 = vunpack.c.h.bf16 %v71
    %v261 = vunpack.c.l.bf16 %v72
    %v262 = vunpack.c.h.bf16 %v72
    %v263 = vunpack.c.l.bf16 %v73
    %v264 = vunpack.c.h.bf16 %v73
    %v265 = vunpack.c.l.bf16 %v74
    %v266 = vunpack.c.h.bf16 %v74
    %v267 = vunpack.c.l.bf16 %v75
    %v268 = vunpack.c.h.bf16 %v75
    %v269 = vunpack.c.l.bf16 %v76
    %v270 = vunpack.c.h.bf16 %v76
    %v271 = vunpack.c.l.bf16 %v77
    %v272 = vunpack.c.h.bf16 %v77
    %v273 = vunpack.c.l.bf16 %v78
    %v274 = vunpack.c.h.bf16 %v78
    %v275 = vunpack.c.l.bf16 %v79
    %v276 = vunpack.c.h.bf16 %v79
    %v277 = vunpack.c.l.bf16 %v80
    %v278 = vunpack.c.h.bf16 %v80
    %v279 = vunpack.c.l.bf16 %v81
    %v280 = vunpack.c.h.bf16 %v81
    %v281 = vunpack.c.l.bf16 %v82
    %v282 = vunpack.c.h.bf16 %v82
    %v283 = vunpack.c.l.bf16 %v83
    %v284 = vunpack.c.h.bf16 %v83
    %v285 = vunpack.c.l.bf16 %v84
    %v286 = vunpack.c.h.bf16 %v84
    %v287 = vunpack.c.l.bf16 %v85
    %v288 = vunpack.c.h.bf16 %v85
    %v289 = vunpack.c.l.bf16 %v86
    %v290 = vunpack.c.h.bf16 %v86
    %v291 = vunpack.c.l.bf16 %v87
    %v292 = vunpack.c.h.bf16 %v87
    %v293 = vunpack.c.l.bf16 %v88
    %v294 = vunpack.c.h.bf16 %v88
    %v295 = vunpack.c.l.bf16 %v89
    %v296 = vunpack.c.h.bf16 %v89
    %v297 = vunpack.c.l.bf16 %v90
    %v298 = vunpack.c.h.bf16 %v90
    %v299 = vunpack.c.l.bf16 %v91
    %v300 = vunpack.c.h.bf16 %v91
    %v301 = vunpack.c.l.bf16 %v92
    %v302 = vunpack.c.h.bf16 %v92
    %v303 = vunpack.c.l.bf16 %v93
    %v304 = vunpack.c.h.bf16 %v93
    %v305 = vunpack.c.l.bf16 %v94
    %v306 = vunpack.c.h.bf16 %v94
    %v307 = vunpack.c.l.bf16 %v95
    %v308 = vunpack.c.h.bf16 %v95
    %v309 = vunpack.c.l.bf16 %v96
    %v310 = vunpack.c.h.bf16 %v96
    %v311 = vunpack.c.l.bf16 %v97
    %v312 = vunpack.c.h.bf16 %v97
    %v313 = vunpack.c.l.bf16 %v98
    %v314 = vunpack.c.h.bf16 %v98
    %v315 = vunpack.c.l.bf16 %v99
    %v316 = vunpack.c.h.bf16 %v99
    %v317 = vunpack.c.l.bf16 %v100
    %v318 = vunpack.c.h.bf16 %v100
    %v319 = vunpack.c.l.bf16 %v101
    %v320 = vunpack.c.h.bf16 %v101
    %v321 = vunpack.c.l.bf16 %v102
    %v322 = vunpack.c.h.bf16 %v102
    %v323 = vunpack.c.l.bf16 %v103
    %v324 = vunpack.c.h.bf16 %v103
    %v325 = vunpack.c.l.bf16 %v104
    %v326 = vunpack.c.h.bf16 %v104
    %v327 = vunpack.c.l.bf16 %v105
    %v328 = vunpack.c.h.bf16 %v105
    %v329 = vunpack.c.l.bf16 %v106
    %v330 = vunpack.c.h.bf16 %v106
    %v331 = vunpack.c.l.bf16 %v107
    %v332 = vunpack.c.h.bf16 %v107
    %v333 = vunpack.c.l.bf16 %v108
    %v334 = vunpack.c.h.bf16 %v108
    %v335 = vunpack.c.l.bf16 %v109
    %v336 = vunpack.c.h.bf16 %v109
    %v337 = vunpack.c.l.bf16 %v110
    %v338 = vunpack.c.h.bf16 %v110
    %v339 = vunpack.c.l.bf16 %v111
    %v340 = vunpack.c.h.bf16 %v111
    %v341 = vunpack.c.l.bf16 %v112
    %v342 = vunpack.c.h.bf16 %v112
    %v343 = vunpack.c.l.bf16 %v113
    %v344 = vunpack.c.h.bf16 %v113
    %v345 = vunpack.c.l.bf16 %v114
    %v346 = vunpack.c.h.bf16 %v114
    %v347 = vunpack.c.l.bf16 %v115
    %v348 = vunpack.c.h.bf16 %v115
    %v349 = vunpack.c.l.bf16 %v116
    %v350 = vunpack.c.h.bf16 %v116
    %v351 = vunpack.c.l.bf16 %v117
    %v352 = vunpack.c.h.bf16 %v117
    %v353 = vunpack.c.l.bf16 %v118
    %v354 = vunpack.c.h.bf16 %v118
    %v355 = vunpack.c.l.bf16 %v119
    %v356 = vunpack.c.h.bf16 %v119
    %v357 = vunpack.c.l.bf16 %v120
    %v358 = vunpack.c.h.bf16 %v120
    %v359 = vunpack.c.l.bf16 %v121
    %v360 = vunpack.c.h.bf16 %v121
    %v361 = vunpack.c.l.bf16 %v122
    %v362 = vunpack.c.h.bf16 %v122
    %v363 = vunpack.c.l.bf16 %v123
    %v364 = vunpack.c.h.bf16 %v123
    %v365 = vunpack.c.l.bf16 %v124
    %v366 = vunpack.c.h.bf16 %v124
    %v367 = vunpack.c.l.bf16 %v125
    %v368 = vunpack.c.h.bf16 %v125
    %v369 = vunpack.c.l.bf16 %v126
    %v370 = vunpack.c.h.bf16 %v126
    %v371 = vunpack.c.l.bf16 %v127
    %v372 = vunpack.c.h.bf16 %v127
    %v373 = vunpack.c.l.bf16 %v128
    %v374 = vunpack.c.h.bf16 %v128
    %v375 = vunpack.c.l.bf16 %v129
    %v376 = vunpack.c.h.bf16 %v129
    %v377 = vunpack.c.l.bf16 %v130
    %v378 = vunpack.c.h.bf16 %v130
    %v379 = vunpack.c.l.bf16 %v131
    %v380 = vunpack.c.h.bf16 %v131
    %v381 = vunpack.c.l.bf16 %v132
    %v382 = vunpack.c.h.bf16 %v132
    %v383 = vunpack.c.l.bf16 %v133
    %v384 = vunpack.c.h.bf16 %v133
    %v385 = vunpack.c.l.bf16 %v134
    %v386 = vunpack.c.h.bf16 %v134
    %v387 = vunpack.c.l.bf16 %v135
    %v388 = vunpack.c.h.bf16 %v135
    %v389 = vunpack.c.l.bf16 %v136
    %v390 = vunpack.c.h.bf16 %v136
    %v391 = vunpack.c.l.bf16 %v137
    %v392 = vunpack.c.h.bf16 %v137
    %v393 = vunpack.c.l.bf16 %v138
    %v394 = vunpack.c.h.bf16 %v138
    %v395 = vrot.slane %v139, 4
    %v396 = vmax.f32 %v139, %v395
    %v397 = vrot.slane %v396, 2
    %v398 = vmax.f32 %v396, %v397
    %v399 = vrot.slane %v398, 1
    %v400 = vmax.f32 %v398, %v399
    %v401 = vrot.slane %v140, 4
    %v402 = vmax.f32 %v140, %v401
    %v403 = vrot.slane %v402, 2
    %v404 = vmax.f32 %v402, %v403
    %v405 = vrot.slane %v404, 1
    %v406 = vmax.f32 %v404, %v405
    %v407 = vrot.slane %v141, 4
    %v408 = vmax.f32 %v141, %v407
    %v409 = vrot.slane %v408, 2
    %v410 = vmax.f32 %v408, %v409
    %v411 = vrot.slane %v410, 1
    %v412 = vmax.f32 %v410, %v411
    %v413 = vrot.slane %v142, 4
    %v414 = vmax.f32 %v142, %v413
    %v415 = vrot.slane %v414, 2
    %v416 = vmax.f32 %v414, %v415
    %v417 = vrot.slane %v416, 1
    %v418 = vmax.f32 %v416, %v417
    %v419 = vrot.slane %v143, 4
    %v420 = vmax.f32 %v143, %v419
    %v421 = vrot.slane %v420, 2
    %v422 = vmax.f32 %v420, %v421
    %v423 = vrot.slane %v422, 1
    %v424 = vmax.f32 %v422, %v423
    %v425 = vrot.slane %v144, 4
    %v426 = vmax.f32 %v144, %v425
    %v427 = vrot.slane %v426, 2
    %v428 = vmax.f32 %v426, %v427
    %v429 = vrot.slane %v428, 1
    %v430 = vmax.f32 %v428, %v429
    %v431 = vrot.slane %v145, 4
    %v432 = vmax.f32 %v145, %v431
    %v433 = vrot.slane %v432, 2
    %v434 = vmax.f32 %v432, %v433
    %v435 = vrot.slane %v434, 1
    %v436 = vmax.f32 %v434, %v435
    %v437 = vrot.slane %v146, 4
    %v438 = vmax.f32 %v146, %v437
    %v439 = vrot.slane %v438, 2
    %v440 = vmax.f32 %v438, %v439
    %v441 = vrot.slane %v440, 1
    %v442 = vmax.f32 %v440, %v441
    %v443 = vrot.slane %v147, 4
    %v444 = vmax.f32 %v147, %v443
    %v445 = vrot.slane %v444, 2
    %v446 = vmax.f32 %v444, %v445
    %v447 = vrot.slane %v446, 1
    %v448 = vmax.f32 %v446, %v447
    %v449 = vrot.slane %v148, 4
    %v450 = vmax.f32 %v148, %v449
    %v451 = vrot.slane %v450, 2
    %v452 = vmax.f32 %v450, %v451
    %v453 = vrot.slane %v452, 1
    %v454 = vmax.f32 %v452, %v453
    %v455 = vrot.slane %v149, 4
    %v456 = vmax.f32 %v149, %v455
    %v457 = vrot.slane %v456, 2
    %v458 = vmax.f32 %v456, %v457
    %v459 = vrot.slane %v458, 1
    %v460 = vmax.f32 %v458, %v459
    %v461 = vrot.slane %v150, 4
    %v462 = vmax.f32 %v150, %v461
    %v463 = vrot.slane %v462, 2
    %v464 = vmax.f32 %v462, %v463
    %v465 = vrot.slane %v464, 1
    %v466 = vmax.f32 %v464, %v465
    %v467 = vrot.slane %v151, 4
    %v468 = vmax.f32 %v151, %v467
    %v469 = vrot.slane %v468, 2
    %v470 = vmax.f32 %v468, %v469
    %v471 = vrot.slane %v470, 1
    %v472 = vmax.f32 %v470, %v471
    %v473 = vrot.slane %v152, 4
    %v474 = vmax.f32 %v152, %v473
    %v475 = vrot.slane %v474, 2
    %v476 = vmax.f32 %v474, %v475
    %v477 = vrot.slane %v476, 1
    %v478 = vmax.f32 %v476, %v477
    %v479 = vrot.slane %v153, 4
    %v480 = vmax.f32 %v153, %v479
    %v481 = vrot.slane %v480, 2
    %v482 = vmax.f32 %v480, %v481
    %v483 = vrot.slane %v482, 1
    %v484 = vmax.f32 %v482, %v483
    %v485 = vrot.slane %v154, 4
    %v486 = vmax.f32 %v154, %v485
    %v487 = vrot.slane %v486, 2
    %v488 = vmax.f32 %v486, %v487
    %v489 = vrot.slane %v488, 1
    %v490 = vmax.f32 %v488, %v489
    %v491 = vrot.slane %v155, 4
    %v492 = vmax.f32 %v155, %v491
    %v493 = vrot.slane %v492, 2
    %v494 = vmax.f32 %v492, %v493
    %v495 = vrot.slane %v494, 1
    %v496 = vmax.f32 %v494, %v495
    %v497 = vrot.slane %v156, 4
    %v498 = vmax.f32 %v156, %v497
    %v499 = vrot.slane %v498, 2
    %v500 = vmax.f32 %v498, %v499
    %v501 = vrot.slane %v500, 1
    %v502 = vmax.f32 %v500, %v501
    %v503 = vrot.slane %v157, 4
    %v504 = vmax.f32 %v157, %v503
    %v505 = vrot.slane %v504, 2
    %v506 = vmax.f32 %v504, %v505
    %v507 = vrot.slane %v506, 1
    %v508 = vmax.f32 %v506, %v507
    %v509 = vrot.slane %v158, 4
    %v510 = vmax.f32 %v158, %v509
    %v511 = vrot.slane %v510, 2
    %v512 = vmax.f32 %v510, %v511
    %v513 = vrot.slane %v512, 1
    %v514 = vmax.f32 %v512, %v513
    %v515 = vrot.slane %v159, 4
    %v516 = vmax.f32 %v159, %v515
    %v517 = vrot.slane %v516, 2
    %v518 = vmax.f32 %v516, %v517
    %v519 = vrot.slane %v518, 1
    %v520 = vmax.f32 %v518, %v519
    %v521 = vrot.slane %v160, 4
    %v522 = vmax.f32 %v160, %v521
    %v523 = vrot.slane %v522, 2
    %v524 = vmax.f32 %v522, %v523
    %v525 = vrot.slane %v524, 1
    %v526 = vmax.f32 %v524, %v525
    %v527 = vrot.slane %v161, 4
    %v528 = vmax.f32 %v161, %v527
    %v529 = vrot.slane %v528, 2
    %v530 = vmax.f32 %v528, %v529
    %v531 = vrot.slane %v530, 1
    %v532 = vmax.f32 %v530, %v531
    %v533 = vrot.slane %v162, 4
    %v534 = vmax.f32 %v162, %v533
    %v535 = vrot.slane %v534, 2
    %v536 = vmax.f32 %v534, %v535
    %v537 = vrot.slane %v536, 1
    %v538 = vmax.f32 %v536, %v537
    %v539 = vrot.slane %v163, 4
    %v540 = vmax.f32 %v163, %v539
    %v541 = vrot.slane %v540, 2
    %v542 = vmax.f32 %v540, %v541
    %v543 = vrot.slane %v542, 1
    %v544 = vmax.f32 %v542, %v543
    %v545 = vrot.slane %v164, 4
    %v546 = vmax.f32 %v164, %v545
    %v547 = vrot.slane %v546, 2
    %v548 = vmax.f32 %v546, %v547
    %v549 = vrot.slane %v548, 1
    %v550 = vmax.f32 %v548, %v549
    %v551 = vrot.slane %v165, 4
    %v552 = vmax.f32 %v165, %v551
    %v553 = vrot.slane %v552, 2
    %v554 = vmax.f32 %v552, %v553
    %v555 = vrot.slane %v554, 1
    %v556 = vmax.f32 %v554, %v555
    %v557 = vrot.slane %v166, 4
    %v558 = vmax.f32 %v166, %v557
    %v559 = vrot.slane %v558, 2
    %v560 = vmax.f32 %v558, %v559
    %v561 = vrot.slane %v560, 1
    %v562 = vmax.f32 %v560, %v561
    %v563 = vrot.slane %v167, 4
    %v564 = vmax.f32 %v167, %v563
    %v565 = vrot.slane %v564, 2
    %v566 = vmax.f32 %v564, %v565
    %v567 = vrot.slane %v566, 1
    %v568 = vmax.f32 %v566, %v567
    %v569 = vrot.slane %v168, 4
    %v570 = vmax.f32 %v168, %v569
    %v571 = vrot.slane %v570, 2
    %v572 = vmax.f32 %v570, %v571
    %v573 = vrot.slane %v572, 1
    %v574 = vmax.f32 %v572, %v573
    %v575 = vrot.slane %v169, 4
    %v576 = vmax.f32 %v169, %v575
    %v577 = vrot.slane %v576, 2
    %v578 = vmax.f32 %v576, %v577
    %v579 = vrot.slane %v578, 1
    %v580 = vmax.f32 %v578, %v579
    %v581 = vrot.slane %v170, 4
    %v582 = vmax.f32 %v170, %v581
    %v583 = vrot.slane %v582, 2
    %v584 = vmax.f32 %v582, %v583
    %v585 = vrot.slane %v584, 1
    %v586 = vmax.f32 %v584, %v585
    %v587 = vrot.slane %v171, 4
    %v588 = vmax.f32 %v171, %v587
    %v589 = vrot.slane %v588, 2
    %v590 = vmax.f32 %v588, %v589
    %v591 = vrot.slane %v590, 1
    %v592 = vmax.f32 %v590, %v591
    %v593 = vrot.slane %v172, 4
    %v594 = vmax.f32 %v172, %v593
    %v595 = vrot.slane %v594, 2
    %v596 = vmax.f32 %v594, %v595
    %v597 = vrot.slane %v596, 1
    %v598 = vmax.f32 %v596, %v597
    %v599 = vrot.slane %v173, 4
    %v600 = vmax.f32 %v173, %v599
    %v601 = vrot.slane %v600, 2
    %v602 = vmax.f32 %v600, %v601
    %v603 = vrot.slane %v602, 1
    %v604 = vmax.f32 %v602, %v603
    %v605 = vrot.slane %v174, 4
    %v606 = vmax.f32 %v174, %v605
    %v607 = vrot.slane %v606, 2
    %v608 = vmax.f32 %v606, %v607
    %v609 = vrot.slane %v608, 1
    %v610 = vmax.f32 %v608, %v609
    %v611 = vrot.slane %v175, 4
    %v612 = vmax.f32 %v175, %v611
    %v613 = vrot.slane %v612, 2
    %v614 = vmax.f32 %v612, %v613
    %v615 = vrot.slane %v614, 1
    %v616 = vmax.f32 %v614, %v615
    %v617 = vrot.slane %v176, 4
    %v618 = vmax.f32 %v176, %v617
    %v619 = vrot.slane %v618, 2
    %v620 = vmax.f32 %v618, %v619
    %v621 = vrot.slane %v620, 1
    %v622 = vmax.f32 %v620, %v621
    %v623 = vrot.slane %v177, 4
    %v624 = vmax.f32 %v177, %v623
    %v625 = vrot.slane %v624, 2
    %v626 = vmax.f32 %v624, %v625
    %v627 = vrot.slane %v626, 1
    %v628 = vmax.f32 %v626, %v627
    %v629 = vrot.slane %v178, 4
    %v630 = vmax.f32 %v178, %v629
    %v631 = vrot.slane %v630, 2
    %v632 = vmax.f32 %v630, %v631
    %v633 = vrot.slane %v632, 1
    %v634 = vmax.f32 %v632, %v633
    %v635 = vrot.slane %v179, 4
    %v636 = vmax.f32 %v179, %v635
    %v637 = vrot.slane %v636, 2
    %v638 = vmax.f32 %v636, %v637
    %v639 = vrot.slane %v638, 1
    %v640 = vmax.f32 %v638, %v639
    %v641 = vrot.slane %v180, 4
    %v642 = vmax.f32 %v180, %v641
    %v643 = vrot.slane %v642, 2
    %v644 = vmax.f32 %v642, %v643
    %v645 = vrot.slane %v644, 1
    %v646 = vmax.f32 %v644, %v645
    %v647 = vrot.slane %v181, 4
    %v648 = vmax.f32 %v181, %v647
    %v649 = vrot.slane %v648, 2
    %v650 = vmax.f32 %v648, %v649
    %v651 = vrot.slane %v650, 1
    %v652 = vmax.f32 %v650, %v651
    %v653 = vrot.slane %v182, 4
    %v654 = vmax.f32 %v182, %v653
    %v655 = vrot.slane %v654, 2
    %v656 = vmax.f32 %v654, %v655
    %v657 = vrot.slane %v656, 1
    %v658 = vmax.f32 %v656, %v657
    %v659 = vrot.slane %v183, 4
    %v660 = vmax.f32 %v183, %v659
    %v661 = vrot.slane %v660, 2
    %v662 = vmax.f32 %v660, %v661
    %v663 = vrot.slane %v662, 1
    %v664 = vmax.f32 %v662, %v663
    %v665 = vrot.slane %v184, 4
    %v666 = vmax.f32 %v184, %v665
    %v667 = vrot.slane %v666, 2
    %v668 = vmax.f32 %v666, %v667
    %v669 = vrot.slane %v668, 1
    %v670 = vmax.f32 %v668, %v669
    %v671 = vrot.slane %v185, 4
    %v672 = vmax.f32 %v185, %v671
    %v673 = vrot.slane %v672, 2
    %v674 = vmax.f32 %v672, %v673
    %v675 = vrot.slane %v674, 1
    %v676 = vmax.f32 %v674, %v675
    %v677 = vrot.slane %v186, 4
    %v678 = vmax.f32 %v186, %v677
    %v679 = vrot.slane %v678, 2
    %v680 = vmax.f32 %v678, %v679
    %v681 = vrot.slane %v680, 1
    %v682 = vmax.f32 %v680, %v681
    %v683 = vrot.slane %v187, 4
    %v684 = vmax.f32 %v187, %v683
    %v685 = vrot.slane %v684, 2
    %v686 = vmax.f32 %v684, %v685
    %v687 = vrot.slane %v686, 1
    %v688 = vmax.f32 %v686, %v687
    %v689 = vrot.slane %v188, 4
    %v690 = vmax.f32 %v188, %v689
    %v691 = vrot.slane %v690, 2
    %v692 = vmax.f32 %v690, %v691
    %v693 = vrot.slane %v692, 1
    %v694 = vmax.f32 %v692, %v693
    %v695 = vrot.slane %v189, 4
    %v696 = vmax.f32 %v189, %v695
    %v697 = vrot.slane %v696, 2
    %v698 = vmax.f32 %v696, %v697
    %v699 = vrot.slane %v698, 1
    %v700 = vmax.f32 %v698, %v699
    %v701 = vrot.slane %v190, 4
    %v702 = vmax.f32 %v190, %v701
    %v703 = vrot.slane %v702, 2
    %v704 = vmax.f32 %v702, %v703
    %v705 = vrot.slane %v704, 1
    %v706 = vmax.f32 %v704, %v705
    %v707 = vrot.slane %v191, 4
    %v708 = vmax.f32 %v191, %v707
    %v709 = vrot.slane %v708, 2
    %v710 = vmax.f32 %v708, %v709
    %v711 = vrot.slane %v710, 1
    %v712 = vmax.f32 %v710, %v711
    %v713 = vrot.slane %v192, 4
    %v714 = vmax.f32 %v192, %v713
    %v715 = vrot.slane %v714, 2
    %v716 = vmax.f32 %v714, %v715
    %v717 = vrot.slane %v716, 1
    %v718 = vmax.f32 %v716, %v717
    %v719 = vrot.slane %v193, 4
    %v720 = vmax.f32 %v193, %v719
    %v721 = vrot.slane %v720, 2
    %v722 = vmax.f32 %v720, %v721
    %v723 = vrot.slane %v722, 1
    %v724 = vmax.f32 %v722, %v723
    %v725 = vrot.slane %v194, 4
    %v726 = vmax.f32 %v194, %v725
    %v727 = vrot.slane %v726, 2
    %v728 = vmax.f32 %v726, %v727
    %v729 = vrot.slane %v728, 1
    %v730 = vmax.f32 %v728, %v729
    %v731 = vrot.slane %v195, 4
    %v732 = vmax.f32 %v195, %v731
    %v733 = vrot.slane %v732, 2
    %v734 = vmax.f32 %v732, %v733
    %v735 = vrot.slane %v734, 1
    %v736 = vmax.f32 %v734, %v735
    %v737 = vrot.slane %v196, 4
    %v738 = vmax.f32 %v196, %v737
    %v739 = vrot.slane %v738, 2
    %v740 = vmax.f32 %v738, %v739
    %v741 = vrot.slane %v740, 1
    %v742 = vmax.f32 %v740, %v741
    %v743 = vrot.slane %v197, 4
    %v744 = vmax.f32 %v197, %v743
    %v745 = vrot.slane %v744, 2
    %v746 = vmax.f32 %v744, %v745
    %v747 = vrot.slane %v746, 1
    %v748 = vmax.f32 %v746, %v747
    %v749 = vrot.slane %v198, 4
    %v750 = vmax.f32 %v198, %v749
    %v751 = vrot.slane %v750, 2
    %v752 = vmax.f32 %v750, %v751
    %v753 = vrot.slane %v752, 1
    %v754 = vmax.f32 %v752, %v753
    %v755 = vrot.slane %v199, 4
    %v756 = vmax.f32 %v199, %v755
    %v757 = vrot.slane %v756, 2
    %v758 = vmax.f32 %v756, %v757
    %v759 = vrot.slane %v758, 1
    %v760 = vmax.f32 %v758, %v759
    %v761 = vrot.slane %v200, 4
    %v762 = vmax.f32 %v200, %v761
    %v763 = vrot.slane %v762, 2
    %v764 = vmax.f32 %v762, %v763
    %v765 = vrot.slane %v764, 1
    %v766 = vmax.f32 %v764, %v765
    %v767 = vrot.slane %v201, 4
    %v768 = vmax.f32 %v201, %v767
    %v769 = vrot.slane %v768, 2
    %v770 = vmax.f32 %v768, %v769
    %v771 = vrot.slane %v770, 1
    %v772 = vmax.f32 %v770, %v771
    %v773 = vrot.slane %v202, 4
    %v774 = vmax.f32 %v202, %v773
    %v775 = vrot.slane %v774, 2
    %v776 = vmax.f32 %v774, %v775
    %v777 = vrot.slane %v776, 1
    %v778 = vmax.f32 %v776, %v777
    %v779 = vrot.slane %v203, 4
    %v780 = vmax.f32 %v203, %v779
    %v781 = vrot.slane %v780, 2
    %v782 = vmax.f32 %v780, %v781
    %v783 = vrot.slane %v782, 1
    %v784 = vmax.f32 %v782, %v783
    %v785 = vrot.slane %v204, 4
    %v786 = vmax.f32 %v204, %v785
    %v787 = vrot.slane %v786, 2
    %v788 = vmax.f32 %v786, %v787
    %v789 = vrot.slane %v788, 1
    %v790 = vmax.f32 %v788, %v789
    %v791 = vrot.slane %v205, 4
    %v792 = vmax.f32 %v205, %v791
    %v793 = vrot.slane %v792, 2
    %v794 = vmax.f32 %v792, %v793
    %v795 = vrot.slane %v794, 1
    %v796 = vmax.f32 %v794, %v795
    %v797 = vrot.slane %v206, 4
    %v798 = vmax.f32 %v206, %v797
    %v799 = vrot.slane %v798, 2
    %v800 = vmax.f32 %v798, %v799
    %v801 = vrot.slane %v800, 1
    %v802 = vmax.f32 %v800, %v801
    %v803 = vrot.slane %v207, 4
    %v804 = vmax.f32 %v207, %v803
    %v805 = vrot.slane %v804, 2
    %v806 = vmax.f32 %v804, %v805
    %v807 = vrot.slane %v806, 1
    %v808 = vmax.f32 %v806, %v807
    %v809 = vrot.slane %v208, 4
    %v810 = vmax.f32 %v208, %v809
    %v811 = vrot.slane %v810, 2
    %v812 = vmax.f32 %v810, %v811
    %v813 = vrot.slane %v812, 1
    %v814 = vmax.f32 %v812, %v813
    %v815 = vrot.slane %v209, 4
    %v816 = vmax.f32 %v209, %v815
    %v817 = vrot.slane %v816, 2
    %v818 = vmax.f32 %v816, %v817
    %v819 = vrot.slane %v818, 1
    %v820 = vmax.f32 %v818, %v819
    %v821 = vrot.slane %v210, 4
    %v822 = vmax.f32 %v210, %v821
    %v823 = vrot.slane %v822, 2
    %v824 = vmax.f32 %v822, %v823
    %v825 = vrot.slane %v824, 1
    %v826 = vmax.f32 %v824, %v825
    %v827 = vrot.slane %v211, 4
    %v828 = vmax.f32 %v211, %v827
    %v829 = vrot.slane %v828, 2
    %v830 = vmax.f32 %v828, %v829
    %v831 = vrot.slane %v830, 1
    %v832 = vmax.f32 %v830, %v831
    %v833 = vrot.slane %v212, 4
    %v834 = vmax.f32 %v212, %v833
    %v835 = vrot.slane %v834, 2
    %v836 = vmax.f32 %v834, %v835
    %v837 = vrot.slane %v836, 1
    %v838 = vmax.f32 %v836, %v837
    %v839 = vrot.slane %v213, 4
    %v840 = vmax.f32 %v213, %v839
    %v841 = vrot.slane %v840, 2
    %v842 = vmax.f32 %v840, %v841
    %v843 = vrot.slane %v842, 1
    %v844 = vmax.f32 %v842, %v843
    %v845 = vrot.slane %v214, 4
    %v846 = vmax.f32 %v214, %v845
    %v847 = vrot.slane %v846, 2
    %v848 = vmax.f32 %v846, %v847
    %v849 = vrot.slane %v848, 1
    %v850 = vmax.f32 %v848, %v849
    %v851 = vrot.slane %v215, 4
    %v852 = vmax.f32 %v215, %v851
    %v853 = vrot.slane %v852, 2
    %v854 = vmax.f32 %v852, %v853
    %v855 = vrot.slane %v854, 1
    %v856 = vmax.f32 %v854, %v855
    %v857 = vrot.slane %v216, 4
    %v858 = vmax.f32 %v216, %v857
    %v859 = vrot.slane %v858, 2
    %v860 = vmax.f32 %v858, %v859
    %v861 = vrot.slane %v860, 1
    %v862 = vmax.f32 %v860, %v861
    %v863 = vrot.slane %v217, 4
    %v864 = vmax.f32 %v217, %v863
    %v865 = vrot.slane %v864, 2
    %v866 = vmax.f32 %v864, %v865
    %v867 = vrot.slane %v866, 1
    %v868 = vmax.f32 %v866, %v867
    %v869 = vrot.slane %v218, 4
    %v870 = vmax.f32 %v218, %v869
    %v871 = vrot.slane %v870, 2
    %v872 = vmax.f32 %v870, %v871
    %v873 = vrot.slane %v872, 1
    %v874 = vmax.f32 %v872, %v873
    %v875 = vrot.slane %v219, 4
    %v876 = vmax.f32 %v219, %v875
    %v877 = vrot.slane %v876, 2
    %v878 = vmax.f32 %v876, %v877
    %v879 = vrot.slane %v878, 1
    %v880 = vmax.f32 %v878, %v879
    %v881 = vrot.slane %v220, 4
    %v882 = vmax.f32 %v220, %v881
    %v883 = vrot.slane %v882, 2
    %v884 = vmax.f32 %v882, %v883
    %v885 = vrot.slane %v884, 1
    %v886 = vmax.f32 %v884, %v885
    %v887 = vrot.slane %v221, 4
    %v888 = vmax.f32 %v221, %v887
    %v889 = vrot.slane %v888, 2
    %v890 = vmax.f32 %v888, %v889
    %v891 = vrot.slane %v890, 1
    %v892 = vmax.f32 %v890, %v891
    %v893 = vrot.slane %v222, 4
    %v894 = vmax.f32 %v222, %v893
    %v895 = vrot.slane %v894, 2
    %v896 = vmax.f32 %v894, %v895
    %v897 = vrot.slane %v896, 1
    %v898 = vmax.f32 %v896, %v897
    %v899 = vrot.slane %v223, 4
    %v900 = vmax.f32 %v223, %v899
    %v901 = vrot.slane %v900, 2
    %v902 = vmax.f32 %v900, %v901
    %v903 = vrot.slane %v902, 1
    %v904 = vmax.f32 %v902, %v903
    %v905 = vrot.slane %v224, 4
    %v906 = vmax.f32 %v224, %v905
    %v907 = vrot.slane %v906, 2
    %v908 = vmax.f32 %v906, %v907
    %v909 = vrot.slane %v908, 1
    %v910 = vmax.f32 %v908, %v909
    %v911 = vrot.slane %v225, 4
    %v912 = vmax.f32 %v225, %v911
    %v913 = vrot.slane %v912, 2
    %v914 = vmax.f32 %v912, %v913
    %v915 = vrot.slane %v914, 1
    %v916 = vmax.f32 %v914, %v915
    %v917 = vrot.slane %v226, 4
    %v918 = vmax.f32 %v226, %v917
    %v919 = vrot.slane %v918, 2
    %v920 = vmax.f32 %v918, %v919
    %v921 = vrot.slane %v920, 1
    %v922 = vmax.f32 %v920, %v921
    %v923 = vrot.slane %v227, 4
    %v924 = vmax.f32 %v227, %v923
    %v925 = vrot.slane %v924, 2
    %v926 = vmax.f32 %v924, %v925
    %v927 = vrot.slane %v926, 1
    %v928 = vmax.f32 %v926, %v927
    %v929 = vrot.slane %v228, 4
    %v930 = vmax.f32 %v228, %v929
    %v931 = vrot.slane %v930, 2
    %v932 = vmax.f32 %v930, %v931
    %v933 = vrot.slane %v932, 1
    %v934 = vmax.f32 %v932, %v933
    %v935 = vrot.slane %v229, 4
    %v936 = vmax.f32 %v229, %v935
    %v937 = vrot.slane %v936, 2
    %v938 = vmax.f32 %v936, %v937
    %v939 = vrot.slane %v938, 1
    %v940 = vmax.f32 %v938, %v939
    %v941 = vrot.slane %v230, 4
    %v942 = vmax.f32 %v230, %v941
    %v943 = vrot.slane %v942, 2
    %v944 = vmax.f32 %v942, %v943
    %v945 = vrot.slane %v944, 1
    %v946 = vmax.f32 %v944, %v945
    %v947 = vrot.slane %v231, 4
    %v948 = vmax.f32 %v231, %v947
    %v949 = vrot.slane %v948, 2
    %v950 = vmax.f32 %v948, %v949
    %v951 = vrot.slane %v950, 1
    %v952 = vmax.f32 %v950, %v951
    %v953 = vrot.slane %v232, 4
    %v954 = vmax.f32 %v232, %v953
    %v955 = vrot.slane %v954, 2
    %v956 = vmax.f32 %v954, %v955
    %v957 = vrot.slane %v956, 1
    %v958 = vmax.f32 %v956, %v957
    %v959 = vrot.slane %v233, 4
    %v960 = vmax.f32 %v233, %v959
    %v961 = vrot.slane %v960, 2
    %v962 = vmax.f32 %v960, %v961
    %v963 = vrot.slane %v962, 1
    %v964 = vmax.f32 %v962, %v963
    %v965 = vrot.slane %v234, 4
    %v966 = vmax.f32 %v234, %v965
    %v967 = vrot.slane %v966, 2
    %v968 = vmax.f32 %v966, %v967
    %v969 = vrot.slane %v968, 1
    %v970 = vmax.f32 %v968, %v969
    %v971 = vrot.slane %v235, 4
    %v972 = vmax.f32 %v235, %v971
    %v973 = vrot.slane %v972, 2
    %v974 = vmax.f32 %v972, %v973
    %v975 = vrot.slane %v974, 1
    %v976 = vmax.f32 %v974, %v975
    %v977 = vrot.slane %v236, 4
    %v978 = vmax.f32 %v236, %v977
    %v979 = vrot.slane %v978, 2
    %v980 = vmax.f32 %v978, %v979
    %v981 = vrot.slane %v980, 1
    %v982 = vmax.f32 %v980, %v981
    %v983 = vrot.slane %v237, 4
    %v984 = vmax.f32 %v237, %v983
    %v985 = vrot.slane %v984, 2
    %v986 = vmax.f32 %v984, %v985
    %v987 = vrot.slane %v986, 1
    %v988 = vmax.f32 %v986, %v987
    %v989 = vrot.slane %v238, 4
    %v990 = vmax.f32 %v238, %v989
    %v991 = vrot.slane %v990, 2
    %v992 = vmax.f32 %v990, %v991
    %v993 = vrot.slane %v992, 1
    %v994 = vmax.f32 %v992, %v993
    %v995 = vrot.slane %v239, 4
    %v996 = vmax.f32 %v239, %v995
    %v997 = vrot.slane %v996, 2
    %v998 = vmax.f32 %v996, %v997
    %v999 = vrot.slane %v998, 1
    %v1000 = vmax.f32 %v998, %v999
    %v1001 = vrot.slane %v240, 4
    %v1002 = vmax.f32 %v240, %v1001
    %v1003 = vrot.slane %v1002, 2
    %v1004 = vmax.f32 %v1002, %v1003
    %v1005 = vrot.slane %v1004, 1
    %v1006 = vmax.f32 %v1004, %v1005
    %v1007 = vrot.slane %v241, 4
    %v1008 = vmax.f32 %v241, %v1007
    %v1009 = vrot.slane %v1008, 2
    %v1010 = vmax.f32 %v1008, %v1009
    %v1011 = vrot.slane %v1010, 1
    %v1012 = vmax.f32 %v1010, %v1011
    %v1013 = vrot.slane %v242, 4
    %v1014 = vmax.f32 %v242, %v1013
    %v1015 = vrot.slane %v1014, 2
    %v1016 = vmax.f32 %v1014, %v1015
    %v1017 = vrot.slane %v1016, 1
    %v1018 = vmax.f32 %v1016, %v1017
    %v1019 = vrot.slane %v243, 4
    %v1020 = vmax.f32 %v243, %v1019
    %v1021 = vrot.slane %v1020, 2
    %v1022 = vmax.f32 %v1020, %v1021
    %v1023 = vrot.slane %v1022, 1
    %v1024 = vmax.f32 %v1022, %v1023
    %v1025 = vrot.slane %v244, 4
    %v1026 = vmax.f32 %v244, %v1025
    %v1027 = vrot.slane %v1026, 2
    %v1028 = vmax.f32 %v1026, %v1027
    %v1029 = vrot.slane %v1028, 1
    %v1030 = vmax.f32 %v1028, %v1029
    %v1031 = vrot.slane %v245, 4
    %v1032 = vmax.f32 %v245, %v1031
    %v1033 = vrot.slane %v1032, 2
    %v1034 = vmax.f32 %v1032, %v1033
    %v1035 = vrot.slane %v1034, 1
    %v1036 = vmax.f32 %v1034, %v1035
    %v1037 = vrot.slane %v246, 4
    %v1038 = vmax.f32 %v246, %v1037
    %v1039 = vrot.slane %v1038, 2
    %v1040 = vmax.f32 %v1038, %v1039
    %v1041 = vrot.slane %v1040, 1
    %v1042 = vmax.f32 %v1040, %v1041
    %v1043 = vrot.slane %v247, 4
    %v1044 = vmax.f32 %v247, %v1043
    %v1045 = vrot.slane %v1044, 2
    %v1046 = vmax.f32 %v1044, %v1045
    %v1047 = vrot.slane %v1046, 1
    %v1048 = vmax.f32 %v1046, %v1047
    %v1049 = vrot.slane %v248, 4
    %v1050 = vmax.f32 %v248, %v1049
    %v1051 = vrot.slane %v1050, 2
    %v1052 = vmax.f32 %v1050, %v1051
    %v1053 = vrot.slane %v1052, 1
    %v1054 = vmax.f32 %v1052, %v1053
    %v1055 = vrot.slane %v249, 4
    %v1056 = vmax.f32 %v249, %v1055
    %v1057 = vrot.slane %v1056, 2
    %v1058 = vmax.f32 %v1056, %v1057
    %v1059 = vrot.slane %v1058, 1
    %v1060 = vmax.f32 %v1058, %v1059
    %v1061 = vrot.slane %v250, 4
    %v1062 = vmax.f32 %v250, %v1061
    %v1063 = vrot.slane %v1062, 2
    %v1064 = vmax.f32 %v1062, %v1063
    %v1065 = vrot.slane %v1064, 1
    %v1066 = vmax.f32 %v1064, %v1065
    %v1067 = vrot.slane %v251, 4
    %v1068 = vmax.f32 %v251, %v1067
    %v1069 = vrot.slane %v1068, 2
    %v1070 = vmax.f32 %v1068, %v1069
    %v1071 = vrot.slane %v1070, 1
    %v1072 = vmax.f32 %v1070, %v1071
    %v1073 = vrot.slane %v252, 4
    %v1074 = vmax.f32 %v252, %v1073
    %v1075 = vrot.slane %v1074, 2
    %v1076 = vmax.f32 %v1074, %v1075
    %v1077 = vrot.slane %v1076, 1
    %v1078 = vmax.f32 %v1076, %v1077
    %v1079 = vrot.slane %v253, 4
    %v1080 = vmax.f32 %v253, %v1079
    %v1081 = vrot.slane %v1080, 2
    %v1082 = vmax.f32 %v1080, %v1081
    %v1083 = vrot.slane %v1082, 1
    %v1084 = vmax.f32 %v1082, %v1083
    %v1085 = vrot.slane %v254, 4
    %v1086 = vmax.f32 %v254, %v1085
    %v1087 = vrot.slane %v1086, 2
    %v1088 = vmax.f32 %v1086, %v1087
    %v1089 = vrot.slane %v1088, 1
    %v1090 = vmax.f32 %v1088, %v1089
    %v1091 = vrot.slane %v255, 4
    %v1092 = vmax.f32 %v255, %v1091
    %v1093 = vrot.slane %v1092, 2
    %v1094 = vmax.f32 %v1092, %v1093
    %v1095 = vrot.slane %v1094, 1
    %v1096 = vmax.f32 %v1094, %v1095
    %v1097 = vrot.slane %v256, 4
    %v1098 = vmax.f32 %v256, %v1097
    %v1099 = vrot.slane %v1098, 2
    %v1100 = vmax.f32 %v1098, %v1099
    %v1101 = vrot.slane %v1100, 1
    %v1102 = vmax.f32 %v1100, %v1101
    %v1103 = vrot.slane %v257, 4
    %v1104 = vmax.f32 %v257, %v1103
    %v1105 = vrot.slane %v1104, 2
    %v1106 = vmax.f32 %v1104, %v1105
    %v1107 = vrot.slane %v1106, 1
    %v1108 = vmax.f32 %v1106, %v1107
    %v1109 = vrot.slane %v258, 4
    %v1110 = vmax.f32 %v258, %v1109
    %v1111 = vrot.slane %v1110, 2
    %v1112 = vmax.f32 %v1110, %v1111
    %v1113 = vrot.slane %v1112, 1
    %v1114 = vmax.f32 %v1112, %v1113
    %v1115 = vrot.slane %v259, 4
    %v1116 = vmax.f32 %v259, %v1115
    %v1117 = vrot.slane %v1116, 2
    %v1118 = vmax.f32 %v1116, %v1117
    %v1119 = vrot.slane %v1118, 1
    %v1120 = vmax.f32 %v1118, %v1119
    %v1121 = vrot.slane %v260, 4
    %v1122 = vmax.f32 %v260, %v1121
    %v1123 = vrot.slane %v1122, 2
    %v1124 = vmax.f32 %v1122, %v1123
    %v1125 = vrot.slane %v1124, 1
    %v1126 = vmax.f32 %v1124, %v1125
    %v1127 = vrot.slane %v261, 4
    %v1128 = vmax.f32 %v261, %v1127
    %v1129 = vrot.slane %v1128, 2
    %v1130 = vmax.f32 %v1128, %v1129
    %v1131 = vrot.slane %v1130, 1
    %v1132 = vmax.f32 %v1130, %v1131
    %v1133 = vrot.slane %v262, 4
    %v1134 = vmax.f32 %v262, %v1133
    %v1135 = vrot.slane %v1134, 2
    %v1136 = vmax.f32 %v1134, %v1135
    %v1137 = vrot.slane %v1136, 1
    %v1138 = vmax.f32 %v1136, %v1137
    %v1139 = vrot.slane %v263, 4
    %v1140 = vmax.f32 %v263, %v1139
    %v1141 = vrot.slane %v1140, 2
    %v1142 = vmax.f32 %v1140, %v1141
    %v1143 = vrot.slane %v1142, 1
    %v1144 = vmax.f32 %v1142, %v1143
    %v1145 = vrot.slane %v264, 4
    %v1146 = vmax.f32 %v264, %v1145
    %v1147 = vrot.slane %v1146, 2
    %v1148 = vmax.f32 %v1146, %v1147
    %v1149 = vrot.slane %v1148, 1
    %v1150 = vmax.f32 %v1148, %v1149
    %v1151 = vrot.slane %v265, 4
    %v1152 = vmax.f32 %v265, %v1151
    %v1153 = vrot.slane %v1152, 2
    %v1154 = vmax.f32 %v1152, %v1153
    %v1155 = vrot.slane %v1154, 1
    %v1156 = vmax.f32 %v1154, %v1155
    %v1157 = vrot.slane %v266, 4
    %v1158 = vmax.f32 %v266, %v1157
    %v1159 = vrot.slane %v1158, 2
    %v1160 = vmax.f32 %v1158, %v1159
    %v1161 = vrot.slane %v1160, 1
    %v1162 = vmax.f32 %v1160, %v1161
    %v1163 = vrot.slane %v267, 4
    %v1164 = vmax.f32 %v267, %v1163
    %v1165 = vrot.slane %v1164, 2
    %v1166 = vmax.f32 %v1164, %v1165
    %v1167 = vrot.slane %v1166, 1
    %v1168 = vmax.f32 %v1166, %v1167
    %v1169 = vrot.slane %v268, 4
    %v1170 = vmax.f32 %v268, %v1169
    %v1171 = vrot.slane %v1170, 2
    %v1172 = vmax.f32 %v1170, %v1171
    %v1173 = vrot.slane %v1172, 1
    %v1174 = vmax.f32 %v1172, %v1173
    %v1175 = vrot.slane %v269, 4
    %v1176 = vmax.f32 %v269, %v1175
    %v1177 = vrot.slane %v1176, 2
    %v1178 = vmax.f32 %v1176, %v1177
    %v1179 = vrot.slane %v1178, 1
    %v1180 = vmax.f32 %v1178, %v1179
    %v1181 = vrot.slane %v270, 4
    %v1182 = vmax.f32 %v270, %v1181
    %v1183 = vrot.slane %v1182, 2
    %v1184 = vmax.f32 %v1182, %v1183
    %v1185 = vrot.slane %v1184, 1
    %v1186 = vmax.f32 %v1184, %v1185
    %v1187 = vrot.slane %v271, 4
    %v1188 = vmax.f32 %v271, %v1187
    %v1189 = vrot.slane %v1188, 2
    %v1190 = vmax.f32 %v1188, %v1189
    %v1191 = vrot.slane %v1190, 1
    %v1192 = vmax.f32 %v1190, %v1191
    %v1193 = vrot.slane %v272, 4
    %v1194 = vmax.f32 %v272, %v1193
    %v1195 = vrot.slane %v1194, 2
    %v1196 = vmax.f32 %v1194, %v1195
    %v1197 = vrot.slane %v1196, 1
    %v1198 = vmax.f32 %v1196, %v1197
    %v1199 = vrot.slane %v273, 4
    %v1200 = vmax.f32 %v273, %v1199
    %v1201 = vrot.slane %v1200, 2
    %v1202 = vmax.f32 %v1200, %v1201
    %v1203 = vrot.slane %v1202, 1
    %v1204 = vmax.f32 %v1202, %v1203
    %v1205 = vrot.slane %v274, 4
    %v1206 = vmax.f32 %v274, %v1205
    %v1207 = vrot.slane %v1206, 2
    %v1208 = vmax.f32 %v1206, %v1207
    %v1209 = vrot.slane %v1208, 1
    %v1210 = vmax.f32 %v1208, %v1209
    %v1211 = vrot.slane %v275, 4
    %v1212 = vmax.f32 %v275, %v1211
    %v1213 = vrot.slane %v1212, 2
    %v1214 = vmax.f32 %v1212, %v1213
    %v1215 = vrot.slane %v1214, 1
    %v1216 = vmax.f32 %v1214, %v1215
    %v1217 = vrot.slane %v276, 4
    %v1218 = vmax.f32 %v276, %v1217
    %v1219 = vrot.slane %v1218, 2
    %v1220 = vmax.f32 %v1218, %v1219
    %v1221 = vrot.slane %v1220, 1
    %v1222 = vmax.f32 %v1220, %v1221
    %v1223 = vrot.slane %v277, 4
    %v1224 = vmax.f32 %v277, %v1223
    %v1225 = vrot.slane %v1224, 2
    %v1226 = vmax.f32 %v1224, %v1225
    %v1227 = vrot.slane %v1226, 1
    %v1228 = vmax.f32 %v1226, %v1227
    %v1229 = vrot.slane %v278, 4
    %v1230 = vmax.f32 %v278, %v1229
    %v1231 = vrot.slane %v1230, 2
    %v1232 = vmax.f32 %v1230, %v1231
    %v1233 = vrot.slane %v1232, 1
    %v1234 = vmax.f32 %v1232, %v1233
    %v1235 = vrot.slane %v279, 4
    %v1236 = vmax.f32 %v279, %v1235
    %v1237 = vrot.slane %v1236, 2
    %v1238 = vmax.f32 %v1236, %v1237
    %v1239 = vrot.slane %v1238, 1
    %v1240 = vmax.f32 %v1238, %v1239
    %v1241 = vrot.slane %v280, 4
    %v1242 = vmax.f32 %v280, %v1241
    %v1243 = vrot.slane %v1242, 2
    %v1244 = vmax.f32 %v1242, %v1243
    %v1245 = vrot.slane %v1244, 1
    %v1246 = vmax.f32 %v1244, %v1245
    %v1247 = vrot.slane %v281, 4
    %v1248 = vmax.f32 %v281, %v1247
    %v1249 = vrot.slane %v1248, 2
    %v1250 = vmax.f32 %v1248, %v1249
    %v1251 = vrot.slane %v1250, 1
    %v1252 = vmax.f32 %v1250, %v1251
    %v1253 = vrot.slane %v282, 4
    %v1254 = vmax.f32 %v282, %v1253
    %v1255 = vrot.slane %v1254, 2
    %v1256 = vmax.f32 %v1254, %v1255
    %v1257 = vrot.slane %v1256, 1
    %v1258 = vmax.f32 %v1256, %v1257
    %v1259 = vrot.slane %v283, 4
    %v1260 = vmax.f32 %v283, %v1259
    %v1261 = vrot.slane %v1260, 2
    %v1262 = vmax.f32 %v1260, %v1261
    %v1263 = vrot.slane %v1262, 1
    %v1264 = vmax.f32 %v1262, %v1263
    %v1265 = vrot.slane %v284, 4
    %v1266 = vmax.f32 %v284, %v1265
    %v1267 = vrot.slane %v1266, 2
    %v1268 = vmax.f32 %v1266, %v1267
    %v1269 = vrot.slane %v1268, 1
    %v1270 = vmax.f32 %v1268, %v1269
    %v1271 = vrot.slane %v285, 4
    %v1272 = vmax.f32 %v285, %v1271
    %v1273 = vrot.slane %v1272, 2
    %v1274 = vmax.f32 %v1272, %v1273
    %v1275 = vrot.slane %v1274, 1
    %v1276 = vmax.f32 %v1274, %v1275
    %v1277 = vrot.slane %v286, 4
    %v1278 = vmax.f32 %v286, %v1277
    %v1279 = vrot.slane %v1278, 2
    %v1280 = vmax.f32 %v1278, %v1279
    %v1281 = vrot.slane %v1280, 1
    %v1282 = vmax.f32 %v1280, %v1281
    %v1283 = vrot.slane %v287, 4
    %v1284 = vmax.f32 %v287, %v1283
    %v1285 = vrot.slane %v1284, 2
    %v1286 = vmax.f32 %v1284, %v1285
    %v1287 = vrot.slane %v1286, 1
    %v1288 = vmax.f32 %v1286, %v1287
    %v1289 = vrot.slane %v288, 4
    %v1290 = vmax.f32 %v288, %v1289
    %v1291 = vrot.slane %v1290, 2
    %v1292 = vmax.f32 %v1290, %v1291
    %v1293 = vrot.slane %v1292, 1
    %v1294 = vmax.f32 %v1292, %v1293
    %v1295 = vrot.slane %v289, 4
    %v1296 = vmax.f32 %v289, %v1295
    %v1297 = vrot.slane %v1296, 2
    %v1298 = vmax.f32 %v1296, %v1297
    %v1299 = vrot.slane %v1298, 1
    %v1300 = vmax.f32 %v1298, %v1299
    %v1301 = vrot.slane %v290, 4
    %v1302 = vmax.f32 %v290, %v1301
    %v1303 = vrot.slane %v1302, 2
    %v1304 = vmax.f32 %v1302, %v1303
    %v1305 = vrot.slane %v1304, 1
    %v1306 = vmax.f32 %v1304, %v1305
    %v1307 = vrot.slane %v291, 4
    %v1308 = vmax.f32 %v291, %v1307
    %v1309 = vrot.slane %v1308, 2
    %v1310 = vmax.f32 %v1308, %v1309
    %v1311 = vrot.slane %v1310, 1
    %v1312 = vmax.f32 %v1310, %v1311
    %v1313 = vrot.slane %v292, 4
    %v1314 = vmax.f32 %v292, %v1313
    %v1315 = vrot.slane %v1314, 2
    %v1316 = vmax.f32 %v1314, %v1315
    %v1317 = vrot.slane %v1316, 1
    %v1318 = vmax.f32 %v1316, %v1317
    %v1319 = vrot.slane %v293, 4
    %v1320 = vmax.f32 %v293, %v1319
    %v1321 = vrot.slane %v1320, 2
    %v1322 = vmax.f32 %v1320, %v1321
    %v1323 = vrot.slane %v1322, 1
    %v1324 = vmax.f32 %v1322, %v1323
    %v1325 = vrot.slane %v294, 4
    %v1326 = vmax.f32 %v294, %v1325
    %v1327 = vrot.slane %v1326, 2
    %v1328 = vmax.f32 %v1326, %v1327
    %v1329 = vrot.slane %v1328, 1
    %v1330 = vmax.f32 %v1328, %v1329
    %v1331 = vrot.slane %v295, 4
    %v1332 = vmax.f32 %v295, %v1331
    %v1333 = vrot.slane %v1332, 2
    %v1334 = vmax.f32 %v1332, %v1333
    %v1335 = vrot.slane %v1334, 1
    %v1336 = vmax.f32 %v1334, %v1335
    %v1337 = vrot.slane %v296, 4
    %v1338 = vmax.f32 %v296, %v1337
    %v1339 = vrot.slane %v1338, 2
    %v1340 = vmax.f32 %v1338, %v1339
    %v1341 = vrot.slane %v1340, 1
    %v1342 = vmax.f32 %v1340, %v1341
    %v1343 = vrot.slane %v297, 4
    %v1344 = vmax.f32 %v297, %v1343
    %v1345 = vrot.slane %v1344, 2
    %v1346 = vmax.f32 %v1344, %v1345
    %v1347 = vrot.slane %v1346, 1
    %v1348 = vmax.f32 %v1346, %v1347
    %v1349 = vrot.slane %v298, 4
    %v1350 = vmax.f32 %v298, %v1349
    %v1351 = vrot.slane %v1350, 2
    %v1352 = vmax.f32 %v1350, %v1351
    %v1353 = vrot.slane %v1352, 1
    %v1354 = vmax.f32 %v1352, %v1353
    %v1355 = vrot.slane %v299, 4
    %v1356 = vmax.f32 %v299, %v1355
    %v1357 = vrot.slane %v1356, 2
    %v1358 = vmax.f32 %v1356, %v1357
    %v1359 = vrot.slane %v1358, 1
    %v1360 = vmax.f32 %v1358, %v1359
    %v1361 = vrot.slane %v300, 4
    %v1362 = vmax.f32 %v300, %v1361
    %v1363 = vrot.slane %v1362, 2
    %v1364 = vmax.f32 %v1362, %v1363
    %v1365 = vrot.slane %v1364, 1
    %v1366 = vmax.f32 %v1364, %v1365
    %v1367 = vrot.slane %v301, 4
    %v1368 = vmax.f32 %v301, %v1367
    %v1369 = vrot.slane %v1368, 2
    %v1370 = vmax.f32 %v1368, %v1369
    %v1371 = vrot.slane %v1370, 1
    %v1372 = vmax.f32 %v1370, %v1371
    %v1373 = vrot.slane %v302, 4
    %v1374 = vmax.f32 %v302, %v1373
    %v1375 = vrot.slane %v1374, 2
    %v1376 = vmax.f32 %v1374, %v1375
    %v1377 = vrot.slane %v1376, 1
    %v1378 = vmax.f32 %v1376, %v1377
    %v1379 = vrot.slane %v303, 4
    %v1380 = vmax.f32 %v303, %v1379
    %v1381 = vrot.slane %v1380, 2
    %v1382 = vmax.f32 %v1380, %v1381
    %v1383 = vrot.slane %v1382, 1
    %v1384 = vmax.f32 %v1382, %v1383
    %v1385 = vrot.slane %v304, 4
    %v1386 = vmax.f32 %v304, %v1385
    %v1387 = vrot.slane %v1386, 2
    %v1388 = vmax.f32 %v1386, %v1387
    %v1389 = vrot.slane %v1388, 1
    %v1390 = vmax.f32 %v1388, %v1389
    %v1391 = vrot.slane %v305, 4
    %v1392 = vmax.f32 %v305, %v1391
    %v1393 = vrot.slane %v1392, 2
    %v1394 = vmax.f32 %v1392, %v1393
    %v1395 = vrot.slane %v1394, 1
    %v1396 = vmax.f32 %v1394, %v1395
    %v1397 = vrot.slane %v306, 4
    %v1398 = vmax.f32 %v306, %v1397
    %v1399 = vrot.slane %v1398, 2
    %v1400 = vmax.f32 %v1398, %v1399
    %v1401 = vrot.slane %v1400, 1
    %v1402 = vmax.f32 %v1400, %v1401
    %v1403 = vrot.slane %v307, 4
    %v1404 = vmax.f32 %v307, %v1403
    %v1405 = vrot.slane %v1404, 2
    %v1406 = vmax.f32 %v1404, %v1405
    %v1407 = vrot.slane %v1406, 1
    %v1408 = vmax.f32 %v1406, %v1407
    %v1409 = vrot.slane %v308, 4
    %v1410 = vmax.f32 %v308, %v1409
    %v1411 = vrot.slane %v1410, 2
    %v1412 = vmax.f32 %v1410, %v1411
    %v1413 = vrot.slane %v1412, 1
    %v1414 = vmax.f32 %v1412, %v1413
    %v1415 = vrot.slane %v309, 4
    %v1416 = vmax.f32 %v309, %v1415
    %v1417 = vrot.slane %v1416, 2
    %v1418 = vmax.f32 %v1416, %v1417
    %v1419 = vrot.slane %v1418, 1
    %v1420 = vmax.f32 %v1418, %v1419
    %v1421 = vrot.slane %v310, 4
    %v1422 = vmax.f32 %v310, %v1421
    %v1423 = vrot.slane %v1422, 2
    %v1424 = vmax.f32 %v1422, %v1423
    %v1425 = vrot.slane %v1424, 1
    %v1426 = vmax.f32 %v1424, %v1425
    %v1427 = vrot.slane %v311, 4
    %v1428 = vmax.f32 %v311, %v1427
    %v1429 = vrot.slane %v1428, 2
    %v1430 = vmax.f32 %v1428, %v1429
    %v1431 = vrot.slane %v1430, 1
    %v1432 = vmax.f32 %v1430, %v1431
    %v1433 = vrot.slane %v312, 4
    %v1434 = vmax.f32 %v312, %v1433
    %v1435 = vrot.slane %v1434, 2
    %v1436 = vmax.f32 %v1434, %v1435
    %v1437 = vrot.slane %v1436, 1
    %v1438 = vmax.f32 %v1436, %v1437
    %v1439 = vrot.slane %v313, 4
    %v1440 = vmax.f32 %v313, %v1439
    %v1441 = vrot.slane %v1440, 2
    %v1442 = vmax.f32 %v1440, %v1441
    %v1443 = vrot.slane %v1442, 1
    %v1444 = vmax.f32 %v1442, %v1443
    %v1445 = vrot.slane %v314, 4
    %v1446 = vmax.f32 %v314, %v1445
    %v1447 = vrot.slane %v1446, 2
    %v1448 = vmax.f32 %v1446, %v1447
    %v1449 = vrot.slane %v1448, 1
    %v1450 = vmax.f32 %v1448, %v1449
    %v1451 = vrot.slane %v315, 4
    %v1452 = vmax.f32 %v315, %v1451
    %v1453 = vrot.slane %v1452, 2
    %v1454 = vmax.f32 %v1452, %v1453
    %v1455 = vrot.slane %v1454, 1
    %v1456 = vmax.f32 %v1454, %v1455
    %v1457 = vrot.slane %v316, 4
    %v1458 = vmax.f32 %v316, %v1457
    %v1459 = vrot.slane %v1458, 2
    %v1460 = vmax.f32 %v1458, %v1459
    %v1461 = vrot.slane %v1460, 1
    %v1462 = vmax.f32 %v1460, %v1461
    %v1463 = vrot.slane %v317, 4
    %v1464 = vmax.f32 %v317, %v1463
    %v1465 = vrot.slane %v1464, 2
    %v1466 = vmax.f32 %v1464, %v1465
    %v1467 = vrot.slane %v1466, 1
    %v1468 = vmax.f32 %v1466, %v1467
    %v1469 = vrot.slane %v318, 4
    %v1470 = vmax.f32 %v318, %v1469
    %v1471 = vrot.slane %v1470, 2
    %v1472 = vmax.f32 %v1470, %v1471
    %v1473 = vrot.slane %v1472, 1
    %v1474 = vmax.f32 %v1472, %v1473
    %v1475 = vrot.slane %v319, 4
    %v1476 = vmax.f32 %v319, %v1475
    %v1477 = vrot.slane %v1476, 2
    %v1478 = vmax.f32 %v1476, %v1477
    %v1479 = vrot.slane %v1478, 1
    %v1480 = vmax.f32 %v1478, %v1479
    %v1481 = vrot.slane %v320, 4
    %v1482 = vmax.f32 %v320, %v1481
    %v1483 = vrot.slane %v1482, 2
    %v1484 = vmax.f32 %v1482, %v1483
    %v1485 = vrot.slane %v1484, 1
    %v1486 = vmax.f32 %v1484, %v1485
    %v1487 = vrot.slane %v321, 4
    %v1488 = vmax.f32 %v321, %v1487
    %v1489 = vrot.slane %v1488, 2
    %v1490 = vmax.f32 %v1488, %v1489
    %v1491 = vrot.slane %v1490, 1
    %v1492 = vmax.f32 %v1490, %v1491
    %v1493 = vrot.slane %v322, 4
    %v1494 = vmax.f32 %v322, %v1493
    %v1495 = vrot.slane %v1494, 2
    %v1496 = vmax.f32 %v1494, %v1495
    %v1497 = vrot.slane %v1496, 1
    %v1498 = vmax.f32 %v1496, %v1497
    %v1499 = vrot.slane %v323, 4
    %v1500 = vmax.f32 %v323, %v1499
    %v1501 = vrot.slane %v1500, 2
    %v1502 = vmax.f32 %v1500, %v1501
    %v1503 = vrot.slane %v1502, 1
    %v1504 = vmax.f32 %v1502, %v1503
    %v1505 = vrot.slane %v324, 4
    %v1506 = vmax.f32 %v324, %v1505
    %v1507 = vrot.slane %v1506, 2
    %v1508 = vmax.f32 %v1506, %v1507
    %v1509 = vrot.slane %v1508, 1
    %v1510 = vmax.f32 %v1508, %v1509
    %v1511 = vrot.slane %v325, 4
    %v1512 = vmax.f32 %v325, %v1511
    %v1513 = vrot.slane %v1512, 2
    %v1514 = vmax.f32 %v1512, %v1513
    %v1515 = vrot.slane %v1514, 1
    %v1516 = vmax.f32 %v1514, %v1515
    %v1517 = vrot.slane %v326, 4
    %v1518 = vmax.f32 %v326, %v1517
    %v1519 = vrot.slane %v1518, 2
    %v1520 = vmax.f32 %v1518, %v1519
    %v1521 = vrot.slane %v1520, 1
    %v1522 = vmax.f32 %v1520, %v1521
    %v1523 = vrot.slane %v327, 4
    %v1524 = vmax.f32 %v327, %v1523
    %v1525 = vrot.slane %v1524, 2
    %v1526 = vmax.f32 %v1524, %v1525
    %v1527 = vrot.slane %v1526, 1
    %v1528 = vmax.f32 %v1526, %v1527
    %v1529 = vrot.slane %v328, 4
    %v1530 = vmax.f32 %v328, %v1529
    %v1531 = vrot.slane %v1530, 2
    %v1532 = vmax.f32 %v1530, %v1531
    %v1533 = vrot.slane %v1532, 1
    %v1534 = vmax.f32 %v1532, %v1533
    %v1535 = vrot.slane %v329, 4
    %v1536 = vmax.f32 %v329, %v1535
    %v1537 = vrot.slane %v1536, 2
    %v1538 = vmax.f32 %v1536, %v1537
    %v1539 = vrot.slane %v1538, 1
    %v1540 = vmax.f32 %v1538, %v1539
    %v1541 = vrot.slane %v330, 4
    %v1542 = vmax.f32 %v330, %v1541
    %v1543 = vrot.slane %v1542, 2
    %v1544 = vmax.f32 %v1542, %v1543
    %v1545 = vrot.slane %v1544, 1
    %v1546 = vmax.f32 %v1544, %v1545
    %v1547 = vrot.slane %v331, 4
    %v1548 = vmax.f32 %v331, %v1547
    %v1549 = vrot.slane %v1548, 2
    %v1550 = vmax.f32 %v1548, %v1549
    %v1551 = vrot.slane %v1550, 1
    %v1552 = vmax.f32 %v1550, %v1551
    %v1553 = vrot.slane %v332, 4
    %v1554 = vmax.f32 %v332, %v1553
    %v1555 = vrot.slane %v1554, 2
    %v1556 = vmax.f32 %v1554, %v1555
    %v1557 = vrot.slane %v1556, 1
    %v1558 = vmax.f32 %v1556, %v1557
    %v1559 = vrot.slane %v333, 4
    %v1560 = vmax.f32 %v333, %v1559
    %v1561 = vrot.slane %v1560, 2
    %v1562 = vmax.f32 %v1560, %v1561
    %v1563 = vrot.slane %v1562, 1
    %v1564 = vmax.f32 %v1562, %v1563
    %v1565 = vrot.slane %v334, 4
    %v1566 = vmax.f32 %v334, %v1565
    %v1567 = vrot.slane %v1566, 2
    %v1568 = vmax.f32 %v1566, %v1567
    %v1569 = vrot.slane %v1568, 1
    %v1570 = vmax.f32 %v1568, %v1569
    %v1571 = vrot.slane %v335, 4
    %v1572 = vmax.f32 %v335, %v1571
    %v1573 = vrot.slane %v1572, 2
    %v1574 = vmax.f32 %v1572, %v1573
    %v1575 = vrot.slane %v1574, 1
    %v1576 = vmax.f32 %v1574, %v1575
    %v1577 = vrot.slane %v336, 4
    %v1578 = vmax.f32 %v336, %v1577
    %v1579 = vrot.slane %v1578, 2
    %v1580 = vmax.f32 %v1578, %v1579
    %v1581 = vrot.slane %v1580, 1
    %v1582 = vmax.f32 %v1580, %v1581
    %v1583 = vrot.slane %v337, 4
    %v1584 = vmax.f32 %v337, %v1583
    %v1585 = vrot.slane %v1584, 2
    %v1586 = vmax.f32 %v1584, %v1585
    %v1587 = vrot.slane %v1586, 1
    %v1588 = vmax.f32 %v1586, %v1587
    %v1589 = vrot.slane %v338, 4
    %v1590 = vmax.f32 %v338, %v1589
    %v1591 = vrot.slane %v1590, 2
    %v1592 = vmax.f32 %v1590, %v1591
    %v1593 = vrot.slane %v1592, 1
    %v1594 = vmax.f32 %v1592, %v1593
    %v1595 = vrot.slane %v339, 4
    %v1596 = vmax.f32 %v339, %v1595
    %v1597 = vrot.slane %v1596, 2
    %v1598 = vmax.f32 %v1596, %v1597
    %v1599 = vrot.slane %v1598, 1
    %v1600 = vmax.f32 %v1598, %v1599
    %v1601 = vrot.slane %v340, 4
    %v1602 = vmax.f32 %v340, %v1601
    %v1603 = vrot.slane %v1602, 2
    %v1604 = vmax.f32 %v1602, %v1603
    %v1605 = vrot.slane %v1604, 1
    %v1606 = vmax.f32 %v1604, %v1605
    %v1607 = vrot.slane %v341, 4
    %v1608 = vmax.f32 %v341, %v1607
    %v1609 = vrot.slane %v1608, 2
    %v1610 = vmax.f32 %v1608, %v1609
    %v1611 = vrot.slane %v1610, 1
    %v1612 = vmax.f32 %v1610, %v1611
    %v1613 = vrot.slane %v342, 4
    %v1614 = vmax.f32 %v342, %v1613
    %v1615 = vrot.slane %v1614, 2
    %v1616 = vmax.f32 %v1614, %v1615
    %v1617 = vrot.slane %v1616, 1
    %v1618 = vmax.f32 %v1616, %v1617
    %v1619 = vrot.slane %v343, 4
    %v1620 = vmax.f32 %v343, %v1619
    %v1621 = vrot.slane %v1620, 2
    %v1622 = vmax.f32 %v1620, %v1621
    %v1623 = vrot.slane %v1622, 1
    %v1624 = vmax.f32 %v1622, %v1623
    %v1625 = vrot.slane %v344, 4
    %v1626 = vmax.f32 %v344, %v1625
    %v1627 = vrot.slane %v1626, 2
    %v1628 = vmax.f32 %v1626, %v1627
    %v1629 = vrot.slane %v1628, 1
    %v1630 = vmax.f32 %v1628, %v1629
    %v1631 = vrot.slane %v345, 4
    %v1632 = vmax.f32 %v345, %v1631
    %v1633 = vrot.slane %v1632, 2
    %v1634 = vmax.f32 %v1632, %v1633
    %v1635 = vrot.slane %v1634, 1
    %v1636 = vmax.f32 %v1634, %v1635
    %v1637 = vrot.slane %v346, 4
    %v1638 = vmax.f32 %v346, %v1637
    %v1639 = vrot.slane %v1638, 2
    %v1640 = vmax.f32 %v1638, %v1639
    %v1641 = vrot.slane %v1640, 1
    %v1642 = vmax.f32 %v1640, %v1641
    %v1643 = vrot.slane %v347, 4
    %v1644 = vmax.f32 %v347, %v1643
    %v1645 = vrot.slane %v1644, 2
    %v1646 = vmax.f32 %v1644, %v1645
    %v1647 = vrot.slane %v1646, 1
    %v1648 = vmax.f32 %v1646, %v1647
    %v1649 = vrot.slane %v348, 4
    %v1650 = vmax.f32 %v348, %v1649
    %v1651 = vrot.slane %v1650, 2
    %v1652 = vmax.f32 %v1650, %v1651
    %v1653 = vrot.slane %v1652, 1
    %v1654 = vmax.f32 %v1652, %v1653
    %v1655 = vrot.slane %v349, 4
    %v1656 = vmax.f32 %v349, %v1655
    %v1657 = vrot.slane %v1656, 2
    %v1658 = vmax.f32 %v1656, %v1657
    %v1659 = vrot.slane %v1658, 1
    %v1660 = vmax.f32 %v1658, %v1659
    %v1661 = vrot.slane %v350, 4
    %v1662 = vmax.f32 %v350, %v1661
    %v1663 = vrot.slane %v1662, 2
    %v1664 = vmax.f32 %v1662, %v1663
    %v1665 = vrot.slane %v1664, 1
    %v1666 = vmax.f32 %v1664, %v1665
    %v1667 = vrot.slane %v351, 4
    %v1668 = vmax.f32 %v351, %v1667
    %v1669 = vrot.slane %v1668, 2
    %v1670 = vmax.f32 %v1668, %v1669
    %v1671 = vrot.slane %v1670, 1
    %v1672 = vmax.f32 %v1670, %v1671
    %v1673 = vrot.slane %v352, 4
    %v1674 = vmax.f32 %v352, %v1673
    %v1675 = vrot.slane %v1674, 2
    %v1676 = vmax.f32 %v1674, %v1675
    %v1677 = vrot.slane %v1676, 1
    %v1678 = vmax.f32 %v1676, %v1677
    %v1679 = vrot.slane %v353, 4
    %v1680 = vmax.f32 %v353, %v1679
    %v1681 = vrot.slane %v1680, 2
    %v1682 = vmax.f32 %v1680, %v1681
    %v1683 = vrot.slane %v1682, 1
    %v1684 = vmax.f32 %v1682, %v1683
    %v1685 = vrot.slane %v354, 4
    %v1686 = vmax.f32 %v354, %v1685
    %v1687 = vrot.slane %v1686, 2
    %v1688 = vmax.f32 %v1686, %v1687
    %v1689 = vrot.slane %v1688, 1
    %v1690 = vmax.f32 %v1688, %v1689
    %v1691 = vrot.slane %v355, 4
    %v1692 = vmax.f32 %v355, %v1691
    %v1693 = vrot.slane %v1692, 2
    %v1694 = vmax.f32 %v1692, %v1693
    %v1695 = vrot.slane %v1694, 1
    %v1696 = vmax.f32 %v1694, %v1695
    %v1697 = vrot.slane %v356, 4
    %v1698 = vmax.f32 %v356, %v1697
    %v1699 = vrot.slane %v1698, 2
    %v1700 = vmax.f32 %v1698, %v1699
    %v1701 = vrot.slane %v1700, 1
    %v1702 = vmax.f32 %v1700, %v1701
    %v1703 = vrot.slane %v357, 4
    %v1704 = vmax.f32 %v357, %v1703
    %v1705 = vrot.slane %v1704, 2
    %v1706 = vmax.f32 %v1704, %v1705
    %v1707 = vrot.slane %v1706, 1
    %v1708 = vmax.f32 %v1706, %v1707
    %v1709 = vrot.slane %v358, 4
    %v1710 = vmax.f32 %v358, %v1709
    %v1711 = vrot.slane %v1710, 2
    %v1712 = vmax.f32 %v1710, %v1711
    %v1713 = vrot.slane %v1712, 1
    %v1714 = vmax.f32 %v1712, %v1713
    %v1715 = vrot.slane %v359, 4
    %v1716 = vmax.f32 %v359, %v1715
    %v1717 = vrot.slane %v1716, 2
    %v1718 = vmax.f32 %v1716, %v1717
    %v1719 = vrot.slane %v1718, 1
    %v1720 = vmax.f32 %v1718, %v1719
    %v1721 = vrot.slane %v360, 4
    %v1722 = vmax.f32 %v360, %v1721
    %v1723 = vrot.slane %v1722, 2
    %v1724 = vmax.f32 %v1722, %v1723
    %v1725 = vrot.slane %v1724, 1
    %v1726 = vmax.f32 %v1724, %v1725
    %v1727 = vrot.slane %v361, 4
    %v1728 = vmax.f32 %v361, %v1727
    %v1729 = vrot.slane %v1728, 2
    %v1730 = vmax.f32 %v1728, %v1729
    %v1731 = vrot.slane %v1730, 1
    %v1732 = vmax.f32 %v1730, %v1731
    %v1733 = vrot.slane %v362, 4
    %v1734 = vmax.f32 %v362, %v1733
    %v1735 = vrot.slane %v1734, 2
    %v1736 = vmax.f32 %v1734, %v1735
    %v1737 = vrot.slane %v1736, 1
    %v1738 = vmax.f32 %v1736, %v1737
    %v1739 = vrot.slane %v363, 4
    %v1740 = vmax.f32 %v363, %v1739
    %v1741 = vrot.slane %v1740, 2
    %v1742 = vmax.f32 %v1740, %v1741
    %v1743 = vrot.slane %v1742, 1
    %v1744 = vmax.f32 %v1742, %v1743
    %v1745 = vrot.slane %v364, 4
    %v1746 = vmax.f32 %v364, %v1745
    %v1747 = vrot.slane %v1746, 2
    %v1748 = vmax.f32 %v1746, %v1747
    %v1749 = vrot.slane %v1748, 1
    %v1750 = vmax.f32 %v1748, %v1749
    %v1751 = vrot.slane %v365, 4
    %v1752 = vmax.f32 %v365, %v1751
    %v1753 = vrot.slane %v1752, 2
    %v1754 = vmax.f32 %v1752, %v1753
    %v1755 = vrot.slane %v1754, 1
    %v1756 = vmax.f32 %v1754, %v1755
    %v1757 = vrot.slane %v366, 4
    %v1758 = vmax.f32 %v366, %v1757
    %v1759 = vrot.slane %v1758, 2
    %v1760 = vmax.f32 %v1758, %v1759
    %v1761 = vrot.slane %v1760, 1
    %v1762 = vmax.f32 %v1760, %v1761
    %v1763 = vrot.slane %v367, 4
    %v1764 = vmax.f32 %v367, %v1763
    %v1765 = vrot.slane %v1764, 2
    %v1766 = vmax.f32 %v1764, %v1765
    %v1767 = vrot.slane %v1766, 1
    %v1768 = vmax.f32 %v1766, %v1767
    %v1769 = vrot.slane %v368, 4
    %v1770 = vmax.f32 %v368, %v1769
    %v1771 = vrot.slane %v1770, 2
    %v1772 = vmax.f32 %v1770, %v1771
    %v1773 = vrot.slane %v1772, 1
    %v1774 = vmax.f32 %v1772, %v1773
    %v1775 = vrot.slane %v369, 4
    %v1776 = vmax.f32 %v369, %v1775
    %v1777 = vrot.slane %v1776, 2
    %v1778 = vmax.f32 %v1776, %v1777
    %v1779 = vrot.slane %v1778, 1
    %v1780 = vmax.f32 %v1778, %v1779
    %v1781 = vrot.slane %v370, 4
    %v1782 = vmax.f32 %v370, %v1781
    %v1783 = vrot.slane %v1782, 2
    %v1784 = vmax.f32 %v1782, %v1783
    %v1785 = vrot.slane %v1784, 1
    %v1786 = vmax.f32 %v1784, %v1785
    %v1787 = vrot.slane %v371, 4
    %v1788 = vmax.f32 %v371, %v1787
    %v1789 = vrot.slane %v1788, 2
    %v1790 = vmax.f32 %v1788, %v1789
    %v1791 = vrot.slane %v1790, 1
    %v1792 = vmax.f32 %v1790, %v1791
    %v1793 = vrot.slane %v372, 4
    %v1794 = vmax.f32 %v372, %v1793
    %v1795 = vrot.slane %v1794, 2
    %v1796 = vmax.f32 %v1794, %v1795
    %v1797 = vrot.slane %v1796, 1
    %v1798 = vmax.f32 %v1796, %v1797
    %v1799 = vrot.slane %v373, 4
    %v1800 = vmax.f32 %v373, %v1799
    %v1801 = vrot.slane %v1800, 2
    %v1802 = vmax.f32 %v1800, %v1801
    %v1803 = vrot.slane %v1802, 1
    %v1804 = vmax.f32 %v1802, %v1803
    %v1805 = vrot.slane %v374, 4
    %v1806 = vmax.f32 %v374, %v1805
    %v1807 = vrot.slane %v1806, 2
    %v1808 = vmax.f32 %v1806, %v1807
    %v1809 = vrot.slane %v1808, 1
    %v1810 = vmax.f32 %v1808, %v1809
    %v1811 = vrot.slane %v375, 4
    %v1812 = vmax.f32 %v375, %v1811
    %v1813 = vrot.slane %v1812, 2
    %v1814 = vmax.f32 %v1812, %v1813
    %v1815 = vrot.slane %v1814, 1
    %v1816 = vmax.f32 %v1814, %v1815
    %v1817 = vrot.slane %v376, 4
    %v1818 = vmax.f32 %v376, %v1817
    %v1819 = vrot.slane %v1818, 2
    %v1820 = vmax.f32 %v1818, %v1819
    %v1821 = vrot.slane %v1820, 1
    %v1822 = vmax.f32 %v1820, %v1821
    %v1823 = vrot.slane %v377, 4
    %v1824 = vmax.f32 %v377, %v1823
    %v1825 = vrot.slane %v1824, 2
    %v1826 = vmax.f32 %v1824, %v1825
    %v1827 = vrot.slane %v1826, 1
    %v1828 = vmax.f32 %v1826, %v1827
    %v1829 = vrot.slane %v378, 4
    %v1830 = vmax.f32 %v378, %v1829
    %v1831 = vrot.slane %v1830, 2
    %v1832 = vmax.f32 %v1830, %v1831
    %v1833 = vrot.slane %v1832, 1
    %v1834 = vmax.f32 %v1832, %v1833
    %v1835 = vrot.slane %v379, 4
    %v1836 = vmax.f32 %v379, %v1835
    %v1837 = vrot.slane %v1836, 2
    %v1838 = vmax.f32 %v1836, %v1837
    %v1839 = vrot.slane %v1838, 1
    %v1840 = vmax.f32 %v1838, %v1839
    %v1841 = vrot.slane %v380, 4
    %v1842 = vmax.f32 %v380, %v1841
    %v1843 = vrot.slane %v1842, 2
    %v1844 = vmax.f32 %v1842, %v1843
    %v1845 = vrot.slane %v1844, 1
    %v1846 = vmax.f32 %v1844, %v1845
    %v1847 = vrot.slane %v381, 4
    %v1848 = vmax.f32 %v381, %v1847
    %v1849 = vrot.slane %v1848, 2
    %v1850 = vmax.f32 %v1848, %v1849
    %v1851 = vrot.slane %v1850, 1
    %v1852 = vmax.f32 %v1850, %v1851
    %v1853 = vrot.slane %v382, 4
    %v1854 = vmax.f32 %v382, %v1853
    %v1855 = vrot.slane %v1854, 2
    %v1856 = vmax.f32 %v1854, %v1855
    %v1857 = vrot.slane %v1856, 1
    %v1858 = vmax.f32 %v1856, %v1857
    %v1859 = vrot.slane %v383, 4
    %v1860 = vmax.f32 %v383, %v1859
    %v1861 = vrot.slane %v1860, 2
    %v1862 = vmax.f32 %v1860, %v1861
    %v1863 = vrot.slane %v1862, 1
    %v1864 = vmax.f32 %v1862, %v1863
    %v1865 = vrot.slane %v384, 4
    %v1866 = vmax.f32 %v384, %v1865
    %v1867 = vrot.slane %v1866, 2
    %v1868 = vmax.f32 %v1866, %v1867
    %v1869 = vrot.slane %v1868, 1
    %v1870 = vmax.f32 %v1868, %v1869
    %v1871 = vrot.slane %v385, 4
    %v1872 = vmax.f32 %v385, %v1871
    %v1873 = vrot.slane %v1872, 2
    %v1874 = vmax.f32 %v1872, %v1873
    %v1875 = vrot.slane %v1874, 1
    %v1876 = vmax.f32 %v1874, %v1875
    %v1877 = vrot.slane %v386, 4
    %v1878 = vmax.f32 %v386, %v1877
    %v1879 = vrot.slane %v1878, 2
    %v1880 = vmax.f32 %v1878, %v1879
    %v1881 = vrot.slane %v1880, 1
    %v1882 = vmax.f32 %v1880, %v1881
    %v1883 = vrot.slane %v387, 4
    %v1884 = vmax.f32 %v387, %v1883
    %v1885 = vrot.slane %v1884, 2
    %v1886 = vmax.f32 %v1884, %v1885
    %v1887 = vrot.slane %v1886, 1
    %v1888 = vmax.f32 %v1886, %v1887
    %v1889 = vrot.slane %v388, 4
    %v1890 = vmax.f32 %v388, %v1889
    %v1891 = vrot.slane %v1890, 2
    %v1892 = vmax.f32 %v1890, %v1891
    %v1893 = vrot.slane %v1892, 1
    %v1894 = vmax.f32 %v1892, %v1893
    %v1895 = vrot.slane %v389, 4
    %v1896 = vmax.f32 %v389, %v1895
    %v1897 = vrot.slane %v1896, 2
    %v1898 = vmax.f32 %v1896, %v1897
    %v1899 = vrot.slane %v1898, 1
    %v1900 = vmax.f32 %v1898, %v1899
    %v1901 = vrot.slane %v390, 4
    %v1902 = vmax.f32 %v390, %v1901
    %v1903 = vrot.slane %v1902, 2
    %v1904 = vmax.f32 %v1902, %v1903
    %v1905 = vrot.slane %v1904, 1
    %v1906 = vmax.f32 %v1904, %v1905
    %v1907 = vrot.slane %v391, 4
    %v1908 = vmax.f32 %v391, %v1907
    %v1909 = vrot.slane %v1908, 2
    %v1910 = vmax.f32 %v1908, %v1909
    %v1911 = vrot.slane %v1910, 1
    %v1912 = vmax.f32 %v1910, %v1911
    %v1913 = vrot.slane %v392, 4
    %v1914 = vmax.f32 %v392, %v1913
    %v1915 = vrot.slane %v1914, 2
    %v1916 = vmax.f32 %v1914, %v1915
    %v1917 = vrot.slane %v1916, 1
    %v1918 = vmax.f32 %v1916, %v1917
    %v1919 = vrot.slane %v393, 4
    %v1920 = vmax.f32 %v393, %v1919
    %v1921 = vrot.slane %v1920, 2
    %v1922 = vmax.f32 %v1920, %v1921
    %v1923 = vrot.slane %v1922, 1
    %v1924 = vmax.f32 %v1922, %v1923
    %v1925 = vrot.slane %v394, 4
    %v1926 = vmax.f32 %v394, %v1925
    %v1927 = vrot.slane %v1926, 2
    %v1928 = vmax.f32 %v1926, %v1927
    %v1929 = vrot.slane %v1928, 1
    %v1930 = vmax.f32 %v1928, %v1929
    %v1931 = vsub.f32 %v139, %v400
    %v1932 = vsub.f32 %v140, %v406
    %v1933 = vsub.f32 %v141, %v412
    %v1934 = vsub.f32 %v142, %v418
    %v1935 = vsub.f32 %v143, %v424
    %v1936 = vsub.f32 %v144, %v430
    %v1937 = vsub.f32 %v145, %v436
    %v1938 = vsub.f32 %v146, %v442
    %v1939 = vsub.f32 %v147, %v448
    %v1940 = vsub.f32 %v148, %v454
    %v1941 = vsub.f32 %v149, %v460
    %v1942 = vsub.f32 %v150, %v466
    %v1943 = vsub.f32 %v151, %v472
    %v1944 = vsub.f32 %v152, %v478
    %v1945 = vsub.f32 %v153, %v484
    %v1946 = vsub.f32 %v154, %v490
    %v1947 = vsub.f32 %v155, %v496
    %v1948 = vsub.f32 %v156, %v502
    %v1949 = vsub.f32 %v157, %v508
    %v1950 = vsub.f32 %v158, %v514
    %v1951 = vsub.f32 %v159, %v520
    %v1952 = vsub.f32 %v160, %v526
    %v1953 = vsub.f32 %v161, %v532
    %v1954 = vsub.f32 %v162, %v538
    %v1955 = vsub.f32 %v163, %v544
    %v1956 = vsub.f32 %v164, %v550
    %v1957 = vsub.f32 %v165, %v556
    %v1958 = vsub.f32 %v166, %v562
    %v1959 = vsub.f32 %v167, %v568
    %v1960 = vsub.f32 %v168, %v574
    %v1961 = vsub.f32 %v169, %v580
    %v1962 = vsub.f32 %v170, %v586
    %v1963 = vsub.f32 %v171, %v592
    %v1964 = vsub.f32 %v172, %v598
    %v1965 = vsub.f32 %v173, %v604
    %v1966 = vsub.f32 %v174, %v610
    %v1967 = vsub.f32 %v175, %v616
    %v1968 = vsub.f32 %v176, %v622
    %v1969 = vsub.f32 %v177, %v628
    %v1970 = vsub.f32 %v178, %v634
    %v1971 = vsub.f32 %v179, %v640
    %v1972 = vsub.f32 %v180, %v646
    %v1973 = vsub.f32 %v181, %v652
    %v1974 = vsub.f32 %v182, %v658
    %v1975 = vsub.f32 %v183, %v664
    %v1976 = vsub.f32 %v184, %v670
    %v1977 = vsub.f32 %v185, %v676
    %v1978 = vsub.f32 %v186, %v682
    %v1979 = vsub.f32 %v187, %v688
    %v1980 = vsub.f32 %v188, %v694
    %v1981 = vsub.f32 %v189, %v700
    %v1982 = vsub.f32 %v190, %v706
    %v1983 = vsub.f32 %v191, %v712
    %v1984 = vsub.f32 %v192, %v718
    %v1985 = vsub.f32 %v193, %v724
    %v1986 = vsub.f32 %v194, %v730
    %v1987 = vsub.f32 %v195, %v736
    %v1988 = vsub.f32 %v196, %v742
    %v1989 = vsub.f32 %v197, %v748
    %v1990 = vsub.f32 %v198, %v754
    %v1991 = vsub.f32 %v199, %v760
    %v1992 = vsub.f32 %v200, %v766
    %v1993 = vsub.f32 %v201, %v772
    %v1994 = vsub.f32 %v202, %v778
    %v1995 = vsub.f32 %v203, %v784
    %v1996 = vsub.f32 %v204, %v790
    %v1997 = vsub.f32 %v205, %v796
    %v1998 = vsub.f32 %v206, %v802
    %v1999 = vsub.f32 %v207, %v808
    %v2000 = vsub.f32 %v208, %v814
    %v2001 = vsub.f32 %v209, %v820
    %v2002 = vsub.f32 %v210, %v826
    %v2003 = vsub.f32 %v211, %v832
    %v2004 = vsub.f32 %v212, %v838
    %v2005 = vsub.f32 %v213, %v844
    %v2006 = vsub.f32 %v214, %v850
    %v2007 = vsub.f32 %v215, %v856
    %v2008 = vsub.f32 %v216, %v862
    %v2009 = vsub.f32 %v217, %v868
    %v2010 = vsub.f32 %v218, %v874
    %v2011 = vsub.f32 %v219, %v880
    %v2012 = vsub.f32 %v220, %v886
    %v2013 = vsub.f32 %v221, %v892
    %v2014 = vsub.f32 %v222, %v898
    %v2015 = vsub.f32 %v223, %v904
    %v2016 = vsub.f32 %v224, %v910
    %v2017 = vsub.f32 %v225, %v916
    %v2018 = vsub.f32 %v226, %v922
    %v2019 = vsub.f32 %v227, %v928
    %v2020 = vsub.f32 %v228, %v934
    %v2021 = vsub.f32 %v229, %v940
    %v2022 = vsub.f32 %v230, %v946
    %v2023 = vsub.f32 %v231, %v952
    %v2024 = vsub.f32 %v232, %v958
    %v2025 = vsub.f32 %v233, %v964
    %v2026 = vsub.f32 %v234, %v970
    %v2027 = vsub.f32 %v235, %v976
    %v2028 = vsub.f32 %v236, %v982
    %v2029 = vsub.f32 %v237, %v988
    %v2030 = vsub.f32 %v238, %v994
    %v2031 = vsub.f32 %v239, %v1000
    %v2032 = vsub.f32 %v240, %v1006
    %v2033 = vsub.f32 %v241, %v1012
    %v2034 = vsub.f32 %v242, %v1018
    %v2035 = vsub.f32 %v243, %v1024
    %v2036 = vsub.f32 %v244, %v1030
    %v2037 = vsub.f32 %v245, %v1036
    %v2038 = vsub.f32 %v246, %v1042
    %v2039 = vsub.f32 %v247, %v1048
    %v2040 = vsub.f32 %v248, %v1054
    %v2041 = vsub.f32 %v249, %v1060
    %v2042 = vsub.f32 %v250, %v1066
    %v2043 = vsub.f32 %v251, %v1072
    %v2044 = vsub.f32 %v252, %v1078
    %v2045 = vsub.f32 %v253, %v1084
    %v2046 = vsub.f32 %v254, %v1090
    %v2047 = vsub.f32 %v255, %v1096
    %v2048 = vsub.f32 %v256, %v1102
    %v2049 = vsub.f32 %v257, %v1108
    %v2050 = vsub.f32 %v258, %v1114
    %v2051 = vsub.f32 %v259, %v1120
    %v2052 = vsub.f32 %v260, %v1126
    %v2053 = vsub.f32 %v261, %v1132
    %v2054 = vsub.f32 %v262, %v1138
    %v2055 = vsub.f32 %v263, %v1144
    %v2056 = vsub.f32 %v264, %v1150
    %v2057 = vsub.f32 %v265, %v1156
    %v2058 = vsub.f32 %v266, %v1162
    %v2059 = vsub.f32 %v267, %v1168
    %v2060 = vsub.f32 %v268, %v1174
    %v2061 = vsub.f32 %v269, %v1180
    %v2062 = vsub.f32 %v270, %v1186
    %v2063 = vsub.f32 %v271, %v1192
    %v2064 = vsub.f32 %v272, %v1198
    %v2065 = vsub.f32 %v273, %v1204
    %v2066 = vsub.f32 %v274, %v1210
    %v2067 = vsub.f32 %v275, %v1216
    %v2068 = vsub.f32 %v276, %v1222
    %v2069 = vsub.f32 %v277, %v1228
    %v2070 = vsub.f32 %v278, %v1234
    %v2071 = vsub.f32 %v279, %v1240
    %v2072 = vsub.f32 %v280, %v1246
    %v2073 = vsub.f32 %v281, %v1252
    %v2074 = vsub.f32 %v282, %v1258
    %v2075 = vsub.f32 %v283, %v1264
    %v2076 = vsub.f32 %v284, %v1270
    %v2077 = vsub.f32 %v285, %v1276
    %v2078 = vsub.f32 %v286, %v1282
    %v2079 = vsub.f32 %v287, %v1288
    %v2080 = vsub.f32 %v288, %v1294
    %v2081 = vsub.f32 %v289, %v1300
    %v2082 = vsub.f32 %v290, %v1306
    %v2083 = vsub.f32 %v291, %v1312
    %v2084 = vsub.f32 %v292, %v1318
    %v2085 = vsub.f32 %v293, %v1324
    %v2086 = vsub.f32 %v294, %v1330
    %v2087 = vsub.f32 %v295, %v1336
    %v2088 = vsub.f32 %v296, %v1342
    %v2089 = vsub.f32 %v297, %v1348
    %v2090 = vsub.f32 %v298, %v1354
    %v2091 = vsub.f32 %v299, %v1360
    %v2092 = vsub.f32 %v300, %v1366
    %v2093 = vsub.f32 %v301, %v1372
    %v2094 = vsub.f32 %v302, %v1378
    %v2095 = vsub.f32 %v303, %v1384
    %v2096 = vsub.f32 %v304, %v1390
    %v2097 = vsub.f32 %v305, %v1396
    %v2098 = vsub.f32 %v306, %v1402
    %v2099 = vsub.f32 %v307, %v1408
    %v2100 = vsub.f32 %v308, %v1414
    %v2101 = vsub.f32 %v309, %v1420
    %v2102 = vsub.f32 %v310, %v1426
    %v2103 = vsub.f32 %v311, %v1432
    %v2104 = vsub.f32 %v312, %v1438
    %v2105 = vsub.f32 %v313, %v1444
    %v2106 = vsub.f32 %v314, %v1450
    %v2107 = vsub.f32 %v315, %v1456
    %v2108 = vsub.f32 %v316, %v1462
    %v2109 = vsub.f32 %v317, %v1468
    %v2110 = vsub.f32 %v318, %v1474
    %v2111 = vsub.f32 %v319, %v1480
    %v2112 = vsub.f32 %v320, %v1486
    %v2113 = vsub.f32 %v321, %v1492
    %v2114 = vsub.f32 %v322, %v1498
    %v2115 = vsub.f32 %v323, %v1504
    %v2116 = vsub.f32 %v324, %v1510
    %v2117 = vsub.f32 %v325, %v1516
    %v2118 = vsub.f32 %v326, %v1522
    %v2119 = vsub.f32 %v327, %v1528
    %v2120 = vsub.f32 %v328, %v1534
    %v2121 = vsub.f32 %v329, %v1540
    %v2122 = vsub.f32 %v330, %v1546
    %v2123 = vsub.f32 %v331, %v1552
    %v2124 = vsub.f32 %v332, %v1558
    %v2125 = vsub.f32 %v333, %v1564
    %v2126 = vsub.f32 %v334, %v1570
    %v2127 = vsub.f32 %v335, %v1576
    %v2128 = vsub.f32 %v336, %v1582
    %v2129 = vsub.f32 %v337, %v1588
    %v2130 = vsub.f32 %v338, %v1594
    %v2131 = vsub.f32 %v339, %v1600
    %v2132 = vsub.f32 %v340, %v1606
    %v2133 = vsub.f32 %v341, %v1612
    %v2134 = vsub.f32 %v342, %v1618
    %v2135 = vsub.f32 %v343, %v1624
    %v2136 = vsub.f32 %v344, %v1630
    %v2137 = vsub.f32 %v345, %v1636
    %v2138 = vsub.f32 %v346, %v1642
    %v2139 = vsub.f32 %v347, %v1648
    %v2140 = vsub.f32 %v348, %v1654
    %v2141 = vsub.f32 %v349, %v1660
    %v2142 = vsub.f32 %v350, %v1666
    %v2143 = vsub.f32 %v351, %v1672
    %v2144 = vsub.f32 %v352, %v1678
    %v2145 = vsub.f32 %v353, %v1684
    %v2146 = vsub.f32 %v354, %v1690
    %v2147 = vsub.f32 %v355, %v1696
    %v2148 = vsub.f32 %v356, %v1702
    %v2149 = vsub.f32 %v357, %v1708
    %v2150 = vsub.f32 %v358, %v1714
    %v2151 = vsub.f32 %v359, %v1720
    %v2152 = vsub.f32 %v360, %v1726
    %v2153 = vsub.f32 %v361, %v1732
    %v2154 = vsub.f32 %v362, %v1738
    %v2155 = vsub.f32 %v363, %v1744
    %v2156 = vsub.f32 %v364, %v1750
    %v2157 = vsub.f32 %v365, %v1756
    %v2158 = vsub.f32 %v366, %v1762
    %v2159 = vsub.f32 %v367, %v1768
    %v2160 = vsub.f32 %v368, %v1774
    %v2161 = vsub.f32 %v369, %v1780
    %v2162 = vsub.f32 %v370, %v1786
    %v2163 = vsub.f32 %v371, %v1792
    %v2164 = vsub.f32 %v372, %v1798
    %v2165 = vsub.f32 %v373, %v1804
    %v2166 = vsub.f32 %v374, %v1810
    %v2167 = vsub.f32 %v375, %v1816
    %v2168 = vsub.f32 %v376, %v1822
    %v2169 = vsub.f32 %v377, %v1828
    %v2170 = vsub.f32 %v378, %v1834
    %v2171 = vsub.f32 %v379, %v1840
    %v2172 = vsub.f32 %v380, %v1846
    %v2173 = vsub.f32 %v381, %v1852
    %v2174 = vsub.f32 %v382, %v1858
    %v2175 = vsub.f32 %v383, %v1864
    %v2176 = vsub.f32 %v384, %v1870
    %v2177 = vsub.f32 %v385, %v1876
    %v2178 = vsub.f32 %v386, %v1882
    %v2179 = vsub.f32 %v387, %v1888
    %v2180 = vsub.f32 %v388, %v1894
    %v2181 = vsub.f32 %v389, %v1900
    %v2182 = vsub.f32 %v390, %v1906
    %v2183 = vsub.f32 %v391, %v1912
    %v2184 = vsub.f32 %v392, %v1918
    %v2185 = vsub.f32 %v393, %v1924
    %v2186 = vsub.f32 %v394, %v1930
    %v2187 = vmul.f32 %v1931, 1.442695
    %v2188 = vpow.pop %v2187
    %v2189 = vmul.f32 %v1932, 1.442695
    %v2190 = vpow.pop %v2189
    %v2191 = vmul.f32 %v1933, 1.442695
    %v2192 = vpow.pop %v2191
    %v2193 = vmul.f32 %v1934, 1.442695
    %v2194 = vpow.pop %v2193
    %v2195 = vmul.f32 %v1935, 1.442695
    %v2196 = vpow.pop %v2195
    %v2197 = vmul.f32 %v1936, 1.442695
    %v2198 = vpow.pop %v2197
    %v2199 = vmul.f32 %v1937, 1.442695
    %v2200 = vpow.pop %v2199
    %v2201 = vmul.f32 %v1938, 1.442695
    %v2202 = vpow.pop %v2201
    %v2203 = vmul.f32 %v1939, 1.442695
    %v2204 = vpow.pop %v2203
    %v2205 = vmul.f32 %v1940, 1.442695
    %v2206 = vpow.pop %v2205
    %v2207 = vmul.f32 %v1941, 1.442695
    %v2208 = vpow.pop %v2207
    %v2209 = vmul.f32 %v1942, 1.442695
    %v2210 = vpow.pop %v2209
    %v2211 = vmul.f32 %v1943, 1.442695
    %v2212 = vpow.pop %v2211
    %v2213 = vmul.f32 %v1944, 1.442695
    %v2214 = vpow.pop %v2213
    %v2215 = vmul.f32 %v1945, 1.442695
    %v2216 = vpow.pop %v2215
    %v2217 = vmul.f32 %v1946, 1.442695
    %v2218 = vpow.pop %v2217
    %v2219 = vmul.f32 %v1947, 1.442695
    %v2220 = vpow.pop %v2219
    %v2221 = vmul.f32 %v1948, 1.442695
    %v2222 = vpow.pop %v2221
    %v2223 = vmul.f32 %v1949, 1.442695
    %v2224 = vpow.pop %v2223
    %v2225 = vmul.f32 %v1950, 1.442695
    %v2226 = vpow.pop %v2225
    %v2227 = vmul.f32 %v1951, 1.442695
    %v2228 = vpow.pop %v2227
    %v2229 = vmul.f32 %v1952, 1.442695
    %v2230 = vpow.pop %v2229
    %v2231 = vmul.f32 %v1953, 1.442695
    %v2232 = vpow.pop %v2231
    %v2233 = vmul.f32 %v1954, 1.442695
    %v2234 = vpow.pop %v2233
    %v2235 = vmul.f32 %v1955, 1.442695
    %v2236 = vpow.pop %v2235
    %v2237 = vmul.f32 %v1956, 1.442695
    %v2238 = vpow.pop %v2237
    %v2239 = vmul.f32 %v1957, 1.442695
    %v2240 = vpow.pop %v2239
    %v2241 = vmul.f32 %v1958, 1.442695
    %v2242 = vpow.pop %v2241
    %v2243 = vmul.f32 %v1959, 1.442695
    %v2244 = vpow.pop %v2243
    %v2245 = vmul.f32 %v1960, 1.442695
    %v2246 = vpow.pop %v2245
    %v2247 = vmul.f32 %v1961, 1.442695
    %v2248 = vpow.pop %v2247
    %v2249 = vmul.f32 %v1962, 1.442695
    %v2250 = vpow.pop %v2249
    %v2251 = vmul.f32 %v1963, 1.442695
    %v2252 = vpow.pop %v2251
    %v2253 = vmul.f32 %v1964, 1.442695
    %v2254 = vpow.pop %v2253
    %v2255 = vmul.f32 %v1965, 1.442695
    %v2256 = vpow.pop %v2255
    %v2257 = vmul.f32 %v1966, 1.442695
    %v2258 = vpow.pop %v2257
    %v2259 = vmul.f32 %v1967, 1.442695
    %v2260 = vpow.pop %v2259
    %v2261 = vmul.f32 %v1968, 1.442695
    %v2262 = vpow.pop %v2261
    %v2263 = vmul.f32 %v1969, 1.442695
    %v2264 = vpow.pop %v2263
    %v2265 = vmul.f32 %v1970, 1.442695
    %v2266 = vpow.pop %v2265
    %v2267 = vmul.f32 %v1971, 1.442695
    %v2268 = vpow.pop %v2267
    %v2269 = vmul.f32 %v1972, 1.442695
    %v2270 = vpow.pop %v2269
    %v2271 = vmul.f32 %v1973, 1.442695
    %v2272 = vpow.pop %v2271
    %v2273 = vmul.f32 %v1974, 1.442695
    %v2274 = vpow.pop %v2273
    %v2275 = vmul.f32 %v1975, 1.442695
    %v2276 = vpow.pop %v2275
    %v2277 = vmul.f32 %v1976, 1.442695
    %v2278 = vpow.pop %v2277
    %v2279 = vmul.f32 %v1977, 1.442695
    %v2280 = vpow.pop %v2279
    %v2281 = vmul.f32 %v1978, 1.442695
    %v2282 = vpow.pop %v2281
    %v2283 = vmul.f32 %v1979, 1.442695
    %v2284 = vpow.pop %v2283
    %v2285 = vmul.f32 %v1980, 1.442695
    %v2286 = vpow.pop %v2285
    %v2287 = vmul.f32 %v1981, 1.442695
    %v2288 = vpow.pop %v2287
    %v2289 = vmul.f32 %v1982, 1.442695
    %v2290 = vpow.pop %v2289
    %v2291 = vmul.f32 %v1983, 1.442695
    %v2292 = vpow.pop %v2291
    %v2293 = vmul.f32 %v1984, 1.442695
    %v2294 = vpow.pop %v2293
    %v2295 = vmul.f32 %v1985, 1.442695
    %v2296 = vpow.pop %v2295
    %v2297 = vmul.f32 %v1986, 1.442695
    %v2298 = vpow.pop %v2297
    %v2299 = vmul.f32 %v1987, 1.442695
    %v2300 = vpow.pop %v2299
    %v2301 = vmul.f32 %v1988, 1.442695
    %v2302 = vpow.pop %v2301
    %v2303 = vmul.f32 %v1989, 1.442695
    %v2304 = vpow.pop %v2303
    %v2305 = vmul.f32 %v1990, 1.442695
    %v2306 = vpow.pop %v2305
    %v2307 = vmul.f32 %v1991, 1.442695
    %v2308 = vpow.pop %v2307
    %v2309 = vmul.f32 %v1992, 1.442695
    %v2310 = vpow.pop %v2309
    %v2311 = vmul.f32 %v1993, 1.442695
    %v2312 = vpow.pop %v2311
    %v2313 = vmul.f32 %v1994, 1.442695
    %v2314 = vpow.pop %v2313
    %v2315 = vmul.f32 %v1995, 1.442695
    %v2316 = vpow.pop %v2315
    %v2317 = vmul.f32 %v1996, 1.442695
    %v2318 = vpow.pop %v2317
    %v2319 = vmul.f32 %v1997, 1.442695
    %v2320 = vpow.pop %v2319
    %v2321 = vmul.f32 %v1998, 1.442695
    %v2322 = vpow.pop %v2321
    %v2323 = vmul.f32 %v1999, 1.442695
    %v2324 = vpow.pop %v2323
    %v2325 = vmul.f32 %v2000, 1.442695
    %v2326 = vpow.pop %v2325
    %v2327 = vmul.f32 %v2001, 1.442695
    %v2328 = vpow.pop %v2327
    %v2329 = vmul.f32 %v2002, 1.442695
    %v2330 = vpow.pop %v2329
    %v2331 = vmul.f32 %v2003, 1.442695
    %v2332 = vpow.pop %v2331
    %v2333 = vmul.f32 %v2004, 1.442695
    %v2334 = vpow.pop %v2333
    %v2335 = vmul.f32 %v2005, 1.442695
    %v2336 = vpow.pop %v2335
    %v2337 = vmul.f32 %v2006, 1.442695
    %v2338 = vpow.pop %v2337
    %v2339 = vmul.f32 %v2007, 1.442695
    %v2340 = vpow.pop %v2339
    %v2341 = vmul.f32 %v2008, 1.442695
    %v2342 = vpow.pop %v2341
    %v2343 = vmul.f32 %v2009, 1.442695
    %v2344 = vpow.pop %v2343
    %v2345 = vmul.f32 %v2010, 1.442695
    %v2346 = vpow.pop %v2345
    %v2347 = vmul.f32 %v2011, 1.442695
    %v2348 = vpow.pop %v2347
    %v2349 = vmul.f32 %v2012, 1.442695
    %v2350 = vpow.pop %v2349
    %v2351 = vmul.f32 %v2013, 1.442695
    %v2352 = vpow.pop %v2351
    %v2353 = vmul.f32 %v2014, 1.442695
    %v2354 = vpow.pop %v2353
    %v2355 = vmul.f32 %v2015, 1.442695
    %v2356 = vpow.pop %v2355
    %v2357 = vmul.f32 %v2016, 1.442695
    %v2358 = vpow.pop %v2357
    %v2359 = vmul.f32 %v2017, 1.442695
    %v2360 = vpow.pop %v2359
    %v2361 = vmul.f32 %v2018, 1.442695
    %v2362 = vpow.pop %v2361
    %v2363 = vmul.f32 %v2019, 1.442695
    %v2364 = vpow.pop %v2363
    %v2365 = vmul.f32 %v2020, 1.442695
    %v2366 = vpow.pop %v2365
    %v2367 = vmul.f32 %v2021, 1.442695
    %v2368 = vpow.pop %v2367
    %v2369 = vmul.f32 %v2022, 1.442695
    %v2370 = vpow.pop %v2369
    %v2371 = vmul.f32 %v2023, 1.442695
    %v2372 = vpow.pop %v2371
    %v2373 = vmul.f32 %v2024, 1.442695
    %v2374 = vpow.pop %v2373
    %v2375 = vmul.f32 %v2025, 1.442695
    %v2376 = vpow.pop %v2375
    %v2377 = vmul.f32 %v2026, 1.442695
    %v2378 = vpow.pop %v2377
    %v2379 = vmul.f32 %v2027, 1.442695
    %v2380 = vpow.pop %v2379
    %v2381 = vmul.f32 %v2028, 1.442695
    %v2382 = vpow.pop %v2381
    %v2383 = vmul.f32 %v2029, 1.442695
    %v2384 = vpow.pop %v2383
    %v2385 = vmul.f32 %v2030, 1.442695
    %v2386 = vpow.pop %v2385
    %v2387 = vmul.f32 %v2031, 1.442695
    %v2388 = vpow.pop %v2387
    %v2389 = vmul.f32 %v2032, 1.442695
    %v2390 = vpow.pop %v2389
    %v2391 = vmul.f32 %v2033, 1.442695
    %v2392 = vpow.pop %v2391
    %v2393 = vmul.f32 %v2034, 1.442695
    %v2394 = vpow.pop %v2393
    %v2395 = vmul.f32 %v2035, 1.442695
    %v2396 = vpow.pop %v2395
    %v2397 = vmul.f32 %v2036, 1.442695
    %v2398 = vpow.pop %v2397
    %v2399 = vmul.f32 %v2037, 1.442695
    %v2400 = vpow.pop %v2399
    %v2401 = vmul.f32 %v2038, 1.442695
    %v2402 = vpow.pop %v2401
    %v2403 = vmul.f32 %v2039, 1.442695
    %v2404 = vpow.pop %v2403
    %v2405 = vmul.f32 %v2040, 1.442695
    %v2406 = vpow.pop %v2405
    %v2407 = vmul.f32 %v2041, 1.442695
    %v2408 = vpow.pop %v2407
    %v2409 = vmul.f32 %v2042, 1.442695
    %v2410 = vpow.pop %v2409
    %v2411 = vmul.f32 %v2043, 1.442695
    %v2412 = vpow.pop %v2411
    %v2413 = vmul.f32 %v2044, 1.442695
    %v2414 = vpow.pop %v2413
    %v2415 = vmul.f32 %v2045, 1.442695
    %v2416 = vpow.pop %v2415
    %v2417 = vmul.f32 %v2046, 1.442695
    %v2418 = vpow.pop %v2417
    %v2419 = vmul.f32 %v2047, 1.442695
    %v2420 = vpow.pop %v2419
    %v2421 = vmul.f32 %v2048, 1.442695
    %v2422 = vpow.pop %v2421
    %v2423 = vmul.f32 %v2049, 1.442695
    %v2424 = vpow.pop %v2423
    %v2425 = vmul.f32 %v2050, 1.442695
    %v2426 = vpow.pop %v2425
    %v2427 = vmul.f32 %v2051, 1.442695
    %v2428 = vpow.pop %v2427
    %v2429 = vmul.f32 %v2052, 1.442695
    %v2430 = vpow.pop %v2429
    %v2431 = vmul.f32 %v2053, 1.442695
    %v2432 = vpow.pop %v2431
    %v2433 = vmul.f32 %v2054, 1.442695
    %v2434 = vpow.pop %v2433
    %v2435 = vmul.f32 %v2055, 1.442695
    %v2436 = vpow.pop %v2435
    %v2437 = vmul.f32 %v2056, 1.442695
    %v2438 = vpow.pop %v2437
    %v2439 = vmul.f32 %v2057, 1.442695
    %v2440 = vpow.pop %v2439
    %v2441 = vmul.f32 %v2058, 1.442695
    %v2442 = vpow.pop %v2441
    %v2443 = vmul.f32 %v2059, 1.442695
    %v2444 = vpow.pop %v2443
    %v2445 = vmul.f32 %v2060, 1.442695
    %v2446 = vpow.pop %v2445
    %v2447 = vmul.f32 %v2061, 1.442695
    %v2448 = vpow.pop %v2447
    %v2449 = vmul.f32 %v2062, 1.442695
    %v2450 = vpow.pop %v2449
    %v2451 = vmul.f32 %v2063, 1.442695
    %v2452 = vpow.pop %v2451
    %v2453 = vmul.f32 %v2064, 1.442695
    %v2454 = vpow.pop %v2453
    %v2455 = vmul.f32 %v2065, 1.442695
    %v2456 = vpow.pop %v2455
    %v2457 = vmul.f32 %v2066, 1.442695
    %v2458 = vpow.pop %v2457
    %v2459 = vmul.f32 %v2067, 1.442695
    %v2460 = vpow.pop %v2459
    %v2461 = vmul.f32 %v2068, 1.442695
    %v2462 = vpow.pop %v2461
    %v2463 = vmul.f32 %v2069, 1.442695
    %v2464 = vpow.pop %v2463
    %v2465 = vmul.f32 %v2070, 1.442695
    %v2466 = vpow.pop %v2465
    %v2467 = vmul.f32 %v2071, 1.442695
    %v2468 = vpow.pop %v2467
    %v2469 = vmul.f32 %v2072, 1.442695
    %v2470 = vpow.pop %v2469
    %v2471 = vmul.f32 %v2073, 1.442695
    %v2472 = vpow.pop %v2471
    %v2473 = vmul.f32 %v2074, 1.442695
    %v2474 = vpow.pop %v2473
    %v2475 = vmul.f32 %v2075, 1.442695
    %v2476 = vpow.pop %v2475
    %v2477 = vmul.f32 %v2076, 1.442695
    %v2478 = vpow.pop %v2477
    %v2479 = vmul.f32 %v2077, 1.442695
    %v2480 = vpow.pop %v2479
    %v2481 = vmul.f32 %v2078, 1.442695
    %v2482 = vpow.pop %v2481
    %v2483 = vmul.f32 %v2079, 1.442695
    %v2484 = vpow.pop %v2483
    %v2485 = vmul.f32 %v2080, 1.442695
    %v2486 = vpow.pop %v2485
    %v2487 = vmul.f32 %v2081, 1.442695
    %v2488 = vpow.pop %v2487
    %v2489 = vmul.f32 %v2082, 1.442695
    %v2490 = vpow.pop %v2489
    %v2491 = vmul.f32 %v2083, 1.442695
    %v2492 = vpow.pop %v2491
    %v2493 = vmul.f32 %v2084, 1.442695
    %v2494 = vpow.pop %v2493
    %v2495 = vmul.f32 %v2085, 1.442695
    %v2496 = vpow.pop %v2495
    %v2497 = vmul.f32 %v2086, 1.442695
    %v2498 = vpow.pop %v2497
    %v2499 = vmul.f32 %v2087, 1.442695
    %v2500 = vpow.pop %v2499
    %v2501 = vmul.f32 %v2088, 1.442695
    %v2502 = vpow.pop %v2501
    %v2503 = vmul.f32 %v2089, 1.442695
    %v2504 = vpow.pop %v2503
    %v2505 = vmul.f32 %v2090, 1.442695
    %v2506 = vpow.pop %v2505
    %v2507 = vmul.f32 %v2091, 1.442695
    %v2508 = vpow.pop %v2507
    %v2509 = vmul.f32 %v2092, 1.442695
    %v2510 = vpow.pop %v2509
    %v2511 = vmul.f32 %v2093, 1.442695
    %v2512 = vpow.pop %v2511
    %v2513 = vmul.f32 %v2094, 1.442695
    %v2514 = vpow.pop %v2513
    %v2515 = vmul.f32 %v2095, 1.442695
    %v2516 = vpow.pop %v2515
    %v2517 = vmul.f32 %v2096, 1.442695
    %v2518 = vpow.pop %v2517
    %v2519 = vmul.f32 %v2097, 1.442695
    %v2520 = vpow.pop %v2519
    %v2521 = vmul.f32 %v2098, 1.442695
    %v2522 = vpow.pop %v2521
    %v2523 = vmul.f32 %v2099, 1.442695
    %v2524 = vpow.pop %v2523
    %v2525 = vmul.f32 %v2100, 1.442695
    %v2526 = vpow.pop %v2525
    %v2527 = vmul.f32 %v2101, 1.442695
    %v2528 = vpow.pop %v2527
    %v2529 = vmul.f32 %v2102, 1.442695
    %v2530 = vpow.pop %v2529
    %v2531 = vmul.f32 %v2103, 1.442695
    %v2532 = vpow.pop %v2531
    %v2533 = vmul.f32 %v2104, 1.442695
    %v2534 = vpow.pop %v2533
    %v2535 = vmul.f32 %v2105, 1.442695
    %v2536 = vpow.pop %v2535
    %v2537 = vmul.f32 %v2106, 1.442695
    %v2538 = vpow.pop %v2537
    %v2539 = vmul.f32 %v2107, 1.442695
    %v2540 = vpow.pop %v2539
    %v2541 = vmul.f32 %v2108, 1.442695
    %v2542 = vpow.pop %v2541
    %v2543 = vmul.f32 %v2109, 1.442695
    %v2544 = vpow.pop %v2543
    %v2545 = vmul.f32 %v2110, 1.442695
    %v2546 = vpow.pop %v2545
    %v2547 = vmul.f32 %v2111, 1.442695
    %v2548 = vpow.pop %v2547
    %v2549 = vmul.f32 %v2112, 1.442695
    %v2550 = vpow.pop %v2549
    %v2551 = vmul.f32 %v2113, 1.442695
    %v2552 = vpow.pop %v2551
    %v2553 = vmul.f32 %v2114, 1.442695
    %v2554 = vpow.pop %v2553
    %v2555 = vmul.f32 %v2115, 1.442695
    %v2556 = vpow.pop %v2555
    %v2557 = vmul.f32 %v2116, 1.442695
    %v2558 = vpow.pop %v2557
    %v2559 = vmul.f32 %v2117, 1.442695
    %v2560 = vpow.pop %v2559
    %v2561 = vmul.f32 %v2118, 1.442695
    %v2562 = vpow.pop %v2561
    %v2563 = vmul.f32 %v2119, 1.442695
    %v2564 = vpow.pop %v2563
    %v2565 = vmul.f32 %v2120, 1.442695
    %v2566 = vpow.pop %v2565
    %v2567 = vmul.f32 %v2121, 1.442695
    %v2568 = vpow.pop %v2567
    %v2569 = vmul.f32 %v2122, 1.442695
    %v2570 = vpow.pop %v2569
    %v2571 = vmul.f32 %v2123, 1.442695
    %v2572 = vpow.pop %v2571
    %v2573 = vmul.f32 %v2124, 1.442695
    %v2574 = vpow.pop %v2573
    %v2575 = vmul.f32 %v2125, 1.442695
    %v2576 = vpow.pop %v2575
    %v2577 = vmul.f32 %v2126, 1.442695
    %v2578 = vpow.pop %v2577
    %v2579 = vmul.f32 %v2127, 1.442695
    %v2580 = vpow.pop %v2579
    %v2581 = vmul.f32 %v2128, 1.442695
    %v2582 = vpow.pop %v2581
    %v2583 = vmul.f32 %v2129, 1.442695
    %v2584 = vpow.pop %v2583
    %v2585 = vmul.f32 %v2130, 1.442695
    %v2586 = vpow.pop %v2585
    %v2587 = vmul.f32 %v2131, 1.442695
    %v2588 = vpow.pop %v2587
    %v2589 = vmul.f32 %v2132, 1.442695
    %v2590 = vpow.pop %v2589
    %v2591 = vmul.f32 %v2133, 1.442695
    %v2592 = vpow.pop %v2591
    %v2593 = vmul.f32 %v2134, 1.442695
    %v2594 = vpow.pop %v2593
    %v2595 = vmul.f32 %v2135, 1.442695
    %v2596 = vpow.pop %v2595
    %v2597 = vmul.f32 %v2136, 1.442695
    %v2598 = vpow.pop %v2597
    %v2599 = vmul.f32 %v2137, 1.442695
    %v2600 = vpow.pop %v2599
    %v2601 = vmul.f32 %v2138, 1.442695
    %v2602 = vpow.pop %v2601
    %v2603 = vmul.f32 %v2139, 1.442695
    %v2604 = vpow.pop %v2603
    %v2605 = vmul.f32 %v2140, 1.442695
    %v2606 = vpow.pop %v2605
    %v2607 = vmul.f32 %v2141, 1.442695
    %v2608 = vpow.pop %v2607
    %v2609 = vmul.f32 %v2142, 1.442695
    %v2610 = vpow.pop %v2609
    %v2611 = vmul.f32 %v2143, 1.442695
    %v2612 = vpow.pop %v2611
    %v2613 = vmul.f32 %v2144, 1.442695
    %v2614 = vpow.pop %v2613
    %v2615 = vmul.f32 %v2145, 1.442695
    %v2616 = vpow.pop %v2615
    %v2617 = vmul.f32 %v2146, 1.442695
    %v2618 = vpow.pop %v2617
    %v2619 = vmul.f32 %v2147, 1.442695
    %v2620 = vpow.pop %v2619
    %v2621 = vmul.f32 %v2148, 1.442695
    %v2622 = vpow.pop %v2621
    %v2623 = vmul.f32 %v2149, 1.442695
    %v2624 = vpow.pop %v2623
    %v2625 = vmul.f32 %v2150, 1.442695
    %v2626 = vpow.pop %v2625
    %v2627 = vmul.f32 %v2151, 1.442695
    %v2628 = vpow.pop %v2627
    %v2629 = vmul.f32 %v2152, 1.442695
    %v2630 = vpow.pop %v2629
    %v2631 = vmul.f32 %v2153, 1.442695
    %v2632 = vpow.pop %v2631
    %v2633 = vmul.f32 %v2154, 1.442695
    %v2634 = vpow.pop %v2633
    %v2635 = vmul.f32 %v2155, 1.442695
    %v2636 = vpow.pop %v2635
    %v2637 = vmul.f32 %v2156, 1.442695
    %v2638 = vpow.pop %v2637
    %v2639 = vmul.f32 %v2157, 1.442695
    %v2640 = vpow.pop %v2639
    %v2641 = vmul.f32 %v2158, 1.442695
    %v2642 = vpow.pop %v2641
    %v2643 = vmul.f32 %v2159, 1.442695
    %v2644 = vpow.pop %v2643
    %v2645 = vmul.f32 %v2160, 1.442695
    %v2646 = vpow.pop %v2645
    %v2647 = vmul.f32 %v2161, 1.442695
    %v2648 = vpow.pop %v2647
    %v2649 = vmul.f32 %v2162, 1.442695
    %v2650 = vpow.pop %v2649
    %v2651 = vmul.f32 %v2163, 1.442695
    %v2652 = vpow.pop %v2651
    %v2653 = vmul.f32 %v2164, 1.442695
    %v2654 = vpow.pop %v2653
    %v2655 = vmul.f32 %v2165, 1.442695
    %v2656 = vpow.pop %v2655
    %v2657 = vmul.f32 %v2166, 1.442695
    %v2658 = vpow.pop %v2657
    %v2659 = vmul.f32 %v2167, 1.442695
    %v2660 = vpow.pop %v2659
    %v2661 = vmul.f32 %v2168, 1.442695
    %v2662 = vpow.pop %v2661
    %v2663 = vmul.f32 %v2169, 1.442695
    %v2664 = vpow.pop %v2663
    %v2665 = vmul.f32 %v2170, 1.442695
    %v2666 = vpow.pop %v2665
    %v2667 = vmul.f32 %v2171, 1.442695
    %v2668 = vpow.pop %v2667
    %v2669 = vmul.f32 %v2172, 1.442695
    %v2670 = vpow.pop %v2669
    %v2671 = vmul.f32 %v2173, 1.442695
    %v2672 = vpow.pop %v2671
    %v2673 = vmul.f32 %v2174, 1.442695
    %v2674 = vpow.pop %v2673
    %v2675 = vmul.f32 %v2175, 1.442695
    %v2676 = vpow.pop %v2675
    %v2677 = vmul.f32 %v2176, 1.442695
    %v2678 = vpow.pop %v2677
    %v2679 = vmul.f32 %v2177, 1.442695
    %v2680 = vpow.pop %v2679
    %v2681 = vmul.f32 %v2178, 1.442695
    %v2682 = vpow.pop %v2681
    %v2683 = vmul.f32 %v2179, 1.442695
    %v2684 = vpow.pop %v2683
    %v2685 = vmul.f32 %v2180, 1.442695
    %v2686 = vpow.pop %v2685
    %v2687 = vmul.f32 %v2181, 1.442695
    %v2688 = vpow.pop %v2687
    %v2689 = vmul.f32 %v2182, 1.442695
    %v2690 = vpow.pop %v2689
    %v2691 = vmul.f32 %v2183, 1.442695
    %v2692 = vpow.pop %v2691
    %v2693 = vmul.f32 %v2184, 1.442695
    %v2694 = vpow.pop %v2693
    %v2695 = vmul.f32 %v2185, 1.442695
    %v2696 = vpow.pop %v2695
    %v2697 = vmul.f32 %v2186, 1.442695
    %v2698 = vpow.pop %v2697
    %v2699 = vrot.slane %v2188, 4
    %v2700 = vadd.f32 %v2188, %v2699
    %v2701 = vrot.slane %v2700, 2
    %v2702 = vadd.f32 %v2700, %v2701
    %v2703 = vrot.slane %v2702, 1
    %v2704 = vadd.f32 %v2702, %v2703
    %v2705 = vrot.slane %v2190, 4
    %v2706 = vadd.f32 %v2190, %v2705
    %v2707 = vrot.slane %v2706, 2
    %v2708 = vadd.f32 %v2706, %v2707
    %v2709 = vrot.slane %v2708, 1
    %v2710 = vadd.f32 %v2708, %v2709
    %v2711 = vrot.slane %v2192, 4
    %v2712 = vadd.f32 %v2192, %v2711
    %v2713 = vrot.slane %v2712, 2
    %v2714 = vadd.f32 %v2712, %v2713
    %v2715 = vrot.slane %v2714, 1
    %v2716 = vadd.f32 %v2714, %v2715
    %v2717 = vrot.slane %v2194, 4
    %v2718 = vadd.f32 %v2194, %v2717
    %v2719 = vrot.slane %v2718, 2
    %v2720 = vadd.f32 %v2718, %v2719
    %v2721 = vrot.slane %v2720, 1
    %v2722 = vadd.f32 %v2720, %v2721
    %v2723 = vrot.slane %v2196, 4
    %v2724 = vadd.f32 %v2196, %v2723
    %v2725 = vrot.slane %v2724, 2
    %v2726 = vadd.f32 %v2724, %v2725
    %v2727 = vrot.slane %v2726, 1
    %v2728 = vadd.f32 %v2726, %v2727
    %v2729 = vrot.slane %v2198, 4
    %v2730 = vadd.f32 %v2198, %v2729
    %v2731 = vrot.slane %v2730, 2
    %v2732 = vadd.f32 %v2730, %v2731
    %v2733 = vrot.slane %v2732, 1
    %v2734 = vadd.f32 %v2732, %v2733
    %v2735 = vrot.slane %v2200, 4
    %v2736 = vadd.f32 %v2200, %v2735
    %v2737 = vrot.slane %v2736, 2
    %v2738 = vadd.f32 %v2736, %v2737
    %v2739 = vrot.slane %v2738, 1
    %v2740 = vadd.f32 %v2738, %v2739
    %v2741 = vrot.slane %v2202, 4
    %v2742 = vadd.f32 %v2202, %v2741
    %v2743 = vrot.slane %v2742, 2
    %v2744 = vadd.f32 %v2742, %v2743
    %v2745 = vrot.slane %v2744, 1
    %v2746 = vadd.f32 %v2744, %v2745
    %v2747 = vrot.slane %v2204, 4
    %v2748 = vadd.f32 %v2204, %v2747
    %v2749 = vrot.slane %v2748, 2
    %v2750 = vadd.f32 %v2748, %v2749
    %v2751 = vrot.slane %v2750, 1
    %v2752 = vadd.f32 %v2750, %v2751
    %v2753 = vrot.slane %v2206, 4
    %v2754 = vadd.f32 %v2206, %v2753
    %v2755 = vrot.slane %v2754, 2
    %v2756 = vadd.f32 %v2754, %v2755
    %v2757 = vrot.slane %v2756, 1
    %v2758 = vadd.f32 %v2756, %v2757
    %v2759 = vrot.slane %v2208, 4
    %v2760 = vadd.f32 %v2208, %v2759
    %v2761 = vrot.slane %v2760, 2
    %v2762 = vadd.f32 %v2760, %v2761
    %v2763 = vrot.slane %v2762, 1
    %v2764 = vadd.f32 %v2762, %v2763
    %v2765 = vrot.slane %v2210, 4
    %v2766 = vadd.f32 %v2210, %v2765
    %v2767 = vrot.slane %v2766, 2
    %v2768 = vadd.f32 %v2766, %v2767
    %v2769 = vrot.slane %v2768, 1
    %v2770 = vadd.f32 %v2768, %v2769
    %v2771 = vrot.slane %v2212, 4
    %v2772 = vadd.f32 %v2212, %v2771
    %v2773 = vrot.slane %v2772, 2
    %v2774 = vadd.f32 %v2772, %v2773
    %v2775 = vrot.slane %v2774, 1
    %v2776 = vadd.f32 %v2774, %v2775
    %v2777 = vrot.slane %v2214, 4
    %v2778 = vadd.f32 %v2214, %v2777
    %v2779 = vrot.slane %v2778, 2
    %v2780 = vadd.f32 %v2778, %v2779
    %v2781 = vrot.slane %v2780, 1
    %v2782 = vadd.f32 %v2780, %v2781
    %v2783 = vrot.slane %v2216, 4
    %v2784 = vadd.f32 %v2216, %v2783
    %v2785 = vrot.slane %v2784, 2
    %v2786 = vadd.f32 %v2784, %v2785
    %v2787 = vrot.slane %v2786, 1
    %v2788 = vadd.f32 %v2786, %v2787
    %v2789 = vrot.slane %v2218, 4
    %v2790 = vadd.f32 %v2218, %v2789
    %v2791 = vrot.slane %v2790, 2
    %v2792 = vadd.f32 %v2790, %v2791
    %v2793 = vrot.slane %v2792, 1
    %v2794 = vadd.f32 %v2792, %v2793
    %v2795 = vrot.slane %v2220, 4
    %v2796 = vadd.f32 %v2220, %v2795
    %v2797 = vrot.slane %v2796, 2
    %v2798 = vadd.f32 %v2796, %v2797
    %v2799 = vrot.slane %v2798, 1
    %v2800 = vadd.f32 %v2798, %v2799
    %v2801 = vrot.slane %v2222, 4
    %v2802 = vadd.f32 %v2222, %v2801
    %v2803 = vrot.slane %v2802, 2
    %v2804 = vadd.f32 %v2802, %v2803
    %v2805 = vrot.slane %v2804, 1
    %v2806 = vadd.f32 %v2804, %v2805
    %v2807 = vrot.slane %v2224, 4
    %v2808 = vadd.f32 %v2224, %v2807
    %v2809 = vrot.slane %v2808, 2
    %v2810 = vadd.f32 %v2808, %v2809
    %v2811 = vrot.slane %v2810, 1
    %v2812 = vadd.f32 %v2810, %v2811
    %v2813 = vrot.slane %v2226, 4
    %v2814 = vadd.f32 %v2226, %v2813
    %v2815 = vrot.slane %v2814, 2
    %v2816 = vadd.f32 %v2814, %v2815
    %v2817 = vrot.slane %v2816, 1
    %v2818 = vadd.f32 %v2816, %v2817
    %v2819 = vrot.slane %v2228, 4
    %v2820 = vadd.f32 %v2228, %v2819
    %v2821 = vrot.slane %v2820, 2
    %v2822 = vadd.f32 %v2820, %v2821
    %v2823 = vrot.slane %v2822, 1
    %v2824 = vadd.f32 %v2822, %v2823
    %v2825 = vrot.slane %v2230, 4
    %v2826 = vadd.f32 %v2230, %v2825
    %v2827 = vrot.slane %v2826, 2
    %v2828 = vadd.f32 %v2826, %v2827
    %v2829 = vrot.slane %v2828, 1
    %v2830 = vadd.f32 %v2828, %v2829
    %v2831 = vrot.slane %v2232, 4
    %v2832 = vadd.f32 %v2232, %v2831
    %v2833 = vrot.slane %v2832, 2
    %v2834 = vadd.f32 %v2832, %v2833
    %v2835 = vrot.slane %v2834, 1
    %v2836 = vadd.f32 %v2834, %v2835
    %v2837 = vrot.slane %v2234, 4
    %v2838 = vadd.f32 %v2234, %v2837
    %v2839 = vrot.slane %v2838, 2
    %v2840 = vadd.f32 %v2838, %v2839
    %v2841 = vrot.slane %v2840, 1
    %v2842 = vadd.f32 %v2840, %v2841
    %v2843 = vrot.slane %v2236, 4
    %v2844 = vadd.f32 %v2236, %v2843
    %v2845 = vrot.slane %v2844, 2
    %v2846 = vadd.f32 %v2844, %v2845
    %v2847 = vrot.slane %v2846, 1
    %v2848 = vadd.f32 %v2846, %v2847
    %v2849 = vrot.slane %v2238, 4
    %v2850 = vadd.f32 %v2238, %v2849
    %v2851 = vrot.slane %v2850, 2
    %v2852 = vadd.f32 %v2850, %v2851
    %v2853 = vrot.slane %v2852, 1
    %v2854 = vadd.f32 %v2852, %v2853
    %v2855 = vrot.slane %v2240, 4
    %v2856 = vadd.f32 %v2240, %v2855
    %v2857 = vrot.slane %v2856, 2
    %v2858 = vadd.f32 %v2856, %v2857
    %v2859 = vrot.slane %v2858, 1
    %v2860 = vadd.f32 %v2858, %v2859
    %v2861 = vrot.slane %v2242, 4
    %v2862 = vadd.f32 %v2242, %v2861
    %v2863 = vrot.slane %v2862, 2
    %v2864 = vadd.f32 %v2862, %v2863
    %v2865 = vrot.slane %v2864, 1
    %v2866 = vadd.f32 %v2864, %v2865
    %v2867 = vrot.slane %v2244, 4
    %v2868 = vadd.f32 %v2244, %v2867
    %v2869 = vrot.slane %v2868, 2
    %v2870 = vadd.f32 %v2868, %v2869
    %v2871 = vrot.slane %v2870, 1
    %v2872 = vadd.f32 %v2870, %v2871
    %v2873 = vrot.slane %v2246, 4
    %v2874 = vadd.f32 %v2246, %v2873
    %v2875 = vrot.slane %v2874, 2
    %v2876 = vadd.f32 %v2874, %v2875
    %v2877 = vrot.slane %v2876, 1
    %v2878 = vadd.f32 %v2876, %v2877
    %v2879 = vrot.slane %v2248, 4
    %v2880 = vadd.f32 %v2248, %v2879
    %v2881 = vrot.slane %v2880, 2
    %v2882 = vadd.f32 %v2880, %v2881
    %v2883 = vrot.slane %v2882, 1
    %v2884 = vadd.f32 %v2882, %v2883
    %v2885 = vrot.slane %v2250, 4
    %v2886 = vadd.f32 %v2250, %v2885
    %v2887 = vrot.slane %v2886, 2
    %v2888 = vadd.f32 %v2886, %v2887
    %v2889 = vrot.slane %v2888, 1
    %v2890 = vadd.f32 %v2888, %v2889
    %v2891 = vrot.slane %v2252, 4
    %v2892 = vadd.f32 %v2252, %v2891
    %v2893 = vrot.slane %v2892, 2
    %v2894 = vadd.f32 %v2892, %v2893
    %v2895 = vrot.slane %v2894, 1
    %v2896 = vadd.f32 %v2894, %v2895
    %v2897 = vrot.slane %v2254, 4
    %v2898 = vadd.f32 %v2254, %v2897
    %v2899 = vrot.slane %v2898, 2
    %v2900 = vadd.f32 %v2898, %v2899
    %v2901 = vrot.slane %v2900, 1
    %v2902 = vadd.f32 %v2900, %v2901
    %v2903 = vrot.slane %v2256, 4
    %v2904 = vadd.f32 %v2256, %v2903
    %v2905 = vrot.slane %v2904, 2
    %v2906 = vadd.f32 %v2904, %v2905
    %v2907 = vrot.slane %v2906, 1
    %v2908 = vadd.f32 %v2906, %v2907
    %v2909 = vrot.slane %v2258, 4
    %v2910 = vadd.f32 %v2258, %v2909
    %v2911 = vrot.slane %v2910, 2
    %v2912 = vadd.f32 %v2910, %v2911
    %v2913 = vrot.slane %v2912, 1
    %v2914 = vadd.f32 %v2912, %v2913
    %v2915 = vrot.slane %v2260, 4
    %v2916 = vadd.f32 %v2260, %v2915
    %v2917 = vrot.slane %v2916, 2
    %v2918 = vadd.f32 %v2916, %v2917
    %v2919 = vrot.slane %v2918, 1
    %v2920 = vadd.f32 %v2918, %v2919
    %v2921 = vrot.slane %v2262, 4
    %v2922 = vadd.f32 %v2262, %v2921
    %v2923 = vrot.slane %v2922, 2
    %v2924 = vadd.f32 %v2922, %v2923
    %v2925 = vrot.slane %v2924, 1
    %v2926 = vadd.f32 %v2924, %v2925
    %v2927 = vrot.slane %v2264, 4
    %v2928 = vadd.f32 %v2264, %v2927
    %v2929 = vrot.slane %v2928, 2
    %v2930 = vadd.f32 %v2928, %v2929
    %v2931 = vrot.slane %v2930, 1
    %v2932 = vadd.f32 %v2930, %v2931
    %v2933 = vrot.slane %v2266, 4
    %v2934 = vadd.f32 %v2266, %v2933
    %v2935 = vrot.slane %v2934, 2
    %v2936 = vadd.f32 %v2934, %v2935
    %v2937 = vrot.slane %v2936, 1
    %v2938 = vadd.f32 %v2936, %v2937
    %v2939 = vrot.slane %v2268, 4
    %v2940 = vadd.f32 %v2268, %v2939
    %v2941 = vrot.slane %v2940, 2
    %v2942 = vadd.f32 %v2940, %v2941
    %v2943 = vrot.slane %v2942, 1
    %v2944 = vadd.f32 %v2942, %v2943
    %v2945 = vrot.slane %v2270, 4
    %v2946 = vadd.f32 %v2270, %v2945
    %v2947 = vrot.slane %v2946, 2
    %v2948 = vadd.f32 %v2946, %v2947
    %v2949 = vrot.slane %v2948, 1
    %v2950 = vadd.f32 %v2948, %v2949
    %v2951 = vrot.slane %v2272, 4
    %v2952 = vadd.f32 %v2272, %v2951
    %v2953 = vrot.slane %v2952, 2
    %v2954 = vadd.f32 %v2952, %v2953
    %v2955 = vrot.slane %v2954, 1
    %v2956 = vadd.f32 %v2954, %v2955
    %v2957 = vrot.slane %v2274, 4
    %v2958 = vadd.f32 %v2274, %v2957
    %v2959 = vrot.slane %v2958, 2
    %v2960 = vadd.f32 %v2958, %v2959
    %v2961 = vrot.slane %v2960, 1
    %v2962 = vadd.f32 %v2960, %v2961
    %v2963 = vrot.slane %v2276, 4
    %v2964 = vadd.f32 %v2276, %v2963
    %v2965 = vrot.slane %v2964, 2
    %v2966 = vadd.f32 %v2964, %v2965
    %v2967 = vrot.slane %v2966, 1
    %v2968 = vadd.f32 %v2966, %v2967
    %v2969 = vrot.slane %v2278, 4
    %v2970 = vadd.f32 %v2278, %v2969
    %v2971 = vrot.slane %v2970, 2
    %v2972 = vadd.f32 %v2970, %v2971
    %v2973 = vrot.slane %v2972, 1
    %v2974 = vadd.f32 %v2972, %v2973
    %v2975 = vrot.slane %v2280, 4
    %v2976 = vadd.f32 %v2280, %v2975
    %v2977 = vrot.slane %v2976, 2
    %v2978 = vadd.f32 %v2976, %v2977
    %v2979 = vrot.slane %v2978, 1
    %v2980 = vadd.f32 %v2978, %v2979
    %v2981 = vrot.slane %v2282, 4
    %v2982 = vadd.f32 %v2282, %v2981
    %v2983 = vrot.slane %v2982, 2
    %v2984 = vadd.f32 %v2982, %v2983
    %v2985 = vrot.slane %v2984, 1
    %v2986 = vadd.f32 %v2984, %v2985
    %v2987 = vrot.slane %v2284, 4
    %v2988 = vadd.f32 %v2284, %v2987
    %v2989 = vrot.slane %v2988, 2
    %v2990 = vadd.f32 %v2988, %v2989
    %v2991 = vrot.slane %v2990, 1
    %v2992 = vadd.f32 %v2990, %v2991
    %v2993 = vrot.slane %v2286, 4
    %v2994 = vadd.f32 %v2286, %v2993
    %v2995 = vrot.slane %v2994, 2
    %v2996 = vadd.f32 %v2994, %v2995
    %v2997 = vrot.slane %v2996, 1
    %v2998 = vadd.f32 %v2996, %v2997
    %v2999 = vrot.slane %v2288, 4
    %v3000 = vadd.f32 %v2288, %v2999
    %v3001 = vrot.slane %v3000, 2
    %v3002 = vadd.f32 %v3000, %v3001
    %v3003 = vrot.slane %v3002, 1
    %v3004 = vadd.f32 %v3002, %v3003
    %v3005 = vrot.slane %v2290, 4
    %v3006 = vadd.f32 %v2290, %v3005
    %v3007 = vrot.slane %v3006, 2
    %v3008 = vadd.f32 %v3006, %v3007
    %v3009 = vrot.slane %v3008, 1
    %v3010 = vadd.f32 %v3008, %v3009
    %v3011 = vrot.slane %v2292, 4
    %v3012 = vadd.f32 %v2292, %v3011
    %v3013 = vrot.slane %v3012, 2
    %v3014 = vadd.f32 %v3012, %v3013
    %v3015 = vrot.slane %v3014, 1
    %v3016 = vadd.f32 %v3014, %v3015
    %v3017 = vrot.slane %v2294, 4
    %v3018 = vadd.f32 %v2294, %v3017
    %v3019 = vrot.slane %v3018, 2
    %v3020 = vadd.f32 %v3018, %v3019
    %v3021 = vrot.slane %v3020, 1
    %v3022 = vadd.f32 %v3020, %v3021
    %v3023 = vrot.slane %v2296, 4
    %v3024 = vadd.f32 %v2296, %v3023
    %v3025 = vrot.slane %v3024, 2
    %v3026 = vadd.f32 %v3024, %v3025
    %v3027 = vrot.slane %v3026, 1
    %v3028 = vadd.f32 %v3026, %v3027
    %v3029 = vrot.slane %v2298, 4
    %v3030 = vadd.f32 %v2298, %v3029
    %v3031 = vrot.slane %v3030, 2
    %v3032 = vadd.f32 %v3030, %v3031
    %v3033 = vrot.slane %v3032, 1
    %v3034 = vadd.f32 %v3032, %v3033
    %v3035 = vrot.slane %v2300, 4
    %v3036 = vadd.f32 %v2300, %v3035
    %v3037 = vrot.slane %v3036, 2
    %v3038 = vadd.f32 %v3036, %v3037
    %v3039 = vrot.slane %v3038, 1
    %v3040 = vadd.f32 %v3038, %v3039
    %v3041 = vrot.slane %v2302, 4
    %v3042 = vadd.f32 %v2302, %v3041
    %v3043 = vrot.slane %v3042, 2
    %v3044 = vadd.f32 %v3042, %v3043
    %v3045 = vrot.slane %v3044, 1
    %v3046 = vadd.f32 %v3044, %v3045
    %v3047 = vrot.slane %v2304, 4
    %v3048 = vadd.f32 %v2304, %v3047
    %v3049 = vrot.slane %v3048, 2
    %v3050 = vadd.f32 %v3048, %v3049
    %v3051 = vrot.slane %v3050, 1
    %v3052 = vadd.f32 %v3050, %v3051
    %v3053 = vrot.slane %v2306, 4
    %v3054 = vadd.f32 %v2306, %v3053
    %v3055 = vrot.slane %v3054, 2
    %v3056 = vadd.f32 %v3054, %v3055
    %v3057 = vrot.slane %v3056, 1
    %v3058 = vadd.f32 %v3056, %v3057
    %v3059 = vrot.slane %v2308, 4
    %v3060 = vadd.f32 %v2308, %v3059
    %v3061 = vrot.slane %v3060, 2
    %v3062 = vadd.f32 %v3060, %v3061
    %v3063 = vrot.slane %v3062, 1
    %v3064 = vadd.f32 %v3062, %v3063
    %v3065 = vrot.slane %v2310, 4
    %v3066 = vadd.f32 %v2310, %v3065
    %v3067 = vrot.slane %v3066, 2
    %v3068 = vadd.f32 %v3066, %v3067
    %v3069 = vrot.slane %v3068, 1
    %v3070 = vadd.f32 %v3068, %v3069
    %v3071 = vrot.slane %v2312, 4
    %v3072 = vadd.f32 %v2312, %v3071
    %v3073 = vrot.slane %v3072, 2
    %v3074 = vadd.f32 %v3072, %v3073
    %v3075 = vrot.slane %v3074, 1
    %v3076 = vadd.f32 %v3074, %v3075
    %v3077 = vrot.slane %v2314, 4
    %v3078 = vadd.f32 %v2314, %v3077
    %v3079 = vrot.slane %v3078, 2
    %v3080 = vadd.f32 %v3078, %v3079
    %v3081 = vrot.slane %v3080, 1
    %v3082 = vadd.f32 %v3080, %v3081
    %v3083 = vrot.slane %v2316, 4
    %v3084 = vadd.f32 %v2316, %v3083
    %v3085 = vrot.slane %v3084, 2
    %v3086 = vadd.f32 %v3084, %v3085
    %v3087 = vrot.slane %v3086, 1
    %v3088 = vadd.f32 %v3086, %v3087
    %v3089 = vrot.slane %v2318, 4
    %v3090 = vadd.f32 %v2318, %v3089
    %v3091 = vrot.slane %v3090, 2
    %v3092 = vadd.f32 %v3090, %v3091
    %v3093 = vrot.slane %v3092, 1
    %v3094 = vadd.f32 %v3092, %v3093
    %v3095 = vrot.slane %v2320, 4
    %v3096 = vadd.f32 %v2320, %v3095
    %v3097 = vrot.slane %v3096, 2
    %v3098 = vadd.f32 %v3096, %v3097
    %v3099 = vrot.slane %v3098, 1
    %v3100 = vadd.f32 %v3098, %v3099
    %v3101 = vrot.slane %v2322, 4
    %v3102 = vadd.f32 %v2322, %v3101
    %v3103 = vrot.slane %v3102, 2
    %v3104 = vadd.f32 %v3102, %v3103
    %v3105 = vrot.slane %v3104, 1
    %v3106 = vadd.f32 %v3104, %v3105
    %v3107 = vrot.slane %v2324, 4
    %v3108 = vadd.f32 %v2324, %v3107
    %v3109 = vrot.slane %v3108, 2
    %v3110 = vadd.f32 %v3108, %v3109
    %v3111 = vrot.slane %v3110, 1
    %v3112 = vadd.f32 %v3110, %v3111
    %v3113 = vrot.slane %v2326, 4
    %v3114 = vadd.f32 %v2326, %v3113
    %v3115 = vrot.slane %v3114, 2
    %v3116 = vadd.f32 %v3114, %v3115
    %v3117 = vrot.slane %v3116, 1
    %v3118 = vadd.f32 %v3116, %v3117
    %v3119 = vrot.slane %v2328, 4
    %v3120 = vadd.f32 %v2328, %v3119
    %v3121 = vrot.slane %v3120, 2
    %v3122 = vadd.f32 %v3120, %v3121
    %v3123 = vrot.slane %v3122, 1
    %v3124 = vadd.f32 %v3122, %v3123
    %v3125 = vrot.slane %v2330, 4
    %v3126 = vadd.f32 %v2330, %v3125
    %v3127 = vrot.slane %v3126, 2
    %v3128 = vadd.f32 %v3126, %v3127
    %v3129 = vrot.slane %v3128, 1
    %v3130 = vadd.f32 %v3128, %v3129
    %v3131 = vrot.slane %v2332, 4
    %v3132 = vadd.f32 %v2332, %v3131
    %v3133 = vrot.slane %v3132, 2
    %v3134 = vadd.f32 %v3132, %v3133
    %v3135 = vrot.slane %v3134, 1
    %v3136 = vadd.f32 %v3134, %v3135
    %v3137 = vrot.slane %v2334, 4
    %v3138 = vadd.f32 %v2334, %v3137
    %v3139 = vrot.slane %v3138, 2
    %v3140 = vadd.f32 %v3138, %v3139
    %v3141 = vrot.slane %v3140, 1
    %v3142 = vadd.f32 %v3140, %v3141
    %v3143 = vrot.slane %v2336, 4
    %v3144 = vadd.f32 %v2336, %v3143
    %v3145 = vrot.slane %v3144, 2
    %v3146 = vadd.f32 %v3144, %v3145
    %v3147 = vrot.slane %v3146, 1
    %v3148 = vadd.f32 %v3146, %v3147
    %v3149 = vrot.slane %v2338, 4
    %v3150 = vadd.f32 %v2338, %v3149
    %v3151 = vrot.slane %v3150, 2
    %v3152 = vadd.f32 %v3150, %v3151
    %v3153 = vrot.slane %v3152, 1
    %v3154 = vadd.f32 %v3152, %v3153
    %v3155 = vrot.slane %v2340, 4
    %v3156 = vadd.f32 %v2340, %v3155
    %v3157 = vrot.slane %v3156, 2
    %v3158 = vadd.f32 %v3156, %v3157
    %v3159 = vrot.slane %v3158, 1
    %v3160 = vadd.f32 %v3158, %v3159
    %v3161 = vrot.slane %v2342, 4
    %v3162 = vadd.f32 %v2342, %v3161
    %v3163 = vrot.slane %v3162, 2
    %v3164 = vadd.f32 %v3162, %v3163
    %v3165 = vrot.slane %v3164, 1
    %v3166 = vadd.f32 %v3164, %v3165
    %v3167 = vrot.slane %v2344, 4
    %v3168 = vadd.f32 %v2344, %v3167
    %v3169 = vrot.slane %v3168, 2
    %v3170 = vadd.f32 %v3168, %v3169
    %v3171 = vrot.slane %v3170, 1
    %v3172 = vadd.f32 %v3170, %v3171
    %v3173 = vrot.slane %v2346, 4
    %v3174 = vadd.f32 %v2346, %v3173
    %v3175 = vrot.slane %v3174, 2
    %v3176 = vadd.f32 %v3174, %v3175
    %v3177 = vrot.slane %v3176, 1
    %v3178 = vadd.f32 %v3176, %v3177
    %v3179 = vrot.slane %v2348, 4
    %v3180 = vadd.f32 %v2348, %v3179
    %v3181 = vrot.slane %v3180, 2
    %v3182 = vadd.f32 %v3180, %v3181
    %v3183 = vrot.slane %v3182, 1
    %v3184 = vadd.f32 %v3182, %v3183
    %v3185 = vrot.slane %v2350, 4
    %v3186 = vadd.f32 %v2350, %v3185
    %v3187 = vrot.slane %v3186, 2
    %v3188 = vadd.f32 %v3186, %v3187
    %v3189 = vrot.slane %v3188, 1
    %v3190 = vadd.f32 %v3188, %v3189
    %v3191 = vrot.slane %v2352, 4
    %v3192 = vadd.f32 %v2352, %v3191
    %v3193 = vrot.slane %v3192, 2
    %v3194 = vadd.f32 %v3192, %v3193
    %v3195 = vrot.slane %v3194, 1
    %v3196 = vadd.f32 %v3194, %v3195
    %v3197 = vrot.slane %v2354, 4
    %v3198 = vadd.f32 %v2354, %v3197
    %v3199 = vrot.slane %v3198, 2
    %v3200 = vadd.f32 %v3198, %v3199
    %v3201 = vrot.slane %v3200, 1
    %v3202 = vadd.f32 %v3200, %v3201
    %v3203 = vrot.slane %v2356, 4
    %v3204 = vadd.f32 %v2356, %v3203
    %v3205 = vrot.slane %v3204, 2
    %v3206 = vadd.f32 %v3204, %v3205
    %v3207 = vrot.slane %v3206, 1
    %v3208 = vadd.f32 %v3206, %v3207
    %v3209 = vrot.slane %v2358, 4
    %v3210 = vadd.f32 %v2358, %v3209
    %v3211 = vrot.slane %v3210, 2
    %v3212 = vadd.f32 %v3210, %v3211
    %v3213 = vrot.slane %v3212, 1
    %v3214 = vadd.f32 %v3212, %v3213
    %v3215 = vrot.slane %v2360, 4
    %v3216 = vadd.f32 %v2360, %v3215
    %v3217 = vrot.slane %v3216, 2
    %v3218 = vadd.f32 %v3216, %v3217
    %v3219 = vrot.slane %v3218, 1
    %v3220 = vadd.f32 %v3218, %v3219
    %v3221 = vrot.slane %v2362, 4
    %v3222 = vadd.f32 %v2362, %v3221
    %v3223 = vrot.slane %v3222, 2
    %v3224 = vadd.f32 %v3222, %v3223
    %v3225 = vrot.slane %v3224, 1
    %v3226 = vadd.f32 %v3224, %v3225
    %v3227 = vrot.slane %v2364, 4
    %v3228 = vadd.f32 %v2364, %v3227
    %v3229 = vrot.slane %v3228, 2
    %v3230 = vadd.f32 %v3228, %v3229
    %v3231 = vrot.slane %v3230, 1
    %v3232 = vadd.f32 %v3230, %v3231
    %v3233 = vrot.slane %v2366, 4
    %v3234 = vadd.f32 %v2366, %v3233
    %v3235 = vrot.slane %v3234, 2
    %v3236 = vadd.f32 %v3234, %v3235
    %v3237 = vrot.slane %v3236, 1
    %v3238 = vadd.f32 %v3236, %v3237
    %v3239 = vrot.slane %v2368, 4
    %v3240 = vadd.f32 %v2368, %v3239
    %v3241 = vrot.slane %v3240, 2
    %v3242 = vadd.f32 %v3240, %v3241
    %v3243 = vrot.slane %v3242, 1
    %v3244 = vadd.f32 %v3242, %v3243
    %v3245 = vrot.slane %v2370, 4
    %v3246 = vadd.f32 %v2370, %v3245
    %v3247 = vrot.slane %v3246, 2
    %v3248 = vadd.f32 %v3246, %v3247
    %v3249 = vrot.slane %v3248, 1
    %v3250 = vadd.f32 %v3248, %v3249
    %v3251 = vrot.slane %v2372, 4
    %v3252 = vadd.f32 %v2372, %v3251
    %v3253 = vrot.slane %v3252, 2
    %v3254 = vadd.f32 %v3252, %v3253
    %v3255 = vrot.slane %v3254, 1
    %v3256 = vadd.f32 %v3254, %v3255
    %v3257 = vrot.slane %v2374, 4
    %v3258 = vadd.f32 %v2374, %v3257
    %v3259 = vrot.slane %v3258, 2
    %v3260 = vadd.f32 %v3258, %v3259
    %v3261 = vrot.slane %v3260, 1
    %v3262 = vadd.f32 %v3260, %v3261
    %v3263 = vrot.slane %v2376, 4
    %v3264 = vadd.f32 %v2376, %v3263
    %v3265 = vrot.slane %v3264, 2
    %v3266 = vadd.f32 %v3264, %v3265
    %v3267 = vrot.slane %v3266, 1
    %v3268 = vadd.f32 %v3266, %v3267
    %v3269 = vrot.slane %v2378, 4
    %v3270 = vadd.f32 %v2378, %v3269
    %v3271 = vrot.slane %v3270, 2
    %v3272 = vadd.f32 %v3270, %v3271
    %v3273 = vrot.slane %v3272, 1
    %v3274 = vadd.f32 %v3272, %v3273
    %v3275 = vrot.slane %v2380, 4
    %v3276 = vadd.f32 %v2380, %v3275
    %v3277 = vrot.slane %v3276, 2
    %v3278 = vadd.f32 %v3276, %v3277
    %v3279 = vrot.slane %v3278, 1
    %v3280 = vadd.f32 %v3278, %v3279
    %v3281 = vrot.slane %v2382, 4
    %v3282 = vadd.f32 %v2382, %v3281
    %v3283 = vrot.slane %v3282, 2
    %v3284 = vadd.f32 %v3282, %v3283
    %v3285 = vrot.slane %v3284, 1
    %v3286 = vadd.f32 %v3284, %v3285
    %v3287 = vrot.slane %v2384, 4
    %v3288 = vadd.f32 %v2384, %v3287
    %v3289 = vrot.slane %v3288, 2
    %v3290 = vadd.f32 %v3288, %v3289
    %v3291 = vrot.slane %v3290, 1
    %v3292 = vadd.f32 %v3290, %v3291
    %v3293 = vrot.slane %v2386, 4
    %v3294 = vadd.f32 %v2386, %v3293
    %v3295 = vrot.slane %v3294, 2
    %v3296 = vadd.f32 %v3294, %v3295
    %v3297 = vrot.slane %v3296, 1
    %v3298 = vadd.f32 %v3296, %v3297
    %v3299 = vrot.slane %v2388, 4
    %v3300 = vadd.f32 %v2388, %v3299
    %v3301 = vrot.slane %v3300, 2
    %v3302 = vadd.f32 %v3300, %v3301
    %v3303 = vrot.slane %v3302, 1
    %v3304 = vadd.f32 %v3302, %v3303
    %v3305 = vrot.slane %v2390, 4
    %v3306 = vadd.f32 %v2390, %v3305
    %v3307 = vrot.slane %v3306, 2
    %v3308 = vadd.f32 %v3306, %v3307
    %v3309 = vrot.slane %v3308, 1
    %v3310 = vadd.f32 %v3308, %v3309
    %v3311 = vrot.slane %v2392, 4
    %v3312 = vadd.f32 %v2392, %v3311
    %v3313 = vrot.slane %v3312, 2
    %v3314 = vadd.f32 %v3312, %v3313
    %v3315 = vrot.slane %v3314, 1
    %v3316 = vadd.f32 %v3314, %v3315
    %v3317 = vrot.slane %v2394, 4
    %v3318 = vadd.f32 %v2394, %v3317
    %v3319 = vrot.slane %v3318, 2
    %v3320 = vadd.f32 %v3318, %v3319
    %v3321 = vrot.slane %v3320, 1
    %v3322 = vadd.f32 %v3320, %v3321
    %v3323 = vrot.slane %v2396, 4
    %v3324 = vadd.f32 %v2396, %v3323
    %v3325 = vrot.slane %v3324, 2
    %v3326 = vadd.f32 %v3324, %v3325
    %v3327 = vrot.slane %v3326, 1
    %v3328 = vadd.f32 %v3326, %v3327
    %v3329 = vrot.slane %v2398, 4
    %v3330 = vadd.f32 %v2398, %v3329
    %v3331 = vrot.slane %v3330, 2
    %v3332 = vadd.f32 %v3330, %v3331
    %v3333 = vrot.slane %v3332, 1
    %v3334 = vadd.f32 %v3332, %v3333
    %v3335 = vrot.slane %v2400, 4
    %v3336 = vadd.f32 %v2400, %v3335
    %v3337 = vrot.slane %v3336, 2
    %v3338 = vadd.f32 %v3336, %v3337
    %v3339 = vrot.slane %v3338, 1
    %v3340 = vadd.f32 %v3338, %v3339
    %v3341 = vrot.slane %v2402, 4
    %v3342 = vadd.f32 %v2402, %v3341
    %v3343 = vrot.slane %v3342, 2
    %v3344 = vadd.f32 %v3342, %v3343
    %v3345 = vrot.slane %v3344, 1
    %v3346 = vadd.f32 %v3344, %v3345
    %v3347 = vrot.slane %v2404, 4
    %v3348 = vadd.f32 %v2404, %v3347
    %v3349 = vrot.slane %v3348, 2
    %v3350 = vadd.f32 %v3348, %v3349
    %v3351 = vrot.slane %v3350, 1
    %v3352 = vadd.f32 %v3350, %v3351
    %v3353 = vrot.slane %v2406, 4
    %v3354 = vadd.f32 %v2406, %v3353
    %v3355 = vrot.slane %v3354, 2
    %v3356 = vadd.f32 %v3354, %v3355
    %v3357 = vrot.slane %v3356, 1
    %v3358 = vadd.f32 %v3356, %v3357
    %v3359 = vrot.slane %v2408, 4
    %v3360 = vadd.f32 %v2408, %v3359
    %v3361 = vrot.slane %v3360, 2
    %v3362 = vadd.f32 %v3360, %v3361
    %v3363 = vrot.slane %v3362, 1
    %v3364 = vadd.f32 %v3362, %v3363
    %v3365 = vrot.slane %v2410, 4
    %v3366 = vadd.f32 %v2410, %v3365
    %v3367 = vrot.slane %v3366, 2
    %v3368 = vadd.f32 %v3366, %v3367
    %v3369 = vrot.slane %v3368, 1
    %v3370 = vadd.f32 %v3368, %v3369
    %v3371 = vrot.slane %v2412, 4
    %v3372 = vadd.f32 %v2412, %v3371
    %v3373 = vrot.slane %v3372, 2
    %v3374 = vadd.f32 %v3372, %v3373
    %v3375 = vrot.slane %v3374, 1
    %v3376 = vadd.f32 %v3374, %v3375
    %v3377 = vrot.slane %v2414, 4
    %v3378 = vadd.f32 %v2414, %v3377
    %v3379 = vrot.slane %v3378, 2
    %v3380 = vadd.f32 %v3378, %v3379
    %v3381 = vrot.slane %v3380, 1
    %v3382 = vadd.f32 %v3380, %v3381
    %v3383 = vrot.slane %v2416, 4
    %v3384 = vadd.f32 %v2416, %v3383
    %v3385 = vrot.slane %v3384, 2
    %v3386 = vadd.f32 %v3384, %v3385
    %v3387 = vrot.slane %v3386, 1
    %v3388 = vadd.f32 %v3386, %v3387
    %v3389 = vrot.slane %v2418, 4
    %v3390 = vadd.f32 %v2418, %v3389
    %v3391 = vrot.slane %v3390, 2
    %v3392 = vadd.f32 %v3390, %v3391
    %v3393 = vrot.slane %v3392, 1
    %v3394 = vadd.f32 %v3392, %v3393
    %v3395 = vrot.slane %v2420, 4
    %v3396 = vadd.f32 %v2420, %v3395
    %v3397 = vrot.slane %v3396, 2
    %v3398 = vadd.f32 %v3396, %v3397
    %v3399 = vrot.slane %v3398, 1
    %v3400 = vadd.f32 %v3398, %v3399
    %v3401 = vrot.slane %v2422, 4
    %v3402 = vadd.f32 %v2422, %v3401
    %v3403 = vrot.slane %v3402, 2
    %v3404 = vadd.f32 %v3402, %v3403
    %v3405 = vrot.slane %v3404, 1
    %v3406 = vadd.f32 %v3404, %v3405
    %v3407 = vrot.slane %v2424, 4
    %v3408 = vadd.f32 %v2424, %v3407
    %v3409 = vrot.slane %v3408, 2
    %v3410 = vadd.f32 %v3408, %v3409
    %v3411 = vrot.slane %v3410, 1
    %v3412 = vadd.f32 %v3410, %v3411
    %v3413 = vrot.slane %v2426, 4
    %v3414 = vadd.f32 %v2426, %v3413
    %v3415 = vrot.slane %v3414, 2
    %v3416 = vadd.f32 %v3414, %v3415
    %v3417 = vrot.slane %v3416, 1
    %v3418 = vadd.f32 %v3416, %v3417
    %v3419 = vrot.slane %v2428, 4
    %v3420 = vadd.f32 %v2428, %v3419
    %v3421 = vrot.slane %v3420, 2
    %v3422 = vadd.f32 %v3420, %v3421
    %v3423 = vrot.slane %v3422, 1
    %v3424 = vadd.f32 %v3422, %v3423
    %v3425 = vrot.slane %v2430, 4
    %v3426 = vadd.f32 %v2430, %v3425
    %v3427 = vrot.slane %v3426, 2
    %v3428 = vadd.f32 %v3426, %v3427
    %v3429 = vrot.slane %v3428, 1
    %v3430 = vadd.f32 %v3428, %v3429
    %v3431 = vrot.slane %v2432, 4
    %v3432 = vadd.f32 %v2432, %v3431
    %v3433 = vrot.slane %v3432, 2
    %v3434 = vadd.f32 %v3432, %v3433
    %v3435 = vrot.slane %v3434, 1
    %v3436 = vadd.f32 %v3434, %v3435
    %v3437 = vrot.slane %v2434, 4
    %v3438 = vadd.f32 %v2434, %v3437
    %v3439 = vrot.slane %v3438, 2
    %v3440 = vadd.f32 %v3438, %v3439
    %v3441 = vrot.slane %v3440, 1
    %v3442 = vadd.f32 %v3440, %v3441
    %v3443 = vrot.slane %v2436, 4
    %v3444 = vadd.f32 %v2436, %v3443
    %v3445 = vrot.slane %v3444, 2
    %v3446 = vadd.f32 %v3444, %v3445
    %v3447 = vrot.slane %v3446, 1
    %v3448 = vadd.f32 %v3446, %v3447
    %v3449 = vrot.slane %v2438, 4
    %v3450 = vadd.f32 %v2438, %v3449
    %v3451 = vrot.slane %v3450, 2
    %v3452 = vadd.f32 %v3450, %v3451
    %v3453 = vrot.slane %v3452, 1
    %v3454 = vadd.f32 %v3452, %v3453
    %v3455 = vrot.slane %v2440, 4
    %v3456 = vadd.f32 %v2440, %v3455
    %v3457 = vrot.slane %v3456, 2
    %v3458 = vadd.f32 %v3456, %v3457
    %v3459 = vrot.slane %v3458, 1
    %v3460 = vadd.f32 %v3458, %v3459
    %v3461 = vrot.slane %v2442, 4
    %v3462 = vadd.f32 %v2442, %v3461
    %v3463 = vrot.slane %v3462, 2
    %v3464 = vadd.f32 %v3462, %v3463
    %v3465 = vrot.slane %v3464, 1
    %v3466 = vadd.f32 %v3464, %v3465
    %v3467 = vrot.slane %v2444, 4
    %v3468 = vadd.f32 %v2444, %v3467
    %v3469 = vrot.slane %v3468, 2
    %v3470 = vadd.f32 %v3468, %v3469
    %v3471 = vrot.slane %v3470, 1
    %v3472 = vadd.f32 %v3470, %v3471
    %v3473 = vrot.slane %v2446, 4
    %v3474 = vadd.f32 %v2446, %v3473
    %v3475 = vrot.slane %v3474, 2
    %v3476 = vadd.f32 %v3474, %v3475
    %v3477 = vrot.slane %v3476, 1
    %v3478 = vadd.f32 %v3476, %v3477
    %v3479 = vrot.slane %v2448, 4
    %v3480 = vadd.f32 %v2448, %v3479
    %v3481 = vrot.slane %v3480, 2
    %v3482 = vadd.f32 %v3480, %v3481
    %v3483 = vrot.slane %v3482, 1
    %v3484 = vadd.f32 %v3482, %v3483
    %v3485 = vrot.slane %v2450, 4
    %v3486 = vadd.f32 %v2450, %v3485
    %v3487 = vrot.slane %v3486, 2
    %v3488 = vadd.f32 %v3486, %v3487
    %v3489 = vrot.slane %v3488, 1
    %v3490 = vadd.f32 %v3488, %v3489
    %v3491 = vrot.slane %v2452, 4
    %v3492 = vadd.f32 %v2452, %v3491
    %v3493 = vrot.slane %v3492, 2
    %v3494 = vadd.f32 %v3492, %v3493
    %v3495 = vrot.slane %v3494, 1
    %v3496 = vadd.f32 %v3494, %v3495
    %v3497 = vrot.slane %v2454, 4
    %v3498 = vadd.f32 %v2454, %v3497
    %v3499 = vrot.slane %v3498, 2
    %v3500 = vadd.f32 %v3498, %v3499
    %v3501 = vrot.slane %v3500, 1
    %v3502 = vadd.f32 %v3500, %v3501
    %v3503 = vrot.slane %v2456, 4
    %v3504 = vadd.f32 %v2456, %v3503
    %v3505 = vrot.slane %v3504, 2
    %v3506 = vadd.f32 %v3504, %v3505
    %v3507 = vrot.slane %v3506, 1
    %v3508 = vadd.f32 %v3506, %v3507
    %v3509 = vrot.slane %v2458, 4
    %v3510 = vadd.f32 %v2458, %v3509
    %v3511 = vrot.slane %v3510, 2
    %v3512 = vadd.f32 %v3510, %v3511
    %v3513 = vrot.slane %v3512, 1
    %v3514 = vadd.f32 %v3512, %v3513
    %v3515 = vrot.slane %v2460, 4
    %v3516 = vadd.f32 %v2460, %v3515
    %v3517 = vrot.slane %v3516, 2
    %v3518 = vadd.f32 %v3516, %v3517
    %v3519 = vrot.slane %v3518, 1
    %v3520 = vadd.f32 %v3518, %v3519
    %v3521 = vrot.slane %v2462, 4
    %v3522 = vadd.f32 %v2462, %v3521
    %v3523 = vrot.slane %v3522, 2
    %v3524 = vadd.f32 %v3522, %v3523
    %v3525 = vrot.slane %v3524, 1
    %v3526 = vadd.f32 %v3524, %v3525
    %v3527 = vrot.slane %v2464, 4
    %v3528 = vadd.f32 %v2464, %v3527
    %v3529 = vrot.slane %v3528, 2
    %v3530 = vadd.f32 %v3528, %v3529
    %v3531 = vrot.slane %v3530, 1
    %v3532 = vadd.f32 %v3530, %v3531
    %v3533 = vrot.slane %v2466, 4
    %v3534 = vadd.f32 %v2466, %v3533
    %v3535 = vrot.slane %v3534, 2
    %v3536 = vadd.f32 %v3534, %v3535
    %v3537 = vrot.slane %v3536, 1
    %v3538 = vadd.f32 %v3536, %v3537
    %v3539 = vrot.slane %v2468, 4
    %v3540 = vadd.f32 %v2468, %v3539
    %v3541 = vrot.slane %v3540, 2
    %v3542 = vadd.f32 %v3540, %v3541
    %v3543 = vrot.slane %v3542, 1
    %v3544 = vadd.f32 %v3542, %v3543
    %v3545 = vrot.slane %v2470, 4
    %v3546 = vadd.f32 %v2470, %v3545
    %v3547 = vrot.slane %v3546, 2
    %v3548 = vadd.f32 %v3546, %v3547
    %v3549 = vrot.slane %v3548, 1
    %v3550 = vadd.f32 %v3548, %v3549
    %v3551 = vrot.slane %v2472, 4
    %v3552 = vadd.f32 %v2472, %v3551
    %v3553 = vrot.slane %v3552, 2
    %v3554 = vadd.f32 %v3552, %v3553
    %v3555 = vrot.slane %v3554, 1
    %v3556 = vadd.f32 %v3554, %v3555
    %v3557 = vrot.slane %v2474, 4
    %v3558 = vadd.f32 %v2474, %v3557
    %v3559 = vrot.slane %v3558, 2
    %v3560 = vadd.f32 %v3558, %v3559
    %v3561 = vrot.slane %v3560, 1
    %v3562 = vadd.f32 %v3560, %v3561
    %v3563 = vrot.slane %v2476, 4
    %v3564 = vadd.f32 %v2476, %v3563
    %v3565 = vrot.slane %v3564, 2
    %v3566 = vadd.f32 %v3564, %v3565
    %v3567 = vrot.slane %v3566, 1
    %v3568 = vadd.f32 %v3566, %v3567
    %v3569 = vrot.slane %v2478, 4
    %v3570 = vadd.f32 %v2478, %v3569
    %v3571 = vrot.slane %v3570, 2
    %v3572 = vadd.f32 %v3570, %v3571
    %v3573 = vrot.slane %v3572, 1
    %v3574 = vadd.f32 %v3572, %v3573
    %v3575 = vrot.slane %v2480, 4
    %v3576 = vadd.f32 %v2480, %v3575
    %v3577 = vrot.slane %v3576, 2
    %v3578 = vadd.f32 %v3576, %v3577
    %v3579 = vrot.slane %v3578, 1
    %v3580 = vadd.f32 %v3578, %v3579
    %v3581 = vrot.slane %v2482, 4
    %v3582 = vadd.f32 %v2482, %v3581
    %v3583 = vrot.slane %v3582, 2
    %v3584 = vadd.f32 %v3582, %v3583
    %v3585 = vrot.slane %v3584, 1
    %v3586 = vadd.f32 %v3584, %v3585
    %v3587 = vrot.slane %v2484, 4
    %v3588 = vadd.f32 %v2484, %v3587
    %v3589 = vrot.slane %v3588, 2
    %v3590 = vadd.f32 %v3588, %v3589
    %v3591 = vrot.slane %v3590, 1
    %v3592 = vadd.f32 %v3590, %v3591
    %v3593 = vrot.slane %v2486, 4
    %v3594 = vadd.f32 %v2486, %v3593
    %v3595 = vrot.slane %v3594, 2
    %v3596 = vadd.f32 %v3594, %v3595
    %v3597 = vrot.slane %v3596, 1
    %v3598 = vadd.f32 %v3596, %v3597
    %v3599 = vrot.slane %v2488, 4
    %v3600 = vadd.f32 %v2488, %v3599
    %v3601 = vrot.slane %v3600, 2
    %v3602 = vadd.f32 %v3600, %v3601
    %v3603 = vrot.slane %v3602, 1
    %v3604 = vadd.f32 %v3602, %v3603
    %v3605 = vrot.slane %v2490, 4
    %v3606 = vadd.f32 %v2490, %v3605
    %v3607 = vrot.slane %v3606, 2
    %v3608 = vadd.f32 %v3606, %v3607
    %v3609 = vrot.slane %v3608, 1
    %v3610 = vadd.f32 %v3608, %v3609
    %v3611 = vrot.slane %v2492, 4
    %v3612 = vadd.f32 %v2492, %v3611
    %v3613 = vrot.slane %v3612, 2
    %v3614 = vadd.f32 %v3612, %v3613
    %v3615 = vrot.slane %v3614, 1
    %v3616 = vadd.f32 %v3614, %v3615
    %v3617 = vrot.slane %v2494, 4
    %v3618 = vadd.f32 %v2494, %v3617
    %v3619 = vrot.slane %v3618, 2
    %v3620 = vadd.f32 %v3618, %v3619
    %v3621 = vrot.slane %v3620, 1
    %v3622 = vadd.f32 %v3620, %v3621
    %v3623 = vrot.slane %v2496, 4
    %v3624 = vadd.f32 %v2496, %v3623
    %v3625 = vrot.slane %v3624, 2
    %v3626 = vadd.f32 %v3624, %v3625
    %v3627 = vrot.slane %v3626, 1
    %v3628 = vadd.f32 %v3626, %v3627
    %v3629 = vrot.slane %v2498, 4
    %v3630 = vadd.f32 %v2498, %v3629
    %v3631 = vrot.slane %v3630, 2
    %v3632 = vadd.f32 %v3630, %v3631
    %v3633 = vrot.slane %v3632, 1
    %v3634 = vadd.f32 %v3632, %v3633
    %v3635 = vrot.slane %v2500, 4
    %v3636 = vadd.f32 %v2500, %v3635
    %v3637 = vrot.slane %v3636, 2
    %v3638 = vadd.f32 %v3636, %v3637
    %v3639 = vrot.slane %v3638, 1
    %v3640 = vadd.f32 %v3638, %v3639
    %v3641 = vrot.slane %v2502, 4
    %v3642 = vadd.f32 %v2502, %v3641
    %v3643 = vrot.slane %v3642, 2
    %v3644 = vadd.f32 %v3642, %v3643
    %v3645 = vrot.slane %v3644, 1
    %v3646 = vadd.f32 %v3644, %v3645
    %v3647 = vrot.slane %v2504, 4
    %v3648 = vadd.f32 %v2504, %v3647
    %v3649 = vrot.slane %v3648, 2
    %v3650 = vadd.f32 %v3648, %v3649
    %v3651 = vrot.slane %v3650, 1
    %v3652 = vadd.f32 %v3650, %v3651
    %v3653 = vrot.slane %v2506, 4
    %v3654 = vadd.f32 %v2506, %v3653
    %v3655 = vrot.slane %v3654, 2
    %v3656 = vadd.f32 %v3654, %v3655
    %v3657 = vrot.slane %v3656, 1
    %v3658 = vadd.f32 %v3656, %v3657
    %v3659 = vrot.slane %v2508, 4
    %v3660 = vadd.f32 %v2508, %v3659
    %v3661 = vrot.slane %v3660, 2
    %v3662 = vadd.f32 %v3660, %v3661
    %v3663 = vrot.slane %v3662, 1
    %v3664 = vadd.f32 %v3662, %v3663
    %v3665 = vrot.slane %v2510, 4
    %v3666 = vadd.f32 %v2510, %v3665
    %v3667 = vrot.slane %v3666, 2
    %v3668 = vadd.f32 %v3666, %v3667
    %v3669 = vrot.slane %v3668, 1
    %v3670 = vadd.f32 %v3668, %v3669
    %v3671 = vrot.slane %v2512, 4
    %v3672 = vadd.f32 %v2512, %v3671
    %v3673 = vrot.slane %v3672, 2
    %v3674 = vadd.f32 %v3672, %v3673
    %v3675 = vrot.slane %v3674, 1
    %v3676 = vadd.f32 %v3674, %v3675
    %v3677 = vrot.slane %v2514, 4
    %v3678 = vadd.f32 %v2514, %v3677
    %v3679 = vrot.slane %v3678, 2
    %v3680 = vadd.f32 %v3678, %v3679
    %v3681 = vrot.slane %v3680, 1
    %v3682 = vadd.f32 %v3680, %v3681
    %v3683 = vrot.slane %v2516, 4
    %v3684 = vadd.f32 %v2516, %v3683
    %v3685 = vrot.slane %v3684, 2
    %v3686 = vadd.f32 %v3684, %v3685
    %v3687 = vrot.slane %v3686, 1
    %v3688 = vadd.f32 %v3686, %v3687
    %v3689 = vrot.slane %v2518, 4
    %v3690 = vadd.f32 %v2518, %v3689
    %v3691 = vrot.slane %v3690, 2
    %v3692 = vadd.f32 %v3690, %v3691
    %v3693 = vrot.slane %v3692, 1
    %v3694 = vadd.f32 %v3692, %v3693
    %v3695 = vrot.slane %v2520, 4
    %v3696 = vadd.f32 %v2520, %v3695
    %v3697 = vrot.slane %v3696, 2
    %v3698 = vadd.f32 %v3696, %v3697
    %v3699 = vrot.slane %v3698, 1
    %v3700 = vadd.f32 %v3698, %v3699
    %v3701 = vrot.slane %v2522, 4
    %v3702 = vadd.f32 %v2522, %v3701
    %v3703 = vrot.slane %v3702, 2
    %v3704 = vadd.f32 %v3702, %v3703
    %v3705 = vrot.slane %v3704, 1
    %v3706 = vadd.f32 %v3704, %v3705
    %v3707 = vrot.slane %v2524, 4
    %v3708 = vadd.f32 %v2524, %v3707
    %v3709 = vrot.slane %v3708, 2
    %v3710 = vadd.f32 %v3708, %v3709
    %v3711 = vrot.slane %v3710, 1
    %v3712 = vadd.f32 %v3710, %v3711
    %v3713 = vrot.slane %v2526, 4
    %v3714 = vadd.f32 %v2526, %v3713
    %v3715 = vrot.slane %v3714, 2
    %v3716 = vadd.f32 %v3714, %v3715
    %v3717 = vrot.slane %v3716, 1
    %v3718 = vadd.f32 %v3716, %v3717
    %v3719 = vrot.slane %v2528, 4
    %v3720 = vadd.f32 %v2528, %v3719
    %v3721 = vrot.slane %v3720, 2
    %v3722 = vadd.f32 %v3720, %v3721
    %v3723 = vrot.slane %v3722, 1
    %v3724 = vadd.f32 %v3722, %v3723
    %v3725 = vrot.slane %v2530, 4
    %v3726 = vadd.f32 %v2530, %v3725
    %v3727 = vrot.slane %v3726, 2
    %v3728 = vadd.f32 %v3726, %v3727
    %v3729 = vrot.slane %v3728, 1
    %v3730 = vadd.f32 %v3728, %v3729
    %v3731 = vrot.slane %v2532, 4
    %v3732 = vadd.f32 %v2532, %v3731
    %v3733 = vrot.slane %v3732, 2
    %v3734 = vadd.f32 %v3732, %v3733
    %v3735 = vrot.slane %v3734, 1
    %v3736 = vadd.f32 %v3734, %v3735
    %v3737 = vrot.slane %v2534, 4
    %v3738 = vadd.f32 %v2534, %v3737
    %v3739 = vrot.slane %v3738, 2
    %v3740 = vadd.f32 %v3738, %v3739
    %v3741 = vrot.slane %v3740, 1
    %v3742 = vadd.f32 %v3740, %v3741
    %v3743 = vrot.slane %v2536, 4
    %v3744 = vadd.f32 %v2536, %v3743
    %v3745 = vrot.slane %v3744, 2
    %v3746 = vadd.f32 %v3744, %v3745
    %v3747 = vrot.slane %v3746, 1
    %v3748 = vadd.f32 %v3746, %v3747
    %v3749 = vrot.slane %v2538, 4
    %v3750 = vadd.f32 %v2538, %v3749
    %v3751 = vrot.slane %v3750, 2
    %v3752 = vadd.f32 %v3750, %v3751
    %v3753 = vrot.slane %v3752, 1
    %v3754 = vadd.f32 %v3752, %v3753
    %v3755 = vrot.slane %v2540, 4
    %v3756 = vadd.f32 %v2540, %v3755
    %v3757 = vrot.slane %v3756, 2
    %v3758 = vadd.f32 %v3756, %v3757
    %v3759 = vrot.slane %v3758, 1
    %v3760 = vadd.f32 %v3758, %v3759
    %v3761 = vrot.slane %v2542, 4
    %v3762 = vadd.f32 %v2542, %v3761
    %v3763 = vrot.slane %v3762, 2
    %v3764 = vadd.f32 %v3762, %v3763
    %v3765 = vrot.slane %v3764, 1
    %v3766 = vadd.f32 %v3764, %v3765
    %v3767 = vrot.slane %v2544, 4
    %v3768 = vadd.f32 %v2544, %v3767
    %v3769 = vrot.slane %v3768, 2
    %v3770 = vadd.f32 %v3768, %v3769
    %v3771 = vrot.slane %v3770, 1
    %v3772 = vadd.f32 %v3770, %v3771
    %v3773 = vrot.slane %v2546, 4
    %v3774 = vadd.f32 %v2546, %v3773
    %v3775 = vrot.slane %v3774, 2
    %v3776 = vadd.f32 %v3774, %v3775
    %v3777 = vrot.slane %v3776, 1
    %v3778 = vadd.f32 %v3776, %v3777
    %v3779 = vrot.slane %v2548, 4
    %v3780 = vadd.f32 %v2548, %v3779
    %v3781 = vrot.slane %v3780, 2
    %v3782 = vadd.f32 %v3780, %v3781
    %v3783 = vrot.slane %v3782, 1
    %v3784 = vadd.f32 %v3782, %v3783
    %v3785 = vrot.slane %v2550, 4
    %v3786 = vadd.f32 %v2550, %v3785
    %v3787 = vrot.slane %v3786, 2
    %v3788 = vadd.f32 %v3786, %v3787
    %v3789 = vrot.slane %v3788, 1
    %v3790 = vadd.f32 %v3788, %v3789
    %v3791 = vrot.slane %v2552, 4
    %v3792 = vadd.f32 %v2552, %v3791
    %v3793 = vrot.slane %v3792, 2
    %v3794 = vadd.f32 %v3792, %v3793
    %v3795 = vrot.slane %v3794, 1
    %v3796 = vadd.f32 %v3794, %v3795
    %v3797 = vrot.slane %v2554, 4
    %v3798 = vadd.f32 %v2554, %v3797
    %v3799 = vrot.slane %v3798, 2
    %v3800 = vadd.f32 %v3798, %v3799
    %v3801 = vrot.slane %v3800, 1
    %v3802 = vadd.f32 %v3800, %v3801
    %v3803 = vrot.slane %v2556, 4
    %v3804 = vadd.f32 %v2556, %v3803
    %v3805 = vrot.slane %v3804, 2
    %v3806 = vadd.f32 %v3804, %v3805
    %v3807 = vrot.slane %v3806, 1
    %v3808 = vadd.f32 %v3806, %v3807
    %v3809 = vrot.slane %v2558, 4
    %v3810 = vadd.f32 %v2558, %v3809
    %v3811 = vrot.slane %v3810, 2
    %v3812 = vadd.f32 %v3810, %v3811
    %v3813 = vrot.slane %v3812, 1
    %v3814 = vadd.f32 %v3812, %v3813
    %v3815 = vrot.slane %v2560, 4
    %v3816 = vadd.f32 %v2560, %v3815
    %v3817 = vrot.slane %v3816, 2
    %v3818 = vadd.f32 %v3816, %v3817
    %v3819 = vrot.slane %v3818, 1
    %v3820 = vadd.f32 %v3818, %v3819
    %v3821 = vrot.slane %v2562, 4
    %v3822 = vadd.f32 %v2562, %v3821
    %v3823 = vrot.slane %v3822, 2
    %v3824 = vadd.f32 %v3822, %v3823
    %v3825 = vrot.slane %v3824, 1
    %v3826 = vadd.f32 %v3824, %v3825
    %v3827 = vrot.slane %v2564, 4
    %v3828 = vadd.f32 %v2564, %v3827
    %v3829 = vrot.slane %v3828, 2
    %v3830 = vadd.f32 %v3828, %v3829
    %v3831 = vrot.slane %v3830, 1
    %v3832 = vadd.f32 %v3830, %v3831
    %v3833 = vrot.slane %v2566, 4
    %v3834 = vadd.f32 %v2566, %v3833
    %v3835 = vrot.slane %v3834, 2
    %v3836 = vadd.f32 %v3834, %v3835
    %v3837 = vrot.slane %v3836, 1
    %v3838 = vadd.f32 %v3836, %v3837
    %v3839 = vrot.slane %v2568, 4
    %v3840 = vadd.f32 %v2568, %v3839
    %v3841 = vrot.slane %v3840, 2
    %v3842 = vadd.f32 %v3840, %v3841
    %v3843 = vrot.slane %v3842, 1
    %v3844 = vadd.f32 %v3842, %v3843
    %v3845 = vrot.slane %v2570, 4
    %v3846 = vadd.f32 %v2570, %v3845
    %v3847 = vrot.slane %v3846, 2
    %v3848 = vadd.f32 %v3846, %v3847
    %v3849 = vrot.slane %v3848, 1
    %v3850 = vadd.f32 %v3848, %v3849
    %v3851 = vrot.slane %v2572, 4
    %v3852 = vadd.f32 %v2572, %v3851
    %v3853 = vrot.slane %v3852, 2
    %v3854 = vadd.f32 %v3852, %v3853
    %v3855 = vrot.slane %v3854, 1
    %v3856 = vadd.f32 %v3854, %v3855
    %v3857 = vrot.slane %v2574, 4
    %v3858 = vadd.f32 %v2574, %v3857
    %v3859 = vrot.slane %v3858, 2
    %v3860 = vadd.f32 %v3858, %v3859
    %v3861 = vrot.slane %v3860, 1
    %v3862 = vadd.f32 %v3860, %v3861
    %v3863 = vrot.slane %v2576, 4
    %v3864 = vadd.f32 %v2576, %v3863
    %v3865 = vrot.slane %v3864, 2
    %v3866 = vadd.f32 %v3864, %v3865
    %v3867 = vrot.slane %v3866, 1
    %v3868 = vadd.f32 %v3866, %v3867
    %v3869 = vrot.slane %v2578, 4
    %v3870 = vadd.f32 %v2578, %v3869
    %v3871 = vrot.slane %v3870, 2
    %v3872 = vadd.f32 %v3870, %v3871
    %v3873 = vrot.slane %v3872, 1
    %v3874 = vadd.f32 %v3872, %v3873
    %v3875 = vrot.slane %v2580, 4
    %v3876 = vadd.f32 %v2580, %v3875
    %v3877 = vrot.slane %v3876, 2
    %v3878 = vadd.f32 %v3876, %v3877
    %v3879 = vrot.slane %v3878, 1
    %v3880 = vadd.f32 %v3878, %v3879
    %v3881 = vrot.slane %v2582, 4
    %v3882 = vadd.f32 %v2582, %v3881
    %v3883 = vrot.slane %v3882, 2
    %v3884 = vadd.f32 %v3882, %v3883
    %v3885 = vrot.slane %v3884, 1
    %v3886 = vadd.f32 %v3884, %v3885
    %v3887 = vrot.slane %v2584, 4
    %v3888 = vadd.f32 %v2584, %v3887
    %v3889 = vrot.slane %v3888, 2
    %v3890 = vadd.f32 %v3888, %v3889
    %v3891 = vrot.slane %v3890, 1
    %v3892 = vadd.f32 %v3890, %v3891
    %v3893 = vrot.slane %v2586, 4
    %v3894 = vadd.f32 %v2586, %v3893
    %v3895 = vrot.slane %v3894, 2
    %v3896 = vadd.f32 %v3894, %v3895
    %v3897 = vrot.slane %v3896, 1
    %v3898 = vadd.f32 %v3896, %v3897
    %v3899 = vrot.slane %v2588, 4
    %v3900 = vadd.f32 %v2588, %v3899
    %v3901 = vrot.slane %v3900, 2
    %v3902 = vadd.f32 %v3900, %v3901
    %v3903 = vrot.slane %v3902, 1
    %v3904 = vadd.f32 %v3902, %v3903
    %v3905 = vrot.slane %v2590, 4
    %v3906 = vadd.f32 %v2590, %v3905
    %v3907 = vrot.slane %v3906, 2
    %v3908 = vadd.f32 %v3906, %v3907
    %v3909 = vrot.slane %v3908, 1
    %v3910 = vadd.f32 %v3908, %v3909
    %v3911 = vrot.slane %v2592, 4
    %v3912 = vadd.f32 %v2592, %v3911
    %v3913 = vrot.slane %v3912, 2
    %v3914 = vadd.f32 %v3912, %v3913
    %v3915 = vrot.slane %v3914, 1
    %v3916 = vadd.f32 %v3914, %v3915
    %v3917 = vrot.slane %v2594, 4
    %v3918 = vadd.f32 %v2594, %v3917
    %v3919 = vrot.slane %v3918, 2
    %v3920 = vadd.f32 %v3918, %v3919
    %v3921 = vrot.slane %v3920, 1
    %v3922 = vadd.f32 %v3920, %v3921
    %v3923 = vrot.slane %v2596, 4
    %v3924 = vadd.f32 %v2596, %v3923
    %v3925 = vrot.slane %v3924, 2
    %v3926 = vadd.f32 %v3924, %v3925
    %v3927 = vrot.slane %v3926, 1
    %v3928 = vadd.f32 %v3926, %v3927
    %v3929 = vrot.slane %v2598, 4
    %v3930 = vadd.f32 %v2598, %v3929
    %v3931 = vrot.slane %v3930, 2
    %v3932 = vadd.f32 %v3930, %v3931
    %v3933 = vrot.slane %v3932, 1
    %v3934 = vadd.f32 %v3932, %v3933
    %v3935 = vrot.slane %v2600, 4
    %v3936 = vadd.f32 %v2600, %v3935
    %v3937 = vrot.slane %v3936, 2
    %v3938 = vadd.f32 %v3936, %v3937
    %v3939 = vrot.slane %v3938, 1
    %v3940 = vadd.f32 %v3938, %v3939
    %v3941 = vrot.slane %v2602, 4
    %v3942 = vadd.f32 %v2602, %v3941
    %v3943 = vrot.slane %v3942, 2
    %v3944 = vadd.f32 %v3942, %v3943
    %v3945 = vrot.slane %v3944, 1
    %v3946 = vadd.f32 %v3944, %v3945
    %v3947 = vrot.slane %v2604, 4
    %v3948 = vadd.f32 %v2604, %v3947
    %v3949 = vrot.slane %v3948, 2
    %v3950 = vadd.f32 %v3948, %v3949
    %v3951 = vrot.slane %v3950, 1
    %v3952 = vadd.f32 %v3950, %v3951
    %v3953 = vrot.slane %v2606, 4
    %v3954 = vadd.f32 %v2606, %v3953
    %v3955 = vrot.slane %v3954, 2
    %v3956 = vadd.f32 %v3954, %v3955
    %v3957 = vrot.slane %v3956, 1
    %v3958 = vadd.f32 %v3956, %v3957
    %v3959 = vrot.slane %v2608, 4
    %v3960 = vadd.f32 %v2608, %v3959
    %v3961 = vrot.slane %v3960, 2
    %v3962 = vadd.f32 %v3960, %v3961
    %v3963 = vrot.slane %v3962, 1
    %v3964 = vadd.f32 %v3962, %v3963
    %v3965 = vrot.slane %v2610, 4
    %v3966 = vadd.f32 %v2610, %v3965
    %v3967 = vrot.slane %v3966, 2
    %v3968 = vadd.f32 %v3966, %v3967
    %v3969 = vrot.slane %v3968, 1
    %v3970 = vadd.f32 %v3968, %v3969
    %v3971 = vrot.slane %v2612, 4
    %v3972 = vadd.f32 %v2612, %v3971
    %v3973 = vrot.slane %v3972, 2
    %v3974 = vadd.f32 %v3972, %v3973
    %v3975 = vrot.slane %v3974, 1
    %v3976 = vadd.f32 %v3974, %v3975
    %v3977 = vrot.slane %v2614, 4
    %v3978 = vadd.f32 %v2614, %v3977
    %v3979 = vrot.slane %v3978, 2
    %v3980 = vadd.f32 %v3978, %v3979
    %v3981 = vrot.slane %v3980, 1
    %v3982 = vadd.f32 %v3980, %v3981
    %v3983 = vrot.slane %v2616, 4
    %v3984 = vadd.f32 %v2616, %v3983
    %v3985 = vrot.slane %v3984, 2
    %v3986 = vadd.f32 %v3984, %v3985
    %v3987 = vrot.slane %v3986, 1
    %v3988 = vadd.f32 %v3986, %v3987
    %v3989 = vrot.slane %v2618, 4
    %v3990 = vadd.f32 %v2618, %v3989
    %v3991 = vrot.slane %v3990, 2
    %v3992 = vadd.f32 %v3990, %v3991
    %v3993 = vrot.slane %v3992, 1
    %v3994 = vadd.f32 %v3992, %v3993
    %v3995 = vrot.slane %v2620, 4
    %v3996 = vadd.f32 %v2620, %v3995
    %v3997 = vrot.slane %v3996, 2
    %v3998 = vadd.f32 %v3996, %v3997
    %v3999 = vrot.slane %v3998, 1
    %v4000 = vadd.f32 %v3998, %v3999
    %v4001 = vrot.slane %v2622, 4
    %v4002 = vadd.f32 %v2622, %v4001
    %v4003 = vrot.slane %v4002, 2
    %v4004 = vadd.f32 %v4002, %v4003
    %v4005 = vrot.slane %v4004, 1
    %v4006 = vadd.f32 %v4004, %v4005
    %v4007 = vrot.slane %v2624, 4
    %v4008 = vadd.f32 %v2624, %v4007
    %v4009 = vrot.slane %v4008, 2
    %v4010 = vadd.f32 %v4008, %v4009
    %v4011 = vrot.slane %v4010, 1
    %v4012 = vadd.f32 %v4010, %v4011
    %v4013 = vrot.slane %v2626, 4
    %v4014 = vadd.f32 %v2626, %v4013
    %v4015 = vrot.slane %v4014, 2
    %v4016 = vadd.f32 %v4014, %v4015
    %v4017 = vrot.slane %v4016, 1
    %v4018 = vadd.f32 %v4016, %v4017
    %v4019 = vrot.slane %v2628, 4
    %v4020 = vadd.f32 %v2628, %v4019
    %v4021 = vrot.slane %v4020, 2
    %v4022 = vadd.f32 %v4020, %v4021
    %v4023 = vrot.slane %v4022, 1
    %v4024 = vadd.f32 %v4022, %v4023
    %v4025 = vrot.slane %v2630, 4
    %v4026 = vadd.f32 %v2630, %v4025
    %v4027 = vrot.slane %v4026, 2
    %v4028 = vadd.f32 %v4026, %v4027
    %v4029 = vrot.slane %v4028, 1
    %v4030 = vadd.f32 %v4028, %v4029
    %v4031 = vrot.slane %v2632, 4
    %v4032 = vadd.f32 %v2632, %v4031
    %v4033 = vrot.slane %v4032, 2
    %v4034 = vadd.f32 %v4032, %v4033
    %v4035 = vrot.slane %v4034, 1
    %v4036 = vadd.f32 %v4034, %v4035
    %v4037 = vrot.slane %v2634, 4
    %v4038 = vadd.f32 %v2634, %v4037
    %v4039 = vrot.slane %v4038, 2
    %v4040 = vadd.f32 %v4038, %v4039
    %v4041 = vrot.slane %v4040, 1
    %v4042 = vadd.f32 %v4040, %v4041
    %v4043 = vrot.slane %v2636, 4
    %v4044 = vadd.f32 %v2636, %v4043
    %v4045 = vrot.slane %v4044, 2
    %v4046 = vadd.f32 %v4044, %v4045
    %v4047 = vrot.slane %v4046, 1
    %v4048 = vadd.f32 %v4046, %v4047
    %v4049 = vrot.slane %v2638, 4
    %v4050 = vadd.f32 %v2638, %v4049
    %v4051 = vrot.slane %v4050, 2
    %v4052 = vadd.f32 %v4050, %v4051
    %v4053 = vrot.slane %v4052, 1
    %v4054 = vadd.f32 %v4052, %v4053
    %v4055 = vrot.slane %v2640, 4
    %v4056 = vadd.f32 %v2640, %v4055
    %v4057 = vrot.slane %v4056, 2
    %v4058 = vadd.f32 %v4056, %v4057
    %v4059 = vrot.slane %v4058, 1
    %v4060 = vadd.f32 %v4058, %v4059
    %v4061 = vrot.slane %v2642, 4
    %v4062 = vadd.f32 %v2642, %v4061
    %v4063 = vrot.slane %v4062, 2
    %v4064 = vadd.f32 %v4062, %v4063
    %v4065 = vrot.slane %v4064, 1
    %v4066 = vadd.f32 %v4064, %v4065
    %v4067 = vrot.slane %v2644, 4
    %v4068 = vadd.f32 %v2644, %v4067
    %v4069 = vrot.slane %v4068, 2
    %v4070 = vadd.f32 %v4068, %v4069
    %v4071 = vrot.slane %v4070, 1
    %v4072 = vadd.f32 %v4070, %v4071
    %v4073 = vrot.slane %v2646, 4
    %v4074 = vadd.f32 %v2646, %v4073
    %v4075 = vrot.slane %v4074, 2
    %v4076 = vadd.f32 %v4074, %v4075
    %v4077 = vrot.slane %v4076, 1
    %v4078 = vadd.f32 %v4076, %v4077
    %v4079 = vrot.slane %v2648, 4
    %v4080 = vadd.f32 %v2648, %v4079
    %v4081 = vrot.slane %v4080, 2
    %v4082 = vadd.f32 %v4080, %v4081
    %v4083 = vrot.slane %v4082, 1
    %v4084 = vadd.f32 %v4082, %v4083
    %v4085 = vrot.slane %v2650, 4
    %v4086 = vadd.f32 %v2650, %v4085
    %v4087 = vrot.slane %v4086, 2
    %v4088 = vadd.f32 %v4086, %v4087
    %v4089 = vrot.slane %v4088, 1
    %v4090 = vadd.f32 %v4088, %v4089
    %v4091 = vrot.slane %v2652, 4
    %v4092 = vadd.f32 %v2652, %v4091
    %v4093 = vrot.slane %v4092, 2
    %v4094 = vadd.f32 %v4092, %v4093
    %v4095 = vrot.slane %v4094, 1
    %v4096 = vadd.f32 %v4094, %v4095
    %v4097 = vrot.slane %v2654, 4
    %v4098 = vadd.f32 %v2654, %v4097
    %v4099 = vrot.slane %v4098, 2
    %v4100 = vadd.f32 %v4098, %v4099
    %v4101 = vrot.slane %v4100, 1
    %v4102 = vadd.f32 %v4100, %v4101
    %v4103 = vrot.slane %v2656, 4
    %v4104 = vadd.f32 %v2656, %v4103
    %v4105 = vrot.slane %v4104, 2
    %v4106 = vadd.f32 %v4104, %v4105
    %v4107 = vrot.slane %v4106, 1
    %v4108 = vadd.f32 %v4106, %v4107
    %v4109 = vrot.slane %v2658, 4
    %v4110 = vadd.f32 %v2658, %v4109
    %v4111 = vrot.slane %v4110, 2
    %v4112 = vadd.f32 %v4110, %v4111
    %v4113 = vrot.slane %v4112, 1
    %v4114 = vadd.f32 %v4112, %v4113
    %v4115 = vrot.slane %v2660, 4
    %v4116 = vadd.f32 %v2660, %v4115
    %v4117 = vrot.slane %v4116, 2
    %v4118 = vadd.f32 %v4116, %v4117
    %v4119 = vrot.slane %v4118, 1
    %v4120 = vadd.f32 %v4118, %v4119
    %v4121 = vrot.slane %v2662, 4
    %v4122 = vadd.f32 %v2662, %v4121
    %v4123 = vrot.slane %v4122, 2
    %v4124 = vadd.f32 %v4122, %v4123
    %v4125 = vrot.slane %v4124, 1
    %v4126 = vadd.f32 %v4124, %v4125
    %v4127 = vrot.slane %v2664, 4
    %v4128 = vadd.f32 %v2664, %v4127
    %v4129 = vrot.slane %v4128, 2
    %v4130 = vadd.f32 %v4128, %v4129
    %v4131 = vrot.slane %v4130, 1
    %v4132 = vadd.f32 %v4130, %v4131
    %v4133 = vrot.slane %v2666, 4
    %v4134 = vadd.f32 %v2666, %v4133
    %v4135 = vrot.slane %v4134, 2
    %v4136 = vadd.f32 %v4134, %v4135
    %v4137 = vrot.slane %v4136, 1
    %v4138 = vadd.f32 %v4136, %v4137
    %v4139 = vrot.slane %v2668, 4
    %v4140 = vadd.f32 %v2668, %v4139
    %v4141 = vrot.slane %v4140, 2
    %v4142 = vadd.f32 %v4140, %v4141
    %v4143 = vrot.slane %v4142, 1
    %v4144 = vadd.f32 %v4142, %v4143
    %v4145 = vrot.slane %v2670, 4
    %v4146 = vadd.f32 %v2670, %v4145
    %v4147 = vrot.slane %v4146, 2
    %v4148 = vadd.f32 %v4146, %v4147
    %v4149 = vrot.slane %v4148, 1
    %v4150 = vadd.f32 %v4148, %v4149
    %v4151 = vrot.slane %v2672, 4
    %v4152 = vadd.f32 %v2672, %v4151
    %v4153 = vrot.slane %v4152, 2
    %v4154 = vadd.f32 %v4152, %v4153
    %v4155 = vrot.slane %v4154, 1
    %v4156 = vadd.f32 %v4154, %v4155
    %v4157 = vrot.slane %v2674, 4
    %v4158 = vadd.f32 %v2674, %v4157
    %v4159 = vrot.slane %v4158, 2
    %v4160 = vadd.f32 %v4158, %v4159
    %v4161 = vrot.slane %v4160, 1
    %v4162 = vadd.f32 %v4160, %v4161
    %v4163 = vrot.slane %v2676, 4
    %v4164 = vadd.f32 %v2676, %v4163
    %v4165 = vrot.slane %v4164, 2
    %v4166 = vadd.f32 %v4164, %v4165
    %v4167 = vrot.slane %v4166, 1
    %v4168 = vadd.f32 %v4166, %v4167
    %v4169 = vrot.slane %v2678, 4
    %v4170 = vadd.f32 %v2678, %v4169
    %v4171 = vrot.slane %v4170, 2
    %v4172 = vadd.f32 %v4170, %v4171
    %v4173 = vrot.slane %v4172, 1
    %v4174 = vadd.f32 %v4172, %v4173
    %v4175 = vrot.slane %v2680, 4
    %v4176 = vadd.f32 %v2680, %v4175
    %v4177 = vrot.slane %v4176, 2
    %v4178 = vadd.f32 %v4176, %v4177
    %v4179 = vrot.slane %v4178, 1
    %v4180 = vadd.f32 %v4178, %v4179
    %v4181 = vrot.slane %v2682, 4
    %v4182 = vadd.f32 %v2682, %v4181
    %v4183 = vrot.slane %v4182, 2
    %v4184 = vadd.f32 %v4182, %v4183
    %v4185 = vrot.slane %v4184, 1
    %v4186 = vadd.f32 %v4184, %v4185
    %v4187 = vrot.slane %v2684, 4
    %v4188 = vadd.f32 %v2684, %v4187
    %v4189 = vrot.slane %v4188, 2
    %v4190 = vadd.f32 %v4188, %v4189
    %v4191 = vrot.slane %v4190, 1
    %v4192 = vadd.f32 %v4190, %v4191
    %v4193 = vrot.slane %v2686, 4
    %v4194 = vadd.f32 %v2686, %v4193
    %v4195 = vrot.slane %v4194, 2
    %v4196 = vadd.f32 %v4194, %v4195
    %v4197 = vrot.slane %v4196, 1
    %v4198 = vadd.f32 %v4196, %v4197
    %v4199 = vrot.slane %v2688, 4
    %v4200 = vadd.f32 %v2688, %v4199
    %v4201 = vrot.slane %v4200, 2
    %v4202 = vadd.f32 %v4200, %v4201
    %v4203 = vrot.slane %v4202, 1
    %v4204 = vadd.f32 %v4202, %v4203
    %v4205 = vrot.slane %v2690, 4
    %v4206 = vadd.f32 %v2690, %v4205
    %v4207 = vrot.slane %v4206, 2
    %v4208 = vadd.f32 %v4206, %v4207
    %v4209 = vrot.slane %v4208, 1
    %v4210 = vadd.f32 %v4208, %v4209
    %v4211 = vrot.slane %v2692, 4
    %v4212 = vadd.f32 %v2692, %v4211
    %v4213 = vrot.slane %v4212, 2
    %v4214 = vadd.f32 %v4212, %v4213
    %v4215 = vrot.slane %v4214, 1
    %v4216 = vadd.f32 %v4214, %v4215
    %v4217 = vrot.slane %v2694, 4
    %v4218 = vadd.f32 %v2694, %v4217
    %v4219 = vrot.slane %v4218, 2
    %v4220 = vadd.f32 %v4218, %v4219
    %v4221 = vrot.slane %v4220, 1
    %v4222 = vadd.f32 %v4220, %v4221
    %v4223 = vrot.slane %v2696, 4
    %v4224 = vadd.f32 %v2696, %v4223
    %v4225 = vrot.slane %v4224, 2
    %v4226 = vadd.f32 %v4224, %v4225
    %v4227 = vrot.slane %v4226, 1
    %v4228 = vadd.f32 %v4226, %v4227
    %v4229 = vrot.slane %v2698, 4
    %v4230 = vadd.f32 %v2698, %v4229
    %v4231 = vrot.slane %v4230, 2
    %v4232 = vadd.f32 %v4230, %v4231
    %v4233 = vrot.slane %v4232, 1
    %v4234 = vadd.f32 %v4232, %v4233
    %v4235 = vlog2.pop %v2704
    %v4236 = vmul.f32 %v4235, 0.6931472
    %v4237 = vlog2.pop %v2710
    %v4238 = vmul.f32 %v4237, 0.6931472
    %v4239 = vlog2.pop %v2716
    %v4240 = vmul.f32 %v4239, 0.6931472
    %v4241 = vlog2.pop %v2722
    %v4242 = vmul.f32 %v4241, 0.6931472
    %v4243 = vlog2.pop %v2728
    %v4244 = vmul.f32 %v4243, 0.6931472
    %v4245 = vlog2.pop %v2734
    %v4246 = vmul.f32 %v4245, 0.6931472
    %v4247 = vlog2.pop %v2740
    %v4248 = vmul.f32 %v4247, 0.6931472
    %v4249 = vlog2.pop %v2746
    %v4250 = vmul.f32 %v4249, 0.6931472
    %v4251 = vlog2.pop %v2752
    %v4252 = vmul.f32 %v4251, 0.6931472
    %v4253 = vlog2.pop %v2758
    %v4254 = vmul.f32 %v4253, 0.6931472
    %v4255 = vlog2.pop %v2764
    %v4256 = vmul.f32 %v4255, 0.6931472
    %v4257 = vlog2.pop %v2770
    %v4258 = vmul.f32 %v4257, 0.6931472
    %v4259 = vlog2.pop %v2776
    %v4260 = vmul.f32 %v4259, 0.6931472
    %v4261 = vlog2.pop %v2782
    %v4262 = vmul.f32 %v4261, 0.6931472
    %v4263 = vlog2.pop %v2788
    %v4264 = vmul.f32 %v4263, 0.6931472
    %v4265 = vlog2.pop %v2794
    %v4266 = vmul.f32 %v4265, 0.6931472
    %v4267 = vlog2.pop %v2800
    %v4268 = vmul.f32 %v4267, 0.6931472
    %v4269 = vlog2.pop %v2806
    %v4270 = vmul.f32 %v4269, 0.6931472
    %v4271 = vlog2.pop %v2812
    %v4272 = vmul.f32 %v4271, 0.6931472
    %v4273 = vlog2.pop %v2818
    %v4274 = vmul.f32 %v4273, 0.6931472
    %v4275 = vlog2.pop %v2824
    %v4276 = vmul.f32 %v4275, 0.6931472
    %v4277 = vlog2.pop %v2830
    %v4278 = vmul.f32 %v4277, 0.6931472
    %v4279 = vlog2.pop %v2836
    %v4280 = vmul.f32 %v4279, 0.6931472
    %v4281 = vlog2.pop %v2842
    %v4282 = vmul.f32 %v4281, 0.6931472
    %v4283 = vlog2.pop %v2848
    %v4284 = vmul.f32 %v4283, 0.6931472
    %v4285 = vlog2.pop %v2854
    %v4286 = vmul.f32 %v4285, 0.6931472
    %v4287 = vlog2.pop %v2860
    %v4288 = vmul.f32 %v4287, 0.6931472
    %v4289 = vlog2.pop %v2866
    %v4290 = vmul.f32 %v4289, 0.6931472
    %v4291 = vlog2.pop %v2872
    %v4292 = vmul.f32 %v4291, 0.6931472
    %v4293 = vlog2.pop %v2878
    %v4294 = vmul.f32 %v4293, 0.6931472
    %v4295 = vlog2.pop %v2884
    %v4296 = vmul.f32 %v4295, 0.6931472
    %v4297 = vlog2.pop %v2890
    %v4298 = vmul.f32 %v4297, 0.6931472
    %v4299 = vlog2.pop %v2896
    %v4300 = vmul.f32 %v4299, 0.6931472
    %v4301 = vlog2.pop %v2902
    %v4302 = vmul.f32 %v4301, 0.6931472
    %v4303 = vlog2.pop %v2908
    %v4304 = vmul.f32 %v4303, 0.6931472
    %v4305 = vlog2.pop %v2914
    %v4306 = vmul.f32 %v4305, 0.6931472
    %v4307 = vlog2.pop %v2920
    %v4308 = vmul.f32 %v4307, 0.6931472
    %v4309 = vlog2.pop %v2926
    %v4310 = vmul.f32 %v4309, 0.6931472
    %v4311 = vlog2.pop %v2932
    %v4312 = vmul.f32 %v4311, 0.6931472
    %v4313 = vlog2.pop %v2938
    %v4314 = vmul.f32 %v4313, 0.6931472
    %v4315 = vlog2.pop %v2944
    %v4316 = vmul.f32 %v4315, 0.6931472
    %v4317 = vlog2.pop %v2950
    %v4318 = vmul.f32 %v4317, 0.6931472
    %v4319 = vlog2.pop %v2956
    %v4320 = vmul.f32 %v4319, 0.6931472
    %v4321 = vlog2.pop %v2962
    %v4322 = vmul.f32 %v4321, 0.6931472
    %v4323 = vlog2.pop %v2968
    %v4324 = vmul.f32 %v4323, 0.6931472
    %v4325 = vlog2.pop %v2974
    %v4326 = vmul.f32 %v4325, 0.6931472
    %v4327 = vlog2.pop %v2980
    %v4328 = vmul.f32 %v4327, 0.6931472
    %v4329 = vlog2.pop %v2986
    %v4330 = vmul.f32 %v4329, 0.6931472
    %v4331 = vlog2.pop %v2992
    %v4332 = vmul.f32 %v4331, 0.6931472
    %v4333 = vlog2.pop %v2998
    %v4334 = vmul.f32 %v4333, 0.6931472
    %v4335 = vlog2.pop %v3004
    %v4336 = vmul.f32 %v4335, 0.6931472
    %v4337 = vlog2.pop %v3010
    %v4338 = vmul.f32 %v4337, 0.6931472
    %v4339 = vlog2.pop %v3016
    %v4340 = vmul.f32 %v4339, 0.6931472
    %v4341 = vlog2.pop %v3022
    %v4342 = vmul.f32 %v4341, 0.6931472
    %v4343 = vlog2.pop %v3028
    %v4344 = vmul.f32 %v4343, 0.6931472
    %v4345 = vlog2.pop %v3034
    %v4346 = vmul.f32 %v4345, 0.6931472
    %v4347 = vlog2.pop %v3040
    %v4348 = vmul.f32 %v4347, 0.6931472
    %v4349 = vlog2.pop %v3046
    %v4350 = vmul.f32 %v4349, 0.6931472
    %v4351 = vlog2.pop %v3052
    %v4352 = vmul.f32 %v4351, 0.6931472
    %v4353 = vlog2.pop %v3058
    %v4354 = vmul.f32 %v4353, 0.6931472
    %v4355 = vlog2.pop %v3064
    %v4356 = vmul.f32 %v4355, 0.6931472
    %v4357 = vlog2.pop %v3070
    %v4358 = vmul.f32 %v4357, 0.6931472
    %v4359 = vlog2.pop %v3076
    %v4360 = vmul.f32 %v4359, 0.6931472
    %v4361 = vlog2.pop %v3082
    %v4362 = vmul.f32 %v4361, 0.6931472
    %v4363 = vlog2.pop %v3088
    %v4364 = vmul.f32 %v4363, 0.6931472
    %v4365 = vlog2.pop %v3094
    %v4366 = vmul.f32 %v4365, 0.6931472
    %v4367 = vlog2.pop %v3100
    %v4368 = vmul.f32 %v4367, 0.6931472
    %v4369 = vlog2.pop %v3106
    %v4370 = vmul.f32 %v4369, 0.6931472
    %v4371 = vlog2.pop %v3112
    %v4372 = vmul.f32 %v4371, 0.6931472
    %v4373 = vlog2.pop %v3118
    %v4374 = vmul.f32 %v4373, 0.6931472
    %v4375 = vlog2.pop %v3124
    %v4376 = vmul.f32 %v4375, 0.6931472
    %v4377 = vlog2.pop %v3130
    %v4378 = vmul.f32 %v4377, 0.6931472
    %v4379 = vlog2.pop %v3136
    %v4380 = vmul.f32 %v4379, 0.6931472
    %v4381 = vlog2.pop %v3142
    %v4382 = vmul.f32 %v4381, 0.6931472
    %v4383 = vlog2.pop %v3148
    %v4384 = vmul.f32 %v4383, 0.6931472
    %v4385 = vlog2.pop %v3154
    %v4386 = vmul.f32 %v4385, 0.6931472
    %v4387 = vlog2.pop %v3160
    %v4388 = vmul.f32 %v4387, 0.6931472
    %v4389 = vlog2.pop %v3166
    %v4390 = vmul.f32 %v4389, 0.6931472
    %v4391 = vlog2.pop %v3172
    %v4392 = vmul.f32 %v4391, 0.6931472
    %v4393 = vlog2.pop %v3178
    %v4394 = vmul.f32 %v4393, 0.6931472
    %v4395 = vlog2.pop %v3184
    %v4396 = vmul.f32 %v4395, 0.6931472
    %v4397 = vlog2.pop %v3190
    %v4398 = vmul.f32 %v4397, 0.6931472
    %v4399 = vlog2.pop %v3196
    %v4400 = vmul.f32 %v4399, 0.6931472
    %v4401 = vlog2.pop %v3202
    %v4402 = vmul.f32 %v4401, 0.6931472
    %v4403 = vlog2.pop %v3208
    %v4404 = vmul.f32 %v4403, 0.6931472
    %v4405 = vlog2.pop %v3214
    %v4406 = vmul.f32 %v4405, 0.6931472
    %v4407 = vlog2.pop %v3220
    %v4408 = vmul.f32 %v4407, 0.6931472
    %v4409 = vlog2.pop %v3226
    %v4410 = vmul.f32 %v4409, 0.6931472
    %v4411 = vlog2.pop %v3232
    %v4412 = vmul.f32 %v4411, 0.6931472
    %v4413 = vlog2.pop %v3238
    %v4414 = vmul.f32 %v4413, 0.6931472
    %v4415 = vlog2.pop %v3244
    %v4416 = vmul.f32 %v4415, 0.6931472
    %v4417 = vlog2.pop %v3250
    %v4418 = vmul.f32 %v4417, 0.6931472
    %v4419 = vlog2.pop %v3256
    %v4420 = vmul.f32 %v4419, 0.6931472
    %v4421 = vlog2.pop %v3262
    %v4422 = vmul.f32 %v4421, 0.6931472
    %v4423 = vlog2.pop %v3268
    %v4424 = vmul.f32 %v4423, 0.6931472
    %v4425 = vlog2.pop %v3274
    %v4426 = vmul.f32 %v4425, 0.6931472
    %v4427 = vlog2.pop %v3280
    %v4428 = vmul.f32 %v4427, 0.6931472
    %v4429 = vlog2.pop %v3286
    %v4430 = vmul.f32 %v4429, 0.6931472
    %v4431 = vlog2.pop %v3292
    %v4432 = vmul.f32 %v4431, 0.6931472
    %v4433 = vlog2.pop %v3298
    %v4434 = vmul.f32 %v4433, 0.6931472
    %v4435 = vlog2.pop %v3304
    %v4436 = vmul.f32 %v4435, 0.6931472
    %v4437 = vlog2.pop %v3310
    %v4438 = vmul.f32 %v4437, 0.6931472
    %v4439 = vlog2.pop %v3316
    %v4440 = vmul.f32 %v4439, 0.6931472
    %v4441 = vlog2.pop %v3322
    %v4442 = vmul.f32 %v4441, 0.6931472
    %v4443 = vlog2.pop %v3328
    %v4444 = vmul.f32 %v4443, 0.6931472
    %v4445 = vlog2.pop %v3334
    %v4446 = vmul.f32 %v4445, 0.6931472
    %v4447 = vlog2.pop %v3340
    %v4448 = vmul.f32 %v4447, 0.6931472
    %v4449 = vlog2.pop %v3346
    %v4450 = vmul.f32 %v4449, 0.6931472
    %v4451 = vlog2.pop %v3352
    %v4452 = vmul.f32 %v4451, 0.6931472
    %v4453 = vlog2.pop %v3358
    %v4454 = vmul.f32 %v4453, 0.6931472
    %v4455 = vlog2.pop %v3364
    %v4456 = vmul.f32 %v4455, 0.6931472
    %v4457 = vlog2.pop %v3370
    %v4458 = vmul.f32 %v4457, 0.6931472
    %v4459 = vlog2.pop %v3376
    %v4460 = vmul.f32 %v4459, 0.6931472
    %v4461 = vlog2.pop %v3382
    %v4462 = vmul.f32 %v4461, 0.6931472
    %v4463 = vlog2.pop %v3388
    %v4464 = vmul.f32 %v4463, 0.6931472
    %v4465 = vlog2.pop %v3394
    %v4466 = vmul.f32 %v4465, 0.6931472
    %v4467 = vlog2.pop %v3400
    %v4468 = vmul.f32 %v4467, 0.6931472
    %v4469 = vlog2.pop %v3406
    %v4470 = vmul.f32 %v4469, 0.6931472
    %v4471 = vlog2.pop %v3412
    %v4472 = vmul.f32 %v4471, 0.6931472
    %v4473 = vlog2.pop %v3418
    %v4474 = vmul.f32 %v4473, 0.6931472
    %v4475 = vlog2.pop %v3424
    %v4476 = vmul.f32 %v4475, 0.6931472
    %v4477 = vlog2.pop %v3430
    %v4478 = vmul.f32 %v4477, 0.6931472
    %v4479 = vlog2.pop %v3436
    %v4480 = vmul.f32 %v4479, 0.6931472
    %v4481 = vlog2.pop %v3442
    %v4482 = vmul.f32 %v4481, 0.6931472
    %v4483 = vlog2.pop %v3448
    %v4484 = vmul.f32 %v4483, 0.6931472
    %v4485 = vlog2.pop %v3454
    %v4486 = vmul.f32 %v4485, 0.6931472
    %v4487 = vlog2.pop %v3460
    %v4488 = vmul.f32 %v4487, 0.6931472
    %v4489 = vlog2.pop %v3466
    %v4490 = vmul.f32 %v4489, 0.6931472
    %v4491 = vlog2.pop %v3472
    %v4492 = vmul.f32 %v4491, 0.6931472
    %v4493 = vlog2.pop %v3478
    %v4494 = vmul.f32 %v4493, 0.6931472
    %v4495 = vlog2.pop %v3484
    %v4496 = vmul.f32 %v4495, 0.6931472
    %v4497 = vlog2.pop %v3490
    %v4498 = vmul.f32 %v4497, 0.6931472
    %v4499 = vlog2.pop %v3496
    %v4500 = vmul.f32 %v4499, 0.6931472
    %v4501 = vlog2.pop %v3502
    %v4502 = vmul.f32 %v4501, 0.6931472
    %v4503 = vlog2.pop %v3508
    %v4504 = vmul.f32 %v4503, 0.6931472
    %v4505 = vlog2.pop %v3514
    %v4506 = vmul.f32 %v4505, 0.6931472
    %v4507 = vlog2.pop %v3520
    %v4508 = vmul.f32 %v4507, 0.6931472
    %v4509 = vlog2.pop %v3526
    %v4510 = vmul.f32 %v4509, 0.6931472
    %v4511 = vlog2.pop %v3532
    %v4512 = vmul.f32 %v4511, 0.6931472
    %v4513 = vlog2.pop %v3538
    %v4514 = vmul.f32 %v4513, 0.6931472
    %v4515 = vlog2.pop %v3544
    %v4516 = vmul.f32 %v4515, 0.6931472
    %v4517 = vlog2.pop %v3550
    %v4518 = vmul.f32 %v4517, 0.6931472
    %v4519 = vlog2.pop %v3556
    %v4520 = vmul.f32 %v4519, 0.6931472
    %v4521 = vlog2.pop %v3562
    %v4522 = vmul.f32 %v4521, 0.6931472
    %v4523 = vlog2.pop %v3568
    %v4524 = vmul.f32 %v4523, 0.6931472
    %v4525 = vlog2.pop %v3574
    %v4526 = vmul.f32 %v4525, 0.6931472
    %v4527 = vlog2.pop %v3580
    %v4528 = vmul.f32 %v4527, 0.6931472
    %v4529 = vlog2.pop %v3586
    %v4530 = vmul.f32 %v4529, 0.6931472
    %v4531 = vlog2.pop %v3592
    %v4532 = vmul.f32 %v4531, 0.6931472
    %v4533 = vlog2.pop %v3598
    %v4534 = vmul.f32 %v4533, 0.6931472
    %v4535 = vlog2.pop %v3604
    %v4536 = vmul.f32 %v4535, 0.6931472
    %v4537 = vlog2.pop %v3610
    %v4538 = vmul.f32 %v4537, 0.6931472
    %v4539 = vlog2.pop %v3616
    %v4540 = vmul.f32 %v4539, 0.6931472
    %v4541 = vlog2.pop %v3622
    %v4542 = vmul.f32 %v4541, 0.6931472
    %v4543 = vlog2.pop %v3628
    %v4544 = vmul.f32 %v4543, 0.6931472
    %v4545 = vlog2.pop %v3634
    %v4546 = vmul.f32 %v4545, 0.6931472
    %v4547 = vlog2.pop %v3640
    %v4548 = vmul.f32 %v4547, 0.6931472
    %v4549 = vlog2.pop %v3646
    %v4550 = vmul.f32 %v4549, 0.6931472
    %v4551 = vlog2.pop %v3652
    %v4552 = vmul.f32 %v4551, 0.6931472
    %v4553 = vlog2.pop %v3658
    %v4554 = vmul.f32 %v4553, 0.6931472
    %v4555 = vlog2.pop %v3664
    %v4556 = vmul.f32 %v4555, 0.6931472
    %v4557 = vlog2.pop %v3670
    %v4558 = vmul.f32 %v4557, 0.6931472
    %v4559 = vlog2.pop %v3676
    %v4560 = vmul.f32 %v4559, 0.6931472
    %v4561 = vlog2.pop %v3682
    %v4562 = vmul.f32 %v4561, 0.6931472
    %v4563 = vlog2.pop %v3688
    %v4564 = vmul.f32 %v4563, 0.6931472
    %v4565 = vlog2.pop %v3694
    %v4566 = vmul.f32 %v4565, 0.6931472
    %v4567 = vlog2.pop %v3700
    %v4568 = vmul.f32 %v4567, 0.6931472
    %v4569 = vlog2.pop %v3706
    %v4570 = vmul.f32 %v4569, 0.6931472
    %v4571 = vlog2.pop %v3712
    %v4572 = vmul.f32 %v4571, 0.6931472
    %v4573 = vlog2.pop %v3718
    %v4574 = vmul.f32 %v4573, 0.6931472
    %v4575 = vlog2.pop %v3724
    %v4576 = vmul.f32 %v4575, 0.6931472
    %v4577 = vlog2.pop %v3730
    %v4578 = vmul.f32 %v4577, 0.6931472
    %v4579 = vlog2.pop %v3736
    %v4580 = vmul.f32 %v4579, 0.6931472
    %v4581 = vlog2.pop %v3742
    %v4582 = vmul.f32 %v4581, 0.6931472
    %v4583 = vlog2.pop %v3748
    %v4584 = vmul.f32 %v4583, 0.6931472
    %v4585 = vlog2.pop %v3754
    %v4586 = vmul.f32 %v4585, 0.6931472
    %v4587 = vlog2.pop %v3760
    %v4588 = vmul.f32 %v4587, 0.6931472
    %v4589 = vlog2.pop %v3766
    %v4590 = vmul.f32 %v4589, 0.6931472
    %v4591 = vlog2.pop %v3772
    %v4592 = vmul.f32 %v4591, 0.6931472
    %v4593 = vlog2.pop %v3778
    %v4594 = vmul.f32 %v4593, 0.6931472
    %v4595 = vlog2.pop %v3784
    %v4596 = vmul.f32 %v4595, 0.6931472
    %v4597 = vlog2.pop %v3790
    %v4598 = vmul.f32 %v4597, 0.6931472
    %v4599 = vlog2.pop %v3796
    %v4600 = vmul.f32 %v4599, 0.6931472
    %v4601 = vlog2.pop %v3802
    %v4602 = vmul.f32 %v4601, 0.6931472
    %v4603 = vlog2.pop %v3808
    %v4604 = vmul.f32 %v4603, 0.6931472
    %v4605 = vlog2.pop %v3814
    %v4606 = vmul.f32 %v4605, 0.6931472
    %v4607 = vlog2.pop %v3820
    %v4608 = vmul.f32 %v4607, 0.6931472
    %v4609 = vlog2.pop %v3826
    %v4610 = vmul.f32 %v4609, 0.6931472
    %v4611 = vlog2.pop %v3832
    %v4612 = vmul.f32 %v4611, 0.6931472
    %v4613 = vlog2.pop %v3838
    %v4614 = vmul.f32 %v4613, 0.6931472
    %v4615 = vlog2.pop %v3844
    %v4616 = vmul.f32 %v4615, 0.6931472
    %v4617 = vlog2.pop %v3850
    %v4618 = vmul.f32 %v4617, 0.6931472
    %v4619 = vlog2.pop %v3856
    %v4620 = vmul.f32 %v4619, 0.6931472
    %v4621 = vlog2.pop %v3862
    %v4622 = vmul.f32 %v4621, 0.6931472
    %v4623 = vlog2.pop %v3868
    %v4624 = vmul.f32 %v4623, 0.6931472
    %v4625 = vlog2.pop %v3874
    %v4626 = vmul.f32 %v4625, 0.6931472
    %v4627 = vlog2.pop %v3880
    %v4628 = vmul.f32 %v4627, 0.6931472
    %v4629 = vlog2.pop %v3886
    %v4630 = vmul.f32 %v4629, 0.6931472
    %v4631 = vlog2.pop %v3892
    %v4632 = vmul.f32 %v4631, 0.6931472
    %v4633 = vlog2.pop %v3898
    %v4634 = vmul.f32 %v4633, 0.6931472
    %v4635 = vlog2.pop %v3904
    %v4636 = vmul.f32 %v4635, 0.6931472
    %v4637 = vlog2.pop %v3910
    %v4638 = vmul.f32 %v4637, 0.6931472
    %v4639 = vlog2.pop %v3916
    %v4640 = vmul.f32 %v4639, 0.6931472
    %v4641 = vlog2.pop %v3922
    %v4642 = vmul.f32 %v4641, 0.6931472
    %v4643 = vlog2.pop %v3928
    %v4644 = vmul.f32 %v4643, 0.6931472
    %v4645 = vlog2.pop %v3934
    %v4646 = vmul.f32 %v4645, 0.6931472
    %v4647 = vlog2.pop %v3940
    %v4648 = vmul.f32 %v4647, 0.6931472
    %v4649 = vlog2.pop %v3946
    %v4650 = vmul.f32 %v4649, 0.6931472
    %v4651 = vlog2.pop %v3952
    %v4652 = vmul.f32 %v4651, 0.6931472
    %v4653 = vlog2.pop %v3958
    %v4654 = vmul.f32 %v4653, 0.6931472
    %v4655 = vlog2.pop %v3964
    %v4656 = vmul.f32 %v4655, 0.6931472
    %v4657 = vlog2.pop %v3970
    %v4658 = vmul.f32 %v4657, 0.6931472
    %v4659 = vlog2.pop %v3976
    %v4660 = vmul.f32 %v4659, 0.6931472
    %v4661 = vlog2.pop %v3982
    %v4662 = vmul.f32 %v4661, 0.6931472
    %v4663 = vlog2.pop %v3988
    %v4664 = vmul.f32 %v4663, 0.6931472
    %v4665 = vlog2.pop %v3994
    %v4666 = vmul.f32 %v4665, 0.6931472
    %v4667 = vlog2.pop %v4000
    %v4668 = vmul.f32 %v4667, 0.6931472
    %v4669 = vlog2.pop %v4006
    %v4670 = vmul.f32 %v4669, 0.6931472
    %v4671 = vlog2.pop %v4012
    %v4672 = vmul.f32 %v4671, 0.6931472
    %v4673 = vlog2.pop %v4018
    %v4674 = vmul.f32 %v4673, 0.6931472
    %v4675 = vlog2.pop %v4024
    %v4676 = vmul.f32 %v4675, 0.6931472
    %v4677 = vlog2.pop %v4030
    %v4678 = vmul.f32 %v4677, 0.6931472
    %v4679 = vlog2.pop %v4036
    %v4680 = vmul.f32 %v4679, 0.6931472
    %v4681 = vlog2.pop %v4042
    %v4682 = vmul.f32 %v4681, 0.6931472
    %v4683 = vlog2.pop %v4048
    %v4684 = vmul.f32 %v4683, 0.6931472
    %v4685 = vlog2.pop %v4054
    %v4686 = vmul.f32 %v4685, 0.6931472
    %v4687 = vlog2.pop %v4060
    %v4688 = vmul.f32 %v4687, 0.6931472
    %v4689 = vlog2.pop %v4066
    %v4690 = vmul.f32 %v4689, 0.6931472
    %v4691 = vlog2.pop %v4072
    %v4692 = vmul.f32 %v4691, 0.6931472
    %v4693 = vlog2.pop %v4078
    %v4694 = vmul.f32 %v4693, 0.6931472
    %v4695 = vlog2.pop %v4084
    %v4696 = vmul.f32 %v4695, 0.6931472
    %v4697 = vlog2.pop %v4090
    %v4698 = vmul.f32 %v4697, 0.6931472
    %v4699 = vlog2.pop %v4096
    %v4700 = vmul.f32 %v4699, 0.6931472
    %v4701 = vlog2.pop %v4102
    %v4702 = vmul.f32 %v4701, 0.6931472
    %v4703 = vlog2.pop %v4108
    %v4704 = vmul.f32 %v4703, 0.6931472
    %v4705 = vlog2.pop %v4114
    %v4706 = vmul.f32 %v4705, 0.6931472
    %v4707 = vlog2.pop %v4120
    %v4708 = vmul.f32 %v4707, 0.6931472
    %v4709 = vlog2.pop %v4126
    %v4710 = vmul.f32 %v4709, 0.6931472
    %v4711 = vlog2.pop %v4132
    %v4712 = vmul.f32 %v4711, 0.6931472
    %v4713 = vlog2.pop %v4138
    %v4714 = vmul.f32 %v4713, 0.6931472
    %v4715 = vlog2.pop %v4144
    %v4716 = vmul.f32 %v4715, 0.6931472
    %v4717 = vlog2.pop %v4150
    %v4718 = vmul.f32 %v4717, 0.6931472
    %v4719 = vlog2.pop %v4156
    %v4720 = vmul.f32 %v4719, 0.6931472
    %v4721 = vlog2.pop %v4162
    %v4722 = vmul.f32 %v4721, 0.6931472
    %v4723 = vlog2.pop %v4168
    %v4724 = vmul.f32 %v4723, 0.6931472
    %v4725 = vlog2.pop %v4174
    %v4726 = vmul.f32 %v4725, 0.6931472
    %v4727 = vlog2.pop %v4180
    %v4728 = vmul.f32 %v4727, 0.6931472
    %v4729 = vlog2.pop %v4186
    %v4730 = vmul.f32 %v4729, 0.6931472
    %v4731 = vlog2.pop %v4192
    %v4732 = vmul.f32 %v4731, 0.6931472
    %v4733 = vlog2.pop %v4198
    %v4734 = vmul.f32 %v4733, 0.6931472
    %v4735 = vlog2.pop %v4204
    %v4736 = vmul.f32 %v4735, 0.6931472
    %v4737 = vlog2.pop %v4210
    %v4738 = vmul.f32 %v4737, 0.6931472
    %v4739 = vlog2.pop %v4216
    %v4740 = vmul.f32 %v4739, 0.6931472
    %v4741 = vlog2.pop %v4222
    %v4742 = vmul.f32 %v4741, 0.6931472
    %v4743 = vlog2.pop %v4228
    %v4744 = vmul.f32 %v4743, 0.6931472
    %v4745 = vlog2.pop %v4234
    %v4746 = vmul.f32 %v4745, 0.6931472
    %v4747 = vadd.f32 %v4236, %v400
    %v4748 = vadd.f32 %v4238, %v406
    %v4749 = vadd.f32 %v4240, %v412
    %v4750 = vadd.f32 %v4242, %v418
    %v4751 = vadd.f32 %v4244, %v424
    %v4752 = vadd.f32 %v4246, %v430
    %v4753 = vadd.f32 %v4248, %v436
    %v4754 = vadd.f32 %v4250, %v442
    %v4755 = vadd.f32 %v4252, %v448
    %v4756 = vadd.f32 %v4254, %v454
    %v4757 = vadd.f32 %v4256, %v460
    %v4758 = vadd.f32 %v4258, %v466
    %v4759 = vadd.f32 %v4260, %v472
    %v4760 = vadd.f32 %v4262, %v478
    %v4761 = vadd.f32 %v4264, %v484
    %v4762 = vadd.f32 %v4266, %v490
    %v4763 = vadd.f32 %v4268, %v496
    %v4764 = vadd.f32 %v4270, %v502
    %v4765 = vadd.f32 %v4272, %v508
    %v4766 = vadd.f32 %v4274, %v514
    %v4767 = vadd.f32 %v4276, %v520
    %v4768 = vadd.f32 %v4278, %v526
    %v4769 = vadd.f32 %v4280, %v532
    %v4770 = vadd.f32 %v4282, %v538
    %v4771 = vadd.f32 %v4284, %v544
    %v4772 = vadd.f32 %v4286, %v550
    %v4773 = vadd.f32 %v4288, %v556
    %v4774 = vadd.f32 %v4290, %v562
    %v4775 = vadd.f32 %v4292, %v568
    %v4776 = vadd.f32 %v4294, %v574
    %v4777 = vadd.f32 %v4296, %v580
    %v4778 = vadd.f32 %v4298, %v586
    %v4779 = vadd.f32 %v4300, %v592
    %v4780 = vadd.f32 %v4302, %v598
    %v4781 = vadd.f32 %v4304, %v604
    %v4782 = vadd.f32 %v4306, %v610
    %v4783 = vadd.f32 %v4308, %v616
    %v4784 = vadd.f32 %v4310, %v622
    %v4785 = vadd.f32 %v4312, %v628
    %v4786 = vadd.f32 %v4314, %v634
    %v4787 = vadd.f32 %v4316, %v640
    %v4788 = vadd.f32 %v4318, %v646
    %v4789 = vadd.f32 %v4320, %v652
    %v4790 = vadd.f32 %v4322, %v658
    %v4791 = vadd.f32 %v4324, %v664
    %v4792 = vadd.f32 %v4326, %v670
    %v4793 = vadd.f32 %v4328, %v676
    %v4794 = vadd.f32 %v4330, %v682
    %v4795 = vadd.f32 %v4332, %v688
    %v4796 = vadd.f32 %v4334, %v694
    %v4797 = vadd.f32 %v4336, %v700
    %v4798 = vadd.f32 %v4338, %v706
    %v4799 = vadd.f32 %v4340, %v712
    %v4800 = vadd.f32 %v4342, %v718
    %v4801 = vadd.f32 %v4344, %v724
    %v4802 = vadd.f32 %v4346, %v730
    %v4803 = vadd.f32 %v4348, %v736
    %v4804 = vadd.f32 %v4350, %v742
    %v4805 = vadd.f32 %v4352, %v748
    %v4806 = vadd.f32 %v4354, %v754
    %v4807 = vadd.f32 %v4356, %v760
    %v4808 = vadd.f32 %v4358, %v766
    %v4809 = vadd.f32 %v4360, %v772
    %v4810 = vadd.f32 %v4362, %v778
    %v4811 = vadd.f32 %v4364, %v784
    %v4812 = vadd.f32 %v4366, %v790
    %v4813 = vadd.f32 %v4368, %v796
    %v4814 = vadd.f32 %v4370, %v802
    %v4815 = vadd.f32 %v4372, %v808
    %v4816 = vadd.f32 %v4374, %v814
    %v4817 = vadd.f32 %v4376, %v820
    %v4818 = vadd.f32 %v4378, %v826
    %v4819 = vadd.f32 %v4380, %v832
    %v4820 = vadd.f32 %v4382, %v838
    %v4821 = vadd.f32 %v4384, %v844
    %v4822 = vadd.f32 %v4386, %v850
    %v4823 = vadd.f32 %v4388, %v856
    %v4824 = vadd.f32 %v4390, %v862
    %v4825 = vadd.f32 %v4392, %v868
    %v4826 = vadd.f32 %v4394, %v874
    %v4827 = vadd.f32 %v4396, %v880
    %v4828 = vadd.f32 %v4398, %v886
    %v4829 = vadd.f32 %v4400, %v892
    %v4830 = vadd.f32 %v4402, %v898
    %v4831 = vadd.f32 %v4404, %v904
    %v4832 = vadd.f32 %v4406, %v910
    %v4833 = vadd.f32 %v4408, %v916
    %v4834 = vadd.f32 %v4410, %v922
    %v4835 = vadd.f32 %v4412, %v928
    %v4836 = vadd.f32 %v4414, %v934
    %v4837 = vadd.f32 %v4416, %v940
    %v4838 = vadd.f32 %v4418, %v946
    %v4839 = vadd.f32 %v4420, %v952
    %v4840 = vadd.f32 %v4422, %v958
    %v4841 = vadd.f32 %v4424, %v964
    %v4842 = vadd.f32 %v4426, %v970
    %v4843 = vadd.f32 %v4428, %v976
    %v4844 = vadd.f32 %v4430, %v982
    %v4845 = vadd.f32 %v4432, %v988
    %v4846 = vadd.f32 %v4434, %v994
    %v4847 = vadd.f32 %v4436, %v1000
    %v4848 = vadd.f32 %v4438, %v1006
    %v4849 = vadd.f32 %v4440, %v1012
    %v4850 = vadd.f32 %v4442, %v1018
    %v4851 = vadd.f32 %v4444, %v1024
    %v4852 = vadd.f32 %v4446, %v1030
    %v4853 = vadd.f32 %v4448, %v1036
    %v4854 = vadd.f32 %v4450, %v1042
    %v4855 = vadd.f32 %v4452, %v1048
    %v4856 = vadd.f32 %v4454, %v1054
    %v4857 = vadd.f32 %v4456, %v1060
    %v4858 = vadd.f32 %v4458, %v1066
    %v4859 = vadd.f32 %v4460, %v1072
    %v4860 = vadd.f32 %v4462, %v1078
    %v4861 = vadd.f32 %v4464, %v1084
    %v4862 = vadd.f32 %v4466, %v1090
    %v4863 = vadd.f32 %v4468, %v1096
    %v4864 = vadd.f32 %v4470, %v1102
    %v4865 = vadd.f32 %v4472, %v1108
    %v4866 = vadd.f32 %v4474, %v1114
    %v4867 = vadd.f32 %v4476, %v1120
    %v4868 = vadd.f32 %v4478, %v1126
    %v4869 = vadd.f32 %v4480, %v1132
    %v4870 = vadd.f32 %v4482, %v1138
    %v4871 = vadd.f32 %v4484, %v1144
    %v4872 = vadd.f32 %v4486, %v1150
    %v4873 = vadd.f32 %v4488, %v1156
    %v4874 = vadd.f32 %v4490, %v1162
    %v4875 = vadd.f32 %v4492, %v1168
    %v4876 = vadd.f32 %v4494, %v1174
    %v4877 = vadd.f32 %v4496, %v1180
    %v4878 = vadd.f32 %v4498, %v1186
    %v4879 = vadd.f32 %v4500, %v1192
    %v4880 = vadd.f32 %v4502, %v1198
    %v4881 = vadd.f32 %v4504, %v1204
    %v4882 = vadd.f32 %v4506, %v1210
    %v4883 = vadd.f32 %v4508, %v1216
    %v4884 = vadd.f32 %v4510, %v1222
    %v4885 = vadd.f32 %v4512, %v1228
    %v4886 = vadd.f32 %v4514, %v1234
    %v4887 = vadd.f32 %v4516, %v1240
    %v4888 = vadd.f32 %v4518, %v1246
    %v4889 = vadd.f32 %v4520, %v1252
    %v4890 = vadd.f32 %v4522, %v1258
    %v4891 = vadd.f32 %v4524, %v1264
    %v4892 = vadd.f32 %v4526, %v1270
    %v4893 = vadd.f32 %v4528, %v1276
    %v4894 = vadd.f32 %v4530, %v1282
    %v4895 = vadd.f32 %v4532, %v1288
    %v4896 = vadd.f32 %v4534, %v1294
    %v4897 = vadd.f32 %v4536, %v1300
    %v4898 = vadd.f32 %v4538, %v1306
    %v4899 = vadd.f32 %v4540, %v1312
    %v4900 = vadd.f32 %v4542, %v1318
    %v4901 = vadd.f32 %v4544, %v1324
    %v4902 = vadd.f32 %v4546, %v1330
    %v4903 = vadd.f32 %v4548, %v1336
    %v4904 = vadd.f32 %v4550, %v1342
    %v4905 = vadd.f32 %v4552, %v1348
    %v4906 = vadd.f32 %v4554, %v1354
    %v4907 = vadd.f32 %v4556, %v1360
    %v4908 = vadd.f32 %v4558, %v1366
    %v4909 = vadd.f32 %v4560, %v1372
    %v4910 = vadd.f32 %v4562, %v1378
    %v4911 = vadd.f32 %v4564, %v1384
    %v4912 = vadd.f32 %v4566, %v1390
    %v4913 = vadd.f32 %v4568, %v1396
    %v4914 = vadd.f32 %v4570, %v1402
    %v4915 = vadd.f32 %v4572, %v1408
    %v4916 = vadd.f32 %v4574, %v1414
    %v4917 = vadd.f32 %v4576, %v1420
    %v4918 = vadd.f32 %v4578, %v1426
    %v4919 = vadd.f32 %v4580, %v1432
    %v4920 = vadd.f32 %v4582, %v1438
    %v4921 = vadd.f32 %v4584, %v1444
    %v4922 = vadd.f32 %v4586, %v1450
    %v4923 = vadd.f32 %v4588, %v1456
    %v4924 = vadd.f32 %v4590, %v1462
    %v4925 = vadd.f32 %v4592, %v1468
    %v4926 = vadd.f32 %v4594, %v1474
    %v4927 = vadd.f32 %v4596, %v1480
    %v4928 = vadd.f32 %v4598, %v1486
    %v4929 = vadd.f32 %v4600, %v1492
    %v4930 = vadd.f32 %v4602, %v1498
    %v4931 = vadd.f32 %v4604, %v1504
    %v4932 = vadd.f32 %v4606, %v1510
    %v4933 = vadd.f32 %v4608, %v1516
    %v4934 = vadd.f32 %v4610, %v1522
    %v4935 = vadd.f32 %v4612, %v1528
    %v4936 = vadd.f32 %v4614, %v1534
    %v4937 = vadd.f32 %v4616, %v1540
    %v4938 = vadd.f32 %v4618, %v1546
    %v4939 = vadd.f32 %v4620, %v1552
    %v4940 = vadd.f32 %v4622, %v1558
    %v4941 = vadd.f32 %v4624, %v1564
    %v4942 = vadd.f32 %v4626, %v1570
    %v4943 = vadd.f32 %v4628, %v1576
    %v4944 = vadd.f32 %v4630, %v1582
    %v4945 = vadd.f32 %v4632, %v1588
    %v4946 = vadd.f32 %v4634, %v1594
    %v4947 = vadd.f32 %v4636, %v1600
    %v4948 = vadd.f32 %v4638, %v1606
    %v4949 = vadd.f32 %v4640, %v1612
    %v4950 = vadd.f32 %v4642, %v1618
    %v4951 = vadd.f32 %v4644, %v1624
    %v4952 = vadd.f32 %v4646, %v1630
    %v4953 = vadd.f32 %v4648, %v1636
    %v4954 = vadd.f32 %v4650, %v1642
    %v4955 = vadd.f32 %v4652, %v1648
    %v4956 = vadd.f32 %v4654, %v1654
    %v4957 = vadd.f32 %v4656, %v1660
    %v4958 = vadd.f32 %v4658, %v1666
    %v4959 = vadd.f32 %v4660, %v1672
    %v4960 = vadd.f32 %v4662, %v1678
    %v4961 = vadd.f32 %v4664, %v1684
    %v4962 = vadd.f32 %v4666, %v1690
    %v4963 = vadd.f32 %v4668, %v1696
    %v4964 = vadd.f32 %v4670, %v1702
    %v4965 = vadd.f32 %v4672, %v1708
    %v4966 = vadd.f32 %v4674, %v1714
    %v4967 = vadd.f32 %v4676, %v1720
    %v4968 = vadd.f32 %v4678, %v1726
    %v4969 = vadd.f32 %v4680, %v1732
    %v4970 = vadd.f32 %v4682, %v1738
    %v4971 = vadd.f32 %v4684, %v1744
    %v4972 = vadd.f32 %v4686, %v1750
    %v4973 = vadd.f32 %v4688, %v1756
    %v4974 = vadd.f32 %v4690, %v1762
    %v4975 = vadd.f32 %v4692, %v1768
    %v4976 = vadd.f32 %v4694, %v1774
    %v4977 = vadd.f32 %v4696, %v1780
    %v4978 = vadd.f32 %v4698, %v1786
    %v4979 = vadd.f32 %v4700, %v1792
    %v4980 = vadd.f32 %v4702, %v1798
    %v4981 = vadd.f32 %v4704, %v1804
    %v4982 = vadd.f32 %v4706, %v1810
    %v4983 = vadd.f32 %v4708, %v1816
    %v4984 = vadd.f32 %v4710, %v1822
    %v4985 = vadd.f32 %v4712, %v1828
    %v4986 = vadd.f32 %v4714, %v1834
    %v4987 = vadd.f32 %v4716, %v1840
    %v4988 = vadd.f32 %v4718, %v1846
    %v4989 = vadd.f32 %v4720, %v1852
    %v4990 = vadd.f32 %v4722, %v1858
    %v4991 = vadd.f32 %v4724, %v1864
    %v4992 = vadd.f32 %v4726, %v1870
    %v4993 = vadd.f32 %v4728, %v1876
    %v4994 = vadd.f32 %v4730, %v1882
    %v4995 = vadd.f32 %v4732, %v1888
    %v4996 = vadd.f32 %v4734, %v1894
    %v4997 = vadd.f32 %v4736, %v1900
    %v4998 = vadd.f32 %v4738, %v1906
    %v4999 = vadd.f32 %v4740, %v1912
    %v5000 = vadd.f32 %v4742, %v1918
    %v5001 = vadd.f32 %v4744, %v1924
    %v5002 = vadd.f32 %v4746, %v1930
    %v5003 = vsub.f32 %v139, %v4747
    %v5004 = vsub.f32 %v140, %v4748
    %v5005 = vsub.f32 %v141, %v4749
    %v5006 = vsub.f32 %v142, %v4750
    %v5007 = vsub.f32 %v143, %v4751
    %v5008 = vsub.f32 %v144, %v4752
    %v5009 = vsub.f32 %v145, %v4753
    %v5010 = vsub.f32 %v146, %v4754
    %v5011 = vsub.f32 %v147, %v4755
    %v5012 = vsub.f32 %v148, %v4756
    %v5013 = vsub.f32 %v149, %v4757
    %v5014 = vsub.f32 %v150, %v4758
    %v5015 = vsub.f32 %v151, %v4759
    %v5016 = vsub.f32 %v152, %v4760
    %v5017 = vsub.f32 %v153, %v4761
    %v5018 = vsub.f32 %v154, %v4762
    %v5019 = vsub.f32 %v155, %v4763
    %v5020 = vsub.f32 %v156, %v4764
    %v5021 = vsub.f32 %v157, %v4765
    %v5022 = vsub.f32 %v158, %v4766
    %v5023 = vsub.f32 %v159, %v4767
    %v5024 = vsub.f32 %v160, %v4768
    %v5025 = vsub.f32 %v161, %v4769
    %v5026 = vsub.f32 %v162, %v4770
    %v5027 = vsub.f32 %v163, %v4771
    %v5028 = vsub.f32 %v164, %v4772
    %v5029 = vsub.f32 %v165, %v4773
    %v5030 = vsub.f32 %v166, %v4774
    %v5031 = vsub.f32 %v167, %v4775
    %v5032 = vsub.f32 %v168, %v4776
    %v5033 = vsub.f32 %v169, %v4777
    %v5034 = vsub.f32 %v170, %v4778
    %v5035 = vsub.f32 %v171, %v4779
    %v5036 = vsub.f32 %v172, %v4780
    %v5037 = vsub.f32 %v173, %v4781
    %v5038 = vsub.f32 %v174, %v4782
    %v5039 = vsub.f32 %v175, %v4783
    %v5040 = vsub.f32 %v176, %v4784
    %v5041 = vsub.f32 %v177, %v4785
    %v5042 = vsub.f32 %v178, %v4786
    %v5043 = vsub.f32 %v179, %v4787
    %v5044 = vsub.f32 %v180, %v4788
    %v5045 = vsub.f32 %v181, %v4789
    %v5046 = vsub.f32 %v182, %v4790
    %v5047 = vsub.f32 %v183, %v4791
    %v5048 = vsub.f32 %v184, %v4792
    %v5049 = vsub.f32 %v185, %v4793
    %v5050 = vsub.f32 %v186, %v4794
    %v5051 = vsub.f32 %v187, %v4795
    %v5052 = vsub.f32 %v188, %v4796
    %v5053 = vsub.f32 %v189, %v4797
    %v5054 = vsub.f32 %v190, %v4798
    %v5055 = vsub.f32 %v191, %v4799
    %v5056 = vsub.f32 %v192, %v4800
    %v5057 = vsub.f32 %v193, %v4801
    %v5058 = vsub.f32 %v194, %v4802
    %v5059 = vsub.f32 %v195, %v4803
    %v5060 = vsub.f32 %v196, %v4804
    %v5061 = vsub.f32 %v197, %v4805
    %v5062 = vsub.f32 %v198, %v4806
    %v5063 = vsub.f32 %v199, %v4807
    %v5064 = vsub.f32 %v200, %v4808
    %v5065 = vsub.f32 %v201, %v4809
    %v5066 = vsub.f32 %v202, %v4810
    %v5067 = vsub.f32 %v203, %v4811
    %v5068 = vsub.f32 %v204, %v4812
    %v5069 = vsub.f32 %v205, %v4813
    %v5070 = vsub.f32 %v206, %v4814
    %v5071 = vsub.f32 %v207, %v4815
    %v5072 = vsub.f32 %v208, %v4816
    %v5073 = vsub.f32 %v209, %v4817
    %v5074 = vsub.f32 %v210, %v4818
    %v5075 = vsub.f32 %v211, %v4819
    %v5076 = vsub.f32 %v212, %v4820
    %v5077 = vsub.f32 %v213, %v4821
    %v5078 = vsub.f32 %v214, %v4822
    %v5079 = vsub.f32 %v215, %v4823
    %v5080 = vsub.f32 %v216, %v4824
    %v5081 = vsub.f32 %v217, %v4825
    %v5082 = vsub.f32 %v218, %v4826
    %v5083 = vsub.f32 %v219, %v4827
    %v5084 = vsub.f32 %v220, %v4828
    %v5085 = vsub.f32 %v221, %v4829
    %v5086 = vsub.f32 %v222, %v4830
    %v5087 = vsub.f32 %v223, %v4831
    %v5088 = vsub.f32 %v224, %v4832
    %v5089 = vsub.f32 %v225, %v4833
    %v5090 = vsub.f32 %v226, %v4834
    %v5091 = vsub.f32 %v227, %v4835
    %v5092 = vsub.f32 %v228, %v4836
    %v5093 = vsub.f32 %v229, %v4837
    %v5094 = vsub.f32 %v230, %v4838
    %v5095 = vsub.f32 %v231, %v4839
    %v5096 = vsub.f32 %v232, %v4840
    %v5097 = vsub.f32 %v233, %v4841
    %v5098 = vsub.f32 %v234, %v4842
    %v5099 = vsub.f32 %v235, %v4843
    %v5100 = vsub.f32 %v236, %v4844
    %v5101 = vsub.f32 %v237, %v4845
    %v5102 = vsub.f32 %v238, %v4846
    %v5103 = vsub.f32 %v239, %v4847
    %v5104 = vsub.f32 %v240, %v4848
    %v5105 = vsub.f32 %v241, %v4849
    %v5106 = vsub.f32 %v242, %v4850
    %v5107 = vsub.f32 %v243, %v4851
    %v5108 = vsub.f32 %v244, %v4852
    %v5109 = vsub.f32 %v245, %v4853
    %v5110 = vsub.f32 %v246, %v4854
    %v5111 = vsub.f32 %v247, %v4855
    %v5112 = vsub.f32 %v248, %v4856
    %v5113 = vsub.f32 %v249, %v4857
    %v5114 = vsub.f32 %v250, %v4858
    %v5115 = vsub.f32 %v251, %v4859
    %v5116 = vsub.f32 %v252, %v4860
    %v5117 = vsub.f32 %v253, %v4861
    %v5118 = vsub.f32 %v254, %v4862
    %v5119 = vsub.f32 %v255, %v4863
    %v5120 = vsub.f32 %v256, %v4864
    %v5121 = vsub.f32 %v257, %v4865
    %v5122 = vsub.f32 %v258, %v4866
    %v5123 = vsub.f32 %v259, %v4867
    %v5124 = vsub.f32 %v260, %v4868
    %v5125 = vsub.f32 %v261, %v4869
    %v5126 = vsub.f32 %v262, %v4870
    %v5127 = vsub.f32 %v263, %v4871
    %v5128 = vsub.f32 %v264, %v4872
    %v5129 = vsub.f32 %v265, %v4873
    %v5130 = vsub.f32 %v266, %v4874
    %v5131 = vsub.f32 %v267, %v4875
    %v5132 = vsub.f32 %v268, %v4876
    %v5133 = vsub.f32 %v269, %v4877
    %v5134 = vsub.f32 %v270, %v4878
    %v5135 = vsub.f32 %v271, %v4879
    %v5136 = vsub.f32 %v272, %v4880
    %v5137 = vsub.f32 %v273, %v4881
    %v5138 = vsub.f32 %v274, %v4882
    %v5139 = vsub.f32 %v275, %v4883
    %v5140 = vsub.f32 %v276, %v4884
    %v5141 = vsub.f32 %v277, %v4885
    %v5142 = vsub.f32 %v278, %v4886
    %v5143 = vsub.f32 %v279, %v4887
    %v5144 = vsub.f32 %v280, %v4888
    %v5145 = vsub.f32 %v281, %v4889
    %v5146 = vsub.f32 %v282, %v4890
    %v5147 = vsub.f32 %v283, %v4891
    %v5148 = vsub.f32 %v284, %v4892
    %v5149 = vsub.f32 %v285, %v4893
    %v5150 = vsub.f32 %v286, %v4894
    %v5151 = vsub.f32 %v287, %v4895
    %v5152 = vsub.f32 %v288, %v4896
    %v5153 = vsub.f32 %v289, %v4897
    %v5154 = vsub.f32 %v290, %v4898
    %v5155 = vsub.f32 %v291, %v4899
    %v5156 = vsub.f32 %v292, %v4900
    %v5157 = vsub.f32 %v293, %v4901
    %v5158 = vsub.f32 %v294, %v4902
    %v5159 = vsub.f32 %v295, %v4903
    %v5160 = vsub.f32 %v296, %v4904
    %v5161 = vsub.f32 %v297, %v4905
    %v5162 = vsub.f32 %v298, %v4906
    %v5163 = vsub.f32 %v299, %v4907
    %v5164 = vsub.f32 %v300, %v4908
    %v5165 = vsub.f32 %v301, %v4909
    %v5166 = vsub.f32 %v302, %v4910
    %v5167 = vsub.f32 %v303, %v4911
    %v5168 = vsub.f32 %v304, %v4912
    %v5169 = vsub.f32 %v305, %v4913
    %v5170 = vsub.f32 %v306, %v4914
    %v5171 = vsub.f32 %v307, %v4915
    %v5172 = vsub.f32 %v308, %v4916
    %v5173 = vsub.f32 %v309, %v4917
    %v5174 = vsub.f32 %v310, %v4918
    %v5175 = vsub.f32 %v311, %v4919
    %v5176 = vsub.f32 %v312, %v4920
    %v5177 = vsub.f32 %v313, %v4921
    %v5178 = vsub.f32 %v314, %v4922
    %v5179 = vsub.f32 %v315, %v4923
    %v5180 = vsub.f32 %v316, %v4924
    %v5181 = vsub.f32 %v317, %v4925
    %v5182 = vsub.f32 %v318, %v4926
    %v5183 = vsub.f32 %v319, %v4927
    %v5184 = vsub.f32 %v320, %v4928
    %v5185 = vsub.f32 %v321, %v4929
    %v5186 = vsub.f32 %v322, %v4930
    %v5187 = vsub.f32 %v323, %v4931
    %v5188 = vsub.f32 %v324, %v4932
    %v5189 = vsub.f32 %v325, %v4933
    %v5190 = vsub.f32 %v326, %v4934
    %v5191 = vsub.f32 %v327, %v4935
    %v5192 = vsub.f32 %v328, %v4936
    %v5193 = vsub.f32 %v329, %v4937
    %v5194 = vsub.f32 %v330, %v4938
    %v5195 = vsub.f32 %v331, %v4939
    %v5196 = vsub.f32 %v332, %v4940
    %v5197 = vsub.f32 %v333, %v4941
    %v5198 = vsub.f32 %v334, %v4942
    %v5199 = vsub.f32 %v335, %v4943
    %v5200 = vsub.f32 %v336, %v4944
    %v5201 = vsub.f32 %v337, %v4945
    %v5202 = vsub.f32 %v338, %v4946
    %v5203 = vsub.f32 %v339, %v4947
    %v5204 = vsub.f32 %v340, %v4948
    %v5205 = vsub.f32 %v341, %v4949
    %v5206 = vsub.f32 %v342, %v4950
    %v5207 = vsub.f32 %v343, %v4951
    %v5208 = vsub.f32 %v344, %v4952
    %v5209 = vsub.f32 %v345, %v4953
    %v5210 = vsub.f32 %v346, %v4954
    %v5211 = vsub.f32 %v347, %v4955
    %v5212 = vsub.f32 %v348, %v4956
    %v5213 = vsub.f32 %v349, %v4957
    %v5214 = vsub.f32 %v350, %v4958
    %v5215 = vsub.f32 %v351, %v4959
    %v5216 = vsub.f32 %v352, %v4960
    %v5217 = vsub.f32 %v353, %v4961
    %v5218 = vsub.f32 %v354, %v4962
    %v5219 = vsub.f32 %v355, %v4963
    %v5220 = vsub.f32 %v356, %v4964
    %v5221 = vsub.f32 %v357, %v4965
    %v5222 = vsub.f32 %v358, %v4966
    %v5223 = vsub.f32 %v359, %v4967
    %v5224 = vsub.f32 %v360, %v4968
    %v5225 = vsub.f32 %v361, %v4969
    %v5226 = vsub.f32 %v362, %v4970
    %v5227 = vsub.f32 %v363, %v4971
    %v5228 = vsub.f32 %v364, %v4972
    %v5229 = vsub.f32 %v365, %v4973
    %v5230 = vsub.f32 %v366, %v4974
    %v5231 = vsub.f32 %v367, %v4975
    %v5232 = vsub.f32 %v368, %v4976
    %v5233 = vsub.f32 %v369, %v4977
    %v5234 = vsub.f32 %v370, %v4978
    %v5235 = vsub.f32 %v371, %v4979
    %v5236 = vsub.f32 %v372, %v4980
    %v5237 = vsub.f32 %v373, %v4981
    %v5238 = vsub.f32 %v374, %v4982
    %v5239 = vsub.f32 %v375, %v4983
    %v5240 = vsub.f32 %v376, %v4984
    %v5241 = vsub.f32 %v377, %v4985
    %v5242 = vsub.f32 %v378, %v4986
    %v5243 = vsub.f32 %v379, %v4987
    %v5244 = vsub.f32 %v380, %v4988
    %v5245 = vsub.f32 %v381, %v4989
    %v5246 = vsub.f32 %v382, %v4990
    %v5247 = vsub.f32 %v383, %v4991
    %v5248 = vsub.f32 %v384, %v4992
    %v5249 = vsub.f32 %v385, %v4993
    %v5250 = vsub.f32 %v386, %v4994
    %v5251 = vsub.f32 %v387, %v4995
    %v5252 = vsub.f32 %v388, %v4996
    %v5253 = vsub.f32 %v389, %v4997
    %v5254 = vsub.f32 %v390, %v4998
    %v5255 = vsub.f32 %v391, %v4999
    %v5256 = vsub.f32 %v392, %v5000
    %v5257 = vsub.f32 %v393, %v5001
    %v5258 = vsub.f32 %v394, %v5002
    %v5515 = vcombine.low %v5003, %v5004
    %v5516 = vcombine.low %v5005, %v5006
    %v5517 = vcombine.low %v5007, %v5008
    %v5518 = vcombine.low %v5009, %v5010
    %v5520 = vunpack.c.l.s4 1966171168
    %v5521 = vunpack.c.0.s8 %v5520
    %v5522 = vlaneseq
    %v5523 = vshrl.u32 %v5522, 7
    %v5524 = vsub.s32 %v5521, %v5523
    %v5525 = vrot.slane %v5515, %v5524
    %v5527 = vunpack.c.l.s4 1966171168
    %v5528 = vunpack.c.0.s8 %v5527
    %v5529 = vlaneseq
    %v5530 = vshrl.u32 %v5529, 7
    %v5531 = vsub.s32 %v5528, %v5530
    %v5532 = vrot.slane %v5516, %v5531
    %v5534 = vunpack.c.l.s4 1966171168
    %v5535 = vunpack.c.0.s8 %v5534
    %v5536 = vlaneseq
    %v5537 = vshrl.u32 %v5536, 7
    %v5538 = vsub.s32 %v5535, %v5537
    %v5539 = vrot.slane %v5517, %v5538
    %v5541 = vunpack.c.l.s4 1966171168
    %v5542 = vunpack.c.0.s8 %v5541
    %v5543 = vlaneseq
    %v5544 = vshrl.u32 %v5543, 7
    %v5545 = vsub.s32 %v5542, %v5544
    %v5546 = vrot.slane %v5518, %v5545
    %v5547 = vcombine.low %v5525, %v5532
    %v5548 = vcombine.low %v5539, %v5546
    %v5550 = vunpack.c.l.s4 1966171168
    %v5551 = vunpack.c.0.s8 %v5550
    %v5552 = vlaneseq
    %v5553 = vshrl.u32 %v5552, 7
    %v5554 = vsub.s32 %v5551, %v5553
    %v5555 = vrot.slane %v5547, %v5554
    %v5557 = vunpack.c.l.s4 1966171168
    %v5558 = vunpack.c.0.s8 %v5557
    %v5559 = vlaneseq
    %v5560 = vshrl.u32 %v5559, 7
    %v5561 = vsub.s32 %v5558, %v5560
    %v5562 = vrot.slane %v5548, %v5561
    %v5563 = vcombine.low %v5555, %v5562
    %v5564 = vcombine.low %v5011, %v5012
    %v5565 = vcombine.low %v5013, %v5014
    %v5566 = vcombine.low %v5015, %v5016
    %v5567 = vcombine.low %v5017, %v5018
    %v5569 = vunpack.c.l.s4 1966171168
    %v5570 = vunpack.c.0.s8 %v5569
    %v5571 = vlaneseq
    %v5572 = vshrl.u32 %v5571, 7
    %v5573 = vsub.s32 %v5570, %v5572
    %v5574 = vrot.slane %v5564, %v5573
    %v5576 = vunpack.c.l.s4 1966171168
    %v5577 = vunpack.c.0.s8 %v5576
    %v5578 = vlaneseq
    %v5579 = vshrl.u32 %v5578, 7
    %v5580 = vsub.s32 %v5577, %v5579
    %v5581 = vrot.slane %v5565, %v5580
    %v5583 = vunpack.c.l.s4 1966171168
    %v5584 = vunpack.c.0.s8 %v5583
    %v5585 = vlaneseq
    %v5586 = vshrl.u32 %v5585, 7
    %v5587 = vsub.s32 %v5584, %v5586
    %v5588 = vrot.slane %v5566, %v5587
    %v5590 = vunpack.c.l.s4 1966171168
    %v5591 = vunpack.c.0.s8 %v5590
    %v5592 = vlaneseq
    %v5593 = vshrl.u32 %v5592, 7
    %v5594 = vsub.s32 %v5591, %v5593
    %v5595 = vrot.slane %v5567, %v5594
    %v5596 = vcombine.low %v5574, %v5581
    %v5597 = vcombine.low %v5588, %v5595
    %v5599 = vunpack.c.l.s4 1966171168
    %v5600 = vunpack.c.0.s8 %v5599
    %v5601 = vlaneseq
    %v5602 = vshrl.u32 %v5601, 7
    %v5603 = vsub.s32 %v5600, %v5602
    %v5604 = vrot.slane %v5596, %v5603
    %v5606 = vunpack.c.l.s4 1966171168
    %v5607 = vunpack.c.0.s8 %v5606
    %v5608 = vlaneseq
    %v5609 = vshrl.u32 %v5608, 7
    %v5610 = vsub.s32 %v5607, %v5609
    %v5611 = vrot.slane %v5597, %v5610
    %v5612 = vcombine.low %v5604, %v5611
    %v5613 = vcombine.low %v5019, %v5020
    %v5614 = vcombine.low %v5021, %v5022
    %v5615 = vcombine.low %v5023, %v5024
    %v5616 = vcombine.low %v5025, %v5026
    %v5618 = vunpack.c.l.s4 1966171168
    %v5619 = vunpack.c.0.s8 %v5618
    %v5620 = vlaneseq
    %v5621 = vshrl.u32 %v5620, 7
    %v5622 = vsub.s32 %v5619, %v5621
    %v5623 = vrot.slane %v5613, %v5622
    %v5625 = vunpack.c.l.s4 1966171168
    %v5626 = vunpack.c.0.s8 %v5625
    %v5627 = vlaneseq
    %v5628 = vshrl.u32 %v5627, 7
    %v5629 = vsub.s32 %v5626, %v5628
    %v5630 = vrot.slane %v5614, %v5629
    %v5632 = vunpack.c.l.s4 1966171168
    %v5633 = vunpack.c.0.s8 %v5632
    %v5634 = vlaneseq
    %v5635 = vshrl.u32 %v5634, 7
    %v5636 = vsub.s32 %v5633, %v5635
    %v5637 = vrot.slane %v5615, %v5636
    %v5639 = vunpack.c.l.s4 1966171168
    %v5640 = vunpack.c.0.s8 %v5639
    %v5641 = vlaneseq
    %v5642 = vshrl.u32 %v5641, 7
    %v5643 = vsub.s32 %v5640, %v5642
    %v5644 = vrot.slane %v5616, %v5643
    %v5645 = vcombine.low %v5623, %v5630
    %v5646 = vcombine.low %v5637, %v5644
    %v5648 = vunpack.c.l.s4 1966171168
    %v5649 = vunpack.c.0.s8 %v5648
    %v5650 = vlaneseq
    %v5651 = vshrl.u32 %v5650, 7
    %v5652 = vsub.s32 %v5649, %v5651
    %v5653 = vrot.slane %v5645, %v5652
    %v5655 = vunpack.c.l.s4 1966171168
    %v5656 = vunpack.c.0.s8 %v5655
    %v5657 = vlaneseq
    %v5658 = vshrl.u32 %v5657, 7
    %v5659 = vsub.s32 %v5656, %v5658
    %v5660 = vrot.slane %v5646, %v5659
    %v5661 = vcombine.low %v5653, %v5660
    %v5662 = vcombine.low %v5027, %v5028
    %v5663 = vcombine.low %v5029, %v5030
    %v5664 = vcombine.low %v5031, %v5032
    %v5665 = vcombine.low %v5033, %v5034
    %v5667 = vunpack.c.l.s4 1966171168
    %v5668 = vunpack.c.0.s8 %v5667
    %v5669 = vlaneseq
    %v5670 = vshrl.u32 %v5669, 7
    %v5671 = vsub.s32 %v5668, %v5670
    %v5672 = vrot.slane %v5662, %v5671
    %v5674 = vunpack.c.l.s4 1966171168
    %v5675 = vunpack.c.0.s8 %v5674
    %v5676 = vlaneseq
    %v5677 = vshrl.u32 %v5676, 7
    %v5678 = vsub.s32 %v5675, %v5677
    %v5679 = vrot.slane %v5663, %v5678
    %v5681 = vunpack.c.l.s4 1966171168
    %v5682 = vunpack.c.0.s8 %v5681
    %v5683 = vlaneseq
    %v5684 = vshrl.u32 %v5683, 7
    %v5685 = vsub.s32 %v5682, %v5684
    %v5686 = vrot.slane %v5664, %v5685
    %v5688 = vunpack.c.l.s4 1966171168
    %v5689 = vunpack.c.0.s8 %v5688
    %v5690 = vlaneseq
    %v5691 = vshrl.u32 %v5690, 7
    %v5692 = vsub.s32 %v5689, %v5691
    %v5693 = vrot.slane %v5665, %v5692
    %v5694 = vcombine.low %v5672, %v5679
    %v5695 = vcombine.low %v5686, %v5693
    %v5697 = vunpack.c.l.s4 1966171168
    %v5698 = vunpack.c.0.s8 %v5697
    %v5699 = vlaneseq
    %v5700 = vshrl.u32 %v5699, 7
    %v5701 = vsub.s32 %v5698, %v5700
    %v5702 = vrot.slane %v5694, %v5701
    %v5704 = vunpack.c.l.s4 1966171168
    %v5705 = vunpack.c.0.s8 %v5704
    %v5706 = vlaneseq
    %v5707 = vshrl.u32 %v5706, 7
    %v5708 = vsub.s32 %v5705, %v5707
    %v5709 = vrot.slane %v5695, %v5708
    %v5710 = vcombine.low %v5702, %v5709
    %v5711 = vcombine.low %v5035, %v5036
    %v5712 = vcombine.low %v5037, %v5038
    %v5713 = vcombine.low %v5039, %v5040
    %v5714 = vcombine.low %v5041, %v5042
    %v5716 = vunpack.c.l.s4 1966171168
    %v5717 = vunpack.c.0.s8 %v5716
    %v5718 = vlaneseq
    %v5719 = vshrl.u32 %v5718, 7
    %v5720 = vsub.s32 %v5717, %v5719
    %v5721 = vrot.slane %v5711, %v5720
    %v5723 = vunpack.c.l.s4 1966171168
    %v5724 = vunpack.c.0.s8 %v5723
    %v5725 = vlaneseq
    %v5726 = vshrl.u32 %v5725, 7
    %v5727 = vsub.s32 %v5724, %v5726
    %v5728 = vrot.slane %v5712, %v5727
    %v5730 = vunpack.c.l.s4 1966171168
    %v5731 = vunpack.c.0.s8 %v5730
    %v5732 = vlaneseq
    %v5733 = vshrl.u32 %v5732, 7
    %v5734 = vsub.s32 %v5731, %v5733
    %v5735 = vrot.slane %v5713, %v5734
    %v5737 = vunpack.c.l.s4 1966171168
    %v5738 = vunpack.c.0.s8 %v5737
    %v5739 = vlaneseq
    %v5740 = vshrl.u32 %v5739, 7
    %v5741 = vsub.s32 %v5738, %v5740
    %v5742 = vrot.slane %v5714, %v5741
    %v5743 = vcombine.low %v5721, %v5728
    %v5744 = vcombine.low %v5735, %v5742
    %v5746 = vunpack.c.l.s4 1966171168
    %v5747 = vunpack.c.0.s8 %v5746
    %v5748 = vlaneseq
    %v5749 = vshrl.u32 %v5748, 7
    %v5750 = vsub.s32 %v5747, %v5749
    %v5751 = vrot.slane %v5743, %v5750
    %v5753 = vunpack.c.l.s4 1966171168
    %v5754 = vunpack.c.0.s8 %v5753
    %v5755 = vlaneseq
    %v5756 = vshrl.u32 %v5755, 7
    %v5757 = vsub.s32 %v5754, %v5756
    %v5758 = vrot.slane %v5744, %v5757
    %v5759 = vcombine.low %v5751, %v5758
    %v5760 = vcombine.low %v5043, %v5044
    %v5761 = vcombine.low %v5045, %v5046
    %v5762 = vcombine.low %v5047, %v5048
    %v5763 = vcombine.low %v5049, %v5050
    %v5765 = vunpack.c.l.s4 1966171168
    %v5766 = vunpack.c.0.s8 %v5765
    %v5767 = vlaneseq
    %v5768 = vshrl.u32 %v5767, 7
    %v5769 = vsub.s32 %v5766, %v5768
    %v5770 = vrot.slane %v5760, %v5769
    %v5772 = vunpack.c.l.s4 1966171168
    %v5773 = vunpack.c.0.s8 %v5772
    %v5774 = vlaneseq
    %v5775 = vshrl.u32 %v5774, 7
    %v5776 = vsub.s32 %v5773, %v5775
    %v5777 = vrot.slane %v5761, %v5776
    %v5779 = vunpack.c.l.s4 1966171168
    %v5780 = vunpack.c.0.s8 %v5779
    %v5781 = vlaneseq
    %v5782 = vshrl.u32 %v5781, 7
    %v5783 = vsub.s32 %v5780, %v5782
    %v5784 = vrot.slane %v5762, %v5783
    %v5786 = vunpack.c.l.s4 1966171168
    %v5787 = vunpack.c.0.s8 %v5786
    %v5788 = vlaneseq
    %v5789 = vshrl.u32 %v5788, 7
    %v5790 = vsub.s32 %v5787, %v5789
    %v5791 = vrot.slane %v5763, %v5790
    %v5792 = vcombine.low %v5770, %v5777
    %v5793 = vcombine.low %v5784, %v5791
    %v5795 = vunpack.c.l.s4 1966171168
    %v5796 = vunpack.c.0.s8 %v5795
    %v5797 = vlaneseq
    %v5798 = vshrl.u32 %v5797, 7
    %v5799 = vsub.s32 %v5796, %v5798
    %v5800 = vrot.slane %v5792, %v5799
    %v5802 = vunpack.c.l.s4 1966171168
    %v5803 = vunpack.c.0.s8 %v5802
    %v5804 = vlaneseq
    %v5805 = vshrl.u32 %v5804, 7
    %v5806 = vsub.s32 %v5803, %v5805
    %v5807 = vrot.slane %v5793, %v5806
    %v5808 = vcombine.low %v5800, %v5807
    %v5809 = vcombine.low %v5051, %v5052
    %v5810 = vcombine.low %v5053, %v5054
    %v5811 = vcombine.low %v5055, %v5056
    %v5812 = vcombine.low %v5057, %v5058
    %v5814 = vunpack.c.l.s4 1966171168
    %v5815 = vunpack.c.0.s8 %v5814
    %v5816 = vlaneseq
    %v5817 = vshrl.u32 %v5816, 7
    %v5818 = vsub.s32 %v5815, %v5817
    %v5819 = vrot.slane %v5809, %v5818
    %v5821 = vunpack.c.l.s4 1966171168
    %v5822 = vunpack.c.0.s8 %v5821
    %v5823 = vlaneseq
    %v5824 = vshrl.u32 %v5823, 7
    %v5825 = vsub.s32 %v5822, %v5824
    %v5826 = vrot.slane %v5810, %v5825
    %v5828 = vunpack.c.l.s4 1966171168
    %v5829 = vunpack.c.0.s8 %v5828
    %v5830 = vlaneseq
    %v5831 = vshrl.u32 %v5830, 7
    %v5832 = vsub.s32 %v5829, %v5831
    %v5833 = vrot.slane %v5811, %v5832
    %v5835 = vunpack.c.l.s4 1966171168
    %v5836 = vunpack.c.0.s8 %v5835
    %v5837 = vlaneseq
    %v5838 = vshrl.u32 %v5837, 7
    %v5839 = vsub.s32 %v5836, %v5838
    %v5840 = vrot.slane %v5812, %v5839
    %v5841 = vcombine.low %v5819, %v5826
    %v5842 = vcombine.low %v5833, %v5840
    %v5844 = vunpack.c.l.s4 1966171168
    %v5845 = vunpack.c.0.s8 %v5844
    %v5846 = vlaneseq
    %v5847 = vshrl.u32 %v5846, 7
    %v5848 = vsub.s32 %v5845, %v5847
    %v5849 = vrot.slane %v5841, %v5848
    %v5851 = vunpack.c.l.s4 1966171168
    %v5852 = vunpack.c.0.s8 %v5851
    %v5853 = vlaneseq
    %v5854 = vshrl.u32 %v5853, 7
    %v5855 = vsub.s32 %v5852, %v5854
    %v5856 = vrot.slane %v5842, %v5855
    %v5857 = vcombine.low %v5849, %v5856
    %v5858 = vcombine.low %v5059, %v5060
    %v5859 = vcombine.low %v5061, %v5062
    %v5860 = vcombine.low %v5063, %v5064
    %v5861 = vcombine.low %v5065, %v5066
    %v5863 = vunpack.c.l.s4 1966171168
    %v5864 = vunpack.c.0.s8 %v5863
    %v5865 = vlaneseq
    %v5866 = vshrl.u32 %v5865, 7
    %v5867 = vsub.s32 %v5864, %v5866
    %v5868 = vrot.slane %v5858, %v5867
    %v5870 = vunpack.c.l.s4 1966171168
    %v5871 = vunpack.c.0.s8 %v5870
    %v5872 = vlaneseq
    %v5873 = vshrl.u32 %v5872, 7
    %v5874 = vsub.s32 %v5871, %v5873
    %v5875 = vrot.slane %v5859, %v5874
    %v5877 = vunpack.c.l.s4 1966171168
    %v5878 = vunpack.c.0.s8 %v5877
    %v5879 = vlaneseq
    %v5880 = vshrl.u32 %v5879, 7
    %v5881 = vsub.s32 %v5878, %v5880
    %v5882 = vrot.slane %v5860, %v5881
    %v5884 = vunpack.c.l.s4 1966171168
    %v5885 = vunpack.c.0.s8 %v5884
    %v5886 = vlaneseq
    %v5887 = vshrl.u32 %v5886, 7
    %v5888 = vsub.s32 %v5885, %v5887
    %v5889 = vrot.slane %v5861, %v5888
    %v5890 = vcombine.low %v5868, %v5875
    %v5891 = vcombine.low %v5882, %v5889
    %v5893 = vunpack.c.l.s4 1966171168
    %v5894 = vunpack.c.0.s8 %v5893
    %v5895 = vlaneseq
    %v5896 = vshrl.u32 %v5895, 7
    %v5897 = vsub.s32 %v5894, %v5896
    %v5898 = vrot.slane %v5890, %v5897
    %v5900 = vunpack.c.l.s4 1966171168
    %v5901 = vunpack.c.0.s8 %v5900
    %v5902 = vlaneseq
    %v5903 = vshrl.u32 %v5902, 7
    %v5904 = vsub.s32 %v5901, %v5903
    %v5905 = vrot.slane %v5891, %v5904
    %v5906 = vcombine.low %v5898, %v5905
    %v5907 = vcombine.low %v5067, %v5068
    %v5908 = vcombine.low %v5069, %v5070
    %v5909 = vcombine.low %v5071, %v5072
    %v5910 = vcombine.low %v5073, %v5074
    %v5912 = vunpack.c.l.s4 1966171168
    %v5913 = vunpack.c.0.s8 %v5912
    %v5914 = vlaneseq
    %v5915 = vshrl.u32 %v5914, 7
    %v5916 = vsub.s32 %v5913, %v5915
    %v5917 = vrot.slane %v5907, %v5916
    %v5919 = vunpack.c.l.s4 1966171168
    %v5920 = vunpack.c.0.s8 %v5919
    %v5921 = vlaneseq
    %v5922 = vshrl.u32 %v5921, 7
    %v5923 = vsub.s32 %v5920, %v5922
    %v5924 = vrot.slane %v5908, %v5923
    %v5926 = vunpack.c.l.s4 1966171168
    %v5927 = vunpack.c.0.s8 %v5926
    %v5928 = vlaneseq
    %v5929 = vshrl.u32 %v5928, 7
    %v5930 = vsub.s32 %v5927, %v5929
    %v5931 = vrot.slane %v5909, %v5930
    %v5933 = vunpack.c.l.s4 1966171168
    %v5934 = vunpack.c.0.s8 %v5933
    %v5935 = vlaneseq
    %v5936 = vshrl.u32 %v5935, 7
    %v5937 = vsub.s32 %v5934, %v5936
    %v5938 = vrot.slane %v5910, %v5937
    %v5939 = vcombine.low %v5917, %v5924
    %v5940 = vcombine.low %v5931, %v5938
    %v5942 = vunpack.c.l.s4 1966171168
    %v5943 = vunpack.c.0.s8 %v5942
    %v5944 = vlaneseq
    %v5945 = vshrl.u32 %v5944, 7
    %v5946 = vsub.s32 %v5943, %v5945
    %v5947 = vrot.slane %v5939, %v5946
    %v5949 = vunpack.c.l.s4 1966171168
    %v5950 = vunpack.c.0.s8 %v5949
    %v5951 = vlaneseq
    %v5952 = vshrl.u32 %v5951, 7
    %v5953 = vsub.s32 %v5950, %v5952
    %v5954 = vrot.slane %v5940, %v5953
    %v5955 = vcombine.low %v5947, %v5954
    %v5956 = vcombine.low %v5075, %v5076
    %v5957 = vcombine.low %v5077, %v5078
    %v5958 = vcombine.low %v5079, %v5080
    %v5959 = vcombine.low %v5081, %v5082
    %v5961 = vunpack.c.l.s4 1966171168
    %v5962 = vunpack.c.0.s8 %v5961
    %v5963 = vlaneseq
    %v5964 = vshrl.u32 %v5963, 7
    %v5965 = vsub.s32 %v5962, %v5964
    %v5966 = vrot.slane %v5956, %v5965
    %v5968 = vunpack.c.l.s4 1966171168
    %v5969 = vunpack.c.0.s8 %v5968
    %v5970 = vlaneseq
    %v5971 = vshrl.u32 %v5970, 7
    %v5972 = vsub.s32 %v5969, %v5971
    %v5973 = vrot.slane %v5957, %v5972
    %v5975 = vunpack.c.l.s4 1966171168
    %v5976 = vunpack.c.0.s8 %v5975
    %v5977 = vlaneseq
    %v5978 = vshrl.u32 %v5977, 7
    %v5979 = vsub.s32 %v5976, %v5978
    %v5980 = vrot.slane %v5958, %v5979
    %v5982 = vunpack.c.l.s4 1966171168
    %v5983 = vunpack.c.0.s8 %v5982
    %v5984 = vlaneseq
    %v5985 = vshrl.u32 %v5984, 7
    %v5986 = vsub.s32 %v5983, %v5985
    %v5987 = vrot.slane %v5959, %v5986
    %v5988 = vcombine.low %v5966, %v5973
    %v5989 = vcombine.low %v5980, %v5987
    %v5991 = vunpack.c.l.s4 1966171168
    %v5992 = vunpack.c.0.s8 %v5991
    %v5993 = vlaneseq
    %v5994 = vshrl.u32 %v5993, 7
    %v5995 = vsub.s32 %v5992, %v5994
    %v5996 = vrot.slane %v5988, %v5995
    %v5998 = vunpack.c.l.s4 1966171168
    %v5999 = vunpack.c.0.s8 %v5998
    %v6000 = vlaneseq
    %v6001 = vshrl.u32 %v6000, 7
    %v6002 = vsub.s32 %v5999, %v6001
    %v6003 = vrot.slane %v5989, %v6002
    %v6004 = vcombine.low %v5996, %v6003
    %v6005 = vcombine.low %v5083, %v5084
    %v6006 = vcombine.low %v5085, %v5086
    %v6007 = vcombine.low %v5087, %v5088
    %v6008 = vcombine.low %v5089, %v5090
    %v6010 = vunpack.c.l.s4 1966171168
    %v6011 = vunpack.c.0.s8 %v6010
    %v6012 = vlaneseq
    %v6013 = vshrl.u32 %v6012, 7
    %v6014 = vsub.s32 %v6011, %v6013
    %v6015 = vrot.slane %v6005, %v6014
    %v6017 = vunpack.c.l.s4 1966171168
    %v6018 = vunpack.c.0.s8 %v6017
    %v6019 = vlaneseq
    %v6020 = vshrl.u32 %v6019, 7
    %v6021 = vsub.s32 %v6018, %v6020
    %v6022 = vrot.slane %v6006, %v6021
    %v6024 = vunpack.c.l.s4 1966171168
    %v6025 = vunpack.c.0.s8 %v6024
    %v6026 = vlaneseq
    %v6027 = vshrl.u32 %v6026, 7
    %v6028 = vsub.s32 %v6025, %v6027
    %v6029 = vrot.slane %v6007, %v6028
    %v6031 = vunpack.c.l.s4 1966171168
    %v6032 = vunpack.c.0.s8 %v6031
    %v6033 = vlaneseq
    %v6034 = vshrl.u32 %v6033, 7
    %v6035 = vsub.s32 %v6032, %v6034
    %v6036 = vrot.slane %v6008, %v6035
    %v6037 = vcombine.low %v6015, %v6022
    %v6038 = vcombine.low %v6029, %v6036
    %v6040 = vunpack.c.l.s4 1966171168
    %v6041 = vunpack.c.0.s8 %v6040
    %v6042 = vlaneseq
    %v6043 = vshrl.u32 %v6042, 7
    %v6044 = vsub.s32 %v6041, %v6043
    %v6045 = vrot.slane %v6037, %v6044
    %v6047 = vunpack.c.l.s4 1966171168
    %v6048 = vunpack.c.0.s8 %v6047
    %v6049 = vlaneseq
    %v6050 = vshrl.u32 %v6049, 7
    %v6051 = vsub.s32 %v6048, %v6050
    %v6052 = vrot.slane %v6038, %v6051
    %v6053 = vcombine.low %v6045, %v6052
    %v6054 = vcombine.low %v5091, %v5092
    %v6055 = vcombine.low %v5093, %v5094
    %v6056 = vcombine.low %v5095, %v5096
    %v6057 = vcombine.low %v5097, %v5098
    %v6059 = vunpack.c.l.s4 1966171168
    %v6060 = vunpack.c.0.s8 %v6059
    %v6061 = vlaneseq
    %v6062 = vshrl.u32 %v6061, 7
    %v6063 = vsub.s32 %v6060, %v6062
    %v6064 = vrot.slane %v6054, %v6063
    %v6066 = vunpack.c.l.s4 1966171168
    %v6067 = vunpack.c.0.s8 %v6066
    %v6068 = vlaneseq
    %v6069 = vshrl.u32 %v6068, 7
    %v6070 = vsub.s32 %v6067, %v6069
    %v6071 = vrot.slane %v6055, %v6070
    %v6073 = vunpack.c.l.s4 1966171168
    %v6074 = vunpack.c.0.s8 %v6073
    %v6075 = vlaneseq
    %v6076 = vshrl.u32 %v6075, 7
    %v6077 = vsub.s32 %v6074, %v6076
    %v6078 = vrot.slane %v6056, %v6077
    %v6080 = vunpack.c.l.s4 1966171168
    %v6081 = vunpack.c.0.s8 %v6080
    %v6082 = vlaneseq
    %v6083 = vshrl.u32 %v6082, 7
    %v6084 = vsub.s32 %v6081, %v6083
    %v6085 = vrot.slane %v6057, %v6084
    %v6086 = vcombine.low %v6064, %v6071
    %v6087 = vcombine.low %v6078, %v6085
    %v6089 = vunpack.c.l.s4 1966171168
    %v6090 = vunpack.c.0.s8 %v6089
    %v6091 = vlaneseq
    %v6092 = vshrl.u32 %v6091, 7
    %v6093 = vsub.s32 %v6090, %v6092
    %v6094 = vrot.slane %v6086, %v6093
    %v6096 = vunpack.c.l.s4 1966171168
    %v6097 = vunpack.c.0.s8 %v6096
    %v6098 = vlaneseq
    %v6099 = vshrl.u32 %v6098, 7
    %v6100 = vsub.s32 %v6097, %v6099
    %v6101 = vrot.slane %v6087, %v6100
    %v6102 = vcombine.low %v6094, %v6101
    %v6103 = vcombine.low %v5099, %v5100
    %v6104 = vcombine.low %v5101, %v5102
    %v6105 = vcombine.low %v5103, %v5104
    %v6106 = vcombine.low %v5105, %v5106
    %v6108 = vunpack.c.l.s4 1966171168
    %v6109 = vunpack.c.0.s8 %v6108
    %v6110 = vlaneseq
    %v6111 = vshrl.u32 %v6110, 7
    %v6112 = vsub.s32 %v6109, %v6111
    %v6113 = vrot.slane %v6103, %v6112
    %v6115 = vunpack.c.l.s4 1966171168
    %v6116 = vunpack.c.0.s8 %v6115
    %v6117 = vlaneseq
    %v6118 = vshrl.u32 %v6117, 7
    %v6119 = vsub.s32 %v6116, %v6118
    %v6120 = vrot.slane %v6104, %v6119
    %v6122 = vunpack.c.l.s4 1966171168
    %v6123 = vunpack.c.0.s8 %v6122
    %v6124 = vlaneseq
    %v6125 = vshrl.u32 %v6124, 7
    %v6126 = vsub.s32 %v6123, %v6125
    %v6127 = vrot.slane %v6105, %v6126
    %v6129 = vunpack.c.l.s4 1966171168
    %v6130 = vunpack.c.0.s8 %v6129
    %v6131 = vlaneseq
    %v6132 = vshrl.u32 %v6131, 7
    %v6133 = vsub.s32 %v6130, %v6132
    %v6134 = vrot.slane %v6106, %v6133
    %v6135 = vcombine.low %v6113, %v6120
    %v6136 = vcombine.low %v6127, %v6134
    %v6138 = vunpack.c.l.s4 1966171168
    %v6139 = vunpack.c.0.s8 %v6138
    %v6140 = vlaneseq
    %v6141 = vshrl.u32 %v6140, 7
    %v6142 = vsub.s32 %v6139, %v6141
    %v6143 = vrot.slane %v6135, %v6142
    %v6145 = vunpack.c.l.s4 1966171168
    %v6146 = vunpack.c.0.s8 %v6145
    %v6147 = vlaneseq
    %v6148 = vshrl.u32 %v6147, 7
    %v6149 = vsub.s32 %v6146, %v6148
    %v6150 = vrot.slane %v6136, %v6149
    %v6151 = vcombine.low %v6143, %v6150
    %v6152 = vcombine.low %v5107, %v5108
    %v6153 = vcombine.low %v5109, %v5110
    %v6154 = vcombine.low %v5111, %v5112
    %v6155 = vcombine.low %v5113, %v5114
    %v6157 = vunpack.c.l.s4 1966171168
    %v6158 = vunpack.c.0.s8 %v6157
    %v6159 = vlaneseq
    %v6160 = vshrl.u32 %v6159, 7
    %v6161 = vsub.s32 %v6158, %v6160
    %v6162 = vrot.slane %v6152, %v6161
    %v6164 = vunpack.c.l.s4 1966171168
    %v6165 = vunpack.c.0.s8 %v6164
    %v6166 = vlaneseq
    %v6167 = vshrl.u32 %v6166, 7
    %v6168 = vsub.s32 %v6165, %v6167
    %v6169 = vrot.slane %v6153, %v6168
    %v6171 = vunpack.c.l.s4 1966171168
    %v6172 = vunpack.c.0.s8 %v6171
    %v6173 = vlaneseq
    %v6174 = vshrl.u32 %v6173, 7
    %v6175 = vsub.s32 %v6172, %v6174
    %v6176 = vrot.slane %v6154, %v6175
    %v6178 = vunpack.c.l.s4 1966171168
    %v6179 = vunpack.c.0.s8 %v6178
    %v6180 = vlaneseq
    %v6181 = vshrl.u32 %v6180, 7
    %v6182 = vsub.s32 %v6179, %v6181
    %v6183 = vrot.slane %v6155, %v6182
    %v6184 = vcombine.low %v6162, %v6169
    %v6185 = vcombine.low %v6176, %v6183
    %v6187 = vunpack.c.l.s4 1966171168
    %v6188 = vunpack.c.0.s8 %v6187
    %v6189 = vlaneseq
    %v6190 = vshrl.u32 %v6189, 7
    %v6191 = vsub.s32 %v6188, %v6190
    %v6192 = vrot.slane %v6184, %v6191
    %v6194 = vunpack.c.l.s4 1966171168
    %v6195 = vunpack.c.0.s8 %v6194
    %v6196 = vlaneseq
    %v6197 = vshrl.u32 %v6196, 7
    %v6198 = vsub.s32 %v6195, %v6197
    %v6199 = vrot.slane %v6185, %v6198
    %v6200 = vcombine.low %v6192, %v6199
    %v6201 = vcombine.low %v5115, %v5116
    %v6202 = vcombine.low %v5117, %v5118
    %v6203 = vcombine.low %v5119, %v5120
    %v6204 = vcombine.low %v5121, %v5122
    %v6206 = vunpack.c.l.s4 1966171168
    %v6207 = vunpack.c.0.s8 %v6206
    %v6208 = vlaneseq
    %v6209 = vshrl.u32 %v6208, 7
    %v6210 = vsub.s32 %v6207, %v6209
    %v6211 = vrot.slane %v6201, %v6210
    %v6213 = vunpack.c.l.s4 1966171168
    %v6214 = vunpack.c.0.s8 %v6213
    %v6215 = vlaneseq
    %v6216 = vshrl.u32 %v6215, 7
    %v6217 = vsub.s32 %v6214, %v6216
    %v6218 = vrot.slane %v6202, %v6217
    %v6220 = vunpack.c.l.s4 1966171168
    %v6221 = vunpack.c.0.s8 %v6220
    %v6222 = vlaneseq
    %v6223 = vshrl.u32 %v6222, 7
    %v6224 = vsub.s32 %v6221, %v6223
    %v6225 = vrot.slane %v6203, %v6224
    %v6227 = vunpack.c.l.s4 1966171168
    %v6228 = vunpack.c.0.s8 %v6227
    %v6229 = vlaneseq
    %v6230 = vshrl.u32 %v6229, 7
    %v6231 = vsub.s32 %v6228, %v6230
    %v6232 = vrot.slane %v6204, %v6231
    %v6233 = vcombine.low %v6211, %v6218
    %v6234 = vcombine.low %v6225, %v6232
    %v6236 = vunpack.c.l.s4 1966171168
    %v6237 = vunpack.c.0.s8 %v6236
    %v6238 = vlaneseq
    %v6239 = vshrl.u32 %v6238, 7
    %v6240 = vsub.s32 %v6237, %v6239
    %v6241 = vrot.slane %v6233, %v6240
    %v6243 = vunpack.c.l.s4 1966171168
    %v6244 = vunpack.c.0.s8 %v6243
    %v6245 = vlaneseq
    %v6246 = vshrl.u32 %v6245, 7
    %v6247 = vsub.s32 %v6244, %v6246
    %v6248 = vrot.slane %v6234, %v6247
    %v6249 = vcombine.low %v6241, %v6248
    %v6250 = vcombine.low %v5123, %v5124
    %v6251 = vcombine.low %v5125, %v5126
    %v6252 = vcombine.low %v5127, %v5128
    %v6253 = vcombine.low %v5129, %v5130
    %v6255 = vunpack.c.l.s4 1966171168
    %v6256 = vunpack.c.0.s8 %v6255
    %v6257 = vlaneseq
    %v6258 = vshrl.u32 %v6257, 7
    %v6259 = vsub.s32 %v6256, %v6258
    %v6260 = vrot.slane %v6250, %v6259
    %v6262 = vunpack.c.l.s4 1966171168
    %v6263 = vunpack.c.0.s8 %v6262
    %v6264 = vlaneseq
    %v6265 = vshrl.u32 %v6264, 7
    %v6266 = vsub.s32 %v6263, %v6265
    %v6267 = vrot.slane %v6251, %v6266
    %v6269 = vunpack.c.l.s4 1966171168
    %v6270 = vunpack.c.0.s8 %v6269
    %v6271 = vlaneseq
    %v6272 = vshrl.u32 %v6271, 7
    %v6273 = vsub.s32 %v6270, %v6272
    %v6274 = vrot.slane %v6252, %v6273
    %v6276 = vunpack.c.l.s4 1966171168
    %v6277 = vunpack.c.0.s8 %v6276
    %v6278 = vlaneseq
    %v6279 = vshrl.u32 %v6278, 7
    %v6280 = vsub.s32 %v6277, %v6279
    %v6281 = vrot.slane %v6253, %v6280
    %v6282 = vcombine.low %v6260, %v6267
    %v6283 = vcombine.low %v6274, %v6281
    %v6285 = vunpack.c.l.s4 1966171168
    %v6286 = vunpack.c.0.s8 %v6285
    %v6287 = vlaneseq
    %v6288 = vshrl.u32 %v6287, 7
    %v6289 = vsub.s32 %v6286, %v6288
    %v6290 = vrot.slane %v6282, %v6289
    %v6292 = vunpack.c.l.s4 1966171168
    %v6293 = vunpack.c.0.s8 %v6292
    %v6294 = vlaneseq
    %v6295 = vshrl.u32 %v6294, 7
    %v6296 = vsub.s32 %v6293, %v6295
    %v6297 = vrot.slane %v6283, %v6296
    %v6298 = vcombine.low %v6290, %v6297
    %v6299 = vcombine.low %v5131, %v5132
    %v6300 = vcombine.low %v5133, %v5134
    %v6301 = vcombine.low %v5135, %v5136
    %v6302 = vcombine.low %v5137, %v5138
    %v6304 = vunpack.c.l.s4 1966171168
    %v6305 = vunpack.c.0.s8 %v6304
    %v6306 = vlaneseq
    %v6307 = vshrl.u32 %v6306, 7
    %v6308 = vsub.s32 %v6305, %v6307
    %v6309 = vrot.slane %v6299, %v6308
    %v6311 = vunpack.c.l.s4 1966171168
    %v6312 = vunpack.c.0.s8 %v6311
    %v6313 = vlaneseq
    %v6314 = vshrl.u32 %v6313, 7
    %v6315 = vsub.s32 %v6312, %v6314
    %v6316 = vrot.slane %v6300, %v6315
    %v6318 = vunpack.c.l.s4 1966171168
    %v6319 = vunpack.c.0.s8 %v6318
    %v6320 = vlaneseq
    %v6321 = vshrl.u32 %v6320, 7
    %v6322 = vsub.s32 %v6319, %v6321
    %v6323 = vrot.slane %v6301, %v6322
    %v6325 = vunpack.c.l.s4 1966171168
    %v6326 = vunpack.c.0.s8 %v6325
    %v6327 = vlaneseq
    %v6328 = vshrl.u32 %v6327, 7
    %v6329 = vsub.s32 %v6326, %v6328
    %v6330 = vrot.slane %v6302, %v6329
    %v6331 = vcombine.low %v6309, %v6316
    %v6332 = vcombine.low %v6323, %v6330
    %v6334 = vunpack.c.l.s4 1966171168
    %v6335 = vunpack.c.0.s8 %v6334
    %v6336 = vlaneseq
    %v6337 = vshrl.u32 %v6336, 7
    %v6338 = vsub.s32 %v6335, %v6337
    %v6339 = vrot.slane %v6331, %v6338
    %v6341 = vunpack.c.l.s4 1966171168
    %v6342 = vunpack.c.0.s8 %v6341
    %v6343 = vlaneseq
    %v6344 = vshrl.u32 %v6343, 7
    %v6345 = vsub.s32 %v6342, %v6344
    %v6346 = vrot.slane %v6332, %v6345
    %v6347 = vcombine.low %v6339, %v6346
    %v6348 = vcombine.low %v5139, %v5140
    %v6349 = vcombine.low %v5141, %v5142
    %v6350 = vcombine.low %v5143, %v5144
    %v6351 = vcombine.low %v5145, %v5146
    %v6353 = vunpack.c.l.s4 1966171168
    %v6354 = vunpack.c.0.s8 %v6353
    %v6355 = vlaneseq
    %v6356 = vshrl.u32 %v6355, 7
    %v6357 = vsub.s32 %v6354, %v6356
    %v6358 = vrot.slane %v6348, %v6357
    %v6360 = vunpack.c.l.s4 1966171168
    %v6361 = vunpack.c.0.s8 %v6360
    %v6362 = vlaneseq
    %v6363 = vshrl.u32 %v6362, 7
    %v6364 = vsub.s32 %v6361, %v6363
    %v6365 = vrot.slane %v6349, %v6364
    %v6367 = vunpack.c.l.s4 1966171168
    %v6368 = vunpack.c.0.s8 %v6367
    %v6369 = vlaneseq
    %v6370 = vshrl.u32 %v6369, 7
    %v6371 = vsub.s32 %v6368, %v6370
    %v6372 = vrot.slane %v6350, %v6371
    %v6374 = vunpack.c.l.s4 1966171168
    %v6375 = vunpack.c.0.s8 %v6374
    %v6376 = vlaneseq
    %v6377 = vshrl.u32 %v6376, 7
    %v6378 = vsub.s32 %v6375, %v6377
    %v6379 = vrot.slane %v6351, %v6378
    %v6380 = vcombine.low %v6358, %v6365
    %v6381 = vcombine.low %v6372, %v6379
    %v6383 = vunpack.c.l.s4 1966171168
    %v6384 = vunpack.c.0.s8 %v6383
    %v6385 = vlaneseq
    %v6386 = vshrl.u32 %v6385, 7
    %v6387 = vsub.s32 %v6384, %v6386
    %v6388 = vrot.slane %v6380, %v6387
    %v6390 = vunpack.c.l.s4 1966171168
    %v6391 = vunpack.c.0.s8 %v6390
    %v6392 = vlaneseq
    %v6393 = vshrl.u32 %v6392, 7
    %v6394 = vsub.s32 %v6391, %v6393
    %v6395 = vrot.slane %v6381, %v6394
    %v6396 = vcombine.low %v6388, %v6395
    %v6397 = vcombine.low %v5147, %v5148
    %v6398 = vcombine.low %v5149, %v5150
    %v6399 = vcombine.low %v5151, %v5152
    %v6400 = vcombine.low %v5153, %v5154
    %v6402 = vunpack.c.l.s4 1966171168
    %v6403 = vunpack.c.0.s8 %v6402
    %v6404 = vlaneseq
    %v6405 = vshrl.u32 %v6404, 7
    %v6406 = vsub.s32 %v6403, %v6405
    %v6407 = vrot.slane %v6397, %v6406
    %v6409 = vunpack.c.l.s4 1966171168
    %v6410 = vunpack.c.0.s8 %v6409
    %v6411 = vlaneseq
    %v6412 = vshrl.u32 %v6411, 7
    %v6413 = vsub.s32 %v6410, %v6412
    %v6414 = vrot.slane %v6398, %v6413
    %v6416 = vunpack.c.l.s4 1966171168
    %v6417 = vunpack.c.0.s8 %v6416
    %v6418 = vlaneseq
    %v6419 = vshrl.u32 %v6418, 7
    %v6420 = vsub.s32 %v6417, %v6419
    %v6421 = vrot.slane %v6399, %v6420
    %v6423 = vunpack.c.l.s4 1966171168
    %v6424 = vunpack.c.0.s8 %v6423
    %v6425 = vlaneseq
    %v6426 = vshrl.u32 %v6425, 7
    %v6427 = vsub.s32 %v6424, %v6426
    %v6428 = vrot.slane %v6400, %v6427
    %v6429 = vcombine.low %v6407, %v6414
    %v6430 = vcombine.low %v6421, %v6428
    %v6432 = vunpack.c.l.s4 1966171168
    %v6433 = vunpack.c.0.s8 %v6432
    %v6434 = vlaneseq
    %v6435 = vshrl.u32 %v6434, 7
    %v6436 = vsub.s32 %v6433, %v6435
    %v6437 = vrot.slane %v6429, %v6436
    %v6439 = vunpack.c.l.s4 1966171168
    %v6440 = vunpack.c.0.s8 %v6439
    %v6441 = vlaneseq
    %v6442 = vshrl.u32 %v6441, 7
    %v6443 = vsub.s32 %v6440, %v6442
    %v6444 = vrot.slane %v6430, %v6443
    %v6445 = vcombine.low %v6437, %v6444
    %v6446 = vcombine.low %v5155, %v5156
    %v6447 = vcombine.low %v5157, %v5158
    %v6448 = vcombine.low %v5159, %v5160
    %v6449 = vcombine.low %v5161, %v5162
    %v6451 = vunpack.c.l.s4 1966171168
    %v6452 = vunpack.c.0.s8 %v6451
    %v6453 = vlaneseq
    %v6454 = vshrl.u32 %v6453, 7
    %v6455 = vsub.s32 %v6452, %v6454
    %v6456 = vrot.slane %v6446, %v6455
    %v6458 = vunpack.c.l.s4 1966171168
    %v6459 = vunpack.c.0.s8 %v6458
    %v6460 = vlaneseq
    %v6461 = vshrl.u32 %v6460, 7
    %v6462 = vsub.s32 %v6459, %v6461
    %v6463 = vrot.slane %v6447, %v6462
    %v6465 = vunpack.c.l.s4 1966171168
    %v6466 = vunpack.c.0.s8 %v6465
    %v6467 = vlaneseq
    %v6468 = vshrl.u32 %v6467, 7
    %v6469 = vsub.s32 %v6466, %v6468
    %v6470 = vrot.slane %v6448, %v6469
    %v6472 = vunpack.c.l.s4 1966171168
    %v6473 = vunpack.c.0.s8 %v6472
    %v6474 = vlaneseq
    %v6475 = vshrl.u32 %v6474, 7
    %v6476 = vsub.s32 %v6473, %v6475
    %v6477 = vrot.slane %v6449, %v6476
    %v6478 = vcombine.low %v6456, %v6463
    %v6479 = vcombine.low %v6470, %v6477
    %v6481 = vunpack.c.l.s4 1966171168
    %v6482 = vunpack.c.0.s8 %v6481
    %v6483 = vlaneseq
    %v6484 = vshrl.u32 %v6483, 7
    %v6485 = vsub.s32 %v6482, %v6484
    %v6486 = vrot.slane %v6478, %v6485
    %v6488 = vunpack.c.l.s4 1966171168
    %v6489 = vunpack.c.0.s8 %v6488
    %v6490 = vlaneseq
    %v6491 = vshrl.u32 %v6490, 7
    %v6492 = vsub.s32 %v6489, %v6491
    %v6493 = vrot.slane %v6479, %v6492
    %v6494 = vcombine.low %v6486, %v6493
    %v6495 = vcombine.low %v5163, %v5164
    %v6496 = vcombine.low %v5165, %v5166
    %v6497 = vcombine.low %v5167, %v5168
    %v6498 = vcombine.low %v5169, %v5170
    %v6500 = vunpack.c.l.s4 1966171168
    %v6501 = vunpack.c.0.s8 %v6500
    %v6502 = vlaneseq
    %v6503 = vshrl.u32 %v6502, 7
    %v6504 = vsub.s32 %v6501, %v6503
    %v6505 = vrot.slane %v6495, %v6504
    %v6507 = vunpack.c.l.s4 1966171168
    %v6508 = vunpack.c.0.s8 %v6507
    %v6509 = vlaneseq
    %v6510 = vshrl.u32 %v6509, 7
    %v6511 = vsub.s32 %v6508, %v6510
    %v6512 = vrot.slane %v6496, %v6511
    %v6514 = vunpack.c.l.s4 1966171168
    %v6515 = vunpack.c.0.s8 %v6514
    %v6516 = vlaneseq
    %v6517 = vshrl.u32 %v6516, 7
    %v6518 = vsub.s32 %v6515, %v6517
    %v6519 = vrot.slane %v6497, %v6518
    %v6521 = vunpack.c.l.s4 1966171168
    %v6522 = vunpack.c.0.s8 %v6521
    %v6523 = vlaneseq
    %v6524 = vshrl.u32 %v6523, 7
    %v6525 = vsub.s32 %v6522, %v6524
    %v6526 = vrot.slane %v6498, %v6525
    %v6527 = vcombine.low %v6505, %v6512
    %v6528 = vcombine.low %v6519, %v6526
    %v6530 = vunpack.c.l.s4 1966171168
    %v6531 = vunpack.c.0.s8 %v6530
    %v6532 = vlaneseq
    %v6533 = vshrl.u32 %v6532, 7
    %v6534 = vsub.s32 %v6531, %v6533
    %v6535 = vrot.slane %v6527, %v6534
    %v6537 = vunpack.c.l.s4 1966171168
    %v6538 = vunpack.c.0.s8 %v6537
    %v6539 = vlaneseq
    %v6540 = vshrl.u32 %v6539, 7
    %v6541 = vsub.s32 %v6538, %v6540
    %v6542 = vrot.slane %v6528, %v6541
    %v6543 = vcombine.low %v6535, %v6542
    %v6544 = vcombine.low %v5171, %v5172
    %v6545 = vcombine.low %v5173, %v5174
    %v6546 = vcombine.low %v5175, %v5176
    %v6547 = vcombine.low %v5177, %v5178
    %v6549 = vunpack.c.l.s4 1966171168
    %v6550 = vunpack.c.0.s8 %v6549
    %v6551 = vlaneseq
    %v6552 = vshrl.u32 %v6551, 7
    %v6553 = vsub.s32 %v6550, %v6552
    %v6554 = vrot.slane %v6544, %v6553
    %v6556 = vunpack.c.l.s4 1966171168
    %v6557 = vunpack.c.0.s8 %v6556
    %v6558 = vlaneseq
    %v6559 = vshrl.u32 %v6558, 7
    %v6560 = vsub.s32 %v6557, %v6559
    %v6561 = vrot.slane %v6545, %v6560
    %v6563 = vunpack.c.l.s4 1966171168
    %v6564 = vunpack.c.0.s8 %v6563
    %v6565 = vlaneseq
    %v6566 = vshrl.u32 %v6565, 7
    %v6567 = vsub.s32 %v6564, %v6566
    %v6568 = vrot.slane %v6546, %v6567
    %v6570 = vunpack.c.l.s4 1966171168
    %v6571 = vunpack.c.0.s8 %v6570
    %v6572 = vlaneseq
    %v6573 = vshrl.u32 %v6572, 7
    %v6574 = vsub.s32 %v6571, %v6573
    %v6575 = vrot.slane %v6547, %v6574
    %v6576 = vcombine.low %v6554, %v6561
    %v6577 = vcombine.low %v6568, %v6575
    %v6579 = vunpack.c.l.s4 1966171168
    %v6580 = vunpack.c.0.s8 %v6579
    %v6581 = vlaneseq
    %v6582 = vshrl.u32 %v6581, 7
    %v6583 = vsub.s32 %v6580, %v6582
    %v6584 = vrot.slane %v6576, %v6583
    %v6586 = vunpack.c.l.s4 1966171168
    %v6587 = vunpack.c.0.s8 %v6586
    %v6588 = vlaneseq
    %v6589 = vshrl.u32 %v6588, 7
    %v6590 = vsub.s32 %v6587, %v6589
    %v6591 = vrot.slane %v6577, %v6590
    %v6592 = vcombine.low %v6584, %v6591
    %v6593 = vcombine.low %v5179, %v5180
    %v6594 = vcombine.low %v5181, %v5182
    %v6595 = vcombine.low %v5183, %v5184
    %v6596 = vcombine.low %v5185, %v5186
    %v6598 = vunpack.c.l.s4 1966171168
    %v6599 = vunpack.c.0.s8 %v6598
    %v6600 = vlaneseq
    %v6601 = vshrl.u32 %v6600, 7
    %v6602 = vsub.s32 %v6599, %v6601
    %v6603 = vrot.slane %v6593, %v6602
    %v6605 = vunpack.c.l.s4 1966171168
    %v6606 = vunpack.c.0.s8 %v6605
    %v6607 = vlaneseq
    %v6608 = vshrl.u32 %v6607, 7
    %v6609 = vsub.s32 %v6606, %v6608
    %v6610 = vrot.slane %v6594, %v6609
    %v6612 = vunpack.c.l.s4 1966171168
    %v6613 = vunpack.c.0.s8 %v6612
    %v6614 = vlaneseq
    %v6615 = vshrl.u32 %v6614, 7
    %v6616 = vsub.s32 %v6613, %v6615
    %v6617 = vrot.slane %v6595, %v6616
    %v6619 = vunpack.c.l.s4 1966171168
    %v6620 = vunpack.c.0.s8 %v6619
    %v6621 = vlaneseq
    %v6622 = vshrl.u32 %v6621, 7
    %v6623 = vsub.s32 %v6620, %v6622
    %v6624 = vrot.slane %v6596, %v6623
    %v6625 = vcombine.low %v6603, %v6610
    %v6626 = vcombine.low %v6617, %v6624
    %v6628 = vunpack.c.l.s4 1966171168
    %v6629 = vunpack.c.0.s8 %v6628
    %v6630 = vlaneseq
    %v6631 = vshrl.u32 %v6630, 7
    %v6632 = vsub.s32 %v6629, %v6631
    %v6633 = vrot.slane %v6625, %v6632
    %v6635 = vunpack.c.l.s4 1966171168
    %v6636 = vunpack.c.0.s8 %v6635
    %v6637 = vlaneseq
    %v6638 = vshrl.u32 %v6637, 7
    %v6639 = vsub.s32 %v6636, %v6638
    %v6640 = vrot.slane %v6626, %v6639
    %v6641 = vcombine.low %v6633, %v6640
    %v6642 = vcombine.low %v5187, %v5188
    %v6643 = vcombine.low %v5189, %v5190
    %v6644 = vcombine.low %v5191, %v5192
    %v6645 = vcombine.low %v5193, %v5194
    %v6647 = vunpack.c.l.s4 1966171168
    %v6648 = vunpack.c.0.s8 %v6647
    %v6649 = vlaneseq
    %v6650 = vshrl.u32 %v6649, 7
    %v6651 = vsub.s32 %v6648, %v6650
    %v6652 = vrot.slane %v6642, %v6651
    %v6654 = vunpack.c.l.s4 1966171168
    %v6655 = vunpack.c.0.s8 %v6654
    %v6656 = vlaneseq
    %v6657 = vshrl.u32 %v6656, 7
    %v6658 = vsub.s32 %v6655, %v6657
    %v6659 = vrot.slane %v6643, %v6658
    %v6661 = vunpack.c.l.s4 1966171168
    %v6662 = vunpack.c.0.s8 %v6661
    %v6663 = vlaneseq
    %v6664 = vshrl.u32 %v6663, 7
    %v6665 = vsub.s32 %v6662, %v6664
    %v6666 = vrot.slane %v6644, %v6665
    %v6668 = vunpack.c.l.s4 1966171168
    %v6669 = vunpack.c.0.s8 %v6668
    %v6670 = vlaneseq
    %v6671 = vshrl.u32 %v6670, 7
    %v6672 = vsub.s32 %v6669, %v6671
    %v6673 = vrot.slane %v6645, %v6672
    %v6674 = vcombine.low %v6652, %v6659
    %v6675 = vcombine.low %v6666, %v6673
    %v6677 = vunpack.c.l.s4 1966171168
    %v6678 = vunpack.c.0.s8 %v6677
    %v6679 = vlaneseq
    %v6680 = vshrl.u32 %v6679, 7
    %v6681 = vsub.s32 %v6678, %v6680
    %v6682 = vrot.slane %v6674, %v6681
    %v6684 = vunpack.c.l.s4 1966171168
    %v6685 = vunpack.c.0.s8 %v6684
    %v6686 = vlaneseq
    %v6687 = vshrl.u32 %v6686, 7
    %v6688 = vsub.s32 %v6685, %v6687
    %v6689 = vrot.slane %v6675, %v6688
    %v6690 = vcombine.low %v6682, %v6689
    %v6691 = vcombine.low %v5195, %v5196
    %v6692 = vcombine.low %v5197, %v5198
    %v6693 = vcombine.low %v5199, %v5200
    %v6694 = vcombine.low %v5201, %v5202
    %v6696 = vunpack.c.l.s4 1966171168
    %v6697 = vunpack.c.0.s8 %v6696
    %v6698 = vlaneseq
    %v6699 = vshrl.u32 %v6698, 7
    %v6700 = vsub.s32 %v6697, %v6699
    %v6701 = vrot.slane %v6691, %v6700
    %v6703 = vunpack.c.l.s4 1966171168
    %v6704 = vunpack.c.0.s8 %v6703
    %v6705 = vlaneseq
    %v6706 = vshrl.u32 %v6705, 7
    %v6707 = vsub.s32 %v6704, %v6706
    %v6708 = vrot.slane %v6692, %v6707
    %v6710 = vunpack.c.l.s4 1966171168
    %v6711 = vunpack.c.0.s8 %v6710
    %v6712 = vlaneseq
    %v6713 = vshrl.u32 %v6712, 7
    %v6714 = vsub.s32 %v6711, %v6713
    %v6715 = vrot.slane %v6693, %v6714
    %v6717 = vunpack.c.l.s4 1966171168
    %v6718 = vunpack.c.0.s8 %v6717
    %v6719 = vlaneseq
    %v6720 = vshrl.u32 %v6719, 7
    %v6721 = vsub.s32 %v6718, %v6720
    %v6722 = vrot.slane %v6694, %v6721
    %v6723 = vcombine.low %v6701, %v6708
    %v6724 = vcombine.low %v6715, %v6722
    %v6726 = vunpack.c.l.s4 1966171168
    %v6727 = vunpack.c.0.s8 %v6726
    %v6728 = vlaneseq
    %v6729 = vshrl.u32 %v6728, 7
    %v6730 = vsub.s32 %v6727, %v6729
    %v6731 = vrot.slane %v6723, %v6730
    %v6733 = vunpack.c.l.s4 1966171168
    %v6734 = vunpack.c.0.s8 %v6733
    %v6735 = vlaneseq
    %v6736 = vshrl.u32 %v6735, 7
    %v6737 = vsub.s32 %v6734, %v6736
    %v6738 = vrot.slane %v6724, %v6737
    %v6739 = vcombine.low %v6731, %v6738
    %v6740 = vcombine.low %v5203, %v5204
    %v6741 = vcombine.low %v5205, %v5206
    %v6742 = vcombine.low %v5207, %v5208
    %v6743 = vcombine.low %v5209, %v5210
    %v6745 = vunpack.c.l.s4 1966171168
    %v6746 = vunpack.c.0.s8 %v6745
    %v6747 = vlaneseq
    %v6748 = vshrl.u32 %v6747, 7
    %v6749 = vsub.s32 %v6746, %v6748
    %v6750 = vrot.slane %v6740, %v6749
    %v6752 = vunpack.c.l.s4 1966171168
    %v6753 = vunpack.c.0.s8 %v6752
    %v6754 = vlaneseq
    %v6755 = vshrl.u32 %v6754, 7
    %v6756 = vsub.s32 %v6753, %v6755
    %v6757 = vrot.slane %v6741, %v6756
    %v6759 = vunpack.c.l.s4 1966171168
    %v6760 = vunpack.c.0.s8 %v6759
    %v6761 = vlaneseq
    %v6762 = vshrl.u32 %v6761, 7
    %v6763 = vsub.s32 %v6760, %v6762
    %v6764 = vrot.slane %v6742, %v6763
    %v6766 = vunpack.c.l.s4 1966171168
    %v6767 = vunpack.c.0.s8 %v6766
    %v6768 = vlaneseq
    %v6769 = vshrl.u32 %v6768, 7
    %v6770 = vsub.s32 %v6767, %v6769
    %v6771 = vrot.slane %v6743, %v6770
    %v6772 = vcombine.low %v6750, %v6757
    %v6773 = vcombine.low %v6764, %v6771
    %v6775 = vunpack.c.l.s4 1966171168
    %v6776 = vunpack.c.0.s8 %v6775
    %v6777 = vlaneseq
    %v6778 = vshrl.u32 %v6777, 7
    %v6779 = vsub.s32 %v6776, %v6778
    %v6780 = vrot.slane %v6772, %v6779
    %v6782 = vunpack.c.l.s4 1966171168
    %v6783 = vunpack.c.0.s8 %v6782
    %v6784 = vlaneseq
    %v6785 = vshrl.u32 %v6784, 7
    %v6786 = vsub.s32 %v6783, %v6785
    %v6787 = vrot.slane %v6773, %v6786
    %v6788 = vcombine.low %v6780, %v6787
    %v6789 = vcombine.low %v5211, %v5212
    %v6790 = vcombine.low %v5213, %v5214
    %v6791 = vcombine.low %v5215, %v5216
    %v6792 = vcombine.low %v5217, %v5218
    %v6794 = vunpack.c.l.s4 1966171168
    %v6795 = vunpack.c.0.s8 %v6794
    %v6796 = vlaneseq
    %v6797 = vshrl.u32 %v6796, 7
    %v6798 = vsub.s32 %v6795, %v6797
    %v6799 = vrot.slane %v6789, %v6798
    %v6801 = vunpack.c.l.s4 1966171168
    %v6802 = vunpack.c.0.s8 %v6801
    %v6803 = vlaneseq
    %v6804 = vshrl.u32 %v6803, 7
    %v6805 = vsub.s32 %v6802, %v6804
    %v6806 = vrot.slane %v6790, %v6805
    %v6808 = vunpack.c.l.s4 1966171168
    %v6809 = vunpack.c.0.s8 %v6808
    %v6810 = vlaneseq
    %v6811 = vshrl.u32 %v6810, 7
    %v6812 = vsub.s32 %v6809, %v6811
    %v6813 = vrot.slane %v6791, %v6812
    %v6815 = vunpack.c.l.s4 1966171168
    %v6816 = vunpack.c.0.s8 %v6815
    %v6817 = vlaneseq
    %v6818 = vshrl.u32 %v6817, 7
    %v6819 = vsub.s32 %v6816, %v6818
    %v6820 = vrot.slane %v6792, %v6819
    %v6821 = vcombine.low %v6799, %v6806
    %v6822 = vcombine.low %v6813, %v6820
    %v6824 = vunpack.c.l.s4 1966171168
    %v6825 = vunpack.c.0.s8 %v6824
    %v6826 = vlaneseq
    %v6827 = vshrl.u32 %v6826, 7
    %v6828 = vsub.s32 %v6825, %v6827
    %v6829 = vrot.slane %v6821, %v6828
    %v6831 = vunpack.c.l.s4 1966171168
    %v6832 = vunpack.c.0.s8 %v6831
    %v6833 = vlaneseq
    %v6834 = vshrl.u32 %v6833, 7
    %v6835 = vsub.s32 %v6832, %v6834
    %v6836 = vrot.slane %v6822, %v6835
    %v6837 = vcombine.low %v6829, %v6836
    %v6838 = vcombine.low %v5219, %v5220
    %v6839 = vcombine.low %v5221, %v5222
    %v6840 = vcombine.low %v5223, %v5224
    %v6841 = vcombine.low %v5225, %v5226
    %v6843 = vunpack.c.l.s4 1966171168
    %v6844 = vunpack.c.0.s8 %v6843
    %v6845 = vlaneseq
    %v6846 = vshrl.u32 %v6845, 7
    %v6847 = vsub.s32 %v6844, %v6846
    %v6848 = vrot.slane %v6838, %v6847
    %v6850 = vunpack.c.l.s4 1966171168
    %v6851 = vunpack.c.0.s8 %v6850
    %v6852 = vlaneseq
    %v6853 = vshrl.u32 %v6852, 7
    %v6854 = vsub.s32 %v6851, %v6853
    %v6855 = vrot.slane %v6839, %v6854
    %v6857 = vunpack.c.l.s4 1966171168
    %v6858 = vunpack.c.0.s8 %v6857
    %v6859 = vlaneseq
    %v6860 = vshrl.u32 %v6859, 7
    %v6861 = vsub.s32 %v6858, %v6860
    %v6862 = vrot.slane %v6840, %v6861
    %v6864 = vunpack.c.l.s4 1966171168
    %v6865 = vunpack.c.0.s8 %v6864
    %v6866 = vlaneseq
    %v6867 = vshrl.u32 %v6866, 7
    %v6868 = vsub.s32 %v6865, %v6867
    %v6869 = vrot.slane %v6841, %v6868
    %v6870 = vcombine.low %v6848, %v6855
    %v6871 = vcombine.low %v6862, %v6869
    %v6873 = vunpack.c.l.s4 1966171168
    %v6874 = vunpack.c.0.s8 %v6873
    %v6875 = vlaneseq
    %v6876 = vshrl.u32 %v6875, 7
    %v6877 = vsub.s32 %v6874, %v6876
    %v6878 = vrot.slane %v6870, %v6877
    %v6880 = vunpack.c.l.s4 1966171168
    %v6881 = vunpack.c.0.s8 %v6880
    %v6882 = vlaneseq
    %v6883 = vshrl.u32 %v6882, 7
    %v6884 = vsub.s32 %v6881, %v6883
    %v6885 = vrot.slane %v6871, %v6884
    %v6886 = vcombine.low %v6878, %v6885
    %v6887 = vcombine.low %v5227, %v5228
    %v6888 = vcombine.low %v5229, %v5230
    %v6889 = vcombine.low %v5231, %v5232
    %v6890 = vcombine.low %v5233, %v5234
    %v6892 = vunpack.c.l.s4 1966171168
    %v6893 = vunpack.c.0.s8 %v6892
    %v6894 = vlaneseq
    %v6895 = vshrl.u32 %v6894, 7
    %v6896 = vsub.s32 %v6893, %v6895
    %v6897 = vrot.slane %v6887, %v6896
    %v6899 = vunpack.c.l.s4 1966171168
    %v6900 = vunpack.c.0.s8 %v6899
    %v6901 = vlaneseq
    %v6902 = vshrl.u32 %v6901, 7
    %v6903 = vsub.s32 %v6900, %v6902
    %v6904 = vrot.slane %v6888, %v6903
    %v6906 = vunpack.c.l.s4 1966171168
    %v6907 = vunpack.c.0.s8 %v6906
    %v6908 = vlaneseq
    %v6909 = vshrl.u32 %v6908, 7
    %v6910 = vsub.s32 %v6907, %v6909
    %v6911 = vrot.slane %v6889, %v6910
    %v6913 = vunpack.c.l.s4 1966171168
    %v6914 = vunpack.c.0.s8 %v6913
    %v6915 = vlaneseq
    %v6916 = vshrl.u32 %v6915, 7
    %v6917 = vsub.s32 %v6914, %v6916
    %v6918 = vrot.slane %v6890, %v6917
    %v6919 = vcombine.low %v6897, %v6904
    %v6920 = vcombine.low %v6911, %v6918
    %v6922 = vunpack.c.l.s4 1966171168
    %v6923 = vunpack.c.0.s8 %v6922
    %v6924 = vlaneseq
    %v6925 = vshrl.u32 %v6924, 7
    %v6926 = vsub.s32 %v6923, %v6925
    %v6927 = vrot.slane %v6919, %v6926
    %v6929 = vunpack.c.l.s4 1966171168
    %v6930 = vunpack.c.0.s8 %v6929
    %v6931 = vlaneseq
    %v6932 = vshrl.u32 %v6931, 7
    %v6933 = vsub.s32 %v6930, %v6932
    %v6934 = vrot.slane %v6920, %v6933
    %v6935 = vcombine.low %v6927, %v6934
    %v6936 = vcombine.low %v5235, %v5236
    %v6937 = vcombine.low %v5237, %v5238
    %v6938 = vcombine.low %v5239, %v5240
    %v6939 = vcombine.low %v5241, %v5242
    %v6941 = vunpack.c.l.s4 1966171168
    %v6942 = vunpack.c.0.s8 %v6941
    %v6943 = vlaneseq
    %v6944 = vshrl.u32 %v6943, 7
    %v6945 = vsub.s32 %v6942, %v6944
    %v6946 = vrot.slane %v6936, %v6945
    %v6948 = vunpack.c.l.s4 1966171168
    %v6949 = vunpack.c.0.s8 %v6948
    %v6950 = vlaneseq
    %v6951 = vshrl.u32 %v6950, 7
    %v6952 = vsub.s32 %v6949, %v6951
    %v6953 = vrot.slane %v6937, %v6952
    %v6955 = vunpack.c.l.s4 1966171168
    %v6956 = vunpack.c.0.s8 %v6955
    %v6957 = vlaneseq
    %v6958 = vshrl.u32 %v6957, 7
    %v6959 = vsub.s32 %v6956, %v6958
    %v6960 = vrot.slane %v6938, %v6959
    %v6962 = vunpack.c.l.s4 1966171168
    %v6963 = vunpack.c.0.s8 %v6962
    %v6964 = vlaneseq
    %v6965 = vshrl.u32 %v6964, 7
    %v6966 = vsub.s32 %v6963, %v6965
    %v6967 = vrot.slane %v6939, %v6966
    %v6968 = vcombine.low %v6946, %v6953
    %v6969 = vcombine.low %v6960, %v6967
    %v6971 = vunpack.c.l.s4 1966171168
    %v6972 = vunpack.c.0.s8 %v6971
    %v6973 = vlaneseq
    %v6974 = vshrl.u32 %v6973, 7
    %v6975 = vsub.s32 %v6972, %v6974
    %v6976 = vrot.slane %v6968, %v6975
    %v6978 = vunpack.c.l.s4 1966171168
    %v6979 = vunpack.c.0.s8 %v6978
    %v6980 = vlaneseq
    %v6981 = vshrl.u32 %v6980, 7
    %v6982 = vsub.s32 %v6979, %v6981
    %v6983 = vrot.slane %v6969, %v6982
    %v6984 = vcombine.low %v6976, %v6983
    %v6985 = vcombine.low %v5243, %v5244
    %v6986 = vcombine.low %v5245, %v5246
    %v6987 = vcombine.low %v5247, %v5248
    %v6988 = vcombine.low %v5249, %v5250
    %v6990 = vunpack.c.l.s4 1966171168
    %v6991 = vunpack.c.0.s8 %v6990
    %v6992 = vlaneseq
    %v6993 = vshrl.u32 %v6992, 7
    %v6994 = vsub.s32 %v6991, %v6993
    %v6995 = vrot.slane %v6985, %v6994
    %v6997 = vunpack.c.l.s4 1966171168
    %v6998 = vunpack.c.0.s8 %v6997
    %v6999 = vlaneseq
    %v7000 = vshrl.u32 %v6999, 7
    %v7001 = vsub.s32 %v6998, %v7000
    %v7002 = vrot.slane %v6986, %v7001
    %v7004 = vunpack.c.l.s4 1966171168
    %v7005 = vunpack.c.0.s8 %v7004
    %v7006 = vlaneseq
    %v7007 = vshrl.u32 %v7006, 7
    %v7008 = vsub.s32 %v7005, %v7007
    %v7009 = vrot.slane %v6987, %v7008
    %v7011 = vunpack.c.l.s4 1966171168
    %v7012 = vunpack.c.0.s8 %v7011
    %v7013 = vlaneseq
    %v7014 = vshrl.u32 %v7013, 7
    %v7015 = vsub.s32 %v7012, %v7014
    %v7016 = vrot.slane %v6988, %v7015
    %v7017 = vcombine.low %v6995, %v7002
    %v7018 = vcombine.low %v7009, %v7016
    %v7020 = vunpack.c.l.s4 1966171168
    %v7021 = vunpack.c.0.s8 %v7020
    %v7022 = vlaneseq
    %v7023 = vshrl.u32 %v7022, 7
    %v7024 = vsub.s32 %v7021, %v7023
    %v7025 = vrot.slane %v7017, %v7024
    %v7027 = vunpack.c.l.s4 1966171168
    %v7028 = vunpack.c.0.s8 %v7027
    %v7029 = vlaneseq
    %v7030 = vshrl.u32 %v7029, 7
    %v7031 = vsub.s32 %v7028, %v7030
    %v7032 = vrot.slane %v7018, %v7031
    %v7033 = vcombine.low %v7025, %v7032
    %v7034 = vcombine.low %v5251, %v5252
    %v7035 = vcombine.low %v5253, %v5254
    %v7036 = vcombine.low %v5255, %v5256
    %v7037 = vcombine.low %v5257, %v5258
    %v7039 = vunpack.c.l.s4 1966171168
    %v7040 = vunpack.c.0.s8 %v7039
    %v7041 = vlaneseq
    %v7042 = vshrl.u32 %v7041, 7
    %v7043 = vsub.s32 %v7040, %v7042
    %v7044 = vrot.slane %v7034, %v7043
    %v7046 = vunpack.c.l.s4 1966171168
    %v7047 = vunpack.c.0.s8 %v7046
    %v7048 = vlaneseq
    %v7049 = vshrl.u32 %v7048, 7
    %v7050 = vsub.s32 %v7047, %v7049
    %v7051 = vrot.slane %v7035, %v7050
    %v7053 = vunpack.c.l.s4 1966171168
    %v7054 = vunpack.c.0.s8 %v7053
    %v7055 = vlaneseq
    %v7056 = vshrl.u32 %v7055, 7
    %v7057 = vsub.s32 %v7054, %v7056
    %v7058 = vrot.slane %v7036, %v7057
    %v7060 = vunpack.c.l.s4 1966171168
    %v7061 = vunpack.c.0.s8 %v7060
    %v7062 = vlaneseq
    %v7063 = vshrl.u32 %v7062, 7
    %v7064 = vsub.s32 %v7061, %v7063
    %v7065 = vrot.slane %v7037, %v7064
    %v7066 = vcombine.low %v7044, %v7051
    %v7067 = vcombine.low %v7058, %v7065
    %v7069 = vunpack.c.l.s4 1966171168
    %v7070 = vunpack.c.0.s8 %v7069
    %v7071 = vlaneseq
    %v7072 = vshrl.u32 %v7071, 7
    %v7073 = vsub.s32 %v7070, %v7072
    %v7074 = vrot.slane %v7066, %v7073
    %v7076 = vunpack.c.l.s4 1966171168
    %v7077 = vunpack.c.0.s8 %v7076
    %v7078 = vlaneseq
    %v7079 = vshrl.u32 %v7078, 7
    %v7080 = vsub.s32 %v7077, %v7079
    %v7081 = vrot.slane %v7067, %v7080
    %v7082 = vcombine.low %v7074, %v7081
    %7115 = vst [vmem:[%s1] sm:$0xff] %v5563
    %7116 = vst [vmem:[%s1 + $0x8] sm:$0xff] %v5612
    %7117 = vst [vmem:[%s1 + $0x10] sm:$0xff] %v5661
    %7118 = vst [vmem:[%s1 + $0x18] sm:$0xff] %v5710
    %7119 = vst [vmem:[%s1 + $0x20] sm:$0xff] %v5759
    %7120 = vst [vmem:[%s1 + $0x28] sm:$0xff] %v5808
    %7121 = vst [vmem:[%s1 + $0x30] sm:$0xff] %v5857
    %7122 = vst [vmem:[%s1 + $0x38] sm:$0xff] %v5906
    %7123 = vst [vmem:[%s1 + $0x40] sm:$0xff] %v5955
    %7124 = vst [vmem:[%s1 + $0x48] sm:$0xff] %v6004
    %7125 = vst [vmem:[%s1 + $0x50] sm:$0xff] %v6053
    %7126 = vst [vmem:[%s1 + $0x58] sm:$0xff] %v6102
    %7127 = vst [vmem:[%s1 + $0x60] sm:$0xff] %v6151
    %7128 = vst [vmem:[%s1 + $0x68] sm:$0xff] %v6200
    %7129 = vst [vmem:[%s1 + $0x70] sm:$0xff] %v6249
    %7130 = vst [vmem:[%s1 + $0x78] sm:$0xff] %v6298
    %7131 = vst [vmem:[%s1 + $0x80] sm:$0xff] %v6347
    %7132 = vst [vmem:[%s1 + $0x88] sm:$0xff] %v6396
    %7133 = vst [vmem:[%s1 + $0x90] sm:$0xff] %v6445
    %7134 = vst [vmem:[%s1 + $0x98] sm:$0xff] %v6494
    %7135 = vst [vmem:[%s1 + $0xa0] sm:$0xff] %v6543
    %7136 = vst [vmem:[%s1 + $0xa8] sm:$0xff] %v6592
    %7137 = vst [vmem:[%s1 + $0xb0] sm:$0xff] %v6641
    %7138 = vst [vmem:[%s1 + $0xb8] sm:$0xff] %v6690
    %7139 = vst [vmem:[%s1 + $0xc0] sm:$0xff] %v6739
    %7140 = vst [vmem:[%s1 + $0xc8] sm:$0xff] %v6788
    %7141 = vst [vmem:[%s1 + $0xd0] sm:$0xff] %v6837
    %7142 = vst [vmem:[%s1 + $0xd8] sm:$0xff] %v6886
    %7143 = vst [vmem:[%s1 + $0xe0] sm:$0xff] %v6935
    %7144 = vst [vmem:[%s1 + $0xe8] sm:$0xff] %v6984
    %7145 = vst [vmem:[%s1 + $0xf0] sm:$0xff] %v7033
    %7146 = vst [vmem:[%s1 + $0xf8] sm:$0xff] %v7082
    %v7403 = vcombine.low %v4747, %v4748
    %v7404 = vcombine.low %v4749, %v4750
    %v7405 = vcombine.low %v4751, %v4752
    %v7406 = vcombine.low %v4753, %v4754
    %v7408 = vunpack.c.l.s4 1966171168
    %v7409 = vunpack.c.0.s8 %v7408
    %v7410 = vlaneseq
    %v7411 = vshrl.u32 %v7410, 7
    %v7412 = vsub.s32 %v7409, %v7411
    %v7413 = vrot.slane %v7403, %v7412
    %v7415 = vunpack.c.l.s4 1966171168
    %v7416 = vunpack.c.0.s8 %v7415
    %v7417 = vlaneseq
    %v7418 = vshrl.u32 %v7417, 7
    %v7419 = vsub.s32 %v7416, %v7418
    %v7420 = vrot.slane %v7404, %v7419
    %v7422 = vunpack.c.l.s4 1966171168
    %v7423 = vunpack.c.0.s8 %v7422
    %v7424 = vlaneseq
    %v7425 = vshrl.u32 %v7424, 7
    %v7426 = vsub.s32 %v7423, %v7425
    %v7427 = vrot.slane %v7405, %v7426
    %v7429 = vunpack.c.l.s4 1966171168
    %v7430 = vunpack.c.0.s8 %v7429
    %v7431 = vlaneseq
    %v7432 = vshrl.u32 %v7431, 7
    %v7433 = vsub.s32 %v7430, %v7432
    %v7434 = vrot.slane %v7406, %v7433
    %v7435 = vcombine.low %v7413, %v7420
    %v7436 = vcombine.low %v7427, %v7434
    %v7438 = vunpack.c.l.s4 1966171168
    %v7439 = vunpack.c.0.s8 %v7438
    %v7440 = vlaneseq
    %v7441 = vshrl.u32 %v7440, 7
    %v7442 = vsub.s32 %v7439, %v7441
    %v7443 = vrot.slane %v7435, %v7442
    %v7445 = vunpack.c.l.s4 1966171168
    %v7446 = vunpack.c.0.s8 %v7445
    %v7447 = vlaneseq
    %v7448 = vshrl.u32 %v7447, 7
    %v7449 = vsub.s32 %v7446, %v7448
    %v7450 = vrot.slane %v7436, %v7449
    %v7451 = vcombine.low %v7443, %v7450
    %v7452 = vcombine.low %v4755, %v4756
    %v7453 = vcombine.low %v4757, %v4758
    %v7454 = vcombine.low %v4759, %v4760
    %v7455 = vcombine.low %v4761, %v4762
    %v7457 = vunpack.c.l.s4 1966171168
    %v7458 = vunpack.c.0.s8 %v7457
    %v7459 = vlaneseq
    %v7460 = vshrl.u32 %v7459, 7
    %v7461 = vsub.s32 %v7458, %v7460
    %v7462 = vrot.slane %v7452, %v7461
    %v7464 = vunpack.c.l.s4 1966171168
    %v7465 = vunpack.c.0.s8 %v7464
    %v7466 = vlaneseq
    %v7467 = vshrl.u32 %v7466, 7
    %v7468 = vsub.s32 %v7465, %v7467
    %v7469 = vrot.slane %v7453, %v7468
    %v7471 = vunpack.c.l.s4 1966171168
    %v7472 = vunpack.c.0.s8 %v7471
    %v7473 = vlaneseq
    %v7474 = vshrl.u32 %v7473, 7
    %v7475 = vsub.s32 %v7472, %v7474
    %v7476 = vrot.slane %v7454, %v7475
    %v7478 = vunpack.c.l.s4 1966171168
    %v7479 = vunpack.c.0.s8 %v7478
    %v7480 = vlaneseq
    %v7481 = vshrl.u32 %v7480, 7
    %v7482 = vsub.s32 %v7479, %v7481
    %v7483 = vrot.slane %v7455, %v7482
    %v7484 = vcombine.low %v7462, %v7469
    %v7485 = vcombine.low %v7476, %v7483
    %v7487 = vunpack.c.l.s4 1966171168
    %v7488 = vunpack.c.0.s8 %v7487
    %v7489 = vlaneseq
    %v7490 = vshrl.u32 %v7489, 7
    %v7491 = vsub.s32 %v7488, %v7490
    %v7492 = vrot.slane %v7484, %v7491
    %v7494 = vunpack.c.l.s4 1966171168
    %v7495 = vunpack.c.0.s8 %v7494
    %v7496 = vlaneseq
    %v7497 = vshrl.u32 %v7496, 7
    %v7498 = vsub.s32 %v7495, %v7497
    %v7499 = vrot.slane %v7485, %v7498
    %v7500 = vcombine.low %v7492, %v7499
    %v7501 = vcombine.low %v4763, %v4764
    %v7502 = vcombine.low %v4765, %v4766
    %v7503 = vcombine.low %v4767, %v4768
    %v7504 = vcombine.low %v4769, %v4770
    %v7506 = vunpack.c.l.s4 1966171168
    %v7507 = vunpack.c.0.s8 %v7506
    %v7508 = vlaneseq
    %v7509 = vshrl.u32 %v7508, 7
    %v7510 = vsub.s32 %v7507, %v7509
    %v7511 = vrot.slane %v7501, %v7510
    %v7513 = vunpack.c.l.s4 1966171168
    %v7514 = vunpack.c.0.s8 %v7513
    %v7515 = vlaneseq
    %v7516 = vshrl.u32 %v7515, 7
    %v7517 = vsub.s32 %v7514, %v7516
    %v7518 = vrot.slane %v7502, %v7517
    %v7520 = vunpack.c.l.s4 1966171168
    %v7521 = vunpack.c.0.s8 %v7520
    %v7522 = vlaneseq
    %v7523 = vshrl.u32 %v7522, 7
    %v7524 = vsub.s32 %v7521, %v7523
    %v7525 = vrot.slane %v7503, %v7524
    %v7527 = vunpack.c.l.s4 1966171168
    %v7528 = vunpack.c.0.s8 %v7527
    %v7529 = vlaneseq
    %v7530 = vshrl.u32 %v7529, 7
    %v7531 = vsub.s32 %v7528, %v7530
    %v7532 = vrot.slane %v7504, %v7531
    %v7533 = vcombine.low %v7511, %v7518
    %v7534 = vcombine.low %v7525, %v7532
    %v7536 = vunpack.c.l.s4 1966171168
    %v7537 = vunpack.c.0.s8 %v7536
    %v7538 = vlaneseq
    %v7539 = vshrl.u32 %v7538, 7
    %v7540 = vsub.s32 %v7537, %v7539
    %v7541 = vrot.slane %v7533, %v7540
    %v7543 = vunpack.c.l.s4 1966171168
    %v7544 = vunpack.c.0.s8 %v7543
    %v7545 = vlaneseq
    %v7546 = vshrl.u32 %v7545, 7
    %v7547 = vsub.s32 %v7544, %v7546
    %v7548 = vrot.slane %v7534, %v7547
    %v7549 = vcombine.low %v7541, %v7548
    %v7550 = vcombine.low %v4771, %v4772
    %v7551 = vcombine.low %v4773, %v4774
    %v7552 = vcombine.low %v4775, %v4776
    %v7553 = vcombine.low %v4777, %v4778
    %v7555 = vunpack.c.l.s4 1966171168
    %v7556 = vunpack.c.0.s8 %v7555
    %v7557 = vlaneseq
    %v7558 = vshrl.u32 %v7557, 7
    %v7559 = vsub.s32 %v7556, %v7558
    %v7560 = vrot.slane %v7550, %v7559
    %v7562 = vunpack.c.l.s4 1966171168
    %v7563 = vunpack.c.0.s8 %v7562
    %v7564 = vlaneseq
    %v7565 = vshrl.u32 %v7564, 7
    %v7566 = vsub.s32 %v7563, %v7565
    %v7567 = vrot.slane %v7551, %v7566
    %v7569 = vunpack.c.l.s4 1966171168
    %v7570 = vunpack.c.0.s8 %v7569
    %v7571 = vlaneseq
    %v7572 = vshrl.u32 %v7571, 7
    %v7573 = vsub.s32 %v7570, %v7572
    %v7574 = vrot.slane %v7552, %v7573
    %v7576 = vunpack.c.l.s4 1966171168
    %v7577 = vunpack.c.0.s8 %v7576
    %v7578 = vlaneseq
    %v7579 = vshrl.u32 %v7578, 7
    %v7580 = vsub.s32 %v7577, %v7579
    %v7581 = vrot.slane %v7553, %v7580
    %v7582 = vcombine.low %v7560, %v7567
    %v7583 = vcombine.low %v7574, %v7581
    %v7585 = vunpack.c.l.s4 1966171168
    %v7586 = vunpack.c.0.s8 %v7585
    %v7587 = vlaneseq
    %v7588 = vshrl.u32 %v7587, 7
    %v7589 = vsub.s32 %v7586, %v7588
    %v7590 = vrot.slane %v7582, %v7589
    %v7592 = vunpack.c.l.s4 1966171168
    %v7593 = vunpack.c.0.s8 %v7592
    %v7594 = vlaneseq
    %v7595 = vshrl.u32 %v7594, 7
    %v7596 = vsub.s32 %v7593, %v7595
    %v7597 = vrot.slane %v7583, %v7596
    %v7598 = vcombine.low %v7590, %v7597
    %v7599 = vcombine.low %v4779, %v4780
    %v7600 = vcombine.low %v4781, %v4782
    %v7601 = vcombine.low %v4783, %v4784
    %v7602 = vcombine.low %v4785, %v4786
    %v7604 = vunpack.c.l.s4 1966171168
    %v7605 = vunpack.c.0.s8 %v7604
    %v7606 = vlaneseq
    %v7607 = vshrl.u32 %v7606, 7
    %v7608 = vsub.s32 %v7605, %v7607
    %v7609 = vrot.slane %v7599, %v7608
    %v7611 = vunpack.c.l.s4 1966171168
    %v7612 = vunpack.c.0.s8 %v7611
    %v7613 = vlaneseq
    %v7614 = vshrl.u32 %v7613, 7
    %v7615 = vsub.s32 %v7612, %v7614
    %v7616 = vrot.slane %v7600, %v7615
    %v7618 = vunpack.c.l.s4 1966171168
    %v7619 = vunpack.c.0.s8 %v7618
    %v7620 = vlaneseq
    %v7621 = vshrl.u32 %v7620, 7
    %v7622 = vsub.s32 %v7619, %v7621
    %v7623 = vrot.slane %v7601, %v7622
    %v7625 = vunpack.c.l.s4 1966171168
    %v7626 = vunpack.c.0.s8 %v7625
    %v7627 = vlaneseq
    %v7628 = vshrl.u32 %v7627, 7
    %v7629 = vsub.s32 %v7626, %v7628
    %v7630 = vrot.slane %v7602, %v7629
    %v7631 = vcombine.low %v7609, %v7616
    %v7632 = vcombine.low %v7623, %v7630
    %v7634 = vunpack.c.l.s4 1966171168
    %v7635 = vunpack.c.0.s8 %v7634
    %v7636 = vlaneseq
    %v7637 = vshrl.u32 %v7636, 7
    %v7638 = vsub.s32 %v7635, %v7637
    %v7639 = vrot.slane %v7631, %v7638
    %v7641 = vunpack.c.l.s4 1966171168
    %v7642 = vunpack.c.0.s8 %v7641
    %v7643 = vlaneseq
    %v7644 = vshrl.u32 %v7643, 7
    %v7645 = vsub.s32 %v7642, %v7644
    %v7646 = vrot.slane %v7632, %v7645
    %v7647 = vcombine.low %v7639, %v7646
    %v7648 = vcombine.low %v4787, %v4788
    %v7649 = vcombine.low %v4789, %v4790
    %v7650 = vcombine.low %v4791, %v4792
    %v7651 = vcombine.low %v4793, %v4794
    %v7653 = vunpack.c.l.s4 1966171168
    %v7654 = vunpack.c.0.s8 %v7653
    %v7655 = vlaneseq
    %v7656 = vshrl.u32 %v7655, 7
    %v7657 = vsub.s32 %v7654, %v7656
    %v7658 = vrot.slane %v7648, %v7657
    %v7660 = vunpack.c.l.s4 1966171168
    %v7661 = vunpack.c.0.s8 %v7660
    %v7662 = vlaneseq
    %v7663 = vshrl.u32 %v7662, 7
    %v7664 = vsub.s32 %v7661, %v7663
    %v7665 = vrot.slane %v7649, %v7664
    %v7667 = vunpack.c.l.s4 1966171168
    %v7668 = vunpack.c.0.s8 %v7667
    %v7669 = vlaneseq
    %v7670 = vshrl.u32 %v7669, 7
    %v7671 = vsub.s32 %v7668, %v7670
    %v7672 = vrot.slane %v7650, %v7671
    %v7674 = vunpack.c.l.s4 1966171168
    %v7675 = vunpack.c.0.s8 %v7674
    %v7676 = vlaneseq
    %v7677 = vshrl.u32 %v7676, 7
    %v7678 = vsub.s32 %v7675, %v7677
    %v7679 = vrot.slane %v7651, %v7678
    %v7680 = vcombine.low %v7658, %v7665
    %v7681 = vcombine.low %v7672, %v7679
    %v7683 = vunpack.c.l.s4 1966171168
    %v7684 = vunpack.c.0.s8 %v7683
    %v7685 = vlaneseq
    %v7686 = vshrl.u32 %v7685, 7
    %v7687 = vsub.s32 %v7684, %v7686
    %v7688 = vrot.slane %v7680, %v7687
    %v7690 = vunpack.c.l.s4 1966171168
    %v7691 = vunpack.c.0.s8 %v7690
    %v7692 = vlaneseq
    %v7693 = vshrl.u32 %v7692, 7
    %v7694 = vsub.s32 %v7691, %v7693
    %v7695 = vrot.slane %v7681, %v7694
    %v7696 = vcombine.low %v7688, %v7695
    %v7697 = vcombine.low %v4795, %v4796
    %v7698 = vcombine.low %v4797, %v4798
    %v7699 = vcombine.low %v4799, %v4800
    %v7700 = vcombine.low %v4801, %v4802
    %v7702 = vunpack.c.l.s4 1966171168
    %v7703 = vunpack.c.0.s8 %v7702
    %v7704 = vlaneseq
    %v7705 = vshrl.u32 %v7704, 7
    %v7706 = vsub.s32 %v7703, %v7705
    %v7707 = vrot.slane %v7697, %v7706
    %v7709 = vunpack.c.l.s4 1966171168
    %v7710 = vunpack.c.0.s8 %v7709
    %v7711 = vlaneseq
    %v7712 = vshrl.u32 %v7711, 7
    %v7713 = vsub.s32 %v7710, %v7712
    %v7714 = vrot.slane %v7698, %v7713
    %v7716 = vunpack.c.l.s4 1966171168
    %v7717 = vunpack.c.0.s8 %v7716
    %v7718 = vlaneseq
    %v7719 = vshrl.u32 %v7718, 7
    %v7720 = vsub.s32 %v7717, %v7719
    %v7721 = vrot.slane %v7699, %v7720
    %v7723 = vunpack.c.l.s4 1966171168
    %v7724 = vunpack.c.0.s8 %v7723
    %v7725 = vlaneseq
    %v7726 = vshrl.u32 %v7725, 7
    %v7727 = vsub.s32 %v7724, %v7726
    %v7728 = vrot.slane %v7700, %v7727
    %v7729 = vcombine.low %v7707, %v7714
    %v7730 = vcombine.low %v7721, %v7728
    %v7732 = vunpack.c.l.s4 1966171168
    %v7733 = vunpack.c.0.s8 %v7732
    %v7734 = vlaneseq
    %v7735 = vshrl.u32 %v7734, 7
    %v7736 = vsub.s32 %v7733, %v7735
    %v7737 = vrot.slane %v7729, %v7736
    %v7739 = vunpack.c.l.s4 1966171168
    %v7740 = vunpack.c.0.s8 %v7739
    %v7741 = vlaneseq
    %v7742 = vshrl.u32 %v7741, 7
    %v7743 = vsub.s32 %v7740, %v7742
    %v7744 = vrot.slane %v7730, %v7743
    %v7745 = vcombine.low %v7737, %v7744
    %v7746 = vcombine.low %v4803, %v4804
    %v7747 = vcombine.low %v4805, %v4806
    %v7748 = vcombine.low %v4807, %v4808
    %v7749 = vcombine.low %v4809, %v4810
    %v7751 = vunpack.c.l.s4 1966171168
    %v7752 = vunpack.c.0.s8 %v7751
    %v7753 = vlaneseq
    %v7754 = vshrl.u32 %v7753, 7
    %v7755 = vsub.s32 %v7752, %v7754
    %v7756 = vrot.slane %v7746, %v7755
    %v7758 = vunpack.c.l.s4 1966171168
    %v7759 = vunpack.c.0.s8 %v7758
    %v7760 = vlaneseq
    %v7761 = vshrl.u32 %v7760, 7
    %v7762 = vsub.s32 %v7759, %v7761
    %v7763 = vrot.slane %v7747, %v7762
    %v7765 = vunpack.c.l.s4 1966171168
    %v7766 = vunpack.c.0.s8 %v7765
    %v7767 = vlaneseq
    %v7768 = vshrl.u32 %v7767, 7
    %v7769 = vsub.s32 %v7766, %v7768
    %v7770 = vrot.slane %v7748, %v7769
    %v7772 = vunpack.c.l.s4 1966171168
    %v7773 = vunpack.c.0.s8 %v7772
    %v7774 = vlaneseq
    %v7775 = vshrl.u32 %v7774, 7
    %v7776 = vsub.s32 %v7773, %v7775
    %v7777 = vrot.slane %v7749, %v7776
    %v7778 = vcombine.low %v7756, %v7763
    %v7779 = vcombine.low %v7770, %v7777
    %v7781 = vunpack.c.l.s4 1966171168
    %v7782 = vunpack.c.0.s8 %v7781
    %v7783 = vlaneseq
    %v7784 = vshrl.u32 %v7783, 7
    %v7785 = vsub.s32 %v7782, %v7784
    %v7786 = vrot.slane %v7778, %v7785
    %v7788 = vunpack.c.l.s4 1966171168
    %v7789 = vunpack.c.0.s8 %v7788
    %v7790 = vlaneseq
    %v7791 = vshrl.u32 %v7790, 7
    %v7792 = vsub.s32 %v7789, %v7791
    %v7793 = vrot.slane %v7779, %v7792
    %v7794 = vcombine.low %v7786, %v7793
    %v7795 = vcombine.low %v4811, %v4812
    %v7796 = vcombine.low %v4813, %v4814
    %v7797 = vcombine.low %v4815, %v4816
    %v7798 = vcombine.low %v4817, %v4818
    %v7800 = vunpack.c.l.s4 1966171168
    %v7801 = vunpack.c.0.s8 %v7800
    %v7802 = vlaneseq
    %v7803 = vshrl.u32 %v7802, 7
    %v7804 = vsub.s32 %v7801, %v7803
    %v7805 = vrot.slane %v7795, %v7804
    %v7807 = vunpack.c.l.s4 1966171168
    %v7808 = vunpack.c.0.s8 %v7807
    %v7809 = vlaneseq
    %v7810 = vshrl.u32 %v7809, 7
    %v7811 = vsub.s32 %v7808, %v7810
    %v7812 = vrot.slane %v7796, %v7811
    %v7814 = vunpack.c.l.s4 1966171168
    %v7815 = vunpack.c.0.s8 %v7814
    %v7816 = vlaneseq
    %v7817 = vshrl.u32 %v7816, 7
    %v7818 = vsub.s32 %v7815, %v7817
    %v7819 = vrot.slane %v7797, %v7818
    %v7821 = vunpack.c.l.s4 1966171168
    %v7822 = vunpack.c.0.s8 %v7821
    %v7823 = vlaneseq
    %v7824 = vshrl.u32 %v7823, 7
    %v7825 = vsub.s32 %v7822, %v7824
    %v7826 = vrot.slane %v7798, %v7825
    %v7827 = vcombine.low %v7805, %v7812
    %v7828 = vcombine.low %v7819, %v7826
    %v7830 = vunpack.c.l.s4 1966171168
    %v7831 = vunpack.c.0.s8 %v7830
    %v7832 = vlaneseq
    %v7833 = vshrl.u32 %v7832, 7
    %v7834 = vsub.s32 %v7831, %v7833
    %v7835 = vrot.slane %v7827, %v7834
    %v7837 = vunpack.c.l.s4 1966171168
    %v7838 = vunpack.c.0.s8 %v7837
    %v7839 = vlaneseq
    %v7840 = vshrl.u32 %v7839, 7
    %v7841 = vsub.s32 %v7838, %v7840
    %v7842 = vrot.slane %v7828, %v7841
    %v7843 = vcombine.low %v7835, %v7842
    %v7844 = vcombine.low %v4819, %v4820
    %v7845 = vcombine.low %v4821, %v4822
    %v7846 = vcombine.low %v4823, %v4824
    %v7847 = vcombine.low %v4825, %v4826
    %v7849 = vunpack.c.l.s4 1966171168
    %v7850 = vunpack.c.0.s8 %v7849
    %v7851 = vlaneseq
    %v7852 = vshrl.u32 %v7851, 7
    %v7853 = vsub.s32 %v7850, %v7852
    %v7854 = vrot.slane %v7844, %v7853
    %v7856 = vunpack.c.l.s4 1966171168
    %v7857 = vunpack.c.0.s8 %v7856
    %v7858 = vlaneseq
    %v7859 = vshrl.u32 %v7858, 7
    %v7860 = vsub.s32 %v7857, %v7859
    %v7861 = vrot.slane %v7845, %v7860
    %v7863 = vunpack.c.l.s4 1966171168
    %v7864 = vunpack.c.0.s8 %v7863
    %v7865 = vlaneseq
    %v7866 = vshrl.u32 %v7865, 7
    %v7867 = vsub.s32 %v7864, %v7866
    %v7868 = vrot.slane %v7846, %v7867
    %v7870 = vunpack.c.l.s4 1966171168
    %v7871 = vunpack.c.0.s8 %v7870
    %v7872 = vlaneseq
    %v7873 = vshrl.u32 %v7872, 7
    %v7874 = vsub.s32 %v7871, %v7873
    %v7875 = vrot.slane %v7847, %v7874
    %v7876 = vcombine.low %v7854, %v7861
    %v7877 = vcombine.low %v7868, %v7875
    %v7879 = vunpack.c.l.s4 1966171168
    %v7880 = vunpack.c.0.s8 %v7879
    %v7881 = vlaneseq
    %v7882 = vshrl.u32 %v7881, 7
    %v7883 = vsub.s32 %v7880, %v7882
    %v7884 = vrot.slane %v7876, %v7883
    %v7886 = vunpack.c.l.s4 1966171168
    %v7887 = vunpack.c.0.s8 %v7886
    %v7888 = vlaneseq
    %v7889 = vshrl.u32 %v7888, 7
    %v7890 = vsub.s32 %v7887, %v7889
    %v7891 = vrot.slane %v7877, %v7890
    %v7892 = vcombine.low %v7884, %v7891
    %v7893 = vcombine.low %v4827, %v4828
    %v7894 = vcombine.low %v4829, %v4830
    %v7895 = vcombine.low %v4831, %v4832
    %v7896 = vcombine.low %v4833, %v4834
    %v7898 = vunpack.c.l.s4 1966171168
    %v7899 = vunpack.c.0.s8 %v7898
    %v7900 = vlaneseq
    %v7901 = vshrl.u32 %v7900, 7
    %v7902 = vsub.s32 %v7899, %v7901
    %v7903 = vrot.slane %v7893, %v7902
    %v7905 = vunpack.c.l.s4 1966171168
    %v7906 = vunpack.c.0.s8 %v7905
    %v7907 = vlaneseq
    %v7908 = vshrl.u32 %v7907, 7
    %v7909 = vsub.s32 %v7906, %v7908
    %v7910 = vrot.slane %v7894, %v7909
    %v7912 = vunpack.c.l.s4 1966171168
    %v7913 = vunpack.c.0.s8 %v7912
    %v7914 = vlaneseq
    %v7915 = vshrl.u32 %v7914, 7
    %v7916 = vsub.s32 %v7913, %v7915
    %v7917 = vrot.slane %v7895, %v7916
    %v7919 = vunpack.c.l.s4 1966171168
    %v7920 = vunpack.c.0.s8 %v7919
    %v7921 = vlaneseq
    %v7922 = vshrl.u32 %v7921, 7
    %v7923 = vsub.s32 %v7920, %v7922
    %v7924 = vrot.slane %v7896, %v7923
    %v7925 = vcombine.low %v7903, %v7910
    %v7926 = vcombine.low %v7917, %v7924
    %v7928 = vunpack.c.l.s4 1966171168
    %v7929 = vunpack.c.0.s8 %v7928
    %v7930 = vlaneseq
    %v7931 = vshrl.u32 %v7930, 7
    %v7932 = vsub.s32 %v7929, %v7931
    %v7933 = vrot.slane %v7925, %v7932
    %v7935 = vunpack.c.l.s4 1966171168
    %v7936 = vunpack.c.0.s8 %v7935
    %v7937 = vlaneseq
    %v7938 = vshrl.u32 %v7937, 7
    %v7939 = vsub.s32 %v7936, %v7938
    %v7940 = vrot.slane %v7926, %v7939
    %v7941 = vcombine.low %v7933, %v7940
    %v7942 = vcombine.low %v4835, %v4836
    %v7943 = vcombine.low %v4837, %v4838
    %v7944 = vcombine.low %v4839, %v4840
    %v7945 = vcombine.low %v4841, %v4842
    %v7947 = vunpack.c.l.s4 1966171168
    %v7948 = vunpack.c.0.s8 %v7947
    %v7949 = vlaneseq
    %v7950 = vshrl.u32 %v7949, 7
    %v7951 = vsub.s32 %v7948, %v7950
    %v7952 = vrot.slane %v7942, %v7951
    %v7954 = vunpack.c.l.s4 1966171168
    %v7955 = vunpack.c.0.s8 %v7954
    %v7956 = vlaneseq
    %v7957 = vshrl.u32 %v7956, 7
    %v7958 = vsub.s32 %v7955, %v7957
    %v7959 = vrot.slane %v7943, %v7958
    %v7961 = vunpack.c.l.s4 1966171168
    %v7962 = vunpack.c.0.s8 %v7961
    %v7963 = vlaneseq
    %v7964 = vshrl.u32 %v7963, 7
    %v7965 = vsub.s32 %v7962, %v7964
    %v7966 = vrot.slane %v7944, %v7965
    %v7968 = vunpack.c.l.s4 1966171168
    %v7969 = vunpack.c.0.s8 %v7968
    %v7970 = vlaneseq
    %v7971 = vshrl.u32 %v7970, 7
    %v7972 = vsub.s32 %v7969, %v7971
    %v7973 = vrot.slane %v7945, %v7972
    %v7974 = vcombine.low %v7952, %v7959
    %v7975 = vcombine.low %v7966, %v7973
    %v7977 = vunpack.c.l.s4 1966171168
    %v7978 = vunpack.c.0.s8 %v7977
    %v7979 = vlaneseq
    %v7980 = vshrl.u32 %v7979, 7
    %v7981 = vsub.s32 %v7978, %v7980
    %v7982 = vrot.slane %v7974, %v7981
    %v7984 = vunpack.c.l.s4 1966171168
    %v7985 = vunpack.c.0.s8 %v7984
    %v7986 = vlaneseq
    %v7987 = vshrl.u32 %v7986, 7
    %v7988 = vsub.s32 %v7985, %v7987
    %v7989 = vrot.slane %v7975, %v7988
    %v7990 = vcombine.low %v7982, %v7989
    %v7991 = vcombine.low %v4843, %v4844
    %v7992 = vcombine.low %v4845, %v4846
    %v7993 = vcombine.low %v4847, %v4848
    %v7994 = vcombine.low %v4849, %v4850
    %v7996 = vunpack.c.l.s4 1966171168
    %v7997 = vunpack.c.0.s8 %v7996
    %v7998 = vlaneseq
    %v7999 = vshrl.u32 %v7998, 7
    %v8000 = vsub.s32 %v7997, %v7999
    %v8001 = vrot.slane %v7991, %v8000
    %v8003 = vunpack.c.l.s4 1966171168
    %v8004 = vunpack.c.0.s8 %v8003
    %v8005 = vlaneseq
    %v8006 = vshrl.u32 %v8005, 7
    %v8007 = vsub.s32 %v8004, %v8006
    %v8008 = vrot.slane %v7992, %v8007
    %v8010 = vunpack.c.l.s4 1966171168
    %v8011 = vunpack.c.0.s8 %v8010
    %v8012 = vlaneseq
    %v8013 = vshrl.u32 %v8012, 7
    %v8014 = vsub.s32 %v8011, %v8013
    %v8015 = vrot.slane %v7993, %v8014
    %v8017 = vunpack.c.l.s4 1966171168
    %v8018 = vunpack.c.0.s8 %v8017
    %v8019 = vlaneseq
    %v8020 = vshrl.u32 %v8019, 7
    %v8021 = vsub.s32 %v8018, %v8020
    %v8022 = vrot.slane %v7994, %v8021
    %v8023 = vcombine.low %v8001, %v8008
    %v8024 = vcombine.low %v8015, %v8022
    %v8026 = vunpack.c.l.s4 1966171168
    %v8027 = vunpack.c.0.s8 %v8026
    %v8028 = vlaneseq
    %v8029 = vshrl.u32 %v8028, 7
    %v8030 = vsub.s32 %v8027, %v8029
    %v8031 = vrot.slane %v8023, %v8030
    %v8033 = vunpack.c.l.s4 1966171168
    %v8034 = vunpack.c.0.s8 %v8033
    %v8035 = vlaneseq
    %v8036 = vshrl.u32 %v8035, 7
    %v8037 = vsub.s32 %v8034, %v8036
    %v8038 = vrot.slane %v8024, %v8037
    %v8039 = vcombine.low %v8031, %v8038
    %v8040 = vcombine.low %v4851, %v4852
    %v8041 = vcombine.low %v4853, %v4854
    %v8042 = vcombine.low %v4855, %v4856
    %v8043 = vcombine.low %v4857, %v4858
    %v8045 = vunpack.c.l.s4 1966171168
    %v8046 = vunpack.c.0.s8 %v8045
    %v8047 = vlaneseq
    %v8048 = vshrl.u32 %v8047, 7
    %v8049 = vsub.s32 %v8046, %v8048
    %v8050 = vrot.slane %v8040, %v8049
    %v8052 = vunpack.c.l.s4 1966171168
    %v8053 = vunpack.c.0.s8 %v8052
    %v8054 = vlaneseq
    %v8055 = vshrl.u32 %v8054, 7
    %v8056 = vsub.s32 %v8053, %v8055
    %v8057 = vrot.slane %v8041, %v8056
    %v8059 = vunpack.c.l.s4 1966171168
    %v8060 = vunpack.c.0.s8 %v8059
    %v8061 = vlaneseq
    %v8062 = vshrl.u32 %v8061, 7
    %v8063 = vsub.s32 %v8060, %v8062
    %v8064 = vrot.slane %v8042, %v8063
    %v8066 = vunpack.c.l.s4 1966171168
    %v8067 = vunpack.c.0.s8 %v8066
    %v8068 = vlaneseq
    %v8069 = vshrl.u32 %v8068, 7
    %v8070 = vsub.s32 %v8067, %v8069
    %v8071 = vrot.slane %v8043, %v8070
    %v8072 = vcombine.low %v8050, %v8057
    %v8073 = vcombine.low %v8064, %v8071
    %v8075 = vunpack.c.l.s4 1966171168
    %v8076 = vunpack.c.0.s8 %v8075
    %v8077 = vlaneseq
    %v8078 = vshrl.u32 %v8077, 7
    %v8079 = vsub.s32 %v8076, %v8078
    %v8080 = vrot.slane %v8072, %v8079
    %v8082 = vunpack.c.l.s4 1966171168
    %v8083 = vunpack.c.0.s8 %v8082
    %v8084 = vlaneseq
    %v8085 = vshrl.u32 %v8084, 7
    %v8086 = vsub.s32 %v8083, %v8085
    %v8087 = vrot.slane %v8073, %v8086
    %v8088 = vcombine.low %v8080, %v8087
    %v8089 = vcombine.low %v4859, %v4860
    %v8090 = vcombine.low %v4861, %v4862
    %v8091 = vcombine.low %v4863, %v4864
    %v8092 = vcombine.low %v4865, %v4866
    %v8094 = vunpack.c.l.s4 1966171168
    %v8095 = vunpack.c.0.s8 %v8094
    %v8096 = vlaneseq
    %v8097 = vshrl.u32 %v8096, 7
    %v8098 = vsub.s32 %v8095, %v8097
    %v8099 = vrot.slane %v8089, %v8098
    %v8101 = vunpack.c.l.s4 1966171168
    %v8102 = vunpack.c.0.s8 %v8101
    %v8103 = vlaneseq
    %v8104 = vshrl.u32 %v8103, 7
    %v8105 = vsub.s32 %v8102, %v8104
    %v8106 = vrot.slane %v8090, %v8105
    %v8108 = vunpack.c.l.s4 1966171168
    %v8109 = vunpack.c.0.s8 %v8108
    %v8110 = vlaneseq
    %v8111 = vshrl.u32 %v8110, 7
    %v8112 = vsub.s32 %v8109, %v8111
    %v8113 = vrot.slane %v8091, %v8112
    %v8115 = vunpack.c.l.s4 1966171168
    %v8116 = vunpack.c.0.s8 %v8115
    %v8117 = vlaneseq
    %v8118 = vshrl.u32 %v8117, 7
    %v8119 = vsub.s32 %v8116, %v8118
    %v8120 = vrot.slane %v8092, %v8119
    %v8121 = vcombine.low %v8099, %v8106
    %v8122 = vcombine.low %v8113, %v8120
    %v8124 = vunpack.c.l.s4 1966171168
    %v8125 = vunpack.c.0.s8 %v8124
    %v8126 = vlaneseq
    %v8127 = vshrl.u32 %v8126, 7
    %v8128 = vsub.s32 %v8125, %v8127
    %v8129 = vrot.slane %v8121, %v8128
    %v8131 = vunpack.c.l.s4 1966171168
    %v8132 = vunpack.c.0.s8 %v8131
    %v8133 = vlaneseq
    %v8134 = vshrl.u32 %v8133, 7
    %v8135 = vsub.s32 %v8132, %v8134
    %v8136 = vrot.slane %v8122, %v8135
    %v8137 = vcombine.low %v8129, %v8136
    %v8138 = vcombine.low %v4867, %v4868
    %v8139 = vcombine.low %v4869, %v4870
    %v8140 = vcombine.low %v4871, %v4872
    %v8141 = vcombine.low %v4873, %v4874
    %v8143 = vunpack.c.l.s4 1966171168
    %v8144 = vunpack.c.0.s8 %v8143
    %v8145 = vlaneseq
    %v8146 = vshrl.u32 %v8145, 7
    %v8147 = vsub.s32 %v8144, %v8146
    %v8148 = vrot.slane %v8138, %v8147
    %v8150 = vunpack.c.l.s4 1966171168
    %v8151 = vunpack.c.0.s8 %v8150
    %v8152 = vlaneseq
    %v8153 = vshrl.u32 %v8152, 7
    %v8154 = vsub.s32 %v8151, %v8153
    %v8155 = vrot.slane %v8139, %v8154
    %v8157 = vunpack.c.l.s4 1966171168
    %v8158 = vunpack.c.0.s8 %v8157
    %v8159 = vlaneseq
    %v8160 = vshrl.u32 %v8159, 7
    %v8161 = vsub.s32 %v8158, %v8160
    %v8162 = vrot.slane %v8140, %v8161
    %v8164 = vunpack.c.l.s4 1966171168
    %v8165 = vunpack.c.0.s8 %v8164
    %v8166 = vlaneseq
    %v8167 = vshrl.u32 %v8166, 7
    %v8168 = vsub.s32 %v8165, %v8167
    %v8169 = vrot.slane %v8141, %v8168
    %v8170 = vcombine.low %v8148, %v8155
    %v8171 = vcombine.low %v8162, %v8169
    %v8173 = vunpack.c.l.s4 1966171168
    %v8174 = vunpack.c.0.s8 %v8173
    %v8175 = vlaneseq
    %v8176 = vshrl.u32 %v8175, 7
    %v8177 = vsub.s32 %v8174, %v8176
    %v8178 = vrot.slane %v8170, %v8177
    %v8180 = vunpack.c.l.s4 1966171168
    %v8181 = vunpack.c.0.s8 %v8180
    %v8182 = vlaneseq
    %v8183 = vshrl.u32 %v8182, 7
    %v8184 = vsub.s32 %v8181, %v8183
    %v8185 = vrot.slane %v8171, %v8184
    %v8186 = vcombine.low %v8178, %v8185
    %v8187 = vcombine.low %v4875, %v4876
    %v8188 = vcombine.low %v4877, %v4878
    %v8189 = vcombine.low %v4879, %v4880
    %v8190 = vcombine.low %v4881, %v4882
    %v8192 = vunpack.c.l.s4 1966171168
    %v8193 = vunpack.c.0.s8 %v8192
    %v8194 = vlaneseq
    %v8195 = vshrl.u32 %v8194, 7
    %v8196 = vsub.s32 %v8193, %v8195
    %v8197 = vrot.slane %v8187, %v8196
    %v8199 = vunpack.c.l.s4 1966171168
    %v8200 = vunpack.c.0.s8 %v8199
    %v8201 = vlaneseq
    %v8202 = vshrl.u32 %v8201, 7
    %v8203 = vsub.s32 %v8200, %v8202
    %v8204 = vrot.slane %v8188, %v8203
    %v8206 = vunpack.c.l.s4 1966171168
    %v8207 = vunpack.c.0.s8 %v8206
    %v8208 = vlaneseq
    %v8209 = vshrl.u32 %v8208, 7
    %v8210 = vsub.s32 %v8207, %v8209
    %v8211 = vrot.slane %v8189, %v8210
    %v8213 = vunpack.c.l.s4 1966171168
    %v8214 = vunpack.c.0.s8 %v8213
    %v8215 = vlaneseq
    %v8216 = vshrl.u32 %v8215, 7
    %v8217 = vsub.s32 %v8214, %v8216
    %v8218 = vrot.slane %v8190, %v8217
    %v8219 = vcombine.low %v8197, %v8204
    %v8220 = vcombine.low %v8211, %v8218
    %v8222 = vunpack.c.l.s4 1966171168
    %v8223 = vunpack.c.0.s8 %v8222
    %v8224 = vlaneseq
    %v8225 = vshrl.u32 %v8224, 7
    %v8226 = vsub.s32 %v8223, %v8225
    %v8227 = vrot.slane %v8219, %v8226
    %v8229 = vunpack.c.l.s4 1966171168
    %v8230 = vunpack.c.0.s8 %v8229
    %v8231 = vlaneseq
    %v8232 = vshrl.u32 %v8231, 7
    %v8233 = vsub.s32 %v8230, %v8232
    %v8234 = vrot.slane %v8220, %v8233
    %v8235 = vcombine.low %v8227, %v8234
    %v8236 = vcombine.low %v4883, %v4884
    %v8237 = vcombine.low %v4885, %v4886
    %v8238 = vcombine.low %v4887, %v4888
    %v8239 = vcombine.low %v4889, %v4890
    %v8241 = vunpack.c.l.s4 1966171168
    %v8242 = vunpack.c.0.s8 %v8241
    %v8243 = vlaneseq
    %v8244 = vshrl.u32 %v8243, 7
    %v8245 = vsub.s32 %v8242, %v8244
    %v8246 = vrot.slane %v8236, %v8245
    %v8248 = vunpack.c.l.s4 1966171168
    %v8249 = vunpack.c.0.s8 %v8248
    %v8250 = vlaneseq
    %v8251 = vshrl.u32 %v8250, 7
    %v8252 = vsub.s32 %v8249, %v8251
    %v8253 = vrot.slane %v8237, %v8252
    %v8255 = vunpack.c.l.s4 1966171168
    %v8256 = vunpack.c.0.s8 %v8255
    %v8257 = vlaneseq
    %v8258 = vshrl.u32 %v8257, 7
    %v8259 = vsub.s32 %v8256, %v8258
    %v8260 = vrot.slane %v8238, %v8259
    %v8262 = vunpack.c.l.s4 1966171168
    %v8263 = vunpack.c.0.s8 %v8262
    %v8264 = vlaneseq
    %v8265 = vshrl.u32 %v8264, 7
    %v8266 = vsub.s32 %v8263, %v8265
    %v8267 = vrot.slane %v8239, %v8266
    %v8268 = vcombine.low %v8246, %v8253
    %v8269 = vcombine.low %v8260, %v8267
    %v8271 = vunpack.c.l.s4 1966171168
    %v8272 = vunpack.c.0.s8 %v8271
    %v8273 = vlaneseq
    %v8274 = vshrl.u32 %v8273, 7
    %v8275 = vsub.s32 %v8272, %v8274
    %v8276 = vrot.slane %v8268, %v8275
    %v8278 = vunpack.c.l.s4 1966171168
    %v8279 = vunpack.c.0.s8 %v8278
    %v8280 = vlaneseq
    %v8281 = vshrl.u32 %v8280, 7
    %v8282 = vsub.s32 %v8279, %v8281
    %v8283 = vrot.slane %v8269, %v8282
    %v8284 = vcombine.low %v8276, %v8283
    %v8285 = vcombine.low %v4891, %v4892
    %v8286 = vcombine.low %v4893, %v4894
    %v8287 = vcombine.low %v4895, %v4896
    %v8288 = vcombine.low %v4897, %v4898
    %v8290 = vunpack.c.l.s4 1966171168
    %v8291 = vunpack.c.0.s8 %v8290
    %v8292 = vlaneseq
    %v8293 = vshrl.u32 %v8292, 7
    %v8294 = vsub.s32 %v8291, %v8293
    %v8295 = vrot.slane %v8285, %v8294
    %v8297 = vunpack.c.l.s4 1966171168
    %v8298 = vunpack.c.0.s8 %v8297
    %v8299 = vlaneseq
    %v8300 = vshrl.u32 %v8299, 7
    %v8301 = vsub.s32 %v8298, %v8300
    %v8302 = vrot.slane %v8286, %v8301
    %v8304 = vunpack.c.l.s4 1966171168
    %v8305 = vunpack.c.0.s8 %v8304
    %v8306 = vlaneseq
    %v8307 = vshrl.u32 %v8306, 7
    %v8308 = vsub.s32 %v8305, %v8307
    %v8309 = vrot.slane %v8287, %v8308
    %v8311 = vunpack.c.l.s4 1966171168
    %v8312 = vunpack.c.0.s8 %v8311
    %v8313 = vlaneseq
    %v8314 = vshrl.u32 %v8313, 7
    %v8315 = vsub.s32 %v8312, %v8314
    %v8316 = vrot.slane %v8288, %v8315
    %v8317 = vcombine.low %v8295, %v8302
    %v8318 = vcombine.low %v8309, %v8316
    %v8320 = vunpack.c.l.s4 1966171168
    %v8321 = vunpack.c.0.s8 %v8320
    %v8322 = vlaneseq
    %v8323 = vshrl.u32 %v8322, 7
    %v8324 = vsub.s32 %v8321, %v8323
    %v8325 = vrot.slane %v8317, %v8324
    %v8327 = vunpack.c.l.s4 1966171168
    %v8328 = vunpack.c.0.s8 %v8327
    %v8329 = vlaneseq
    %v8330 = vshrl.u32 %v8329, 7
    %v8331 = vsub.s32 %v8328, %v8330
    %v8332 = vrot.slane %v8318, %v8331
    %v8333 = vcombine.low %v8325, %v8332
    %v8334 = vcombine.low %v4899, %v4900
    %v8335 = vcombine.low %v4901, %v4902
    %v8336 = vcombine.low %v4903, %v4904
    %v8337 = vcombine.low %v4905, %v4906
    %v8339 = vunpack.c.l.s4 1966171168
    %v8340 = vunpack.c.0.s8 %v8339
    %v8341 = vlaneseq
    %v8342 = vshrl.u32 %v8341, 7
    %v8343 = vsub.s32 %v8340, %v8342
    %v8344 = vrot.slane %v8334, %v8343
    %v8346 = vunpack.c.l.s4 1966171168
    %v8347 = vunpack.c.0.s8 %v8346
    %v8348 = vlaneseq
    %v8349 = vshrl.u32 %v8348, 7
    %v8350 = vsub.s32 %v8347, %v8349
    %v8351 = vrot.slane %v8335, %v8350
    %v8353 = vunpack.c.l.s4 1966171168
    %v8354 = vunpack.c.0.s8 %v8353
    %v8355 = vlaneseq
    %v8356 = vshrl.u32 %v8355, 7
    %v8357 = vsub.s32 %v8354, %v8356
    %v8358 = vrot.slane %v8336, %v8357
    %v8360 = vunpack.c.l.s4 1966171168
    %v8361 = vunpack.c.0.s8 %v8360
    %v8362 = vlaneseq
    %v8363 = vshrl.u32 %v8362, 7
    %v8364 = vsub.s32 %v8361, %v8363
    %v8365 = vrot.slane %v8337, %v8364
    %v8366 = vcombine.low %v8344, %v8351
    %v8367 = vcombine.low %v8358, %v8365
    %v8369 = vunpack.c.l.s4 1966171168
    %v8370 = vunpack.c.0.s8 %v8369
    %v8371 = vlaneseq
    %v8372 = vshrl.u32 %v8371, 7
    %v8373 = vsub.s32 %v8370, %v8372
    %v8374 = vrot.slane %v8366, %v8373
    %v8376 = vunpack.c.l.s4 1966171168
    %v8377 = vunpack.c.0.s8 %v8376
    %v8378 = vlaneseq
    %v8379 = vshrl.u32 %v8378, 7
    %v8380 = vsub.s32 %v8377, %v8379
    %v8381 = vrot.slane %v8367, %v8380
    %v8382 = vcombine.low %v8374, %v8381
    %v8383 = vcombine.low %v4907, %v4908
    %v8384 = vcombine.low %v4909, %v4910
    %v8385 = vcombine.low %v4911, %v4912
    %v8386 = vcombine.low %v4913, %v4914
    %v8388 = vunpack.c.l.s4 1966171168
    %v8389 = vunpack.c.0.s8 %v8388
    %v8390 = vlaneseq
    %v8391 = vshrl.u32 %v8390, 7
    %v8392 = vsub.s32 %v8389, %v8391
    %v8393 = vrot.slane %v8383, %v8392
    %v8395 = vunpack.c.l.s4 1966171168
    %v8396 = vunpack.c.0.s8 %v8395
    %v8397 = vlaneseq
    %v8398 = vshrl.u32 %v8397, 7
    %v8399 = vsub.s32 %v8396, %v8398
    %v8400 = vrot.slane %v8384, %v8399
    %v8402 = vunpack.c.l.s4 1966171168
    %v8403 = vunpack.c.0.s8 %v8402
    %v8404 = vlaneseq
    %v8405 = vshrl.u32 %v8404, 7
    %v8406 = vsub.s32 %v8403, %v8405
    %v8407 = vrot.slane %v8385, %v8406
    %v8409 = vunpack.c.l.s4 1966171168
    %v8410 = vunpack.c.0.s8 %v8409
    %v8411 = vlaneseq
    %v8412 = vshrl.u32 %v8411, 7
    %v8413 = vsub.s32 %v8410, %v8412
    %v8414 = vrot.slane %v8386, %v8413
    %v8415 = vcombine.low %v8393, %v8400
    %v8416 = vcombine.low %v8407, %v8414
    %v8418 = vunpack.c.l.s4 1966171168
    %v8419 = vunpack.c.0.s8 %v8418
    %v8420 = vlaneseq
    %v8421 = vshrl.u32 %v8420, 7
    %v8422 = vsub.s32 %v8419, %v8421
    %v8423 = vrot.slane %v8415, %v8422
    %v8425 = vunpack.c.l.s4 1966171168
    %v8426 = vunpack.c.0.s8 %v8425
    %v8427 = vlaneseq
    %v8428 = vshrl.u32 %v8427, 7
    %v8429 = vsub.s32 %v8426, %v8428
    %v8430 = vrot.slane %v8416, %v8429
    %v8431 = vcombine.low %v8423, %v8430
    %v8432 = vcombine.low %v4915, %v4916
    %v8433 = vcombine.low %v4917, %v4918
    %v8434 = vcombine.low %v4919, %v4920
    %v8435 = vcombine.low %v4921, %v4922
    %v8437 = vunpack.c.l.s4 1966171168
    %v8438 = vunpack.c.0.s8 %v8437
    %v8439 = vlaneseq
    %v8440 = vshrl.u32 %v8439, 7
    %v8441 = vsub.s32 %v8438, %v8440
    %v8442 = vrot.slane %v8432, %v8441
    %v8444 = vunpack.c.l.s4 1966171168
    %v8445 = vunpack.c.0.s8 %v8444
    %v8446 = vlaneseq
    %v8447 = vshrl.u32 %v8446, 7
    %v8448 = vsub.s32 %v8445, %v8447
    %v8449 = vrot.slane %v8433, %v8448
    %v8451 = vunpack.c.l.s4 1966171168
    %v8452 = vunpack.c.0.s8 %v8451
    %v8453 = vlaneseq
    %v8454 = vshrl.u32 %v8453, 7
    %v8455 = vsub.s32 %v8452, %v8454
    %v8456 = vrot.slane %v8434, %v8455
    %v8458 = vunpack.c.l.s4 1966171168
    %v8459 = vunpack.c.0.s8 %v8458
    %v8460 = vlaneseq
    %v8461 = vshrl.u32 %v8460, 7
    %v8462 = vsub.s32 %v8459, %v8461
    %v8463 = vrot.slane %v8435, %v8462
    %v8464 = vcombine.low %v8442, %v8449
    %v8465 = vcombine.low %v8456, %v8463
    %v8467 = vunpack.c.l.s4 1966171168
    %v8468 = vunpack.c.0.s8 %v8467
    %v8469 = vlaneseq
    %v8470 = vshrl.u32 %v8469, 7
    %v8471 = vsub.s32 %v8468, %v8470
    %v8472 = vrot.slane %v8464, %v8471
    %v8474 = vunpack.c.l.s4 1966171168
    %v8475 = vunpack.c.0.s8 %v8474
    %v8476 = vlaneseq
    %v8477 = vshrl.u32 %v8476, 7
    %v8478 = vsub.s32 %v8475, %v8477
    %v8479 = vrot.slane %v8465, %v8478
    %v8480 = vcombine.low %v8472, %v8479
    %v8481 = vcombine.low %v4923, %v4924
    %v8482 = vcombine.low %v4925, %v4926
    %v8483 = vcombine.low %v4927, %v4928
    %v8484 = vcombine.low %v4929, %v4930
    %v8486 = vunpack.c.l.s4 1966171168
    %v8487 = vunpack.c.0.s8 %v8486
    %v8488 = vlaneseq
    %v8489 = vshrl.u32 %v8488, 7
    %v8490 = vsub.s32 %v8487, %v8489
    %v8491 = vrot.slane %v8481, %v8490
    %v8493 = vunpack.c.l.s4 1966171168
    %v8494 = vunpack.c.0.s8 %v8493
    %v8495 = vlaneseq
    %v8496 = vshrl.u32 %v8495, 7
    %v8497 = vsub.s32 %v8494, %v8496
    %v8498 = vrot.slane %v8482, %v8497
    %v8500 = vunpack.c.l.s4 1966171168
    %v8501 = vunpack.c.0.s8 %v8500
    %v8502 = vlaneseq
    %v8503 = vshrl.u32 %v8502, 7
    %v8504 = vsub.s32 %v8501, %v8503
    %v8505 = vrot.slane %v8483, %v8504
    %v8507 = vunpack.c.l.s4 1966171168
    %v8508 = vunpack.c.0.s8 %v8507
    %v8509 = vlaneseq
    %v8510 = vshrl.u32 %v8509, 7
    %v8511 = vsub.s32 %v8508, %v8510
    %v8512 = vrot.slane %v8484, %v8511
    %v8513 = vcombine.low %v8491, %v8498
    %v8514 = vcombine.low %v8505, %v8512
    %v8516 = vunpack.c.l.s4 1966171168
    %v8517 = vunpack.c.0.s8 %v8516
    %v8518 = vlaneseq
    %v8519 = vshrl.u32 %v8518, 7
    %v8520 = vsub.s32 %v8517, %v8519
    %v8521 = vrot.slane %v8513, %v8520
    %v8523 = vunpack.c.l.s4 1966171168
    %v8524 = vunpack.c.0.s8 %v8523
    %v8525 = vlaneseq
    %v8526 = vshrl.u32 %v8525, 7
    %v8527 = vsub.s32 %v8524, %v8526
    %v8528 = vrot.slane %v8514, %v8527
    %v8529 = vcombine.low %v8521, %v8528
    %v8530 = vcombine.low %v4931, %v4932
    %v8531 = vcombine.low %v4933, %v4934
    %v8532 = vcombine.low %v4935, %v4936
    %v8533 = vcombine.low %v4937, %v4938
    %v8535 = vunpack.c.l.s4 1966171168
    %v8536 = vunpack.c.0.s8 %v8535
    %v8537 = vlaneseq
    %v8538 = vshrl.u32 %v8537, 7
    %v8539 = vsub.s32 %v8536, %v8538
    %v8540 = vrot.slane %v8530, %v8539
    %v8542 = vunpack.c.l.s4 1966171168
    %v8543 = vunpack.c.0.s8 %v8542
    %v8544 = vlaneseq
    %v8545 = vshrl.u32 %v8544, 7
    %v8546 = vsub.s32 %v8543, %v8545
    %v8547 = vrot.slane %v8531, %v8546
    %v8549 = vunpack.c.l.s4 1966171168
    %v8550 = vunpack.c.0.s8 %v8549
    %v8551 = vlaneseq
    %v8552 = vshrl.u32 %v8551, 7
    %v8553 = vsub.s32 %v8550, %v8552
    %v8554 = vrot.slane %v8532, %v8553
    %v8556 = vunpack.c.l.s4 1966171168
    %v8557 = vunpack.c.0.s8 %v8556
    %v8558 = vlaneseq
    %v8559 = vshrl.u32 %v8558, 7
    %v8560 = vsub.s32 %v8557, %v8559
    %v8561 = vrot.slane %v8533, %v8560
    %v8562 = vcombine.low %v8540, %v8547
    %v8563 = vcombine.low %v8554, %v8561
    %v8565 = vunpack.c.l.s4 1966171168
    %v8566 = vunpack.c.0.s8 %v8565
    %v8567 = vlaneseq
    %v8568 = vshrl.u32 %v8567, 7
    %v8569 = vsub.s32 %v8566, %v8568
    %v8570 = vrot.slane %v8562, %v8569
    %v8572 = vunpack.c.l.s4 1966171168
    %v8573 = vunpack.c.0.s8 %v8572
    %v8574 = vlaneseq
    %v8575 = vshrl.u32 %v8574, 7
    %v8576 = vsub.s32 %v8573, %v8575
    %v8577 = vrot.slane %v8563, %v8576
    %v8578 = vcombine.low %v8570, %v8577
    %v8579 = vcombine.low %v4939, %v4940
    %v8580 = vcombine.low %v4941, %v4942
    %v8581 = vcombine.low %v4943, %v4944
    %v8582 = vcombine.low %v4945, %v4946
    %v8584 = vunpack.c.l.s4 1966171168
    %v8585 = vunpack.c.0.s8 %v8584
    %v8586 = vlaneseq
    %v8587 = vshrl.u32 %v8586, 7
    %v8588 = vsub.s32 %v8585, %v8587
    %v8589 = vrot.slane %v8579, %v8588
    %v8591 = vunpack.c.l.s4 1966171168
    %v8592 = vunpack.c.0.s8 %v8591
    %v8593 = vlaneseq
    %v8594 = vshrl.u32 %v8593, 7
    %v8595 = vsub.s32 %v8592, %v8594
    %v8596 = vrot.slane %v8580, %v8595
    %v8598 = vunpack.c.l.s4 1966171168
    %v8599 = vunpack.c.0.s8 %v8598
    %v8600 = vlaneseq
    %v8601 = vshrl.u32 %v8600, 7
    %v8602 = vsub.s32 %v8599, %v8601
    %v8603 = vrot.slane %v8581, %v8602
    %v8605 = vunpack.c.l.s4 1966171168
    %v8606 = vunpack.c.0.s8 %v8605
    %v8607 = vlaneseq
    %v8608 = vshrl.u32 %v8607, 7
    %v8609 = vsub.s32 %v8606, %v8608
    %v8610 = vrot.slane %v8582, %v8609
    %v8611 = vcombine.low %v8589, %v8596
    %v8612 = vcombine.low %v8603, %v8610
    %v8614 = vunpack.c.l.s4 1966171168
    %v8615 = vunpack.c.0.s8 %v8614
    %v8616 = vlaneseq
    %v8617 = vshrl.u32 %v8616, 7
    %v8618 = vsub.s32 %v8615, %v8617
    %v8619 = vrot.slane %v8611, %v8618
    %v8621 = vunpack.c.l.s4 1966171168
    %v8622 = vunpack.c.0.s8 %v8621
    %v8623 = vlaneseq
    %v8624 = vshrl.u32 %v8623, 7
    %v8625 = vsub.s32 %v8622, %v8624
    %v8626 = vrot.slane %v8612, %v8625
    %v8627 = vcombine.low %v8619, %v8626
    %v8628 = vcombine.low %v4947, %v4948
    %v8629 = vcombine.low %v4949, %v4950
    %v8630 = vcombine.low %v4951, %v4952
    %v8631 = vcombine.low %v4953, %v4954
    %v8633 = vunpack.c.l.s4 1966171168
    %v8634 = vunpack.c.0.s8 %v8633
    %v8635 = vlaneseq
    %v8636 = vshrl.u32 %v8635, 7
    %v8637 = vsub.s32 %v8634, %v8636
    %v8638 = vrot.slane %v8628, %v8637
    %v8640 = vunpack.c.l.s4 1966171168
    %v8641 = vunpack.c.0.s8 %v8640
    %v8642 = vlaneseq
    %v8643 = vshrl.u32 %v8642, 7
    %v8644 = vsub.s32 %v8641, %v8643
    %v8645 = vrot.slane %v8629, %v8644
    %v8647 = vunpack.c.l.s4 1966171168
    %v8648 = vunpack.c.0.s8 %v8647
    %v8649 = vlaneseq
    %v8650 = vshrl.u32 %v8649, 7
    %v8651 = vsub.s32 %v8648, %v8650
    %v8652 = vrot.slane %v8630, %v8651
    %v8654 = vunpack.c.l.s4 1966171168
    %v8655 = vunpack.c.0.s8 %v8654
    %v8656 = vlaneseq
    %v8657 = vshrl.u32 %v8656, 7
    %v8658 = vsub.s32 %v8655, %v8657
    %v8659 = vrot.slane %v8631, %v8658
    %v8660 = vcombine.low %v8638, %v8645
    %v8661 = vcombine.low %v8652, %v8659
    %v8663 = vunpack.c.l.s4 1966171168
    %v8664 = vunpack.c.0.s8 %v8663
    %v8665 = vlaneseq
    %v8666 = vshrl.u32 %v8665, 7
    %v8667 = vsub.s32 %v8664, %v8666
    %v8668 = vrot.slane %v8660, %v8667
    %v8670 = vunpack.c.l.s4 1966171168
    %v8671 = vunpack.c.0.s8 %v8670
    %v8672 = vlaneseq
    %v8673 = vshrl.u32 %v8672, 7
    %v8674 = vsub.s32 %v8671, %v8673
    %v8675 = vrot.slane %v8661, %v8674
    %v8676 = vcombine.low %v8668, %v8675
    %v8677 = vcombine.low %v4955, %v4956
    %v8678 = vcombine.low %v4957, %v4958
    %v8679 = vcombine.low %v4959, %v4960
    %v8680 = vcombine.low %v4961, %v4962
    %v8682 = vunpack.c.l.s4 1966171168
    %v8683 = vunpack.c.0.s8 %v8682
    %v8684 = vlaneseq
    %v8685 = vshrl.u32 %v8684, 7
    %v8686 = vsub.s32 %v8683, %v8685
    %v8687 = vrot.slane %v8677, %v8686
    %v8689 = vunpack.c.l.s4 1966171168
    %v8690 = vunpack.c.0.s8 %v8689
    %v8691 = vlaneseq
    %v8692 = vshrl.u32 %v8691, 7
    %v8693 = vsub.s32 %v8690, %v8692
    %v8694 = vrot.slane %v8678, %v8693
    %v8696 = vunpack.c.l.s4 1966171168
    %v8697 = vunpack.c.0.s8 %v8696
    %v8698 = vlaneseq
    %v8699 = vshrl.u32 %v8698, 7
    %v8700 = vsub.s32 %v8697, %v8699
    %v8701 = vrot.slane %v8679, %v8700
    %v8703 = vunpack.c.l.s4 1966171168
    %v8704 = vunpack.c.0.s8 %v8703
    %v8705 = vlaneseq
    %v8706 = vshrl.u32 %v8705, 7
    %v8707 = vsub.s32 %v8704, %v8706
    %v8708 = vrot.slane %v8680, %v8707
    %v8709 = vcombine.low %v8687, %v8694
    %v8710 = vcombine.low %v8701, %v8708
    %v8712 = vunpack.c.l.s4 1966171168
    %v8713 = vunpack.c.0.s8 %v8712
    %v8714 = vlaneseq
    %v8715 = vshrl.u32 %v8714, 7
    %v8716 = vsub.s32 %v8713, %v8715
    %v8717 = vrot.slane %v8709, %v8716
    %v8719 = vunpack.c.l.s4 1966171168
    %v8720 = vunpack.c.0.s8 %v8719
    %v8721 = vlaneseq
    %v8722 = vshrl.u32 %v8721, 7
    %v8723 = vsub.s32 %v8720, %v8722
    %v8724 = vrot.slane %v8710, %v8723
    %v8725 = vcombine.low %v8717, %v8724
    %v8726 = vcombine.low %v4963, %v4964
    %v8727 = vcombine.low %v4965, %v4966
    %v8728 = vcombine.low %v4967, %v4968
    %v8729 = vcombine.low %v4969, %v4970
    %v8731 = vunpack.c.l.s4 1966171168
    %v8732 = vunpack.c.0.s8 %v8731
    %v8733 = vlaneseq
    %v8734 = vshrl.u32 %v8733, 7
    %v8735 = vsub.s32 %v8732, %v8734
    %v8736 = vrot.slane %v8726, %v8735
    %v8738 = vunpack.c.l.s4 1966171168
    %v8739 = vunpack.c.0.s8 %v8738
    %v8740 = vlaneseq
    %v8741 = vshrl.u32 %v8740, 7
    %v8742 = vsub.s32 %v8739, %v8741
    %v8743 = vrot.slane %v8727, %v8742
    %v8745 = vunpack.c.l.s4 1966171168
    %v8746 = vunpack.c.0.s8 %v8745
    %v8747 = vlaneseq
    %v8748 = vshrl.u32 %v8747, 7
    %v8749 = vsub.s32 %v8746, %v8748
    %v8750 = vrot.slane %v8728, %v8749
    %v8752 = vunpack.c.l.s4 1966171168
    %v8753 = vunpack.c.0.s8 %v8752
    %v8754 = vlaneseq
    %v8755 = vshrl.u32 %v8754, 7
    %v8756 = vsub.s32 %v8753, %v8755
    %v8757 = vrot.slane %v8729, %v8756
    %v8758 = vcombine.low %v8736, %v8743
    %v8759 = vcombine.low %v8750, %v8757
    %v8761 = vunpack.c.l.s4 1966171168
    %v8762 = vunpack.c.0.s8 %v8761
    %v8763 = vlaneseq
    %v8764 = vshrl.u32 %v8763, 7
    %v8765 = vsub.s32 %v8762, %v8764
    %v8766 = vrot.slane %v8758, %v8765
    %v8768 = vunpack.c.l.s4 1966171168
    %v8769 = vunpack.c.0.s8 %v8768
    %v8770 = vlaneseq
    %v8771 = vshrl.u32 %v8770, 7
    %v8772 = vsub.s32 %v8769, %v8771
    %v8773 = vrot.slane %v8759, %v8772
    %v8774 = vcombine.low %v8766, %v8773
    %v8775 = vcombine.low %v4971, %v4972
    %v8776 = vcombine.low %v4973, %v4974
    %v8777 = vcombine.low %v4975, %v4976
    %v8778 = vcombine.low %v4977, %v4978
    %v8780 = vunpack.c.l.s4 1966171168
    %v8781 = vunpack.c.0.s8 %v8780
    %v8782 = vlaneseq
    %v8783 = vshrl.u32 %v8782, 7
    %v8784 = vsub.s32 %v8781, %v8783
    %v8785 = vrot.slane %v8775, %v8784
    %v8787 = vunpack.c.l.s4 1966171168
    %v8788 = vunpack.c.0.s8 %v8787
    %v8789 = vlaneseq
    %v8790 = vshrl.u32 %v8789, 7
    %v8791 = vsub.s32 %v8788, %v8790
    %v8792 = vrot.slane %v8776, %v8791
    %v8794 = vunpack.c.l.s4 1966171168
    %v8795 = vunpack.c.0.s8 %v8794
    %v8796 = vlaneseq
    %v8797 = vshrl.u32 %v8796, 7
    %v8798 = vsub.s32 %v8795, %v8797
    %v8799 = vrot.slane %v8777, %v8798
    %v8801 = vunpack.c.l.s4 1966171168
    %v8802 = vunpack.c.0.s8 %v8801
    %v8803 = vlaneseq
    %v8804 = vshrl.u32 %v8803, 7
    %v8805 = vsub.s32 %v8802, %v8804
    %v8806 = vrot.slane %v8778, %v8805
    %v8807 = vcombine.low %v8785, %v8792
    %v8808 = vcombine.low %v8799, %v8806
    %v8810 = vunpack.c.l.s4 1966171168
    %v8811 = vunpack.c.0.s8 %v8810
    %v8812 = vlaneseq
    %v8813 = vshrl.u32 %v8812, 7
    %v8814 = vsub.s32 %v8811, %v8813
    %v8815 = vrot.slane %v8807, %v8814
    %v8817 = vunpack.c.l.s4 1966171168
    %v8818 = vunpack.c.0.s8 %v8817
    %v8819 = vlaneseq
    %v8820 = vshrl.u32 %v8819, 7
    %v8821 = vsub.s32 %v8818, %v8820
    %v8822 = vrot.slane %v8808, %v8821
    %v8823 = vcombine.low %v8815, %v8822
    %v8824 = vcombine.low %v4979, %v4980
    %v8825 = vcombine.low %v4981, %v4982
    %v8826 = vcombine.low %v4983, %v4984
    %v8827 = vcombine.low %v4985, %v4986
    %v8829 = vunpack.c.l.s4 1966171168
    %v8830 = vunpack.c.0.s8 %v8829
    %v8831 = vlaneseq
    %v8832 = vshrl.u32 %v8831, 7
    %v8833 = vsub.s32 %v8830, %v8832
    %v8834 = vrot.slane %v8824, %v8833
    %v8836 = vunpack.c.l.s4 1966171168
    %v8837 = vunpack.c.0.s8 %v8836
    %v8838 = vlaneseq
    %v8839 = vshrl.u32 %v8838, 7
    %v8840 = vsub.s32 %v8837, %v8839
    %v8841 = vrot.slane %v8825, %v8840
    %v8843 = vunpack.c.l.s4 1966171168
    %v8844 = vunpack.c.0.s8 %v8843
    %v8845 = vlaneseq
    %v8846 = vshrl.u32 %v8845, 7
    %v8847 = vsub.s32 %v8844, %v8846
    %v8848 = vrot.slane %v8826, %v8847
    %v8850 = vunpack.c.l.s4 1966171168
    %v8851 = vunpack.c.0.s8 %v8850
    %v8852 = vlaneseq
    %v8853 = vshrl.u32 %v8852, 7
    %v8854 = vsub.s32 %v8851, %v8853
    %v8855 = vrot.slane %v8827, %v8854
    %v8856 = vcombine.low %v8834, %v8841
    %v8857 = vcombine.low %v8848, %v8855
    %v8859 = vunpack.c.l.s4 1966171168
    %v8860 = vunpack.c.0.s8 %v8859
    %v8861 = vlaneseq
    %v8862 = vshrl.u32 %v8861, 7
    %v8863 = vsub.s32 %v8860, %v8862
    %v8864 = vrot.slane %v8856, %v8863
    %v8866 = vunpack.c.l.s4 1966171168
    %v8867 = vunpack.c.0.s8 %v8866
    %v8868 = vlaneseq
    %v8869 = vshrl.u32 %v8868, 7
    %v8870 = vsub.s32 %v8867, %v8869
    %v8871 = vrot.slane %v8857, %v8870
    %v8872 = vcombine.low %v8864, %v8871
    %v8873 = vcombine.low %v4987, %v4988
    %v8874 = vcombine.low %v4989, %v4990
    %v8875 = vcombine.low %v4991, %v4992
    %v8876 = vcombine.low %v4993, %v4994
    %v8878 = vunpack.c.l.s4 1966171168
    %v8879 = vunpack.c.0.s8 %v8878
    %v8880 = vlaneseq
    %v8881 = vshrl.u32 %v8880, 7
    %v8882 = vsub.s32 %v8879, %v8881
    %v8883 = vrot.slane %v8873, %v8882
    %v8885 = vunpack.c.l.s4 1966171168
    %v8886 = vunpack.c.0.s8 %v8885
    %v8887 = vlaneseq
    %v8888 = vshrl.u32 %v8887, 7
    %v8889 = vsub.s32 %v8886, %v8888
    %v8890 = vrot.slane %v8874, %v8889
    %v8892 = vunpack.c.l.s4 1966171168
    %v8893 = vunpack.c.0.s8 %v8892
    %v8894 = vlaneseq
    %v8895 = vshrl.u32 %v8894, 7
    %v8896 = vsub.s32 %v8893, %v8895
    %v8897 = vrot.slane %v8875, %v8896
    %v8899 = vunpack.c.l.s4 1966171168
    %v8900 = vunpack.c.0.s8 %v8899
    %v8901 = vlaneseq
    %v8902 = vshrl.u32 %v8901, 7
    %v8903 = vsub.s32 %v8900, %v8902
    %v8904 = vrot.slane %v8876, %v8903
    %v8905 = vcombine.low %v8883, %v8890
    %v8906 = vcombine.low %v8897, %v8904
    %v8908 = vunpack.c.l.s4 1966171168
    %v8909 = vunpack.c.0.s8 %v8908
    %v8910 = vlaneseq
    %v8911 = vshrl.u32 %v8910, 7
    %v8912 = vsub.s32 %v8909, %v8911
    %v8913 = vrot.slane %v8905, %v8912
    %v8915 = vunpack.c.l.s4 1966171168
    %v8916 = vunpack.c.0.s8 %v8915
    %v8917 = vlaneseq
    %v8918 = vshrl.u32 %v8917, 7
    %v8919 = vsub.s32 %v8916, %v8918
    %v8920 = vrot.slane %v8906, %v8919
    %v8921 = vcombine.low %v8913, %v8920
    %v8922 = vcombine.low %v4995, %v4996
    %v8923 = vcombine.low %v4997, %v4998
    %v8924 = vcombine.low %v4999, %v5000
    %v8925 = vcombine.low %v5001, %v5002
    %v8927 = vunpack.c.l.s4 1966171168
    %v8928 = vunpack.c.0.s8 %v8927
    %v8929 = vlaneseq
    %v8930 = vshrl.u32 %v8929, 7
    %v8931 = vsub.s32 %v8928, %v8930
    %v8932 = vrot.slane %v8922, %v8931
    %v8934 = vunpack.c.l.s4 1966171168
    %v8935 = vunpack.c.0.s8 %v8934
    %v8936 = vlaneseq
    %v8937 = vshrl.u32 %v8936, 7
    %v8938 = vsub.s32 %v8935, %v8937
    %v8939 = vrot.slane %v8923, %v8938
    %v8941 = vunpack.c.l.s4 1966171168
    %v8942 = vunpack.c.0.s8 %v8941
    %v8943 = vlaneseq
    %v8944 = vshrl.u32 %v8943, 7
    %v8945 = vsub.s32 %v8942, %v8944
    %v8946 = vrot.slane %v8924, %v8945
    %v8948 = vunpack.c.l.s4 1966171168
    %v8949 = vunpack.c.0.s8 %v8948
    %v8950 = vlaneseq
    %v8951 = vshrl.u32 %v8950, 7
    %v8952 = vsub.s32 %v8949, %v8951
    %v8953 = vrot.slane %v8925, %v8952
    %v8954 = vcombine.low %v8932, %v8939
    %v8955 = vcombine.low %v8946, %v8953
    %v8957 = vunpack.c.l.s4 1966171168
    %v8958 = vunpack.c.0.s8 %v8957
    %v8959 = vlaneseq
    %v8960 = vshrl.u32 %v8959, 7
    %v8961 = vsub.s32 %v8958, %v8960
    %v8962 = vrot.slane %v8954, %v8961
    %v8964 = vunpack.c.l.s4 1966171168
    %v8965 = vunpack.c.0.s8 %v8964
    %v8966 = vlaneseq
    %v8967 = vshrl.u32 %v8966, 7
    %v8968 = vsub.s32 %v8965, %v8967
    %v8969 = vrot.slane %v8955, %v8968
    %v8970 = vcombine.low %v8962, %v8969
    %9003 = vst [vmem:[#allocation2] sm:$0xff] %v7451
    %9004 = vst [vmem:[#allocation2 + $0x8] sm:$0xff] %v7500
    %9005 = vst [vmem:[#allocation2 + $0x10] sm:$0xff] %v7549
    %9006 = vst [vmem:[#allocation2 + $0x18] sm:$0xff] %v7598
    %9007 = vst [vmem:[#allocation2 + $0x20] sm:$0xff] %v7647
    %9008 = vst [vmem:[#allocation2 + $0x28] sm:$0xff] %v7696
    %9009 = vst [vmem:[#allocation2 + $0x30] sm:$0xff] %v7745
    %9010 = vst [vmem:[#allocation2 + $0x38] sm:$0xff] %v7794
    %9011 = vst [vmem:[#allocation2 + $0x40] sm:$0xff] %v7843
    %9012 = vst [vmem:[#allocation2 + $0x48] sm:$0xff] %v7892
    %9013 = vst [vmem:[#allocation2 + $0x50] sm:$0xff] %v7941
    %9014 = vst [vmem:[#allocation2 + $0x58] sm:$0xff] %v7990
    %9015 = vst [vmem:[#allocation2 + $0x60] sm:$0xff] %v8039
    %9016 = vst [vmem:[#allocation2 + $0x68] sm:$0xff] %v8088
    %9017 = vst [vmem:[#allocation2 + $0x70] sm:$0xff] %v8137
    %9018 = vst [vmem:[#allocation2 + $0x78] sm:$0xff] %v8186
    %9019 = vst [vmem:[#allocation2 + $0x80] sm:$0xff] %v8235
    %9020 = vst [vmem:[#allocation2 + $0x88] sm:$0xff] %v8284
    %9021 = vst [vmem:[#allocation2 + $0x90] sm:$0xff] %v8333
    %9022 = vst [vmem:[#allocation2 + $0x98] sm:$0xff] %v8382
    %9023 = vst [vmem:[#allocation2 + $0xa0] sm:$0xff] %v8431
    %9024 = vst [vmem:[#allocation2 + $0xa8] sm:$0xff] %v8480
    %9025 = vst [vmem:[#allocation2 + $0xb0] sm:$0xff] %v8529
    %9026 = vst [vmem:[#allocation2 + $0xb8] sm:$0xff] %v8578
    %9027 = vst [vmem:[#allocation2 + $0xc0] sm:$0xff] %v8627
    %9028 = vst [vmem:[#allocation2 + $0xc8] sm:$0xff] %v8676
    %9029 = vst [vmem:[#allocation2 + $0xd0] sm:$0xff] %v8725
    %9030 = vst [vmem:[#allocation2 + $0xd8] sm:$0xff] %v8774
    %9031 = vst [vmem:[#allocation2 + $0xe0] sm:$0xff] %v8823
    %9032 = vst [vmem:[#allocation2 + $0xe8] sm:$0xff] %v8872
    %9033 = vst [vmem:[#allocation2 + $0xf0] sm:$0xff] %v8921
    %9034 = vst [vmem:[#allocation2 + $0xf8] sm:$0xff] %v8970
    // Predicated region
    $region6: #{_stage1.1} parent=1 // pred_check
      _
    $region7: #{_stage1.1} parent=1 // pred_check_branch
      %9036 = sbr.rel (0) target = $region9
    $region8: #{_stage1.1} parent=1 // pred_region
      _
    $region9: #{_stage1.1} parent=1 // pred_fallthru
      _
    // Predicated region
    $region10: #{_stage1.1} parent=1 // pred_check
      _
    $region11: #{_stage1.1} parent=1 // pred_check_branch
      %9038 = sbr.rel (0) target = $region13
    $region12: #{_stage1.1} parent=1 // pred_region
      %s9040 = ssub.s32 4096, 4096
      %9041 = vsyncadd [#allocation3], %s9040
      %s9043 = sshll.u32 [#allocation2], 4
      %s9044 = int_to_ptr.vmem [resolvable:$true] %s9043
      %9046 = dma.vmem_to_hbm [thread:$0]  %s9044, 4096, %s2, [#allocation3]
    $region13: #{_stage1.1} parent=1 // pred_fallthru
      _
    // Predicated region
    $region14: #{_stage1.1} parent=1 // pred_check
      _
    $region15: #{_stage1.1} parent=1 // pred_check_branch
      %9048 = sbr.rel (0) target = $region17
    $region16: #{_stage1.1} parent=1 // pred_region
      _
    $region17: #{_stage1.1} parent=1 // pred_fallthru
      _
    // Predicated region
    $region18: #{_stage1.1} parent=1 // pred_check
      _
    $region19: #{_stage1.1} parent=1 // pred_check_branch
      %9050 = sbr.rel (0) target = $region21
    $region20: #{_stage1.1} parent=1 // pred_region
      %9051 = dma.done [#allocation3], 4096
    $region21: #{_stage1.1} parent=1 // pred_fallthru
      _
    %9052 = vsyncpa [#allocation3], 1

</llo_original>
